<compile_context>
chip_gen: v6e
topology: v6e:2x2x1
jax: 0.10.0
libtpu: 0.0.40
codegen_flags: <defaults>
</compile_context>

<pallas_src>
import functools

import jax
import jax.numpy as jnp
from jax import lax
from jax.experimental import pallas as pl
from jax.experimental.pallas import tpu as pltpu

_BN_EPS = 1e-5
_COMPUTE_DTYPE = jnp.bfloat16        # MXU operand / scratch / output dtype


def _vmem_limit_bytes():
    """Generation-aware VMEM budget (~3/4 of physical capacity)."""
    try:
        cap = int(pltpu.get_tpu_info().vmem_capacity_bytes)
    except Exception:
        cap = 64 * 1024 * 1024
    return max(32 * 1024 * 1024, (cap * 3) // 4)


# --------------------------------------------------------------------------
# Transposed-conv phase plan (kernel=3, padding=1, output_padding=stride-1).
# Per spatial dim returns:
#   pad    : (lo, hi) zero padding of the ORIGINAL input along this dim,
#   starts : distinct static slice starts into the padded input,
#   ktap   : list over output phases of {start -> kernel tap index}.
# --------------------------------------------------------------------------
def _dim_plan(s):
    if s == 1:
        return (1, 1), [0, 1, 2], [{0: 0, 1: 1, 2: 2}]
    if s == 2:
        return (0, 1), [0, 1], [{0: 1}, {0: 0, 1: 2}]
    raise ValueError(f"unsupported stride component: {s}")


# ---------------------------------- kernel ----------------------------------

def _res_decoder_kernel(x_ref, sk_ref, w1_ref, s1_ref, b1_ref,
                        wa_ref, sa_ref, ba_ref, wscT_ref, bsc_ref,
                        wbT_ref, sb_ref, bb_ref,
                        o_ref, catp_ref, tpad_ref,
                        *, starts, sH, sW, H, W):
    """Fused ResDecoderBlock forward for one batch element.

    x_ref   : (1, Hp, Wp, Cin) bf16  (original input, phase-plan zero padding)
    sk_ref  : (1, Ho, Wo, O)   bf16  (concat_tensor, NHWC)
    o_ref   : (1, O, Ho*Wo)    bf16  (flattened NCHW, lane-dense)
    catp_ref: (Ho+2, Wo+2, 2O) bf16 scratch (padded `cat`)
    tpad_ref: (Ho+2, Wo+2, O)  bf16 scratch (padded `t`)
    """
    Cin = x_ref.shape[3]
    O = sk_ref.shape[3]
    C2 = 2 * O
    Ho, Wo = H * sH, W * sW
    HW = Ho * Wo
    cd = catp_ref.dtype
    f32 = jnp.float32

    # --- zero only the 1-pixel halo of the persistent padded scratch; the
    #     interior is fully overwritten below (review: no full-buffer memset).
    for ref, c in ((catp_ref, C2), (tpad_ref, O)):
        ref[0:1, :, :] = jnp.zeros((1, Wo + 2, c), cd)
        ref[Ho + 1:Ho + 2, :, :] = jnp.zeros((1, Wo + 2, c), cd)
        ref[:, 0:1, :] = jnp.zeros((Ho + 2, 1, c), cd)
        ref[:, Wo + 1:Wo + 2, :] = jnp.zeros((Ho + 2, 1, c), cd)

    # --- conv1: ConvTranspose2d(3x3, stride) + folded BN + ReLU,
    #     phase-decomposed (one matmul per output row-phase). ---------------
    patches = jnp.concatenate(
        [x_ref[0, sh:sh + H, sw:sw + W, :].reshape(H * W, Cin)
         for sh, sw in starts], axis=-1)                       # (H*W, nt*Cin) bf16
    row_pieces = []
    for ph in range(sH):
        y = jnp.dot(patches, w1_ref[ph], preferred_element_type=f32)
        y = jnp.maximum(y * s1_ref[0] + b1_ref[0], 0.0)        # (H*W, sW*O) f32
        cols = [y[:, pw * O:(pw + 1) * O].reshape(H, W, O) for pw in range(sW)]
        row_pieces.append(jnp.stack(cols, axis=2).reshape(H, Wo, O))
    h = jnp.stack(row_pieces, axis=1).reshape(Ho, Wo, O)       # phase interleave

    # torch.cat((x, concat_tensor), dim=1): both halves are written straight
    # into the padded scratch -- the concat never exists as a separate value.
    catp_ref[1:1 + Ho, 1:1 + Wo, 0:O] = h.astype(cd)
    catp_ref[1:1 + Ho, 1:1 + Wo, O:C2] = sk_ref[0]

    # --- ConvBlockRes conv_a: 3x3 + BN + ReLU, 3 accumulating matmuls -------
    acc = jnp.zeros((HW, O), f32)
    for kh in range(3):
        p = jnp.concatenate(
            [catp_ref[kh:kh + Ho, kw:kw + Wo, :].reshape(HW, C2)
             for kw in range(3)], axis=-1)                     # (HW, 3*C2) bf16
        acc = acc + jnp.dot(p, wa_ref[kh], preferred_element_type=f32)
    t = jnp.maximum(acc * sa_ref[0] + ba_ref[0], 0.0)
    tpad_ref[1:1 + Ho, 1:1 + Wo, :] = t.reshape(Ho, Wo, O).astype(cd)

    # --- 1x1 shortcut over `cat`, transposed orientation -> (O, HW) ---------
    dnT = (((1,), (1,)), ((), ()))                             # contract last dims
    cat_c = catp_ref[1:1 + Ho, 1:1 + Wo, :].reshape(HW, C2)
    scT = lax.dot_general(wscT_ref[...], cat_c, dnT,
                          preferred_element_type=f32) + bsc_ref[...]

    # --- conv_b: 3x3 + BN + ReLU, transposed orientation, + residual add ----
    accT = jnp.zeros((O, HW), f32)
    for kh in range(3):
        p = jnp.concatenate(
            [tpad_ref[kh:kh + Ho, kw:kw + Wo, :].reshape(HW, O)
             for kw in range(3)], axis=-1)                     # (HW, 3*O) bf16
        accT = accT + lax.dot_general(wbT_ref[kh], p, dnT,
                                      preferred_element_type=f32)
    outT = jnp.maximum(accT * sb_ref[...] + bb_ref[...], 0.0) + scT

    # Lane-dense store: (O, Ho*Wo) == flattened NCHW, last dim multiple of 128.
    o_ref[0] = outT.astype(o_ref.dtype)


# ------------------------------- call wrapper --------------------------------

def res_decoder_block_forward(prep, x_nchw, concat_nchw):
    """ResDecoderBlock.forward (n_blocks=1, eval-mode BN). NCHW in / NCHW out (bf16)."""
    cd = _COMPUTE_DTYPE
    sH, sW = prep['stride']
    N, Cin, H, W = x_nchw.shape
    O = concat_nchw.shape[1]
    Ho, Wo = H * sH, W * sW

    x = jnp.transpose(x_nchw, (0, 2, 3, 1)).astype(cd)          # (N, H, W, Cin)
    skip = jnp.transpose(concat_nchw, (0, 2, 3, 1)).astype(cd)  # (N, Ho, Wo, O)
    xp = jnp.pad(x, ((0, 0), prep['pad_h'], prep['pad_w'], (0, 0)))
    Hp, Wp = int(xp.shape[1]), int(xp.shape[2])

    kernel = functools.partial(_res_decoder_kernel, starts=prep['starts'],
                               sH=sH, sW=sW, H=H, W=W)

    def cspec(arr):  # constant (weight) spec: full array, same block each step
        nd = arr.ndim
        return pl.BlockSpec(arr.shape, lambda n, _nd=nd: (0,) * _nd)

    weights = (prep['w1'], prep['s1'], prep['b1'],
               prep['wa'], prep['sa'], prep['ba'],
               prep['wscT'], prep['bsc'],
               prep['wbT'], prep['sb'], prep['bb'])

    out = pl.pallas_call(
        kernel,
        out_shape=jax.ShapeDtypeStruct((N, O, Ho * Wo), cd),
        grid=(N,),
        in_specs=[
            pl.BlockSpec((1, Hp, Wp, Cin), lambda n: (n, 0, 0, 0)),
            pl.BlockSpec((1, Ho, Wo, O), lambda n: (n, 0, 0, 0)),
        ] + [cspec(w) for w in weights],
        out_specs=pl.BlockSpec((1, O, Ho * Wo), lambda n: (n, 0, 0)),
        scratch_shapes=[
            pltpu.VMEM((Ho + 2, Wo + 2, 2 * O), cd),   # padded cat (bf16)
            pltpu.VMEM((Ho + 2, Wo + 2, O), cd),       # padded t   (bf16)
        ],
        compiler_params=pltpu.CompilerParams(
            dimension_semantics=("parallel",),
            vmem_limit_bytes=_vmem_limit_bytes()),
    )(xp, skip, *weights)

    # (N, O, Ho*Wo) is already flattened NCHW -> free reshape, no XLA transpose.
    return out.reshape(N, O, Ho, Wo)


# ------------------------------ parameter prep -------------------------------

def _fold_bn(bn):
    scale = bn['gamma'] / jnp.sqrt(bn['var'] + _BN_EPS)
    bias = bn['beta'] - bn['mean'] * scale
    return scale, bias


def prepare_params(params, stride):
    """One-time weight preprocessing hoisted out of the forward path."""
    sH, sW = stride
    if (sH, sW) not in ((1, 2), (2, 2)):
        # The reference module only uses (1, 2) / (2, 2); its output_padding
        # rule equals stride - 1 exactly for these.
        raise ValueError(f"unsupported stride {stride}")
    cd = _COMPUTE_DTYPE

    # conv1 (ConvTranspose2d 3x3): flip + HWIO, then one matmul weight per
    # output row-phase: (sH, n_taps*Cin, sW*O).
    wt = params['conv1_w']                                     # (Cin, O, 3, 3)
    Cin, O = wt.shape[0], wt.shape[1]
    wf = jnp.transpose(wt[:, :, ::-1, ::-1], (2, 3, 0, 1))     # (3, 3, Cin, O)
    pad_h, starts_h, ktap_h = _dim_plan(sH)
    pad_w, starts_w, ktap_w = _dim_plan(sW)
    zeros = jnp.zeros((Cin, O), jnp.float32)
    w1_phases = []
    for ph in range(sH):
        row_blocks = []
        for sh in starts_h:
            for sw_ in starts_w:
                kh = ktap_h[ph].get(sh)
                cols = []
                for pw in range(sW):
                    kw = ktap_w[pw].get(sw_)
                    cols.append(zeros if (kh is None or kw is None) else wf[kh, kw])
                row_blocks.append(jnp.concatenate(cols, axis=1))   # (Cin, sW*O)
        w1_phases.append(jnp.concatenate(row_blocks, axis=0))       # (nt*Cin, sW*O)
    w1 = jnp.stack(w1_phases, axis=0)                               # (sH, ., sW*O)
    s1_, b1_ = _fold_bn(params['bn1'])
    s1 = jnp.tile(s1_, sW).reshape(1, sW * O)
    b1 = jnp.tile(b1_, sW).reshape(1, sW * O)

    # ConvBlockRes: per-kernel-row im2col packing + BN fold.
    C2 = 2 * O
    wa_t = params['cbr_conv_a_w']                                   # (O, C2, 3, 3)
    wa = jnp.stack(
        [jnp.concatenate([wa_t[:, :, kh, kw].T for kw in range(3)], axis=0)
         for kh in range(3)], axis=0)                               # (3, 3*C2, O)
    wb_t = params['cbr_conv_b_w']                                   # (O, O, 3, 3)
    wbT = jnp.stack(
        [jnp.concatenate([wb_t[:, :, kh, kw] for kw in range(3)], axis=1)
         for kh in range(3)], axis=0)                               # (3, O, 3*O)
    wscT = params['cbr_sc_w'][:, :, 0, 0]                           # (O, C2)
    sa, ba = _fold_bn(params['cbr_bn_a'])
    sb, bb = _fold_bn(params['cbr_bn_b'])

    starts = [(sh, sw_) for sh in starts_h for sw_ in starts_w]
    return dict(
        stride=(sH, sW), pad_h=pad_h, pad_w=pad_w, starts=starts,
        w1=w1.astype(cd), s1=s1, b1=b1,
        wa=wa.astype(cd), sa=sa.reshape(1, O), ba=ba.reshape(1, O),
        wbT=wbT.astype(cd), sb=sb.reshape(O, 1), bb=bb.reshape(O, 1),
        wscT=wscT.astype(cd), bsc=params['cbr_sc_b'].reshape(O, 1),
    )


# -------------------- pure-XLA reference (for self-checking) -----------------

def reference_forward(params, x_nchw, concat_nchw, stride):
    """Pure-XLA reference with the same bf16 operand rounding / f32 accumulation."""
    cd = _COMPUTE_DTYPE
    q = lambda a: a.astype(cd).astype(jnp.float32)
    dn = ('NHWC', 'HWIO', 'NHWC')
    prec = jax.lax.Precision.HIGHEST

    x = q(jnp.transpose(x_nchw, (0, 2, 3, 1)))
    skip = q(jnp.transpose(concat_nchw, (0, 2, 3, 1)))
    N, H, W, Cin = x.shape
    sH, sW = stride
    opH, opW = sH - 1, sW - 1

    # ConvTranspose2d as conv over the zero-dilated, re-padded input.
    Hd, Wd = (H - 1) * sH + 1, (W - 1) * sW + 1
    xd = jnp.zeros((N, Hd, Wd, Cin), jnp.float32).at[:, ::sH, ::sW, :].set(x)
    xdp = jnp.pad(xd, ((0, 0), (1, 1 + opH), (1, 1 + opW), (0, 0)))
    wf = q(jnp.transpose(params['conv1_w'][:, :, ::-1, ::-1], (2, 3, 0, 1)))
    s1, b1 = _fold_bn(params['bn1'])
    h = lax.conv_general_dilated(xdp, wf, (1, 1), 'VALID',
                                 dimension_numbers=dn, precision=prec)
    h = q(jnp.maximum(h * s1 + b1, 0.0))

    cat = jnp.concatenate([h, skip], axis=-1)
    wa = q(jnp.transpose(params['cbr_conv_a_w'], (2, 3, 1, 0)))
    sa, ba = _fold_bn(params['cbr_bn_a'])
    t = lax.conv_general_dilated(cat, wa, (1, 1), ((1, 1), (1, 1)),
                                 dimension_numbers=dn, precision=prec)
    t = q(jnp.maximum(t * sa + ba, 0.0))
    wb = q(jnp.transpose(params['cbr_conv_b_w'], (2, 3, 1, 0)))
    sb, bb = _fold_bn(params['cbr_bn_b'])
    t = lax.conv_general_dilated(t, wb, (1, 1), ((1, 1), (1, 1)),
                                 dimension_numbers=dn, precision=prec)
    t = jnp.maximum(t * sb + bb, 0.0)
    wsc = q(jnp.transpose(params['cbr_sc_w'][:, :, 0, 0], (1, 0)))
    sc = jnp.einsum('nhwc,cd->nhwd', cat, wsc, precision=prec) + params['cbr_sc_b']
    return jnp.transpose(t + sc, (0, 3, 1, 2))


# ---------------------------------- params -----------------------------------

def init_params(key, in_channels, out_channels):
    C, O = in_channels, out_channels
    keys = jax.random.split(key, 8)

    def w(k, shape, scale=0.2):
        return scale * jax.random.normal(k, shape, jnp.float32)

    def bn(k, c):
        k1, k2, k3, k4 = jax.random.split(k, 4)
        return dict(
            gamma=1.0 + 0.1 * jax.random.normal(k1, (c,), jnp.float32),
            beta=0.1 * jax.random.normal(k2, (c,), jnp.float32),
            mean=0.1 * jax.random.normal(k3, (c,), jnp.float32),
            var=jax.random.uniform(k4, (c,), jnp.float32, minval=0.5, maxval=1.5),
        )

    return dict(
        conv1_w=w(keys[0], (C, O, 3, 3)),           # ConvTranspose2d: (in, out, kH, kW)
        bn1=bn(keys[1], O),
        cbr_conv_a_w=w(keys[2], (O, 2 * O, 3, 3)),  # Conv2d: (out, in, kH, kW)
        cbr_bn_a=bn(keys[3], O),
        cbr_conv_b_w=w(keys[4], (O, O, 3, 3)),
        cbr_bn_b=bn(keys[5], O),
        cbr_sc_w=w(keys[6], (O, 2 * O, 1, 1)),      # shortcut 1x1 conv
        cbr_sc_b=w(keys[7], (O,)),
    )


# ----------------------------------- main -------------------------------------

if __name__ == "__main__":
    key = jax.random.PRNGKey(0)
    in_channels, out_channels = 8, 4
    N, H, W = 2, 8, 8

    for stride in ((2, 2), (1, 2)):                  # both strides the module uses
        kp, kx, kc, key = jax.random.split(key, 4)
        Ho, Wo = H * stride[0], W * stride[1]

        params = init_params(kp, in_channels, out_channels)
        x = jax.random.normal(kx, (N, in_channels, H, W), jnp.float32)
        concat_tensor = jax.random.normal(kc, (N, out_channels, Ho, Wo), jnp.float32)

        prep = prepare_params(params, stride)        # one-time weight prep (hoisted)
        fwd = jax.jit(functools.partial(res_decoder_block_forward, prep))

        out = jax.block_until_ready(fwd(x, concat_tensor))
        assert out.shape == (N, out_channels, Ho, Wo), out.shape

        ref = jax.block_until_ready(reference_forward(params, x, concat_tensor, stride))
        out32 = out.astype(jnp.float32)
        max_err = float(jnp.max(jnp.abs(out32 - ref)))
        assert jnp.allclose(out32, ref, rtol=4e-2, atol=4e-2), (stride, max_err)

    print("KERNEL_OK")
</pallas_src>

<mosaic_0001>
module attributes {stable_mosaic.version = 11 : i64} {
  func.func @_res_decoder_kernel(%arg0: i32, %arg1: memref<1x9x9x8xbf16, #tpu.memory_space<vmem>>, %arg2: memref<1x16x16x4xbf16, #tpu.memory_space<vmem>>, %arg3: memref<2x32x8xbf16, #tpu.memory_space<vmem>>, %arg4: memref<1x8xf32, #tpu.memory_space<vmem>>, %arg5: memref<1x8xf32, #tpu.memory_space<vmem>>, %arg6: memref<3x24x4xbf16, #tpu.memory_space<vmem>>, %arg7: memref<1x4xf32, #tpu.memory_space<vmem>>, %arg8: memref<1x4xf32, #tpu.memory_space<vmem>>, %arg9: memref<4x8xbf16, #tpu.memory_space<vmem>>, %arg10: memref<4x1xf32, #tpu.memory_space<vmem>>, %arg11: memref<3x4x12xbf16, #tpu.memory_space<vmem>>, %arg12: memref<4x1xf32, #tpu.memory_space<vmem>>, %arg13: memref<4x1xf32, #tpu.memory_space<vmem>>, %arg14: memref<1x4x256xbf16, #tpu.memory_space<vmem>>, %arg15: memref<18x18x8xbf16, #tpu.memory_space<vmem>>, %arg16: memref<18x18x4xbf16, #tpu.memory_space<vmem>>) attributes {dimension_semantics = [#tpu.dimension_semantics<parallel>], iteration_bounds = array<i64: 2>, scalar_prefetch = 0 : i64, scratch_operands = 2 : i64, tpu.core_type = #tpu.core_type<tc>, window_params = [{transform_indices = @transform_0, window_bounds = array<i64: 1, 9, 9, 8>}, {transform_indices = @transform_1, window_bounds = array<i64: 1, 16, 16, 4>}, {pipeline_mode = #tpu.pipeline_mode<synchronous>, transform_indices = @transform_2, window_bounds = array<i64: 2, 32, 8>}, {pipeline_mode = #tpu.pipeline_mode<synchronous>, transform_indices = @transform_3, window_bounds = array<i64: 1, 8>}, {pipeline_mode = #tpu.pipeline_mode<synchronous>, transform_indices = @transform_4, window_bounds = array<i64: 1, 8>}, {pipeline_mode = #tpu.pipeline_mode<synchronous>, transform_indices = @transform_5, window_bounds = array<i64: 3, 24, 4>}, {pipeline_mode = #tpu.pipeline_mode<synchronous>, transform_indices = @transform_6, window_bounds = array<i64: 1, 4>}, {pipeline_mode = #tpu.pipeline_mode<synchronous>, transform_indices = @transform_7, window_bounds = array<i64: 1, 4>}, {pipeline_mode = #tpu.pipeline_mode<synchronous>, transform_indices = @transform_8, window_bounds = array<i64: 4, 8>}, {pipeline_mode = #tpu.pipeline_mode<synchronous>, transform_indices = @transform_9, window_bounds = array<i64: 4, 1>}, {pipeline_mode = #tpu.pipeline_mode<synchronous>, transform_indices = @transform_10, window_bounds = array<i64: 3, 4, 12>}, {pipeline_mode = #tpu.pipeline_mode<synchronous>, transform_indices = @transform_11, window_bounds = array<i64: 4, 1>}, {pipeline_mode = #tpu.pipeline_mode<synchronous>, transform_indices = @transform_12, window_bounds = array<i64: 4, 1>}, {transform_indices = @transform_13, window_bounds = array<i64: 1, 4, 256>}]} {
    %cst = arith.constant 0.000000e+00 : bf16
    %0 = vector.broadcast %cst : bf16 to vector<1x18x8xbf16>
    %c0 = arith.constant 0 : index
    %c0_0 = arith.constant 0 : index
    %c0_1 = arith.constant 0 : index
    %1 = vector.load %arg15[%c0, %c0_0, %c0_1] : memref<18x18x8xbf16, #tpu.memory_space<vmem>>, vector<1x18x8xbf16>
    tpu.vector_store %arg15[%c0, %c0_0, %c0_1], %0 {strides = array<i32>} : memref<18x18x8xbf16, #tpu.memory_space<vmem>>, vector<1x18x8xbf16>,
    %cst_2 = arith.constant 0.000000e+00 : bf16
    %2 = vector.broadcast %cst_2 : bf16 to vector<1x18x8xbf16>
    %c17 = arith.constant 17 : index
    %c0_3 = arith.constant 0 : index
    %c0_4 = arith.constant 0 : index
    %3 = vector.load %arg15[%c17, %c0_3, %c0_4] : memref<18x18x8xbf16, #tpu.memory_space<vmem>>, vector<1x18x8xbf16>
    tpu.vector_store %arg15[%c17, %c0_3, %c0_4], %2 {strides = array<i32>} : memref<18x18x8xbf16, #tpu.memory_space<vmem>>, vector<1x18x8xbf16>,
    %cst_5 = arith.constant 0.000000e+00 : bf16
    %4 = vector.broadcast %cst_5 : bf16 to vector<18x1x8xbf16>
    %c0_6 = arith.constant 0 : index
    %c0_7 = arith.constant 0 : index
    %c0_8 = arith.constant 0 : index
    %5 = vector.load %arg15[%c0_6, %c0_7, %c0_8] : memref<18x18x8xbf16, #tpu.memory_space<vmem>>, vector<18x1x8xbf16>
    tpu.vector_store %arg15[%c0_6, %c0_7, %c0_8], %4 {strides = array<i32>} : memref<18x18x8xbf16, #tpu.memory_space<vmem>>, vector<18x1x8xbf16>,
    %cst_9 = arith.constant 0.000000e+00 : bf16
    %6 = vector.broadcast %cst_9 : bf16 to vector<18x1x8xbf16>
    %c0_10 = arith.constant 0 : index
    %c17_11 = arith.constant 17 : index
    %c0_12 = arith.constant 0 : index
    %7 = vector.load %arg15[%c0_10, %c17_11, %c0_12] : memref<18x18x8xbf16, #tpu.memory_space<vmem>>, vector<18x1x8xbf16>
    tpu.vector_store %arg15[%c0_10, %c17_11, %c0_12], %6 {strides = array<i32>} : memref<18x18x8xbf16, #tpu.memory_space<vmem>>, vector<18x1x8xbf16>,
    %cst_13 = arith.constant 0.000000e+00 : bf16
    %8 = vector.broadcast %cst_13 : bf16 to vector<1x18x4xbf16>
    %c0_14 = arith.constant 0 : index
    %c0_15 = arith.constant 0 : index
    %c0_16 = arith.constant 0 : index
    %9 = vector.load %arg16[%c0_14, %c0_15, %c0_16] : memref<18x18x4xbf16, #tpu.memory_space<vmem>>, vector<1x18x4xbf16>
    tpu.vector_store %arg16[%c0_14, %c0_15, %c0_16], %8 {strides = array<i32>} : memref<18x18x4xbf16, #tpu.memory_space<vmem>>, vector<1x18x4xbf16>,
    %cst_17 = arith.constant 0.000000e+00 : bf16
    %10 = vector.broadcast %cst_17 : bf16 to vector<1x18x4xbf16>
    %c17_18 = arith.constant 17 : index
    %c0_19 = arith.constant 0 : index
    %c0_20 = arith.constant 0 : index
    %11 = vector.load %arg16[%c17_18, %c0_19, %c0_20] : memref<18x18x4xbf16, #tpu.memory_space<vmem>>, vector<1x18x4xbf16>
    tpu.vector_store %arg16[%c17_18, %c0_19, %c0_20], %10 {strides = array<i32>} : memref<18x18x4xbf16, #tpu.memory_space<vmem>>, vector<1x18x4xbf16>,
    %cst_21 = arith.constant 0.000000e+00 : bf16
    %12 = vector.broadcast %cst_21 : bf16 to vector<18x1x4xbf16>
    %c0_22 = arith.constant 0 : index
    %c0_23 = arith.constant 0 : index
    %c0_24 = arith.constant 0 : index
    %13 = vector.load %arg16[%c0_22, %c0_23, %c0_24] : memref<18x18x4xbf16, #tpu.memory_space<vmem>>, vector<18x1x4xbf16>
    tpu.vector_store %arg16[%c0_22, %c0_23, %c0_24], %12 {strides = array<i32>} : memref<18x18x4xbf16, #tpu.memory_space<vmem>>, vector<18x1x4xbf16>,
    %cst_25 = arith.constant 0.000000e+00 : bf16
    %14 = vector.broadcast %cst_25 : bf16 to vector<18x1x4xbf16>
    %c0_26 = arith.constant 0 : index
    %c17_27 = arith.constant 17 : index
    %c0_28 = arith.constant 0 : index
    %15 = vector.load %arg16[%c0_26, %c17_27, %c0_28] : memref<18x18x4xbf16, #tpu.memory_space<vmem>>, vector<18x1x4xbf16>
    tpu.vector_store %arg16[%c0_26, %c17_27, %c0_28], %14 {strides = array<i32>} : memref<18x18x4xbf16, #tpu.memory_space<vmem>>, vector<18x1x4xbf16>,
    %c0_29 = arith.constant 0 : index
    %c0_30 = arith.constant 0 : index
    %c0_31 = arith.constant 0 : index
    %c0_32 = arith.constant 0 : index
    %16 = vector.load %arg1[%c0_29, %c0_30, %c0_31, %c0_32] : memref<1x9x9x8xbf16, #tpu.memory_space<vmem>>, vector<1x8x8x8xbf16>
    %17 = vector.shape_cast %16 : vector<1x8x8x8xbf16> to vector<8x8x8xbf16>
    %18 = vector.shape_cast %17 : vector<8x8x8xbf16> to vector<64x8xbf16>
    %c0_33 = arith.constant 0 : index
    %c0_34 = arith.constant 0 : index
    %c1 = arith.constant 1 : index
    %c0_35 = arith.constant 0 : index
    %19 = vector.load %arg1[%c0_33, %c0_34, %c1, %c0_35] : memref<1x9x9x8xbf16, #tpu.memory_space<vmem>>, vector<1x8x8x8xbf16>
    %20 = vector.shape_cast %19 : vector<1x8x8x8xbf16> to vector<8x8x8xbf16>
    %21 = vector.shape_cast %20 : vector<8x8x8xbf16> to vector<64x8xbf16>
    %c0_36 = arith.constant 0 : index
    %c1_37 = arith.constant 1 : index
    %c0_38 = arith.constant 0 : index
    %c0_39 = arith.constant 0 : index
    %22 = vector.load %arg1[%c0_36, %c1_37, %c0_38, %c0_39] : memref<1x9x9x8xbf16, #tpu.memory_space<vmem>>, vector<1x8x8x8xbf16>
    %23 = vector.shape_cast %22 : vector<1x8x8x8xbf16> to vector<8x8x8xbf16>
    %24 = vector.shape_cast %23 : vector<8x8x8xbf16> to vector<64x8xbf16>
    %c0_40 = arith.constant 0 : index
    %c1_41 = arith.constant 1 : index
    %c1_42 = arith.constant 1 : index
    %c0_43 = arith.constant 0 : index
    %25 = vector.load %arg1[%c0_40, %c1_41, %c1_42, %c0_43] : memref<1x9x9x8xbf16, #tpu.memory_space<vmem>>, vector<1x8x8x8xbf16>
    %26 = vector.shape_cast %25 : vector<1x8x8x8xbf16> to vector<8x8x8xbf16>
    %27 = vector.shape_cast %26 : vector<8x8x8xbf16> to vector<64x8xbf16>
    %28 = tpu.concatenate %18, %21, %24, %27 in 1 : vector<64x8xbf16>, vector<64x8xbf16>, vector<64x8xbf16>, vector<64x8xbf16> -> vector<64x32xbf16>
    %c0_44 = arith.constant 0 : index
    %c0_45 = arith.constant 0 : index
    %c0_46 = arith.constant 0 : index
    %29 = vector.load %arg3[%c0_44, %c0_45, %c0_46] : memref<2x32x8xbf16, #tpu.memory_space<vmem>>, vector<1x32x8xbf16>
    %30 = vector.shape_cast %29 : vector<1x32x8xbf16> to vector<32x8xbf16>
    %cst_47 = arith.constant dense<0.000000e+00> : vector<64x8xf32>
    %31 = tpu.matmul %28, %30, %cst_47 {dimension_numbers = #tpu.dot_dimension_numbers<[1], [0], [0], [1], [0, 0, 1, 1], [], []>} : vector<64x32xbf16>, vector<32x8xbf16>, vector<64x8xf32> -> vector<64x8xf32>
    %c0_48 = arith.constant 0 : index
    %c0_49 = arith.constant 0 : index
    %32 = vector.load %arg4[%c0_48, %c0_49] : memref<1x8xf32, #tpu.memory_space<vmem>>, vector<1x8xf32>
    %33 = vector.shape_cast %32 : vector<1x8xf32> to vector<8xf32>
    %34 = vector.shape_cast %33 : vector<8xf32> to vector<1x8xf32>
    %35 = vector.broadcast %34 : vector<1x8xf32> to vector<64x8xf32>
    %36 = arith.mulf %31, %35 : vector<64x8xf32>
    %c0_50 = arith.constant 0 : index
    %c0_51 = arith.constant 0 : index
    %37 = vector.load %arg5[%c0_50, %c0_51] : memref<1x8xf32, #tpu.memory_space<vmem>>, vector<1x8xf32>
    %38 = vector.shape_cast %37 : vector<1x8xf32> to vector<8xf32>
    %39 = vector.shape_cast %38 : vector<8xf32> to vector<1x8xf32>
    %40 = vector.broadcast %39 : vector<1x8xf32> to vector<64x8xf32>
    %41 = arith.addf %36, %40 : vector<64x8xf32>
    %cst_52 = arith.constant 0.000000e+00 : f32
    %42 = vector.broadcast %cst_52 : f32 to vector<64x8xf32>
    %43 = arith.maximumf %41, %42 : vector<64x8xf32>
    %44 = vector.extract_strided_slice %43 {offsets = [0, 0], sizes = [64, 4], strides = [1, 1]} : vector<64x8xf32> to vector<64x4xf32>
    %45 = vector.shape_cast %44 : vector<64x4xf32> to vector<8x8x4xf32>
    %46 = vector.extract_strided_slice %43 {offsets = [0, 4], sizes = [64, 4], strides = [1, 1]} : vector<64x8xf32> to vector<64x4xf32>
    %47 = vector.shape_cast %46 : vector<64x4xf32> to vector<8x8x4xf32>
    %48 = vector.shape_cast %45 : vector<8x8x4xf32> to vector<8x8x1x4xf32>
    %49 = vector.shape_cast %47 : vector<8x8x4xf32> to vector<8x8x1x4xf32>
    %50 = tpu.concatenate %48, %49 in 2 : vector<8x8x1x4xf32>, vector<8x8x1x4xf32> -> vector<8x8x2x4xf32>
    %51 = vector.shape_cast %50 : vector<8x8x2x4xf32> to vector<8x16x4xf32>
    %c1_53 = arith.constant 1 : index
    %c0_54 = arith.constant 0 : index
    %c0_55 = arith.constant 0 : index
    %52 = vector.load %arg3[%c1_53, %c0_54, %c0_55] : memref<2x32x8xbf16, #tpu.memory_space<vmem>>, vector<1x32x8xbf16>
    %53 = vector.shape_cast %52 : vector<1x32x8xbf16> to vector<32x8xbf16>
    %cst_56 = arith.constant dense<0.000000e+00> : vector<64x8xf32>
    %54 = tpu.matmul %28, %53, %cst_56 {dimension_numbers = #tpu.dot_dimension_numbers<[1], [0], [0], [1], [0, 0, 1, 1], [], []>} : vector<64x32xbf16>, vector<32x8xbf16>, vector<64x8xf32> -> vector<64x8xf32>
    %c0_57 = arith.constant 0 : index
    %c0_58 = arith.constant 0 : index
    %55 = vector.load %arg4[%c0_57, %c0_58] : memref<1x8xf32, #tpu.memory_space<vmem>>, vector<1x8xf32>
    %56 = vector.shape_cast %55 : vector<1x8xf32> to vector<8xf32>
    %57 = vector.shape_cast %56 : vector<8xf32> to vector<1x8xf32>
    %58 = vector.broadcast %57 : vector<1x8xf32> to vector<64x8xf32>
    %59 = arith.mulf %54, %58 : vector<64x8xf32>
    %c0_59 = arith.constant 0 : index
    %c0_60 = arith.constant 0 : index
    %60 = vector.load %arg5[%c0_59, %c0_60] : memref<1x8xf32, #tpu.memory_space<vmem>>, vector<1x8xf32>
    %61 = vector.shape_cast %60 : vector<1x8xf32> to vector<8xf32>
    %62 = vector.shape_cast %61 : vector<8xf32> to vector<1x8xf32>
    %63 = vector.broadcast %62 : vector<1x8xf32> to vector<64x8xf32>
    %64 = arith.addf %59, %63 : vector<64x8xf32>
    %cst_61 = arith.constant 0.000000e+00 : f32
    %65 = vector.broadcast %cst_61 : f32 to vector<64x8xf32>
    %66 = arith.maximumf %64, %65 : vector<64x8xf32>
    %67 = vector.extract_strided_slice %66 {offsets = [0, 0], sizes = [64, 4], strides = [1, 1]} : vector<64x8xf32> to vector<64x4xf32>
    %68 = vector.shape_cast %67 : vector<64x4xf32> to vector<8x8x4xf32>
    %69 = vector.extract_strided_slice %66 {offsets = [0, 4], sizes = [64, 4], strides = [1, 1]} : vector<64x8xf32> to vector<64x4xf32>
    %70 = vector.shape_cast %69 : vector<64x4xf32> to vector<8x8x4xf32>
    %71 = vector.shape_cast %68 : vector<8x8x4xf32> to vector<8x8x1x4xf32>
    %72 = vector.shape_cast %70 : vector<8x8x4xf32> to vector<8x8x1x4xf32>
    %73 = tpu.concatenate %71, %72 in 2 : vector<8x8x1x4xf32>, vector<8x8x1x4xf32> -> vector<8x8x2x4xf32>
    %74 = vector.shape_cast %73 : vector<8x8x2x4xf32> to vector<8x16x4xf32>
    %75 = vector.shape_cast %51 : vector<8x16x4xf32> to vector<8x1x16x4xf32>
    %76 = vector.shape_cast %74 : vector<8x16x4xf32> to vector<8x1x16x4xf32>
    %77 = tpu.concatenate %75, %76 in 1 : vector<8x1x16x4xf32>, vector<8x1x16x4xf32> -> vector<8x2x16x4xf32>
    %78 = vector.shape_cast %77 : vector<8x2x16x4xf32> to vector<16x16x4xf32>
    %79 = arith.truncf %78 : vector<16x16x4xf32> to vector<16x16x4xbf16>
    %c1_62 = arith.constant 1 : index
    %c1_63 = arith.constant 1 : index
    %c0_64 = arith.constant 0 : index
    %80 = vector.load %arg15[%c1_62, %c1_63, %c0_64] : memref<18x18x8xbf16, #tpu.memory_space<vmem>>, vector<16x16x4xbf16>
    tpu.vector_store %arg15[%c1_62, %c1_63, %c0_64], %79 {strides = array<i32>} : memref<18x18x8xbf16, #tpu.memory_space<vmem>>, vector<16x16x4xbf16>,
    %c0_65 = arith.constant 0 : index
    %c0_66 = arith.constant 0 : index
    %c0_67 = arith.constant 0 : index
    %c0_68 = arith.constant 0 : index
    %81 = vector.load %arg2[%c0_65, %c0_66, %c0_67, %c0_68] : memref<1x16x16x4xbf16, #tpu.memory_space<vmem>>, vector<1x16x16x4xbf16>
    %82 = vector.shape_cast %81 : vector<1x16x16x4xbf16> to vector<16x16x4xbf16>
    %c1_69 = arith.constant 1 : index
    %c1_70 = arith.constant 1 : index
    %c4 = arith.constant 4 : index
    %83 = vector.load %arg15[%c1_69, %c1_70, %c4] : memref<18x18x8xbf16, #tpu.memory_space<vmem>>, vector<16x16x4xbf16>
    tpu.vector_store %arg15[%c1_69, %c1_70, %c4], %82 {strides = array<i32>} : memref<18x18x8xbf16, #tpu.memory_space<vmem>>, vector<16x16x4xbf16>,
    %cst_71 = arith.constant 0.000000e+00 : f32
    %84 = vector.broadcast %cst_71 : f32 to vector<256x4xf32>
    %c0_72 = arith.constant 0 : index
    %c0_73 = arith.constant 0 : index
    %c0_74 = arith.constant 0 : index
    %85 = vector.load %arg15[%c0_72, %c0_73, %c0_74] : memref<18x18x8xbf16, #tpu.memory_space<vmem>>, vector<16x16x8xbf16>
    %86 = vector.shape_cast %85 : vector<16x16x8xbf16> to vector<256x8xbf16>
    %c0_75 = arith.constant 0 : index
    %c1_76 = arith.constant 1 : index
    %c0_77 = arith.constant 0 : index
    %87 = vector.load %arg15[%c0_75, %c1_76, %c0_77] : memref<18x18x8xbf16, #tpu.memory_space<vmem>>, vector<16x16x8xbf16>
    %88 = vector.shape_cast %87 : vector<16x16x8xbf16> to vector<256x8xbf16>
    %c0_78 = arith.constant 0 : index
    %c2 = arith.constant 2 : index
    %c0_79 = arith.constant 0 : index
    %89 = vector.load %arg15[%c0_78, %c2, %c0_79] : memref<18x18x8xbf16, #tpu.memory_space<vmem>>, vector<16x16x8xbf16>
    %90 = vector.shape_cast %89 : vector<16x16x8xbf16> to vector<256x8xbf16>
    %91 = tpu.concatenate %86, %88, %90 in 1 : vector<256x8xbf16>, vector<256x8xbf16>, vector<256x8xbf16> -> vector<256x24xbf16>
    %c0_80 = arith.constant 0 : index
    %c0_81 = arith.constant 0 : index
    %c0_82 = arith.constant 0 : index
    %92 = vector.load %arg6[%c0_80, %c0_81, %c0_82] : memref<3x24x4xbf16, #tpu.memory_space<vmem>>, vector<1x24x4xbf16>
    %93 = vector.shape_cast %92 : vector<1x24x4xbf16> to vector<24x4xbf16>
    %cst_83 = arith.constant dense<0.000000e+00> : vector<256x4xf32>
    %94 = tpu.matmul %91, %93, %cst_83 {dimension_numbers = #tpu.dot_dimension_numbers<[1], [0], [0], [1], [0, 0, 1, 1], [], []>} : vector<256x24xbf16>, vector<24x4xbf16>, vector<256x4xf32> -> vector<256x4xf32>
    %95 = arith.addf %84, %94 : vector<256x4xf32>
    %c1_84 = arith.constant 1 : index
    %c0_85 = arith.constant 0 : index
    %c0_86 = arith.constant 0 : index
    %96 = vector.load %arg15[%c1_84, %c0_85, %c0_86] : memref<18x18x8xbf16, #tpu.memory_space<vmem>>, vector<16x16x8xbf16>
    %97 = vector.shape_cast %96 : vector<16x16x8xbf16> to vector<256x8xbf16>
    %c1_87 = arith.constant 1 : index
    %c1_88 = arith.constant 1 : index
    %c0_89 = arith.constant 0 : index
    %98 = vector.load %arg15[%c1_87, %c1_88, %c0_89] : memref<18x18x8xbf16, #tpu.memory_space<vmem>>, vector<16x16x8xbf16>
    %99 = vector.shape_cast %98 : vector<16x16x8xbf16> to vector<256x8xbf16>
    %c1_90 = arith.constant 1 : index
    %c2_91 = arith.constant 2 : index
    %c0_92 = arith.constant 0 : index
    %100 = vector.load %arg15[%c1_90, %c2_91, %c0_92] : memref<18x18x8xbf16, #tpu.memory_space<vmem>>, vector<16x16x8xbf16>
    %101 = vector.shape_cast %100 : vector<16x16x8xbf16> to vector<256x8xbf16>
    %102 = tpu.concatenate %97, %99, %101 in 1 : vector<256x8xbf16>, vector<256x8xbf16>, vector<256x8xbf16> -> vector<256x24xbf16>
    %c1_93 = arith.constant 1 : index
    %c0_94 = arith.constant 0 : index
    %c0_95 = arith.constant 0 : index
    %103 = vector.load %arg6[%c1_93, %c0_94, %c0_95] : memref<3x24x4xbf16, #tpu.memory_space<vmem>>, vector<1x24x4xbf16>
    %104 = vector.shape_cast %103 : vector<1x24x4xbf16> to vector<24x4xbf16>
    %cst_96 = arith.constant dense<0.000000e+00> : vector<256x4xf32>
    %105 = tpu.matmul %102, %104, %cst_96 {dimension_numbers = #tpu.dot_dimension_numbers<[1], [0], [0], [1], [0, 0, 1, 1], [], []>} : vector<256x24xbf16>, vector<24x4xbf16>, vector<256x4xf32> -> vector<256x4xf32>
    %106 = arith.addf %95, %105 : vector<256x4xf32>
    %c2_97 = arith.constant 2 : index
    %c0_98 = arith.constant 0 : index
    %c0_99 = arith.constant 0 : index
    %107 = vector.load %arg15[%c2_97, %c0_98, %c0_99] : memref<18x18x8xbf16, #tpu.memory_space<vmem>>, vector<16x16x8xbf16>
    %108 = vector.shape_cast %107 : vector<16x16x8xbf16> to vector<256x8xbf16>
    %c2_100 = arith.constant 2 : index
    %c1_101 = arith.constant 1 : index
    %c0_102 = arith.constant 0 : index
    %109 = vector.load %arg15[%c2_100, %c1_101, %c0_102] : memref<18x18x8xbf16, #tpu.memory_space<vmem>>, vector<16x16x8xbf16>
    %110 = vector.shape_cast %109 : vector<16x16x8xbf16> to vector<256x8xbf16>
    %c2_103 = arith.constant 2 : index
    %c2_104 = arith.constant 2 : index
    %c0_105 = arith.constant 0 : index
    %111 = vector.load %arg15[%c2_103, %c2_104, %c0_105] : memref<18x18x8xbf16, #tpu.memory_space<vmem>>, vector<16x16x8xbf16>
    %112 = vector.shape_cast %111 : vector<16x16x8xbf16> to vector<256x8xbf16>
    %113 = tpu.concatenate %108, %110, %112 in 1 : vector<256x8xbf16>, vector<256x8xbf16>, vector<256x8xbf16> -> vector<256x24xbf16>
    %c2_106 = arith.constant 2 : index
    %c0_107 = arith.constant 0 : index
    %c0_108 = arith.constant 0 : index
    %114 = vector.load %arg6[%c2_106, %c0_107, %c0_108] : memref<3x24x4xbf16, #tpu.memory_space<vmem>>, vector<1x24x4xbf16>
    %115 = vector.shape_cast %114 : vector<1x24x4xbf16> to vector<24x4xbf16>
    %cst_109 = arith.constant dense<0.000000e+00> : vector<256x4xf32>
    %116 = tpu.matmul %113, %115, %cst_109 {dimension_numbers = #tpu.dot_dimension_numbers<[1], [0], [0], [1], [0, 0, 1, 1], [], []>} : vector<256x24xbf16>, vector<24x4xbf16>, vector<256x4xf32> -> vector<256x4xf32>
    %117 = arith.addf %106, %116 : vector<256x4xf32>
    %c0_110 = arith.constant 0 : index
    %c0_111 = arith.constant 0 : index
    %118 = vector.load %arg7[%c0_110, %c0_111] : memref<1x4xf32, #tpu.memory_space<vmem>>, vector<1x4xf32>
    %119 = vector.shape_cast %118 : vector<1x4xf32> to vector<4xf32>
    %120 = vector.shape_cast %119 : vector<4xf32> to vector<1x4xf32>
    %121 = vector.broadcast %120 : vector<1x4xf32> to vector<256x4xf32>
    %122 = arith.mulf %117, %121 : vector<256x4xf32>
    %c0_112 = arith.constant 0 : index
    %c0_113 = arith.constant 0 : index
    %123 = vector.load %arg8[%c0_112, %c0_113] : memref<1x4xf32, #tpu.memory_space<vmem>>, vector<1x4xf32>
    %124 = vector.shape_cast %123 : vector<1x4xf32> to vector<4xf32>
    %125 = vector.shape_cast %124 : vector<4xf32> to vector<1x4xf32>
    %126 = vector.broadcast %125 : vector<1x4xf32> to vector<256x4xf32>
    %127 = arith.addf %122, %126 : vector<256x4xf32>
    %cst_114 = arith.constant 0.000000e+00 : f32
    %128 = vector.broadcast %cst_114 : f32 to vector<256x4xf32>
    %129 = arith.maximumf %127, %128 : vector<256x4xf32>
    %130 = vector.shape_cast %129 : vector<256x4xf32> to vector<16x16x4xf32>
    %131 = arith.truncf %130 : vector<16x16x4xf32> to vector<16x16x4xbf16>
    %c1_115 = arith.constant 1 : index
    %c1_116 = arith.constant 1 : index
    %c0_117 = arith.constant 0 : index
    %132 = vector.load %arg16[%c1_115, %c1_116, %c0_117] : memref<18x18x4xbf16, #tpu.memory_space<vmem>>, vector<16x16x4xbf16>
    tpu.vector_store %arg16[%c1_115, %c1_116, %c0_117], %131 {strides = array<i32>} : memref<18x18x4xbf16, #tpu.memory_space<vmem>>, vector<16x16x4xbf16>,
    %c1_118 = arith.constant 1 : index
    %c1_119 = arith.constant 1 : index
    %c0_120 = arith.constant 0 : index
    %133 = vector.load %arg15[%c1_118, %c1_119, %c0_120] : memref<18x18x8xbf16, #tpu.memory_space<vmem>>, vector<16x16x8xbf16>
    %134 = vector.shape_cast %133 : vector<16x16x8xbf16> to vector<256x8xbf16>
    %c0_121 = arith.constant 0 : index
    %c0_122 = arith.constant 0 : index
    %135 = vector.load %arg9[%c0_121, %c0_122] : memref<4x8xbf16, #tpu.memory_space<vmem>>, vector<4x8xbf16>
    %cst_123 = arith.constant dense<0.000000e+00> : vector<4x256xf32>
    %136 = tpu.matmul %135, %134, %cst_123 {dimension_numbers = #tpu.dot_dimension_numbers<[1], [1], [0], [0], [0, 0, 1, 0], [], []>} : vector<4x8xbf16>, vector<256x8xbf16>, vector<4x256xf32> -> vector<4x256xf32>
    %c0_124 = arith.constant 0 : index
    %c0_125 = arith.constant 0 : index
    %137 = vector.load %arg10[%c0_124, %c0_125] : memref<4x1xf32, #tpu.memory_space<vmem>>, vector<4x1xf32>
    %138 = vector.broadcast %137 : vector<4x1xf32> to vector<4x256xf32>
    %139 = arith.addf %136, %138 : vector<4x256xf32>
    %cst_126 = arith.constant 0.000000e+00 : f32
    %140 = vector.broadcast %cst_126 : f32 to vector<4x256xf32>
    %c0_127 = arith.constant 0 : index
    %c0_128 = arith.constant 0 : index
    %c0_129 = arith.constant 0 : index
    %141 = vector.load %arg16[%c0_127, %c0_128, %c0_129] : memref<18x18x4xbf16, #tpu.memory_space<vmem>>, vector<16x16x4xbf16>
    %142 = vector.shape_cast %141 : vector<16x16x4xbf16> to vector<256x4xbf16>
    %c0_130 = arith.constant 0 : index
    %c1_131 = arith.constant 1 : index
    %c0_132 = arith.constant 0 : index
    %143 = vector.load %arg16[%c0_130, %c1_131, %c0_132] : memref<18x18x4xbf16, #tpu.memory_space<vmem>>, vector<16x16x4xbf16>
    %144 = vector.shape_cast %143 : vector<16x16x4xbf16> to vector<256x4xbf16>
    %c0_133 = arith.constant 0 : index
    %c2_134 = arith.constant 2 : index
    %c0_135 = arith.constant 0 : index
    %145 = vector.load %arg16[%c0_133, %c2_134, %c0_135] : memref<18x18x4xbf16, #tpu.memory_space<vmem>>, vector<16x16x4xbf16>
    %146 = vector.shape_cast %145 : vector<16x16x4xbf16> to vector<256x4xbf16>
    %147 = tpu.concatenate %142, %144, %146 in 1 : vector<256x4xbf16>, vector<256x4xbf16>, vector<256x4xbf16> -> vector<256x12xbf16>
    %c0_136 = arith.constant 0 : index
    %c0_137 = arith.constant 0 : index
    %c0_138 = arith.constant 0 : index
    %148 = vector.load %arg11[%c0_136, %c0_137, %c0_138] : memref<3x4x12xbf16, #tpu.memory_space<vmem>>, vector<1x4x12xbf16>
    %149 = vector.shape_cast %148 : vector<1x4x12xbf16> to vector<4x12xbf16>
    %cst_139 = arith.constant dense<0.000000e+00> : vector<4x256xf32>
    %150 = tpu.matmul %149, %147, %cst_139 {dimension_numbers = #tpu.dot_dimension_numbers<[1], [1], [0], [0], [0, 0, 1, 0], [], []>} : vector<4x12xbf16>, vector<256x12xbf16>, vector<4x256xf32> -> vector<4x256xf32>
    %151 = arith.addf %140, %150 : vector<4x256xf32>
    %c1_140 = arith.constant 1 : index
    %c0_141 = arith.constant 0 : index
    %c0_142 = arith.constant 0 : index
    %152 = vector.load %arg16[%c1_140, %c0_141, %c0_142] : memref<18x18x4xbf16, #tpu.memory_space<vmem>>, vector<16x16x4xbf16>
    %153 = vector.shape_cast %152 : vector<16x16x4xbf16> to vector<256x4xbf16>
    %c1_143 = arith.constant 1 : index
    %c1_144 = arith.constant 1 : index
    %c0_145 = arith.constant 0 : index
    %154 = vector.load %arg16[%c1_143, %c1_144, %c0_145] : memref<18x18x4xbf16, #tpu.memory_space<vmem>>, vector<16x16x4xbf16>
    %155 = vector.shape_cast %154 : vector<16x16x4xbf16> to vector<256x4xbf16>
    %c1_146 = arith.constant 1 : index
    %c2_147 = arith.constant 2 : index
    %c0_148 = arith.constant 0 : index
    %156 = vector.load %arg16[%c1_146, %c2_147, %c0_148] : memref<18x18x4xbf16, #tpu.memory_space<vmem>>, vector<16x16x4xbf16>
    %157 = vector.shape_cast %156 : vector<16x16x4xbf16> to vector<256x4xbf16>
    %158 = tpu.concatenate %153, %155, %157 in 1 : vector<256x4xbf16>, vector<256x4xbf16>, vector<256x4xbf16> -> vector<256x12xbf16>
    %c1_149 = arith.constant 1 : index
    %c0_150 = arith.constant 0 : index
    %c0_151 = arith.constant 0 : index
    %159 = vector.load %arg11[%c1_149, %c0_150, %c0_151] : memref<3x4x12xbf16, #tpu.memory_space<vmem>>, vector<1x4x12xbf16>
    %160 = vector.shape_cast %159 : vector<1x4x12xbf16> to vector<4x12xbf16>
    %cst_152 = arith.constant dense<0.000000e+00> : vector<4x256xf32>
    %161 = tpu.matmul %160, %158, %cst_152 {dimension_numbers = #tpu.dot_dimension_numbers<[1], [1], [0], [0], [0, 0, 1, 0], [], []>} : vector<4x12xbf16>, vector<256x12xbf16>, vector<4x256xf32> -> vector<4x256xf32>
    %162 = arith.addf %151, %161 : vector<4x256xf32>
    %c2_153 = arith.constant 2 : index
    %c0_154 = arith.constant 0 : index
    %c0_155 = arith.constant 0 : index
    %163 = vector.load %arg16[%c2_153, %c0_154, %c0_155] : memref<18x18x4xbf16, #tpu.memory_space<vmem>>, vector<16x16x4xbf16>
    %164 = vector.shape_cast %163 : vector<16x16x4xbf16> to vector<256x4xbf16>
    %c2_156 = arith.constant 2 : index
    %c1_157 = arith.constant 1 : index
    %c0_158 = arith.constant 0 : index
    %165 = vector.load %arg16[%c2_156, %c1_157, %c0_158] : memref<18x18x4xbf16, #tpu.memory_space<vmem>>, vector<16x16x4xbf16>
    %166 = vector.shape_cast %165 : vector<16x16x4xbf16> to vector<256x4xbf16>
    %c2_159 = arith.constant 2 : index
    %c2_160 = arith.constant 2 : index
    %c0_161 = arith.constant 0 : index
    %167 = vector.load %arg16[%c2_159, %c2_160, %c0_161] : memref<18x18x4xbf16, #tpu.memory_space<vmem>>, vector<16x16x4xbf16>
    %168 = vector.shape_cast %167 : vector<16x16x4xbf16> to vector<256x4xbf16>
    %169 = tpu.concatenate %164, %166, %168 in 1 : vector<256x4xbf16>, vector<256x4xbf16>, vector<256x4xbf16> -> vector<256x12xbf16>
    %c2_162 = arith.constant 2 : index
    %c0_163 = arith.constant 0 : index
    %c0_164 = arith.constant 0 : index
    %170 = vector.load %arg11[%c2_162, %c0_163, %c0_164] : memref<3x4x12xbf16, #tpu.memory_space<vmem>>, vector<1x4x12xbf16>
    %171 = vector.shape_cast %170 : vector<1x4x12xbf16> to vector<4x12xbf16>
    %cst_165 = arith.constant dense<0.000000e+00> : vector<4x256xf32>
    %172 = tpu.matmul %171, %169, %cst_165 {dimension_numbers = #tpu.dot_dimension_numbers<[1], [1], [0], [0], [0, 0, 1, 0], [], []>} : vector<4x12xbf16>, vector<256x12xbf16>, vector<4x256xf32> -> vector<4x256xf32>
    %173 = arith.addf %162, %172 : vector<4x256xf32>
    %c0_166 = arith.constant 0 : index
    %c0_167 = arith.constant 0 : index
    %174 = vector.load %arg12[%c0_166, %c0_167] : memref<4x1xf32, #tpu.memory_space<vmem>>, vector<4x1xf32>
    %175 = vector.broadcast %174 : vector<4x1xf32> to vector<4x256xf32>
    %176 = arith.mulf %173, %175 : vector<4x256xf32>
    %c0_168 = arith.constant 0 : index
    %c0_169 = arith.constant 0 : index
    %177 = vector.load %arg13[%c0_168, %c0_169] : memref<4x1xf32, #tpu.memory_space<vmem>>, vector<4x1xf32>
    %178 = vector.broadcast %177 : vector<4x1xf32> to vector<4x256xf32>
    %179 = arith.addf %176, %178 : vector<4x256xf32>
    %cst_170 = arith.constant 0.000000e+00 : f32
    %180 = vector.broadcast %cst_170 : f32 to vector<4x256xf32>
    %181 = arith.maximumf %179, %180 : vector<4x256xf32>
    %182 = arith.addf %181, %139 : vector<4x256xf32>
    %183 = arith.truncf %182 : vector<4x256xf32> to vector<4x256xbf16>
    %c0_171 = arith.constant 0 : index
    %c0_172 = arith.constant 0 : index
    %c0_173 = arith.constant 0 : index
    %184 = vector.load %arg14[%c0_171, %c0_172, %c0_173] : memref<1x4x256xbf16, #tpu.memory_space<vmem>>, vector<1x4x256xbf16>
    %185 = vector.shape_cast %184 : vector<1x4x256xbf16> to vector<4x256xbf16>
    %186 = vector.shape_cast %183 : vector<4x256xbf16> to vector<1x4x256xbf16>
    tpu.vector_store %arg14[%c0_171, %c0_172, %c0_173], %186 {strides = array<i32>} : memref<1x4x256xbf16, #tpu.memory_space<vmem>>, vector<1x4x256xbf16>,
    return
  }
  func.func @transform_0(%arg0: i32) -> (i32, i32, i32, i32) {
    %c0_i32 = arith.constant 0 : i32
    %c0_i32_0 = arith.constant 0 : i32
    %c0_i32_1 = arith.constant 0 : i32
    %c0_i32_2 = arith.constant 0 : i32
    return %arg0, %c0_i32, %c0_i32_0, %c0_i32_1 : i32, i32, i32, i32
  }
  func.func @transform_1(%arg0: i32) -> (i32, i32, i32, i32) {
    %c0_i32 = arith.constant 0 : i32
    %c0_i32_0 = arith.constant 0 : i32
    %c0_i32_1 = arith.constant 0 : i32
    %c0_i32_2 = arith.constant 0 : i32
    return %arg0, %c0_i32, %c0_i32_0, %c0_i32_1 : i32, i32, i32, i32
  }
  func.func @transform_2(%arg0: i32) -> (i32, i32, i32) {
    %c0_i32 = arith.constant 0 : i32
    %c0_i32_0 = arith.constant 0 : i32
    %c0_i32_1 = arith.constant 0 : i32
    %c0_i32_2 = arith.constant 0 : i32
    return %c0_i32, %c0_i32_0, %c0_i32_1 : i32, i32, i32
  }
  func.func @transform_3(%arg0: i32) -> (i32, i32) {
    %c0_i32 = arith.constant 0 : i32
    %c0_i32_0 = arith.constant 0 : i32
    %c0_i32_1 = arith.constant 0 : i32
    return %c0_i32, %c0_i32_0 : i32, i32
  }
  func.func @transform_4(%arg0: i32) -> (i32, i32) {
    %c0_i32 = arith.constant 0 : i32
    %c0_i32_0 = arith.constant 0 : i32
    %c0_i32_1 = arith.constant 0 : i32
    return %c0_i32, %c0_i32_0 : i32, i32
  }
  func.func @transform_5(%arg0: i32) -> (i32, i32, i32) {
    %c0_i32 = arith.constant 0 : i32
    %c0_i32_0 = arith.constant 0 : i32
    %c0_i32_1 = arith.constant 0 : i32
    %c0_i32_2 = arith.constant 0 : i32
    return %c0_i32, %c0_i32_0, %c0_i32_1 : i32, i32, i32
  }
  func.func @transform_6(%arg0: i32) -> (i32, i32) {
    %c0_i32 = arith.constant 0 : i32
    %c0_i32_0 = arith.constant 0 : i32
    %c0_i32_1 = arith.constant 0 : i32
    return %c0_i32, %c0_i32_0 : i32, i32
  }
  func.func @transform_7(%arg0: i32) -> (i32, i32) {
    %c0_i32 = arith.constant 0 : i32
    %c0_i32_0 = arith.constant 0 : i32
    %c0_i32_1 = arith.constant 0 : i32
    return %c0_i32, %c0_i32_0 : i32, i32
  }
  func.func @transform_8(%arg0: i32) -> (i32, i32) {
    %c0_i32 = arith.constant 0 : i32
    %c0_i32_0 = arith.constant 0 : i32
    %c0_i32_1 = arith.constant 0 : i32
    return %c0_i32, %c0_i32_0 : i32, i32
  }
  func.func @transform_9(%arg0: i32) -> (i32, i32) {
    %c0_i32 = arith.constant 0 : i32
    %c0_i32_0 = arith.constant 0 : i32
    %c0_i32_1 = arith.constant 0 : i32
    return %c0_i32, %c0_i32_0 : i32, i32
  }
  func.func @transform_10(%arg0: i32) -> (i32, i32, i32) {
    %c0_i32 = arith.constant 0 : i32
    %c0_i32_0 = arith.constant 0 : i32
    %c0_i32_1 = arith.constant 0 : i32
    %c0_i32_2 = arith.constant 0 : i32
    return %c0_i32, %c0_i32_0, %c0_i32_1 : i32, i32, i32
  }
  func.func @transform_11(%arg0: i32) -> (i32, i32) {
    %c0_i32 = arith.constant 0 : i32
    %c0_i32_0 = arith.constant 0 : i32
    %c0_i32_1 = arith.constant 0 : i32
    return %c0_i32, %c0_i32_0 : i32, i32
  }
  func.func @transform_12(%arg0: i32) -> (i32, i32) {
    %c0_i32 = arith.constant 0 : i32
    %c0_i32_0 = arith.constant 0 : i32
    %c0_i32_1 = arith.constant 0 : i32
    return %c0_i32, %c0_i32_0 : i32, i32
  }
  func.func @transform_13(%arg0: i32) -> (i32, i32, i32) {
    %c0_i32 = arith.constant 0 : i32
    %c0_i32_0 = arith.constant 0 : i32
    %c0_i32_1 = arith.constant 0 : i32
    return %arg0, %c0_i32, %c0_i32_0 : i32, i32, i32
  }
}

</mosaic_0001>

<llo_original>
// kernel: res_decoder_block_forward.1
$region0: #{res_decoder_block_forward.1}
  #allocation0 [shape = 'u32[]', space=smem, size = 0x4, offset = 0x4, fixed_abs, tag = 'smem constant byte address 0x4 - core index']
  #allocation1 [shape = 'u32[144,128]{1,0:T(1,128)}', space=vmem, size = 0x12000, scoped, tag = 'internal scratch']
  #allocation2 [shape = 'bf16[18,18,8]{2,1,0:T(8,128)(2,1)}', space=vmem, size = 0x1b000, scoped, tag = 'scratch operand']
  #allocation3 [shape = 'bf16[18,18,4]{2,1,0:T(8,128)(2,1)}', space=vmem, size = 0x1b000, scoped, tag = 'scratch operand']
  %s0 = inlined_call_operand.vmem [shape: bf16[2,9,9,8], index: 0, kind: input, shape index: {}]
  %s1 = inlined_call_operand.vmem [shape: bf16[2,16,16,4], index: 1, kind: input, shape index: {}]
  %s2 = inlined_call_operand.vmem [shape: bf16[2,32,8], index: 2, kind: input, shape index: {}]
  %s3 = inlined_call_operand.vmem [shape: f32[1,8], index: 3, kind: input, shape index: {}]
  %s4 = inlined_call_operand.vmem [shape: f32[1,8], index: 4, kind: input, shape index: {}]
  %s5 = inlined_call_operand.vmem [shape: bf16[3,24,4], index: 5, kind: input, shape index: {}]
  %s6 = inlined_call_operand.vmem [shape: f32[1,4], index: 6, kind: input, shape index: {}]
  %s7 = inlined_call_operand.vmem [shape: f32[1,4], index: 7, kind: input, shape index: {}]
  %s8 = inlined_call_operand.vmem [shape: bf16[4,8], index: 8, kind: input, shape index: {}]
  %s9 = inlined_call_operand.vmem [shape: f32[4,1], index: 9, kind: input, shape index: {}]
  %s10 = inlined_call_operand.vmem [shape: bf16[3,4,12], index: 10, kind: input, shape index: {}]
  %s11 = inlined_call_operand.vmem [shape: f32[4,1], index: 11, kind: input, shape index: {}]
  %s12 = inlined_call_operand.vmem [shape: f32[4,1], index: 12, kind: input, shape index: {}]
  %s13 = inlined_call_operand.vmem [shape: bf16[2,4,256], index: 13, kind: output, shape index: {}]
  %s14 = sld [smem:[#allocation0]]
  $region85: #{res_decoder_block_forward.1} parent=0
    _
  %s16 = ssub.s32 1, %s14
  %s17 = scalar_select 0, %s16, %s14
  loop: start=0, step=1, limit=4
  $region2: #{res_decoder_block_forward.1} parent=0 // loop_pre_header
    _
  $region3: #{res_decoder_block_forward.1} parent=0 // loop_header
    %s19 = sphi 0, %s23
    %p20 = scmp.ge.s32.totalorder %s19, 4
    %s29 = sphi 0, %s31
    %s32 = sphi 0, %s29
    %s33 = sphi 0, %s32
    %s49 = sphi 0, %s33
    %s55 = sphi 0, %s57
    %s58 = sphi 0, %s55
    %s59 = sphi 0, %s58
    %s75 = sphi 0, %s59
    %s79 = sphi 0, %s79
    %s81 = sphi 0, %s79
    %s82 = sphi 0, %s81
    %s96 = sphi 0, %s82
    %s100 = sphi 0, %s100
    %s102 = sphi 0, %s100
    %s103 = sphi 0, %s102
    %s117 = sphi 0, %s103
    %s121 = sphi 0, %s121
    %s123 = sphi 0, %s121
    %s124 = sphi 0, %s123
    %s138 = sphi 0, %s124
    %s142 = sphi 0, %s142
    %s144 = sphi 0, %s142
    %s145 = sphi 0, %s144
    %s159 = sphi 0, %s145
    %s163 = sphi 0, %s163
    %s165 = sphi 0, %s163
    %s166 = sphi 0, %s165
    %s180 = sphi 0, %s166
    %s184 = sphi 0, %s184
    %s186 = sphi 0, %s184
    %s187 = sphi 0, %s186
    %s201 = sphi 0, %s187
    %s205 = sphi 0, %s205
    %s207 = sphi 0, %s205
    %s208 = sphi 0, %s207
    %s222 = sphi 0, %s208
    %s226 = sphi 0, %s226
    %s228 = sphi 0, %s226
    %s229 = sphi 0, %s228
    %s243 = sphi 0, %s229
    %s247 = sphi 0, %s247
    %s249 = sphi 0, %s247
    %s250 = sphi 0, %s249
    %s264 = sphi 0, %s250
    %s268 = sphi 0, %s268
    %s270 = sphi 0, %s268
    %s271 = sphi 0, %s270
    %s285 = sphi 0, %s271
    %s289 = sphi 0, %s289
    %s291 = sphi 0, %s289
    %s292 = sphi 0, %s291
    %s306 = sphi 0, %s292
    %s312 = sphi 0, %s314
    %s315 = sphi 0, %s312
    %s316 = sphi 0, %s315
    %s332 = sphi 0, %s316
  $region4: #{res_decoder_block_forward.1} parent=0 // loop_header_branch
    %22 = sbr.rel (%p20) target = $region8
  $region5: #{res_decoder_block_forward.1} parent=0 // loop_body
    %s24 = ssub.s32 %s19, 1
    %s25 = ssub.s32 %s19, 2
    %s26 = sadd.s32 %s19, 1
    %s27 = ssub.s32 %s19, %s26
    %p28 = scmp.eq.s32.totalorder %s27, 0
    %s30 = sadd.s32 %s29, 1
    %s31 = scalar_select %p28, %s29, %s30
    %p34 = pneg %p28
    %p35 = scmp.eq.s32.totalorder %s19, 1
    %p36 = por %p34, %p35
    %p37 = scmp.ne.s32.totalorder %s29, %s32
    %p38 = scmp.eq.s32.totalorder %s19, 0
    %p39 = por %p37, %p38
    %p40 = scmp.ne.s32.totalorder %s29, %s32
    %p41 = scmp.eq.s32.totalorder %s24, 1
    %p42 = por %p40, %p41
    %p43 = scmp.ne.s32.totalorder %s32, %s33
    %p44 = scmp.eq.s32.totalorder %s24, 0
    %p45 = por %p43, %p44
    %p46 = scmp.ne.s32.totalorder %s32, %s33
    %p47 = scmp.eq.s32.totalorder %s25, 1
    %p48 = por %p46, %p47
    %p50 = scmp.ne.s32.totalorder %s33, %s49
    %p51 = scmp.eq.s32.totalorder %s25, 0
    %p52 = por %p50, %p51
    %s53 = ssub.s32 %s19, %s26
    %p54 = scmp.eq.s32.totalorder %s53, 0
    %s56 = sadd.s32 %s55, 1
    %s57 = scalar_select %p54, %s55, %s56
    %p60 = pneg %p54
    %p61 = scmp.eq.s32.totalorder %s19, 1
    %p62 = por %p60, %p61
    %p63 = scmp.ne.s32.totalorder %s55, %s58
    %p64 = scmp.eq.s32.totalorder %s19, 0
    %p65 = por %p63, %p64
    %p66 = scmp.ne.s32.totalorder %s55, %s58
    %p67 = scmp.eq.s32.totalorder %s24, 1
    %p68 = por %p66, %p67
    %p69 = scmp.ne.s32.totalorder %s58, %s59
    %p70 = scmp.eq.s32.totalorder %s24, 0
    %p71 = por %p69, %p70
    %p72 = scmp.ne.s32.totalorder %s58, %s59
    %p73 = scmp.eq.s32.totalorder %s25, 1
    %p74 = por %p72, %p73
    %p76 = scmp.ne.s32.totalorder %s59, %s75
    %p77 = scmp.eq.s32.totalorder %s25, 0
    %p78 = por %p76, %p77
    %s80 = sadd.s32 %s79, 1
    %p83 = scmp.eq.s32.totalorder %s19, 1
    %p84 = scmp.ne.s32.totalorder %s79, %s81
    %p85 = scmp.eq.s32.totalorder %s19, 0
    %p86 = por %p84, %p85
    %p87 = scmp.ne.s32.totalorder %s79, %s81
    %p88 = scmp.eq.s32.totalorder %s24, 1
    %p89 = por %p87, %p88
    %p90 = scmp.ne.s32.totalorder %s81, %s82
    %p91 = scmp.eq.s32.totalorder %s24, 0
    %p92 = por %p90, %p91
    %p93 = scmp.ne.s32.totalorder %s81, %s82
    %p94 = scmp.eq.s32.totalorder %s25, 1
    %p95 = por %p93, %p94
    %p97 = scmp.ne.s32.totalorder %s82, %s96
    %p98 = scmp.eq.s32.totalorder %s25, 0
    %p99 = por %p97, %p98
    %s101 = sadd.s32 %s100, 1
    %p104 = scmp.eq.s32.totalorder %s19, 1
    %p105 = scmp.ne.s32.totalorder %s100, %s102
    %p106 = scmp.eq.s32.totalorder %s19, 0
    %p107 = por %p105, %p106
    %p108 = scmp.ne.s32.totalorder %s100, %s102
    %p109 = scmp.eq.s32.totalorder %s24, 1
    %p110 = por %p108, %p109
    %p111 = scmp.ne.s32.totalorder %s102, %s103
    %p112 = scmp.eq.s32.totalorder %s24, 0
    %p113 = por %p111, %p112
    %p114 = scmp.ne.s32.totalorder %s102, %s103
    %p115 = scmp.eq.s32.totalorder %s25, 1
    %p116 = por %p114, %p115
    %p118 = scmp.ne.s32.totalorder %s103, %s117
    %p119 = scmp.eq.s32.totalorder %s25, 0
    %p120 = por %p118, %p119
    %s122 = sadd.s32 %s121, 1
    %p125 = scmp.eq.s32.totalorder %s19, 1
    %p126 = scmp.ne.s32.totalorder %s121, %s123
    %p127 = scmp.eq.s32.totalorder %s19, 0
    %p128 = por %p126, %p127
    %p129 = scmp.ne.s32.totalorder %s121, %s123
    %p130 = scmp.eq.s32.totalorder %s24, 1
    %p131 = por %p129, %p130
    %p132 = scmp.ne.s32.totalorder %s123, %s124
    %p133 = scmp.eq.s32.totalorder %s24, 0
    %p134 = por %p132, %p133
    %p135 = scmp.ne.s32.totalorder %s123, %s124
    %p136 = scmp.eq.s32.totalorder %s25, 1
    %p137 = por %p135, %p136
    %p139 = scmp.ne.s32.totalorder %s124, %s138
    %p140 = scmp.eq.s32.totalorder %s25, 0
    %p141 = por %p139, %p140
    %s143 = sadd.s32 %s142, 1
    %p146 = scmp.eq.s32.totalorder %s19, 1
    %p147 = scmp.ne.s32.totalorder %s142, %s144
    %p148 = scmp.eq.s32.totalorder %s19, 0
    %p149 = por %p147, %p148
    %p150 = scmp.ne.s32.totalorder %s142, %s144
    %p151 = scmp.eq.s32.totalorder %s24, 1
    %p152 = por %p150, %p151
    %p153 = scmp.ne.s32.totalorder %s144, %s145
    %p154 = scmp.eq.s32.totalorder %s24, 0
    %p155 = por %p153, %p154
    %p156 = scmp.ne.s32.totalorder %s144, %s145
    %p157 = scmp.eq.s32.totalorder %s25, 1
    %p158 = por %p156, %p157
    %p160 = scmp.ne.s32.totalorder %s145, %s159
    %p161 = scmp.eq.s32.totalorder %s25, 0
    %p162 = por %p160, %p161
    %s164 = sadd.s32 %s163, 1
    %p167 = scmp.eq.s32.totalorder %s19, 1
    %p168 = scmp.ne.s32.totalorder %s163, %s165
    %p169 = scmp.eq.s32.totalorder %s19, 0
    %p170 = por %p168, %p169
    %p171 = scmp.ne.s32.totalorder %s163, %s165
    %p172 = scmp.eq.s32.totalorder %s24, 1
    %p173 = por %p171, %p172
    %p174 = scmp.ne.s32.totalorder %s165, %s166
    %p175 = scmp.eq.s32.totalorder %s24, 0
    %p176 = por %p174, %p175
    %p177 = scmp.ne.s32.totalorder %s165, %s166
    %p178 = scmp.eq.s32.totalorder %s25, 1
    %p179 = por %p177, %p178
    %p181 = scmp.ne.s32.totalorder %s166, %s180
    %p182 = scmp.eq.s32.totalorder %s25, 0
    %p183 = por %p181, %p182
    %s185 = sadd.s32 %s184, 1
    %p188 = scmp.eq.s32.totalorder %s19, 1
    %p189 = scmp.ne.s32.totalorder %s184, %s186
    %p190 = scmp.eq.s32.totalorder %s19, 0
    %p191 = por %p189, %p190
    %p192 = scmp.ne.s32.totalorder %s184, %s186
    %p193 = scmp.eq.s32.totalorder %s24, 1
    %p194 = por %p192, %p193
    %p195 = scmp.ne.s32.totalorder %s186, %s187
    %p196 = scmp.eq.s32.totalorder %s24, 0
    %p197 = por %p195, %p196
    %p198 = scmp.ne.s32.totalorder %s186, %s187
    %p199 = scmp.eq.s32.totalorder %s25, 1
    %p200 = por %p198, %p199
    %p202 = scmp.ne.s32.totalorder %s187, %s201
    %p203 = scmp.eq.s32.totalorder %s25, 0
    %p204 = por %p202, %p203
    %s206 = sadd.s32 %s205, 1
    %p209 = scmp.eq.s32.totalorder %s19, 1
    %p210 = scmp.ne.s32.totalorder %s205, %s207
    %p211 = scmp.eq.s32.totalorder %s19, 0
    %p212 = por %p210, %p211
    %p213 = scmp.ne.s32.totalorder %s205, %s207
    %p214 = scmp.eq.s32.totalorder %s24, 1
    %p215 = por %p213, %p214
    %p216 = scmp.ne.s32.totalorder %s207, %s208
    %p217 = scmp.eq.s32.totalorder %s24, 0
    %p218 = por %p216, %p217
    %p219 = scmp.ne.s32.totalorder %s207, %s208
    %p220 = scmp.eq.s32.totalorder %s25, 1
    %p221 = por %p219, %p220
    %p223 = scmp.ne.s32.totalorder %s208, %s222
    %p224 = scmp.eq.s32.totalorder %s25, 0
    %p225 = por %p223, %p224
    %s227 = sadd.s32 %s226, 1
    %p230 = scmp.eq.s32.totalorder %s19, 1
    %p231 = scmp.ne.s32.totalorder %s226, %s228
    %p232 = scmp.eq.s32.totalorder %s19, 0
    %p233 = por %p231, %p232
    %p234 = scmp.ne.s32.totalorder %s226, %s228
    %p235 = scmp.eq.s32.totalorder %s24, 1
    %p236 = por %p234, %p235
    %p237 = scmp.ne.s32.totalorder %s228, %s229
    %p238 = scmp.eq.s32.totalorder %s24, 0
    %p239 = por %p237, %p238
    %p240 = scmp.ne.s32.totalorder %s228, %s229
    %p241 = scmp.eq.s32.totalorder %s25, 1
    %p242 = por %p240, %p241
    %p244 = scmp.ne.s32.totalorder %s229, %s243
    %p245 = scmp.eq.s32.totalorder %s25, 0
    %p246 = por %p244, %p245
    %s248 = sadd.s32 %s247, 1
    %p251 = scmp.eq.s32.totalorder %s19, 1
    %p252 = scmp.ne.s32.totalorder %s247, %s249
    %p253 = scmp.eq.s32.totalorder %s19, 0
    %p254 = por %p252, %p253
    %p255 = scmp.ne.s32.totalorder %s247, %s249
    %p256 = scmp.eq.s32.totalorder %s24, 1
    %p257 = por %p255, %p256
    %p258 = scmp.ne.s32.totalorder %s249, %s250
    %p259 = scmp.eq.s32.totalorder %s24, 0
    %p260 = por %p258, %p259
    %p261 = scmp.ne.s32.totalorder %s249, %s250
    %p262 = scmp.eq.s32.totalorder %s25, 1
    %p263 = por %p261, %p262
    %p265 = scmp.ne.s32.totalorder %s250, %s264
    %p266 = scmp.eq.s32.totalorder %s25, 0
    %p267 = por %p265, %p266
    %s269 = sadd.s32 %s268, 1
    %p272 = scmp.eq.s32.totalorder %s19, 1
    %p273 = scmp.ne.s32.totalorder %s268, %s270
    %p274 = scmp.eq.s32.totalorder %s19, 0
    %p275 = por %p273, %p274
    %p276 = scmp.ne.s32.totalorder %s268, %s270
    %p277 = scmp.eq.s32.totalorder %s24, 1
    %p278 = por %p276, %p277
    %p279 = scmp.ne.s32.totalorder %s270, %s271
    %p280 = scmp.eq.s32.totalorder %s24, 0
    %p281 = por %p279, %p280
    %p282 = scmp.ne.s32.totalorder %s270, %s271
    %p283 = scmp.eq.s32.totalorder %s25, 1
    %p284 = por %p282, %p283
    %p286 = scmp.ne.s32.totalorder %s271, %s285
    %p287 = scmp.eq.s32.totalorder %s25, 0
    %p288 = por %p286, %p287
    %s290 = sadd.s32 %s289, 1
    %p293 = scmp.eq.s32.totalorder %s19, 1
    %p294 = scmp.ne.s32.totalorder %s289, %s291
    %p295 = scmp.eq.s32.totalorder %s19, 0
    %p296 = por %p294, %p295
    %p297 = scmp.ne.s32.totalorder %s289, %s291
    %p298 = scmp.eq.s32.totalorder %s24, 1
    %p299 = por %p297, %p298
    %p300 = scmp.ne.s32.totalorder %s291, %s292
    %p301 = scmp.eq.s32.totalorder %s24, 0
    %p302 = por %p300, %p301
    %p303 = scmp.ne.s32.totalorder %s291, %s292
    %p304 = scmp.eq.s32.totalorder %s25, 1
    %p305 = por %p303, %p304
    %p307 = scmp.ne.s32.totalorder %s292, %s306
    %p308 = scmp.eq.s32.totalorder %s25, 0
    %p309 = por %p307, %p308
    %s310 = ssub.s32 %s19, %s26
    %p311 = scmp.eq.s32.totalorder %s310, 0
    %s313 = sadd.s32 %s312, 1
    %s314 = scalar_select %p311, %s312, %s313
    %p317 = pneg %p311
    %p318 = scmp.eq.s32.totalorder %s19, 1
    %p319 = por %p317, %p318
    %p320 = scmp.ne.s32.totalorder %s312, %s315
    %p321 = scmp.eq.s32.totalorder %s19, 0
    %p322 = por %p320, %p321
    %p323 = scmp.ne.s32.totalorder %s312, %s315
    %p324 = scmp.eq.s32.totalorder %s24, 1
    %p325 = por %p323, %p324
    %p326 = scmp.ne.s32.totalorder %s315, %s316
    %p327 = scmp.eq.s32.totalorder %s24, 0
    %p328 = por %p326, %p327
    %p329 = scmp.ne.s32.totalorder %s315, %s316
    %p330 = scmp.eq.s32.totalorder %s25, 1
    %p331 = por %p329, %p330
    %p333 = scmp.ne.s32.totalorder %s316, %s332
    %p334 = scmp.eq.s32.totalorder %s25, 0
    %p335 = por %p333, %p334
    %p336 = scmp.le.s32.totalorder 1, %s19
    %p337 = scmp.lt.s32.totalorder %s19, 3
    %p338 = pnand %p336, %p337
    %p339 = pneg %p338
    // Predicated region
    $region9: #{res_decoder_block_forward.1} parent=5 // pred_check
      _
    $region10: #{res_decoder_block_forward.1} parent=5 // pred_check_branch
      %341 = sbr.rel (%p338) target = $region12
    $region11: #{res_decoder_block_forward.1} parent=5 // pred_region
      %s342 = ssub.s32 %s19, 1
      // Predicated region
      $region13: #{res_decoder_block_forward.1} parent=11 // pred_check
        %p343 = pneg %p92
      $region14: #{res_decoder_block_forward.1} parent=11 // pred_check_branch
        %345 = sbr.rel (%p343) target = $region16
      $region15: #{res_decoder_block_forward.1} parent=11 // pred_region
        _
      $region16: #{res_decoder_block_forward.1} parent=11 // pred_fallthru
        _
      // Predicated region
      $region17: #{res_decoder_block_forward.1} parent=11 // pred_check
        %p346 = pneg %p113
      $region18: #{res_decoder_block_forward.1} parent=11 // pred_check_branch
        %348 = sbr.rel (%p346) target = $region20
      $region19: #{res_decoder_block_forward.1} parent=11 // pred_region
        _
      $region20: #{res_decoder_block_forward.1} parent=11 // pred_fallthru
        _
      // Predicated region
      $region21: #{res_decoder_block_forward.1} parent=11 // pred_check
        %p349 = pneg %p134
      $region22: #{res_decoder_block_forward.1} parent=11 // pred_check_branch
        %351 = sbr.rel (%p349) target = $region24
      $region23: #{res_decoder_block_forward.1} parent=11 // pred_region
        _
      $region24: #{res_decoder_block_forward.1} parent=11 // pred_fallthru
        _
      // Predicated region
      $region25: #{res_decoder_block_forward.1} parent=11 // pred_check
        %p352 = pneg %p155
      $region26: #{res_decoder_block_forward.1} parent=11 // pred_check_branch
        %354 = sbr.rel (%p352) target = $region28
      $region27: #{res_decoder_block_forward.1} parent=11 // pred_region
        _
      $region28: #{res_decoder_block_forward.1} parent=11 // pred_fallthru
        _
      // Predicated region
      $region29: #{res_decoder_block_forward.1} parent=11 // pred_check
        %p355 = pneg %p176
      $region30: #{res_decoder_block_forward.1} parent=11 // pred_check_branch
        %357 = sbr.rel (%p355) target = $region32
      $region31: #{res_decoder_block_forward.1} parent=11 // pred_region
        _
      $region32: #{res_decoder_block_forward.1} parent=11 // pred_fallthru
        _
      // Predicated region
      $region33: #{res_decoder_block_forward.1} parent=11 // pred_check
        %p358 = pneg %p197
      $region34: #{res_decoder_block_forward.1} parent=11 // pred_check_branch
        %360 = sbr.rel (%p358) target = $region36
      $region35: #{res_decoder_block_forward.1} parent=11 // pred_region
        _
      $region36: #{res_decoder_block_forward.1} parent=11 // pred_fallthru
        _
      // Predicated region
      $region37: #{res_decoder_block_forward.1} parent=11 // pred_check
        %p361 = pneg %p218
      $region38: #{res_decoder_block_forward.1} parent=11 // pred_check_branch
        %363 = sbr.rel (%p361) target = $region40
      $region39: #{res_decoder_block_forward.1} parent=11 // pred_region
        _
      $region40: #{res_decoder_block_forward.1} parent=11 // pred_fallthru
        _
      // Predicated region
      $region41: #{res_decoder_block_forward.1} parent=11 // pred_check
        %p364 = pneg %p239
      $region42: #{res_decoder_block_forward.1} parent=11 // pred_check_branch
        %366 = sbr.rel (%p364) target = $region44
      $region43: #{res_decoder_block_forward.1} parent=11 // pred_region
        _
      $region44: #{res_decoder_block_forward.1} parent=11 // pred_fallthru
        _
      // Predicated region
      $region45: #{res_decoder_block_forward.1} parent=11 // pred_check
        %p367 = pneg %p260
      $region46: #{res_decoder_block_forward.1} parent=11 // pred_check_branch
        %369 = sbr.rel (%p367) target = $region48
      $region47: #{res_decoder_block_forward.1} parent=11 // pred_region
        _
      $region48: #{res_decoder_block_forward.1} parent=11 // pred_fallthru
        _
      // Predicated region
      $region49: #{res_decoder_block_forward.1} parent=11 // pred_check
        %p370 = pneg %p281
      $region50: #{res_decoder_block_forward.1} parent=11 // pred_check_branch
        %372 = sbr.rel (%p370) target = $region52
      $region51: #{res_decoder_block_forward.1} parent=11 // pred_region
        _
      $region52: #{res_decoder_block_forward.1} parent=11 // pred_fallthru
        _
      // Predicated region
      $region53: #{res_decoder_block_forward.1} parent=11 // pred_check
        %p373 = pneg %p302
      $region54: #{res_decoder_block_forward.1} parent=11 // pred_check_branch
        %375 = sbr.rel (%p373) target = $region56
      $region55: #{res_decoder_block_forward.1} parent=11 // pred_region
        _
      $region56: #{res_decoder_block_forward.1} parent=11 // pred_fallthru
        _
    $region12: #{res_decoder_block_forward.1} parent=5 // pred_fallthru
      _
    %p376 = scmp.lt.s32.totalorder %s19, 2
    // Predicated region
    $region57: #{res_decoder_block_forward.1} parent=5 // pred_check
      %p377 = pneg %p376
    $region58: #{res_decoder_block_forward.1} parent=5 // pred_check_branch
      %379 = sbr.rel (%p377) target = $region60
    $region59: #{res_decoder_block_forward.1} parent=5 // pred_region
      // Predicated region
      $region61: #{res_decoder_block_forward.1} parent=59 // pred_check
        %p380 = pneg %p39
      $region62: #{res_decoder_block_forward.1} parent=59 // pred_check_branch
        %382 = sbr.rel (%p380) target = $region64
      $region63: #{res_decoder_block_forward.1} parent=59 // pred_region
        %p383 = scmp.lt.s32.totalorder %s19, 1
        %s384 = scalar_select %p383, %s19, 1
        %s385 = smul.addr %s384, 18
        %s386 = smul.addr %s385, 4
        %s387 = scalar_lea.vmem %s0, %s386
      $region64: #{res_decoder_block_forward.1} parent=59 // pred_fallthru
        _
      // Predicated region
      $region65: #{res_decoder_block_forward.1} parent=59 // pred_check
        %p388 = pneg %p65
      $region66: #{res_decoder_block_forward.1} parent=59 // pred_check_branch
        %390 = sbr.rel (%p388) target = $region68
      $region67: #{res_decoder_block_forward.1} parent=59 // pred_region
        %p391 = scmp.lt.s32.totalorder %s19, 1
        %s392 = scalar_select %p391, %s19, 1
        %s393 = smul.addr %s392, 32
        %s394 = smul.addr %s393, 4
        %s395 = scalar_lea.vmem %s1, %s394
      $region68: #{res_decoder_block_forward.1} parent=59 // pred_fallthru
        _
    $region60: #{res_decoder_block_forward.1} parent=5 // pred_fallthru
      _
    %p396 = scmp.le.s32.totalorder 1, %s19
    %p397 = scmp.lt.s32.totalorder %s19, 3
    %p398 = pnand %p396, %p397
    %p399 = pneg %p398
    // Predicated region
    $region69: #{res_decoder_block_forward.1} parent=5 // pred_check
      _
    $region70: #{res_decoder_block_forward.1} parent=5 // pred_check_branch
      %401 = sbr.rel (%p398) target = $region72
    $region71: #{res_decoder_block_forward.1} parent=5 // pred_region
      %s402 = ssub.s32 %s19, 1
      %p403 = scmp.lt.s32.totalorder %s24, 1
      %s404 = scalar_select %p403, %s24, 1
      %s405 = smul.addr %s404, 18
      %s406 = smul.addr %s405, 4
      %s407 = scalar_lea.vmem %s0, %s406
      %p408 = pneg %p45
      %p409 = pneg %p42
      %p410 = scmp.lt.s32.totalorder %s24, 1
      %s411 = scalar_select %p410, %s24, 1
      %s412 = smul.addr %s411, 32
      %s413 = smul.addr %s412, 4
      %s414 = scalar_lea.vmem %s1, %s413
      %p415 = pneg %p71
      %p416 = pneg %p68
      %p417 = pneg %p92
      %p418 = pneg %p89
      %p419 = pneg %p113
      %p420 = pneg %p110
      %p421 = pneg %p134
      %p422 = pneg %p131
      %p423 = pneg %p155
      %p424 = pneg %p152
      %p425 = pneg %p176
      %p426 = pneg %p173
      %p427 = pneg %p197
      %p428 = pneg %p194
      %p429 = pneg %p218
      %p430 = pneg %p215
      %p431 = pneg %p239
      %p432 = pneg %p236
      %p433 = pneg %p260
      %p434 = pneg %p257
      %p435 = pneg %p281
      %p436 = pneg %p278
      %p437 = pneg %p302
      %p438 = pneg %p299
      %p439 = pneg %p328
      %p440 = pneg %p325
      %p441 = scmp.lt.s32.totalorder %s24, 1
      %s442 = scalar_select %p441, %s24, 1
      %s443 = smul.addr %s442, 2
      %s444 = smul.addr %s443, 2
      %s445 = scalar_lea.vmem %s13, %s444
      %p446 = scmp.lt.s32.totalorder %s24, 1
      %s447 = scalar_select %p446, %s24, 1
      %s448 = smul.addr %s447, 18
      %s449 = smul.addr %s448, 4
      %s450 = scalar_lea.vmem %s0, %s449
      %p451 = scmp.lt.s32.totalorder %s24, 1
      %s452 = scalar_select %p451, %s24, 1
      %s453 = smul.addr %s452, 32
      %s454 = smul.addr %s453, 4
      %s455 = scalar_lea.vmem %s1, %s454
      %p456 = scmp.lt.s32.totalorder %s24, 1
      %s457 = scalar_select %p456, %s24, 1
      %s458 = smul.addr %s457, 2
      %s459 = smul.addr %s458, 2
      %s460 = scalar_lea.vmem %s13, %s459
      %vm462 = vcmask 60416
      %463 = vst.msk [vmem:[#allocation2] sm:$0xf] %vm462, 0
      %464 = vst.msk [vmem:[#allocation2 + $0x4] sm:$0xf] %vm462, 0
      %vm465 = vcmask 57344
      %466 = vst.msk [vmem:[#allocation2 + $0x8] sm:$0x1] %vm465, 0
      %s467 = scalar_lea.vmem [#allocation2], 204
      %468 = vst.msk [vmem:[%s467] sm:$0xf] %vm462, 0
      %469 = vst.msk [vmem:[%s467 + $0x4] sm:$0xf] %vm462, 0
      %470 = vst.msk [vmem:[%s467 + $0x8] sm:$0x1] %vm465, 0
      %vm471 = vcmask 57344
      %vm472 = vsmask.f32 256
      %vm473 = vmand %vm471, %vm472
      %v474 = vld [vmem:[#allocation2] sm:$0x1]
      %v475 = vsel %vm473, 0, %v474
      %476 = vst [vmem:[#allocation2] sm:$0x1] %v475
      %v477 = vld [vmem:[#allocation2 + $0xc] sm:$0x1]
      %v478 = vsel %vm473, 0, %v477
      %479 = vst [vmem:[#allocation2 + $0xc] sm:$0x1] %v478
      %v480 = vld [vmem:[#allocation2 + $0x18] sm:$0x1]
      %v481 = vsel %vm473, 0, %v480
      %482 = vst [vmem:[#allocation2 + $0x18] sm:$0x1] %v481
      %v483 = vld [vmem:[#allocation2 + $0x24] sm:$0x1]
      %v484 = vsel %vm473, 0, %v483
      %485 = vst [vmem:[#allocation2 + $0x24] sm:$0x1] %v484
      %v486 = vld [vmem:[#allocation2 + $0x30] sm:$0x1]
      %v487 = vsel %vm473, 0, %v486
      %488 = vst [vmem:[#allocation2 + $0x30] sm:$0x1] %v487
      %v489 = vld [vmem:[#allocation2 + $0x3c] sm:$0x1]
      %v490 = vsel %vm473, 0, %v489
      %491 = vst [vmem:[#allocation2 + $0x3c] sm:$0x1] %v490
      %v492 = vld [vmem:[#allocation2 + $0x48] sm:$0x1]
      %v493 = vsel %vm473, 0, %v492
      %494 = vst [vmem:[#allocation2 + $0x48] sm:$0x1] %v493
      %v495 = vld [vmem:[#allocation2 + $0x54] sm:$0x1]
      %v496 = vsel %vm473, 0, %v495
      %497 = vst [vmem:[#allocation2 + $0x54] sm:$0x1] %v496
      %v498 = vld [vmem:[#allocation2 + $0x60] sm:$0x1]
      %v499 = vsel %vm473, 0, %v498
      %500 = vst [vmem:[#allocation2 + $0x60] sm:$0x1] %v499
      %v501 = vld [vmem:[#allocation2 + $0x6c] sm:$0x1]
      %v502 = vsel %vm473, 0, %v501
      %503 = vst [vmem:[#allocation2 + $0x6c] sm:$0x1] %v502
      %v504 = vld [vmem:[#allocation2 + $0x78] sm:$0x1]
      %v505 = vsel %vm473, 0, %v504
      %506 = vst [vmem:[#allocation2 + $0x78] sm:$0x1] %v505
      %v507 = vld [vmem:[#allocation2 + $0x84] sm:$0x1]
      %v508 = vsel %vm473, 0, %v507
      %509 = vst [vmem:[#allocation2 + $0x84] sm:$0x1] %v508
      %v510 = vld [vmem:[#allocation2 + $0x90] sm:$0x1]
      %v511 = vsel %vm473, 0, %v510
      %512 = vst [vmem:[#allocation2 + $0x90] sm:$0x1] %v511
      %v513 = vld [vmem:[#allocation2 + $0x9c] sm:$0x1]
      %v514 = vsel %vm473, 0, %v513
      %515 = vst [vmem:[#allocation2 + $0x9c] sm:$0x1] %v514
      %v516 = vld [vmem:[#allocation2 + $0xa8] sm:$0x1]
      %v517 = vsel %vm473, 0, %v516
      %518 = vst [vmem:[#allocation2 + $0xa8] sm:$0x1] %v517
      %v519 = vld [vmem:[#allocation2 + $0xb4] sm:$0x1]
      %v520 = vsel %vm473, 0, %v519
      %521 = vst [vmem:[#allocation2 + $0xb4] sm:$0x1] %v520
      %v522 = vld [vmem:[#allocation2 + $0xc0] sm:$0x1]
      %v523 = vsel %vm473, 0, %v522
      %524 = vst [vmem:[#allocation2 + $0xc0] sm:$0x1] %v523
      %v525 = vld [vmem:[#allocation2 + $0xcc] sm:$0x1]
      %v526 = vsel %vm473, 0, %v525
      %527 = vst [vmem:[#allocation2 + $0xcc] sm:$0x1] %v526
      %vm528 = vsmask.f32 7938
      %vm529 = vmand %vm471, %vm528
      %v530 = vld [vmem:[#allocation2 + $0x8] sm:$0x1]
      %v531 = vsel %vm529, 0, %v530
      %532 = vst [vmem:[#allocation2 + $0x8] sm:$0x1] %v531
      %v533 = vld [vmem:[#allocation2 + $0x14] sm:$0x1]
      %v534 = vsel %vm529, 0, %v533
      %535 = vst [vmem:[#allocation2 + $0x14] sm:$0x1] %v534
      %v536 = vld [vmem:[#allocation2 + $0x20] sm:$0x1]
      %v537 = vsel %vm529, 0, %v536
      %538 = vst [vmem:[#allocation2 + $0x20] sm:$0x1] %v537
      %v539 = vld [vmem:[#allocation2 + $0x2c] sm:$0x1]
      %v540 = vsel %vm529, 0, %v539
      %541 = vst [vmem:[#allocation2 + $0x2c] sm:$0x1] %v540
      %v542 = vld [vmem:[#allocation2 + $0x38] sm:$0x1]
      %v543 = vsel %vm529, 0, %v542
      %544 = vst [vmem:[#allocation2 + $0x38] sm:$0x1] %v543
      %v545 = vld [vmem:[#allocation2 + $0x44] sm:$0x1]
      %v546 = vsel %vm529, 0, %v545
      %547 = vst [vmem:[#allocation2 + $0x44] sm:$0x1] %v546
      %v548 = vld [vmem:[#allocation2 + $0x50] sm:$0x1]
      %v549 = vsel %vm529, 0, %v548
      %550 = vst [vmem:[#allocation2 + $0x50] sm:$0x1] %v549
      %v551 = vld [vmem:[#allocation2 + $0x5c] sm:$0x1]
      %v552 = vsel %vm529, 0, %v551
      %553 = vst [vmem:[#allocation2 + $0x5c] sm:$0x1] %v552
      %v554 = vld [vmem:[#allocation2 + $0x68] sm:$0x1]
      %v555 = vsel %vm529, 0, %v554
      %556 = vst [vmem:[#allocation2 + $0x68] sm:$0x1] %v555
      %v557 = vld [vmem:[#allocation2 + $0x74] sm:$0x1]
      %v558 = vsel %vm529, 0, %v557
      %559 = vst [vmem:[#allocation2 + $0x74] sm:$0x1] %v558
      %v560 = vld [vmem:[#allocation2 + $0x80] sm:$0x1]
      %v561 = vsel %vm529, 0, %v560
      %562 = vst [vmem:[#allocation2 + $0x80] sm:$0x1] %v561
      %v563 = vld [vmem:[#allocation2 + $0x8c] sm:$0x1]
      %v564 = vsel %vm529, 0, %v563
      %565 = vst [vmem:[#allocation2 + $0x8c] sm:$0x1] %v564
      %v566 = vld [vmem:[#allocation2 + $0x98] sm:$0x1]
      %v567 = vsel %vm529, 0, %v566
      %568 = vst [vmem:[#allocation2 + $0x98] sm:$0x1] %v567
      %v569 = vld [vmem:[#allocation2 + $0xa4] sm:$0x1]
      %v570 = vsel %vm529, 0, %v569
      %571 = vst [vmem:[#allocation2 + $0xa4] sm:$0x1] %v570
      %v572 = vld [vmem:[#allocation2 + $0xb0] sm:$0x1]
      %v573 = vsel %vm529, 0, %v572
      %574 = vst [vmem:[#allocation2 + $0xb0] sm:$0x1] %v573
      %v575 = vld [vmem:[#allocation2 + $0xbc] sm:$0x1]
      %v576 = vsel %vm529, 0, %v575
      %577 = vst [vmem:[#allocation2 + $0xbc] sm:$0x1] %v576
      %v578 = vld [vmem:[#allocation2 + $0xc8] sm:$0x1]
      %v579 = vsel %vm529, 0, %v578
      %580 = vst [vmem:[#allocation2 + $0xc8] sm:$0x1] %v579
      %v581 = vld [vmem:[#allocation2 + $0xd4] sm:$0x1]
      %v582 = vsel %vm529, 0, %v581
      %583 = vst [vmem:[#allocation2 + $0xd4] sm:$0x1] %v582
      %vm584 = vcmask 27648
      %585 = vst.msk [vmem:[#allocation3] sm:$0xf] %vm584, 0
      %586 = vst.msk [vmem:[#allocation3 + $0x4] sm:$0xf] %vm584, 0
      %vm587 = vcmask 24576
      %588 = vst.msk [vmem:[#allocation3 + $0x8] sm:$0x1] %vm587, 0
      %s589 = scalar_lea.vmem [#allocation3], 204
      %590 = vst.msk [vmem:[%s589] sm:$0xf] %vm584, 0
      %591 = vst.msk [vmem:[%s589 + $0x4] sm:$0xf] %vm584, 0
      %592 = vst.msk [vmem:[%s589 + $0x8] sm:$0x1] %vm587, 0
      %vm593 = vcmask 24576
      %vm594 = vmand %vm593, %vm472
      %v595 = vld [vmem:[#allocation3] sm:$0x1]
      %v596 = vsel %vm594, 0, %v595
      %597 = vst [vmem:[#allocation3] sm:$0x1] %v596
      %v598 = vld [vmem:[#allocation3 + $0xc] sm:$0x1]
      %v599 = vsel %vm594, 0, %v598
      %600 = vst [vmem:[#allocation3 + $0xc] sm:$0x1] %v599
      %v601 = vld [vmem:[#allocation3 + $0x18] sm:$0x1]
      %v602 = vsel %vm594, 0, %v601
      %603 = vst [vmem:[#allocation3 + $0x18] sm:$0x1] %v602
      %v604 = vld [vmem:[#allocation3 + $0x24] sm:$0x1]
      %v605 = vsel %vm594, 0, %v604
      %606 = vst [vmem:[#allocation3 + $0x24] sm:$0x1] %v605
      %v607 = vld [vmem:[#allocation3 + $0x30] sm:$0x1]
      %v608 = vsel %vm594, 0, %v607
      %609 = vst [vmem:[#allocation3 + $0x30] sm:$0x1] %v608
      %v610 = vld [vmem:[#allocation3 + $0x3c] sm:$0x1]
      %v611 = vsel %vm594, 0, %v610
      %612 = vst [vmem:[#allocation3 + $0x3c] sm:$0x1] %v611
      %v613 = vld [vmem:[#allocation3 + $0x48] sm:$0x1]
      %v614 = vsel %vm594, 0, %v613
      %615 = vst [vmem:[#allocation3 + $0x48] sm:$0x1] %v614
      %v616 = vld [vmem:[#allocation3 + $0x54] sm:$0x1]
      %v617 = vsel %vm594, 0, %v616
      %618 = vst [vmem:[#allocation3 + $0x54] sm:$0x1] %v617
      %v619 = vld [vmem:[#allocation3 + $0x60] sm:$0x1]
      %v620 = vsel %vm594, 0, %v619
      %621 = vst [vmem:[#allocation3 + $0x60] sm:$0x1] %v620
      %v622 = vld [vmem:[#allocation3 + $0x6c] sm:$0x1]
      %v623 = vsel %vm594, 0, %v622
      %624 = vst [vmem:[#allocation3 + $0x6c] sm:$0x1] %v623
      %v625 = vld [vmem:[#allocation3 + $0x78] sm:$0x1]
      %v626 = vsel %vm594, 0, %v625
      %627 = vst [vmem:[#allocation3 + $0x78] sm:$0x1] %v626
      %v628 = vld [vmem:[#allocation3 + $0x84] sm:$0x1]
      %v629 = vsel %vm594, 0, %v628
      %630 = vst [vmem:[#allocation3 + $0x84] sm:$0x1] %v629
      %v631 = vld [vmem:[#allocation3 + $0x90] sm:$0x1]
      %v632 = vsel %vm594, 0, %v631
      %633 = vst [vmem:[#allocation3 + $0x90] sm:$0x1] %v632
      %v634 = vld [vmem:[#allocation3 + $0x9c] sm:$0x1]
      %v635 = vsel %vm594, 0, %v634
      %636 = vst [vmem:[#allocation3 + $0x9c] sm:$0x1] %v635
      %v637 = vld [vmem:[#allocation3 + $0xa8] sm:$0x1]
      %v638 = vsel %vm594, 0, %v637
      %639 = vst [vmem:[#allocation3 + $0xa8] sm:$0x1] %v638
      %v640 = vld [vmem:[#allocation3 + $0xb4] sm:$0x1]
      %v641 = vsel %vm594, 0, %v640
      %642 = vst [vmem:[#allocation3 + $0xb4] sm:$0x1] %v641
      %v643 = vld [vmem:[#allocation3 + $0xc0] sm:$0x1]
      %v644 = vsel %vm594, 0, %v643
      %645 = vst [vmem:[#allocation3 + $0xc0] sm:$0x1] %v644
      %v646 = vld [vmem:[#allocation3 + $0xcc] sm:$0x1]
      %v647 = vsel %vm594, 0, %v646
      %648 = vst [vmem:[#allocation3 + $0xcc] sm:$0x1] %v647
      %vm649 = vmand %vm593, %vm528
      %v650 = vld [vmem:[#allocation3 + $0x8] sm:$0x1]
      %v651 = vsel %vm649, 0, %v650
      %652 = vst [vmem:[#allocation3 + $0x8] sm:$0x1] %v651
      %v653 = vld [vmem:[#allocation3 + $0x14] sm:$0x1]
      %v654 = vsel %vm649, 0, %v653
      %655 = vst [vmem:[#allocation3 + $0x14] sm:$0x1] %v654
      %v656 = vld [vmem:[#allocation3 + $0x20] sm:$0x1]
      %v657 = vsel %vm649, 0, %v656
      %658 = vst [vmem:[#allocation3 + $0x20] sm:$0x1] %v657
      %v659 = vld [vmem:[#allocation3 + $0x2c] sm:$0x1]
      %v660 = vsel %vm649, 0, %v659
      %661 = vst [vmem:[#allocation3 + $0x2c] sm:$0x1] %v660
      %v662 = vld [vmem:[#allocation3 + $0x38] sm:$0x1]
      %v663 = vsel %vm649, 0, %v662
      %664 = vst [vmem:[#allocation3 + $0x38] sm:$0x1] %v663
      %v665 = vld [vmem:[#allocation3 + $0x44] sm:$0x1]
      %v666 = vsel %vm649, 0, %v665
      %667 = vst [vmem:[#allocation3 + $0x44] sm:$0x1] %v666
      %v668 = vld [vmem:[#allocation3 + $0x50] sm:$0x1]
      %v669 = vsel %vm649, 0, %v668
      %670 = vst [vmem:[#allocation3 + $0x50] sm:$0x1] %v669
      %v671 = vld [vmem:[#allocation3 + $0x5c] sm:$0x1]
      %v672 = vsel %vm649, 0, %v671
      %673 = vst [vmem:[#allocation3 + $0x5c] sm:$0x1] %v672
      %v674 = vld [vmem:[#allocation3 + $0x68] sm:$0x1]
      %v675 = vsel %vm649, 0, %v674
      %676 = vst [vmem:[#allocation3 + $0x68] sm:$0x1] %v675
      %v677 = vld [vmem:[#allocation3 + $0x74] sm:$0x1]
      %v678 = vsel %vm649, 0, %v677
      %679 = vst [vmem:[#allocation3 + $0x74] sm:$0x1] %v678
      %v680 = vld [vmem:[#allocation3 + $0x80] sm:$0x1]
      %v681 = vsel %vm649, 0, %v680
      %682 = vst [vmem:[#allocation3 + $0x80] sm:$0x1] %v681
      %v683 = vld [vmem:[#allocation3 + $0x8c] sm:$0x1]
      %v684 = vsel %vm649, 0, %v683
      %685 = vst [vmem:[#allocation3 + $0x8c] sm:$0x1] %v684
      %v686 = vld [vmem:[#allocation3 + $0x98] sm:$0x1]
      %v687 = vsel %vm649, 0, %v686
      %688 = vst [vmem:[#allocation3 + $0x98] sm:$0x1] %v687
      %v689 = vld [vmem:[#allocation3 + $0xa4] sm:$0x1]
      %v690 = vsel %vm649, 0, %v689
      %691 = vst [vmem:[#allocation3 + $0xa4] sm:$0x1] %v690
      %v692 = vld [vmem:[#allocation3 + $0xb0] sm:$0x1]
      %v693 = vsel %vm649, 0, %v692
      %694 = vst [vmem:[#allocation3 + $0xb0] sm:$0x1] %v693
      %v695 = vld [vmem:[#allocation3 + $0xbc] sm:$0x1]
      %v696 = vsel %vm649, 0, %v695
      %697 = vst [vmem:[#allocation3 + $0xbc] sm:$0x1] %v696
      %v698 = vld [vmem:[#allocation3 + $0xc8] sm:$0x1]
      %v699 = vsel %vm649, 0, %v698
      %700 = vst [vmem:[#allocation3 + $0xc8] sm:$0x1] %v699
      %v701 = vld [vmem:[#allocation3 + $0xd4] sm:$0x1]
      %v702 = vsel %vm649, 0, %v701
      %703 = vst [vmem:[#allocation3 + $0xd4] sm:$0x1] %v702
      %v704 = vld [vmem:[%s450] sm:$0xf]
      %v705 = vld [vmem:[%s450 + $0x8] sm:$0xf]
      %v706 = vld [vmem:[%s450 + $0x10] sm:$0xf]
      %v707 = vld [vmem:[%s450 + $0x18] sm:$0xf]
      %v708 = vld [vmem:[%s450 + $0x20] sm:$0xf]
      %v709 = vld [vmem:[%s450 + $0x28] sm:$0xf]
      %v710 = vld [vmem:[%s450 + $0x30] sm:$0xf]
      %v711 = vld [vmem:[%s450 + $0x38] sm:$0xf]
      %v712 = vld [vmem:[%s450 + $0x4] sm:$0x1]
      %v713 = vld [vmem:[%s450 + $0xc] sm:$0x1]
      %v714 = vld [vmem:[%s450 + $0x14] sm:$0x1]
      %v715 = vld [vmem:[%s450 + $0x1c] sm:$0x1]
      %v716 = vld [vmem:[%s450 + $0x24] sm:$0x1]
      %v717 = vld [vmem:[%s450 + $0x2c] sm:$0x1]
      %v718 = vld [vmem:[%s450 + $0x34] sm:$0x1]
      %v719 = vld [vmem:[%s450 + $0x3c] sm:$0x1]
      %vm720 = vsmask.f32 3328
      %vm721 = vsmask.f32 7440
      %vm722 = vmor %vm720, %vm721
      %v724 = vshrl.u32 %v704, 16
      %v726 = vrot.slane %v724, 4
      %v727 = vshll.u32 %v704, 16
      %v729 = vrot.slane %v727, 5
      %v730 = vor.u32 %v726, %v729
      %v731 = vrot.slane %v730, 4
      %v733 = vshll.u32 %v712, 16
      %v735 = vrot.slane %v733, 5
      %v736 = vsel %vm722, %v731, %v735
      %v738 = vshrl.u32 %v705, 16
      %v740 = vrot.slane %v738, 4
      %v741 = vshll.u32 %v705, 16
      %v743 = vrot.slane %v741, 5
      %v744 = vor.u32 %v740, %v743
      %v745 = vrot.slane %v744, 4
      %v747 = vshll.u32 %v713, 16
      %v749 = vrot.slane %v747, 5
      %v750 = vsel %vm722, %v745, %v749
      %v752 = vshrl.u32 %v706, 16
      %v754 = vrot.slane %v752, 4
      %v755 = vshll.u32 %v706, 16
      %v757 = vrot.slane %v755, 5
      %v758 = vor.u32 %v754, %v757
      %v759 = vrot.slane %v758, 4
      %v761 = vshll.u32 %v714, 16
      %v763 = vrot.slane %v761, 5
      %v764 = vsel %vm722, %v759, %v763
      %v766 = vshrl.u32 %v707, 16
      %v768 = vrot.slane %v766, 4
      %v769 = vshll.u32 %v707, 16
      %v771 = vrot.slane %v769, 5
      %v772 = vor.u32 %v768, %v771
      %v773 = vrot.slane %v772, 4
      %v775 = vshll.u32 %v715, 16
      %v777 = vrot.slane %v775, 5
      %v778 = vsel %vm722, %v773, %v777
      %v780 = vshrl.u32 %v708, 16
      %v782 = vrot.slane %v780, 4
      %v783 = vshll.u32 %v708, 16
      %v785 = vrot.slane %v783, 5
      %v786 = vor.u32 %v782, %v785
      %v787 = vrot.slane %v786, 4
      %v789 = vshll.u32 %v716, 16
      %v791 = vrot.slane %v789, 5
      %v792 = vsel %vm722, %v787, %v791
      %v794 = vshrl.u32 %v709, 16
      %v796 = vrot.slane %v794, 4
      %v797 = vshll.u32 %v709, 16
      %v799 = vrot.slane %v797, 5
      %v800 = vor.u32 %v796, %v799
      %v801 = vrot.slane %v800, 4
      %v803 = vshll.u32 %v717, 16
      %v805 = vrot.slane %v803, 5
      %v806 = vsel %vm722, %v801, %v805
      %v808 = vshrl.u32 %v710, 16
      %v810 = vrot.slane %v808, 4
      %v811 = vshll.u32 %v710, 16
      %v813 = vrot.slane %v811, 5
      %v814 = vor.u32 %v810, %v813
      %v815 = vrot.slane %v814, 4
      %v817 = vshll.u32 %v718, 16
      %v819 = vrot.slane %v817, 5
      %v820 = vsel %vm722, %v815, %v819
      %v822 = vshrl.u32 %v711, 16
      %v824 = vrot.slane %v822, 4
      %v825 = vshll.u32 %v711, 16
      %v827 = vrot.slane %v825, 5
      %v828 = vor.u32 %v824, %v827
      %v829 = vrot.slane %v828, 4
      %v831 = vshll.u32 %v719, 16
      %v833 = vrot.slane %v831, 5
      %v834 = vsel %vm722, %v829, %v833
      %s835 = scalar_lea.vmem %s450, 8
      %v836 = vld [vmem:[%s835] sm:$0xf]
      %v837 = vld [vmem:[%s835 + $0x8] sm:$0xf]
      %v838 = vld [vmem:[%s835 + $0x10] sm:$0xf]
      %v839 = vld [vmem:[%s835 + $0x18] sm:$0xf]
      %v840 = vld [vmem:[%s835 + $0x20] sm:$0xf]
      %v841 = vld [vmem:[%s835 + $0x28] sm:$0xf]
      %v842 = vld [vmem:[%s835 + $0x30] sm:$0xf]
      %v843 = vld [vmem:[%s835 + $0x38] sm:$0xf]
      %v844 = vld [vmem:[%s835 + $0x4] sm:$0x1]
      %v845 = vld [vmem:[%s835 + $0xc] sm:$0x1]
      %v846 = vld [vmem:[%s835 + $0x14] sm:$0x1]
      %v847 = vld [vmem:[%s835 + $0x1c] sm:$0x1]
      %v848 = vld [vmem:[%s835 + $0x24] sm:$0x1]
      %v849 = vld [vmem:[%s835 + $0x2c] sm:$0x1]
      %v850 = vld [vmem:[%s835 + $0x34] sm:$0x1]
      %v851 = vld [vmem:[%s835 + $0x3c] sm:$0x1]
      %v853 = vshrl.u32 %v836, 16
      %v855 = vrot.slane %v853, 4
      %v856 = vshll.u32 %v836, 16
      %v858 = vrot.slane %v856, 5
      %v859 = vor.u32 %v855, %v858
      %v860 = vrot.slane %v859, 4
      %v862 = vshll.u32 %v844, 16
      %v864 = vrot.slane %v862, 5
      %v865 = vsel %vm722, %v860, %v864
      %v867 = vshrl.u32 %v837, 16
      %v869 = vrot.slane %v867, 4
      %v870 = vshll.u32 %v837, 16
      %v872 = vrot.slane %v870, 5
      %v873 = vor.u32 %v869, %v872
      %v874 = vrot.slane %v873, 4
      %v876 = vshll.u32 %v845, 16
      %v878 = vrot.slane %v876, 5
      %v879 = vsel %vm722, %v874, %v878
      %v881 = vshrl.u32 %v838, 16
      %v883 = vrot.slane %v881, 4
      %v884 = vshll.u32 %v838, 16
      %v886 = vrot.slane %v884, 5
      %v887 = vor.u32 %v883, %v886
      %v888 = vrot.slane %v887, 4
      %v890 = vshll.u32 %v846, 16
      %v892 = vrot.slane %v890, 5
      %v893 = vsel %vm722, %v888, %v892
      %v895 = vshrl.u32 %v839, 16
      %v897 = vrot.slane %v895, 4
      %v898 = vshll.u32 %v839, 16
      %v900 = vrot.slane %v898, 5
      %v901 = vor.u32 %v897, %v900
      %v902 = vrot.slane %v901, 4
      %v904 = vshll.u32 %v847, 16
      %v906 = vrot.slane %v904, 5
      %v907 = vsel %vm722, %v902, %v906
      %v909 = vshrl.u32 %v840, 16
      %v911 = vrot.slane %v909, 4
      %v912 = vshll.u32 %v840, 16
      %v914 = vrot.slane %v912, 5
      %v915 = vor.u32 %v911, %v914
      %v916 = vrot.slane %v915, 4
      %v918 = vshll.u32 %v848, 16
      %v920 = vrot.slane %v918, 5
      %v921 = vsel %vm722, %v916, %v920
      %v923 = vshrl.u32 %v841, 16
      %v925 = vrot.slane %v923, 4
      %v926 = vshll.u32 %v841, 16
      %v928 = vrot.slane %v926, 5
      %v929 = vor.u32 %v925, %v928
      %v930 = vrot.slane %v929, 4
      %v932 = vshll.u32 %v849, 16
      %v934 = vrot.slane %v932, 5
      %v935 = vsel %vm722, %v930, %v934
      %v937 = vshrl.u32 %v842, 16
      %v939 = vrot.slane %v937, 4
      %v940 = vshll.u32 %v842, 16
      %v942 = vrot.slane %v940, 5
      %v943 = vor.u32 %v939, %v942
      %v944 = vrot.slane %v943, 4
      %v946 = vshll.u32 %v850, 16
      %v948 = vrot.slane %v946, 5
      %v949 = vsel %vm722, %v944, %v948
      %v951 = vshrl.u32 %v843, 16
      %v953 = vrot.slane %v951, 4
      %v954 = vshll.u32 %v843, 16
      %v956 = vrot.slane %v954, 5
      %v957 = vor.u32 %v953, %v956
      %v958 = vrot.slane %v957, 4
      %v960 = vshll.u32 %v851, 16
      %v962 = vrot.slane %v960, 5
      %v963 = vsel %vm722, %v958, %v962
      %v972 = vunpack.c.l.b16 %v704
      %v973 = vunpack.c.l.b16 %v705
      %v974 = vunpack.c.l.b16 %v706
      %v975 = vunpack.c.l.b16 %v707
      %v976 = vunpack.c.l.b16 %v708
      %v977 = vunpack.c.l.b16 %v709
      %v978 = vunpack.c.l.b16 %v710
      %v979 = vunpack.c.l.b16 %v711
      %v980 = vpack.c.b16 %v973, %v972
      %v981 = vpack.c.b16 %v975, %v974
      %v982 = vpack.c.b16 %v977, %v976
      %v983 = vpack.c.b16 %v979, %v978
      %v984 = vunpack.c.l.b16 %v736
      %v985 = vunpack.c.l.b16 %v750
      %v986 = vunpack.c.l.b16 %v764
      %v987 = vunpack.c.l.b16 %v778
      %v988 = vunpack.c.l.b16 %v792
      %v989 = vunpack.c.l.b16 %v806
      %v990 = vunpack.c.l.b16 %v820
      %v991 = vunpack.c.l.b16 %v834
      %v992 = vpack.c.b16 %v985, %v984
      %v993 = vpack.c.b16 %v987, %v986
      %v994 = vpack.c.b16 %v989, %v988
      %v995 = vpack.c.b16 %v991, %v990
      %996 = vrot.lane.b32.xlu0 %v992, 8
      %v997 = vpop.permute.xlu0 %996
      %998 = vrot.lane.b32.xlu0 %v993, 8
      %v999 = vpop.permute.xlu0 %998
      %1000 = vrot.lane.b32.xlu0 %v994, 8
      %v1001 = vpop.permute.xlu0 %1000
      %1002 = vrot.lane.b32.xlu0 %v995, 8
      %v1003 = vpop.permute.xlu0 %1002
      %v1012 = vunpack.c.l.b16 %v836
      %v1013 = vunpack.c.l.b16 %v837
      %v1014 = vunpack.c.l.b16 %v838
      %v1015 = vunpack.c.l.b16 %v839
      %v1016 = vunpack.c.l.b16 %v840
      %v1017 = vunpack.c.l.b16 %v841
      %v1018 = vunpack.c.l.b16 %v842
      %v1019 = vunpack.c.l.b16 %v843
      %v1020 = vpack.c.b16 %v1013, %v1012
      %v1021 = vpack.c.b16 %v1015, %v1014
      %v1022 = vpack.c.b16 %v1017, %v1016
      %v1023 = vpack.c.b16 %v1019, %v1018
      %1024 = vrot.lane.b32.xlu0 %v1020, 16
      %v1025 = vpop.permute.xlu0 %1024
      %1026 = vrot.lane.b32.xlu0 %v1021, 16
      %v1027 = vpop.permute.xlu0 %1026
      %1028 = vrot.lane.b32.xlu0 %v1022, 16
      %v1029 = vpop.permute.xlu0 %1028
      %1030 = vrot.lane.b32.xlu0 %v1023, 16
      %v1031 = vpop.permute.xlu0 %1030
      %v1032 = vunpack.c.l.b16 %v865
      %v1033 = vunpack.c.l.b16 %v879
      %v1034 = vunpack.c.l.b16 %v893
      %v1035 = vunpack.c.l.b16 %v907
      %v1036 = vunpack.c.l.b16 %v921
      %v1037 = vunpack.c.l.b16 %v935
      %v1038 = vunpack.c.l.b16 %v949
      %v1039 = vunpack.c.l.b16 %v963
      %v1040 = vpack.c.b16 %v1033, %v1032
      %v1041 = vpack.c.b16 %v1035, %v1034
      %v1042 = vpack.c.b16 %v1037, %v1036
      %v1043 = vpack.c.b16 %v1039, %v1038
      %1044 = vrot.lane.b32.xlu0 %v1040, 24
      %v1045 = vpop.permute.xlu0 %1044
      %1046 = vrot.lane.b32.xlu0 %v1041, 24
      %v1047 = vpop.permute.xlu0 %1046
      %1048 = vrot.lane.b32.xlu0 %v1042, 24
      %v1049 = vpop.permute.xlu0 %1048
      %1050 = vrot.lane.b32.xlu0 %v1043, 24
      %v1051 = vpop.permute.xlu0 %1050
      %vm1052 = vcmask 64512
      %v1055 = vsel %vm1052, %v980, %v997
      %v1058 = vsel %vm1052, %v981, %v999
      %v1061 = vsel %vm1052, %v982, %v1001
      %v1064 = vsel %vm1052, %v983, %v1003
      %vm1065 = vcmask 130048
      %v1067 = vsel %vm1065, %v1055, %v1025
      %v1069 = vsel %vm1065, %v1058, %v1027
      %v1071 = vsel %vm1065, %v1061, %v1029
      %v1073 = vsel %vm1065, %v1064, %v1031
      %vm1074 = vcmask 195584
      %v1076 = vsel %vm1074, %v1067, %v1045
      %v1078 = vsel %vm1074, %v1069, %v1047
      %v1080 = vsel %vm1074, %v1071, %v1049
      %v1082 = vsel %vm1074, %v1073, %v1051
      %v1083 = vld [vmem:[%s2] sm:$0xf]
      %v1084 = vld [vmem:[%s2 + $0x4] sm:$0xf]
      %v1085 = vld [vmem:[%s2 + $0x8] sm:$0xf]
      %v1086 = vld [vmem:[%s2 + $0xc] sm:$0xf]
      %v1091 = vunpack.c.l.b16 %v1083
      %v1092 = vunpack.c.l.b16 %v1084
      %v1093 = vunpack.c.l.b16 %v1085
      %v1094 = vunpack.c.l.b16 %v1086
      %v1095 = vpack.c.b16 %v1092, %v1091
      %v1096 = vpack.c.b16 %v1094, %v1093
      %vm1099 = vcmask 261120
      %v1100 = vsel %vm1099, %v1076, 0
      %v1102 = vsel %vm1099, %v1078, 0
      %v1104 = vsel %vm1099, %v1080, 0
      %v1106 = vsel %vm1099, %v1082, 0
      %1108 = vmatprep.subr.bf16.mxu0 0
      %1109 = vmatpush1.bf16.msra.mxu0 0
      %1110 = vmatprep.subr.bf16.mxu0 0
      %1111 = vmatpush1.bf16.msra.mxu0 0
      %1112 = vmatprep.subr.bf16.mxu0 0
      %1113 = vmatpush1.bf16.msra.mxu0 0
      %1114 = vmatprep.subr.bf16.mxu0 0
      %1115 = vmatpush1.bf16.msra.mxu0 0
      %1116 = vmatprep.subr.bf16.mxu0 0
      %1117 = vmatpush1.bf16.msra.mxu0 0
      %1118 = vmatprep.subr.bf16.mxu0 0
      %1119 = vmatpush1.bf16.msra.mxu0 0
      %1120 = vmatprep.subr.bf16.mxu0 0
      %1121 = vmatpush1.bf16.msra.mxu0 %v1096
      %1122 = vmatprep.subr.bf16.mxu0 0
      %1123 = vmatpush1.bf16.msra.mxu0 %v1095
      %1124 = vmatprep.subr.bf16.mxu0 0
      %1125 = vmatpush2.bf16.msra.mxu0 0
      %1126 = vmatprep.subr.bf16.mxu0 0
      %1127 = vmatpush2.bf16.msra.mxu0 0
      %1128 = vmatprep.subr.bf16.mxu0 0
      %1129 = vmatpush2.bf16.msra.mxu0 0
      %1130 = vmatprep.subr.bf16.mxu0 0
      %1131 = vmatpush2.bf16.msra.mxu0 0
      %1132 = vmatprep.subr.bf16.mxu0 0
      %1133 = vmatpush2.bf16.msra.mxu0 0
      %1134 = vmatprep.subr.bf16.mxu0 0
      %1135 = vmatpush2.bf16.msra.mxu0 0
      %1136 = vmatprep.subr.bf16.mxu0 0
      %1137 = vmatpush2.bf16.msra.mxu0 0
      %1138 = vmatprep.subr.bf16.mxu0 0
      %1139 = vmatpush2.bf16.msra.mxu0 0
      %1140 = vmatprep.mubr.bf16.mxu0 0
      %1141 = vmatmul.mubr.bf16.gmra.mxu0 %v1100
      %v1142 = vpop.f32.mrf.mxu0
      %v1143 = vadd.f32 0.0, %v1142
      %v1144 = vpop.f32.mrf.mxu0
      %v1145 = vpop.f32.mrf.mxu0
      %v1146 = vadd.f32 0.0, %v1145
      %v1147 = vpop.f32.mrf.mxu0
      %1148 = vmatprep.mubr.bf16.mxu0 0
      %1149 = vmatmul.mubr.bf16.gmra.mxu0 %v1102
      %v1150 = vpop.f32.mrf.mxu0
      %v1151 = vadd.f32 0.0, %v1150
      %v1152 = vpop.f32.mrf.mxu0
      %v1153 = vpop.f32.mrf.mxu0
      %v1154 = vadd.f32 0.0, %v1153
      %v1155 = vpop.f32.mrf.mxu0
      %1156 = vmatprep.mubr.bf16.mxu0 0
      %1157 = vmatmul.mubr.bf16.gmra.mxu0 %v1104
      %v1158 = vpop.f32.mrf.mxu0
      %v1159 = vadd.f32 0.0, %v1158
      %v1160 = vpop.f32.mrf.mxu0
      %v1161 = vpop.f32.mrf.mxu0
      %v1162 = vadd.f32 0.0, %v1161
      %v1163 = vpop.f32.mrf.mxu0
      %1164 = vmatprep.mubr.bf16.mxu0 0
      %1165 = vmatmul.mubr.bf16.gmra.mxu0 %v1106
      %v1166 = vpop.f32.mrf.mxu0
      %v1167 = vadd.f32 0.0, %v1166
      %v1168 = vpop.f32.mrf.mxu0
      %v1169 = vpop.f32.mrf.mxu0
      %v1170 = vadd.f32 0.0, %v1169
      %v1171 = vpop.f32.mrf.mxu0
      %1172 = vdwg.mxu0
      %v1173 = vld [vmem:[%s3] sm:$0x1]
      %v1175 = vlaneseq
      %v1176 = vshrl.u32 %v1175, 7
      %v1177 = vsub.s32 0, %v1176
      %v1178 = vrot.slane %v1173, %v1177
      %v1180 = vmul.f32 %v1143, %v1178
      %v1181 = vmul.f32 %v1146, %v1178
      %v1182 = vmul.f32 %v1151, %v1178
      %v1183 = vmul.f32 %v1154, %v1178
      %v1184 = vmul.f32 %v1159, %v1178
      %v1185 = vmul.f32 %v1162, %v1178
      %v1186 = vmul.f32 %v1167, %v1178
      %v1187 = vmul.f32 %v1170, %v1178
      %v1188 = vld [vmem:[%s4] sm:$0x1]
      %v1190 = vlaneseq
      %v1191 = vshrl.u32 %v1190, 7
      %v1192 = vsub.s32 0, %v1191
      %v1193 = vrot.slane %v1188, %v1192
      %v1195 = vadd.f32 %v1180, %v1193
      %v1196 = vadd.f32 %v1181, %v1193
      %v1197 = vadd.f32 %v1182, %v1193
      %v1198 = vadd.f32 %v1183, %v1193
      %v1199 = vadd.f32 %v1184, %v1193
      %v1200 = vadd.f32 %v1185, %v1193
      %v1201 = vadd.f32 %v1186, %v1193
      %v1202 = vadd.f32 %v1187, %v1193
      %v1203 = vmax.f32 %v1195, 0.0
      %v1204 = vmax.f32 %v1196, 0.0
      %v1205 = vmax.f32 %v1197, 0.0
      %v1206 = vmax.f32 %v1198, 0.0
      %v1207 = vmax.f32 %v1199, 0.0
      %v1208 = vmax.f32 %v1200, 0.0
      %v1209 = vmax.f32 %v1201, 0.0
      %v1210 = vmax.f32 %v1202, 0.0
      %v1219 = vcombine.high %v1203, %v1203
      %v1221 = vunpack.c.l.s4 1966171168
      %v1222 = vunpack.c.0.s8 %v1221
      %v1223 = vlaneseq
      %v1224 = vshrl.u32 %v1223, 7
      %v1225 = vsub.s32 %v1222, %v1224
      %v1226 = vrot.slane %v1203, %v1225
      %v1228 = vunpack.c.l.s4 1966171168
      %v1229 = vunpack.c.0.s8 %v1228
      %v1230 = vlaneseq
      %v1231 = vshrl.u32 %v1230, 7
      %v1232 = vsub.s32 %v1229, %v1231
      %v1233 = vrot.slane %v1219, %v1232
      %v1234 = vcombine.high %v1226, %v1226
      %v1235 = vcombine.high %v1233, %v1233
      %v1237 = vunpack.c.l.s4 1966171168
      %v1238 = vunpack.c.0.s8 %v1237
      %v1239 = vlaneseq
      %v1240 = vshrl.u32 %v1239, 7
      %v1241 = vsub.s32 %v1238, %v1240
      %v1242 = vrot.slane %v1226, %v1241
      %v1244 = vunpack.c.l.s4 1966171168
      %v1245 = vunpack.c.0.s8 %v1244
      %v1246 = vlaneseq
      %v1247 = vshrl.u32 %v1246, 7
      %v1248 = vsub.s32 %v1245, %v1247
      %v1249 = vrot.slane %v1233, %v1248
      %v1251 = vunpack.c.l.s4 1966171168
      %v1252 = vunpack.c.0.s8 %v1251
      %v1253 = vlaneseq
      %v1254 = vshrl.u32 %v1253, 7
      %v1255 = vsub.s32 %v1252, %v1254
      %v1256 = vrot.slane %v1234, %v1255
      %v1258 = vunpack.c.l.s4 1966171168
      %v1259 = vunpack.c.0.s8 %v1258
      %v1260 = vlaneseq
      %v1261 = vshrl.u32 %v1260, 7
      %v1262 = vsub.s32 %v1259, %v1261
      %v1263 = vrot.slane %v1235, %v1262
      %v1264 = vcombine.high %v1242, %v1242
      %v1265 = vcombine.high %v1249, %v1249
      %v1266 = vcombine.high %v1256, %v1256
      %v1267 = vcombine.high %v1263, %v1263
      %v1268 = vcombine.high %v1204, %v1204
      %v1270 = vunpack.c.l.s4 1966171168
      %v1271 = vunpack.c.0.s8 %v1270
      %v1272 = vlaneseq
      %v1273 = vshrl.u32 %v1272, 7
      %v1274 = vsub.s32 %v1271, %v1273
      %v1275 = vrot.slane %v1204, %v1274
      %v1277 = vunpack.c.l.s4 1966171168
      %v1278 = vunpack.c.0.s8 %v1277
      %v1279 = vlaneseq
      %v1280 = vshrl.u32 %v1279, 7
      %v1281 = vsub.s32 %v1278, %v1280
      %v1282 = vrot.slane %v1268, %v1281
      %v1283 = vcombine.high %v1275, %v1275
      %v1284 = vcombine.high %v1282, %v1282
      %v1286 = vunpack.c.l.s4 1966171168
      %v1287 = vunpack.c.0.s8 %v1286
      %v1288 = vlaneseq
      %v1289 = vshrl.u32 %v1288, 7
      %v1290 = vsub.s32 %v1287, %v1289
      %v1291 = vrot.slane %v1275, %v1290
      %v1293 = vunpack.c.l.s4 1966171168
      %v1294 = vunpack.c.0.s8 %v1293
      %v1295 = vlaneseq
      %v1296 = vshrl.u32 %v1295, 7
      %v1297 = vsub.s32 %v1294, %v1296
      %v1298 = vrot.slane %v1282, %v1297
      %v1300 = vunpack.c.l.s4 1966171168
      %v1301 = vunpack.c.0.s8 %v1300
      %v1302 = vlaneseq
      %v1303 = vshrl.u32 %v1302, 7
      %v1304 = vsub.s32 %v1301, %v1303
      %v1305 = vrot.slane %v1283, %v1304
      %v1307 = vunpack.c.l.s4 1966171168
      %v1308 = vunpack.c.0.s8 %v1307
      %v1309 = vlaneseq
      %v1310 = vshrl.u32 %v1309, 7
      %v1311 = vsub.s32 %v1308, %v1310
      %v1312 = vrot.slane %v1284, %v1311
      %v1313 = vcombine.high %v1291, %v1291
      %v1314 = vcombine.high %v1298, %v1298
      %v1315 = vcombine.high %v1305, %v1305
      %v1316 = vcombine.high %v1312, %v1312
      %v1317 = vcombine.high %v1205, %v1205
      %v1319 = vunpack.c.l.s4 1966171168
      %v1320 = vunpack.c.0.s8 %v1319
      %v1321 = vlaneseq
      %v1322 = vshrl.u32 %v1321, 7
      %v1323 = vsub.s32 %v1320, %v1322
      %v1324 = vrot.slane %v1205, %v1323
      %v1326 = vunpack.c.l.s4 1966171168
      %v1327 = vunpack.c.0.s8 %v1326
      %v1328 = vlaneseq
      %v1329 = vshrl.u32 %v1328, 7
      %v1330 = vsub.s32 %v1327, %v1329
      %v1331 = vrot.slane %v1317, %v1330
      %v1332 = vcombine.high %v1324, %v1324
      %v1333 = vcombine.high %v1331, %v1331
      %v1335 = vunpack.c.l.s4 1966171168
      %v1336 = vunpack.c.0.s8 %v1335
      %v1337 = vlaneseq
      %v1338 = vshrl.u32 %v1337, 7
      %v1339 = vsub.s32 %v1336, %v1338
      %v1340 = vrot.slane %v1324, %v1339
      %v1342 = vunpack.c.l.s4 1966171168
      %v1343 = vunpack.c.0.s8 %v1342
      %v1344 = vlaneseq
      %v1345 = vshrl.u32 %v1344, 7
      %v1346 = vsub.s32 %v1343, %v1345
      %v1347 = vrot.slane %v1331, %v1346
      %v1349 = vunpack.c.l.s4 1966171168
      %v1350 = vunpack.c.0.s8 %v1349
      %v1351 = vlaneseq
      %v1352 = vshrl.u32 %v1351, 7
      %v1353 = vsub.s32 %v1350, %v1352
      %v1354 = vrot.slane %v1332, %v1353
      %v1356 = vunpack.c.l.s4 1966171168
      %v1357 = vunpack.c.0.s8 %v1356
      %v1358 = vlaneseq
      %v1359 = vshrl.u32 %v1358, 7
      %v1360 = vsub.s32 %v1357, %v1359
      %v1361 = vrot.slane %v1333, %v1360
      %v1362 = vcombine.high %v1340, %v1340
      %v1363 = vcombine.high %v1347, %v1347
      %v1364 = vcombine.high %v1354, %v1354
      %v1365 = vcombine.high %v1361, %v1361
      %v1366 = vcombine.high %v1206, %v1206
      %v1368 = vunpack.c.l.s4 1966171168
      %v1369 = vunpack.c.0.s8 %v1368
      %v1370 = vlaneseq
      %v1371 = vshrl.u32 %v1370, 7
      %v1372 = vsub.s32 %v1369, %v1371
      %v1373 = vrot.slane %v1206, %v1372
      %v1375 = vunpack.c.l.s4 1966171168
      %v1376 = vunpack.c.0.s8 %v1375
      %v1377 = vlaneseq
      %v1378 = vshrl.u32 %v1377, 7
      %v1379 = vsub.s32 %v1376, %v1378
      %v1380 = vrot.slane %v1366, %v1379
      %v1381 = vcombine.high %v1373, %v1373
      %v1382 = vcombine.high %v1380, %v1380
      %v1384 = vunpack.c.l.s4 1966171168
      %v1385 = vunpack.c.0.s8 %v1384
      %v1386 = vlaneseq
      %v1387 = vshrl.u32 %v1386, 7
      %v1388 = vsub.s32 %v1385, %v1387
      %v1389 = vrot.slane %v1373, %v1388
      %v1391 = vunpack.c.l.s4 1966171168
      %v1392 = vunpack.c.0.s8 %v1391
      %v1393 = vlaneseq
      %v1394 = vshrl.u32 %v1393, 7
      %v1395 = vsub.s32 %v1392, %v1394
      %v1396 = vrot.slane %v1380, %v1395
      %v1398 = vunpack.c.l.s4 1966171168
      %v1399 = vunpack.c.0.s8 %v1398
      %v1400 = vlaneseq
      %v1401 = vshrl.u32 %v1400, 7
      %v1402 = vsub.s32 %v1399, %v1401
      %v1403 = vrot.slane %v1381, %v1402
      %v1405 = vunpack.c.l.s4 1966171168
      %v1406 = vunpack.c.0.s8 %v1405
      %v1407 = vlaneseq
      %v1408 = vshrl.u32 %v1407, 7
      %v1409 = vsub.s32 %v1406, %v1408
      %v1410 = vrot.slane %v1382, %v1409
      %v1411 = vcombine.high %v1389, %v1389
      %v1412 = vcombine.high %v1396, %v1396
      %v1413 = vcombine.high %v1403, %v1403
      %v1414 = vcombine.high %v1410, %v1410
      %v1415 = vcombine.high %v1207, %v1207
      %v1417 = vunpack.c.l.s4 1966171168
      %v1418 = vunpack.c.0.s8 %v1417
      %v1419 = vlaneseq
      %v1420 = vshrl.u32 %v1419, 7
      %v1421 = vsub.s32 %v1418, %v1420
      %v1422 = vrot.slane %v1207, %v1421
      %v1424 = vunpack.c.l.s4 1966171168
      %v1425 = vunpack.c.0.s8 %v1424
      %v1426 = vlaneseq
      %v1427 = vshrl.u32 %v1426, 7
      %v1428 = vsub.s32 %v1425, %v1427
      %v1429 = vrot.slane %v1415, %v1428
      %v1430 = vcombine.high %v1422, %v1422
      %v1431 = vcombine.high %v1429, %v1429
      %v1433 = vunpack.c.l.s4 1966171168
      %v1434 = vunpack.c.0.s8 %v1433
      %v1435 = vlaneseq
      %v1436 = vshrl.u32 %v1435, 7
      %v1437 = vsub.s32 %v1434, %v1436
      %v1438 = vrot.slane %v1422, %v1437
      %v1440 = vunpack.c.l.s4 1966171168
      %v1441 = vunpack.c.0.s8 %v1440
      %v1442 = vlaneseq
      %v1443 = vshrl.u32 %v1442, 7
      %v1444 = vsub.s32 %v1441, %v1443
      %v1445 = vrot.slane %v1429, %v1444
      %v1447 = vunpack.c.l.s4 1966171168
      %v1448 = vunpack.c.0.s8 %v1447
      %v1449 = vlaneseq
      %v1450 = vshrl.u32 %v1449, 7
      %v1451 = vsub.s32 %v1448, %v1450
      %v1452 = vrot.slane %v1430, %v1451
      %v1454 = vunpack.c.l.s4 1966171168
      %v1455 = vunpack.c.0.s8 %v1454
      %v1456 = vlaneseq
      %v1457 = vshrl.u32 %v1456, 7
      %v1458 = vsub.s32 %v1455, %v1457
      %v1459 = vrot.slane %v1431, %v1458
      %v1460 = vcombine.high %v1438, %v1438
      %v1461 = vcombine.high %v1445, %v1445
      %v1462 = vcombine.high %v1452, %v1452
      %v1463 = vcombine.high %v1459, %v1459
      %v1464 = vcombine.high %v1208, %v1208
      %v1466 = vunpack.c.l.s4 1966171168
      %v1467 = vunpack.c.0.s8 %v1466
      %v1468 = vlaneseq
      %v1469 = vshrl.u32 %v1468, 7
      %v1470 = vsub.s32 %v1467, %v1469
      %v1471 = vrot.slane %v1208, %v1470
      %v1473 = vunpack.c.l.s4 1966171168
      %v1474 = vunpack.c.0.s8 %v1473
      %v1475 = vlaneseq
      %v1476 = vshrl.u32 %v1475, 7
      %v1477 = vsub.s32 %v1474, %v1476
      %v1478 = vrot.slane %v1464, %v1477
      %v1479 = vcombine.high %v1471, %v1471
      %v1480 = vcombine.high %v1478, %v1478
      %v1482 = vunpack.c.l.s4 1966171168
      %v1483 = vunpack.c.0.s8 %v1482
      %v1484 = vlaneseq
      %v1485 = vshrl.u32 %v1484, 7
      %v1486 = vsub.s32 %v1483, %v1485
      %v1487 = vrot.slane %v1471, %v1486
      %v1489 = vunpack.c.l.s4 1966171168
      %v1490 = vunpack.c.0.s8 %v1489
      %v1491 = vlaneseq
      %v1492 = vshrl.u32 %v1491, 7
      %v1493 = vsub.s32 %v1490, %v1492
      %v1494 = vrot.slane %v1478, %v1493
      %v1496 = vunpack.c.l.s4 1966171168
      %v1497 = vunpack.c.0.s8 %v1496
      %v1498 = vlaneseq
      %v1499 = vshrl.u32 %v1498, 7
      %v1500 = vsub.s32 %v1497, %v1499
      %v1501 = vrot.slane %v1479, %v1500
      %v1503 = vunpack.c.l.s4 1966171168
      %v1504 = vunpack.c.0.s8 %v1503
      %v1505 = vlaneseq
      %v1506 = vshrl.u32 %v1505, 7
      %v1507 = vsub.s32 %v1504, %v1506
      %v1508 = vrot.slane %v1480, %v1507
      %v1509 = vcombine.high %v1487, %v1487
      %v1510 = vcombine.high %v1494, %v1494
      %v1511 = vcombine.high %v1501, %v1501
      %v1512 = vcombine.high %v1508, %v1508
      %v1513 = vcombine.high %v1209, %v1209
      %v1515 = vunpack.c.l.s4 1966171168
      %v1516 = vunpack.c.0.s8 %v1515
      %v1517 = vlaneseq
      %v1518 = vshrl.u32 %v1517, 7
      %v1519 = vsub.s32 %v1516, %v1518
      %v1520 = vrot.slane %v1209, %v1519
      %v1522 = vunpack.c.l.s4 1966171168
      %v1523 = vunpack.c.0.s8 %v1522
      %v1524 = vlaneseq
      %v1525 = vshrl.u32 %v1524, 7
      %v1526 = vsub.s32 %v1523, %v1525
      %v1527 = vrot.slane %v1513, %v1526
      %v1528 = vcombine.high %v1520, %v1520
      %v1529 = vcombine.high %v1527, %v1527
      %v1531 = vunpack.c.l.s4 1966171168
      %v1532 = vunpack.c.0.s8 %v1531
      %v1533 = vlaneseq
      %v1534 = vshrl.u32 %v1533, 7
      %v1535 = vsub.s32 %v1532, %v1534
      %v1536 = vrot.slane %v1520, %v1535
      %v1538 = vunpack.c.l.s4 1966171168
      %v1539 = vunpack.c.0.s8 %v1538
      %v1540 = vlaneseq
      %v1541 = vshrl.u32 %v1540, 7
      %v1542 = vsub.s32 %v1539, %v1541
      %v1543 = vrot.slane %v1527, %v1542
      %v1545 = vunpack.c.l.s4 1966171168
      %v1546 = vunpack.c.0.s8 %v1545
      %v1547 = vlaneseq
      %v1548 = vshrl.u32 %v1547, 7
      %v1549 = vsub.s32 %v1546, %v1548
      %v1550 = vrot.slane %v1528, %v1549
      %v1552 = vunpack.c.l.s4 1966171168
      %v1553 = vunpack.c.0.s8 %v1552
      %v1554 = vlaneseq
      %v1555 = vshrl.u32 %v1554, 7
      %v1556 = vsub.s32 %v1553, %v1555
      %v1557 = vrot.slane %v1529, %v1556
      %v1558 = vcombine.high %v1536, %v1536
      %v1559 = vcombine.high %v1543, %v1543
      %v1560 = vcombine.high %v1550, %v1550
      %v1561 = vcombine.high %v1557, %v1557
      %v1562 = vcombine.high %v1210, %v1210
      %v1564 = vunpack.c.l.s4 1966171168
      %v1565 = vunpack.c.0.s8 %v1564
      %v1566 = vlaneseq
      %v1567 = vshrl.u32 %v1566, 7
      %v1568 = vsub.s32 %v1565, %v1567
      %v1569 = vrot.slane %v1210, %v1568
      %v1571 = vunpack.c.l.s4 1966171168
      %v1572 = vunpack.c.0.s8 %v1571
      %v1573 = vlaneseq
      %v1574 = vshrl.u32 %v1573, 7
      %v1575 = vsub.s32 %v1572, %v1574
      %v1576 = vrot.slane %v1562, %v1575
      %v1577 = vcombine.high %v1569, %v1569
      %v1578 = vcombine.high %v1576, %v1576
      %v1580 = vunpack.c.l.s4 1966171168
      %v1581 = vunpack.c.0.s8 %v1580
      %v1582 = vlaneseq
      %v1583 = vshrl.u32 %v1582, 7
      %v1584 = vsub.s32 %v1581, %v1583
      %v1585 = vrot.slane %v1569, %v1584
      %v1587 = vunpack.c.l.s4 1966171168
      %v1588 = vunpack.c.0.s8 %v1587
      %v1589 = vlaneseq
      %v1590 = vshrl.u32 %v1589, 7
      %v1591 = vsub.s32 %v1588, %v1590
      %v1592 = vrot.slane %v1576, %v1591
      %v1594 = vunpack.c.l.s4 1966171168
      %v1595 = vunpack.c.0.s8 %v1594
      %v1596 = vlaneseq
      %v1597 = vshrl.u32 %v1596, 7
      %v1598 = vsub.s32 %v1595, %v1597
      %v1599 = vrot.slane %v1577, %v1598
      %v1601 = vunpack.c.l.s4 1966171168
      %v1602 = vunpack.c.0.s8 %v1601
      %v1603 = vlaneseq
      %v1604 = vshrl.u32 %v1603, 7
      %v1605 = vsub.s32 %v1602, %v1604
      %v1606 = vrot.slane %v1578, %v1605
      %v1607 = vcombine.high %v1585, %v1585
      %v1608 = vcombine.high %v1592, %v1592
      %v1609 = vcombine.high %v1599, %v1599
      %v1610 = vcombine.high %v1606, %v1606
      %v1675 = vlaneseq
      %v1676 = vshrl.u32 %v1675, 7
      %v1677 = vsub.s32 0, %v1676
      %v1678 = vrot.slane %v1242, %v1677
      %v1679 = vlaneseq
      %v1680 = vshrl.u32 %v1679, 7
      %v1681 = vsub.s32 0, %v1680
      %v1682 = vrot.slane %v1256, %v1681
      %v1683 = vlaneseq
      %v1684 = vshrl.u32 %v1683, 7
      %v1685 = vsub.s32 0, %v1684
      %v1686 = vrot.slane %v1264, %v1685
      %v1687 = vlaneseq
      %v1688 = vshrl.u32 %v1687, 7
      %v1689 = vsub.s32 0, %v1688
      %v1690 = vrot.slane %v1266, %v1689
      %v1691 = vlaneseq
      %v1692 = vshrl.u32 %v1691, 7
      %v1693 = vsub.s32 0, %v1692
      %v1694 = vrot.slane %v1249, %v1693
      %v1695 = vlaneseq
      %v1696 = vshrl.u32 %v1695, 7
      %v1697 = vsub.s32 0, %v1696
      %v1698 = vrot.slane %v1263, %v1697
      %v1699 = vlaneseq
      %v1700 = vshrl.u32 %v1699, 7
      %v1701 = vsub.s32 0, %v1700
      %v1702 = vrot.slane %v1265, %v1701
      %v1703 = vlaneseq
      %v1704 = vshrl.u32 %v1703, 7
      %v1705 = vsub.s32 0, %v1704
      %v1706 = vrot.slane %v1267, %v1705
      %v1707 = vlaneseq
      %v1708 = vshrl.u32 %v1707, 7
      %v1709 = vsub.s32 0, %v1708
      %v1710 = vrot.slane %v1291, %v1709
      %v1711 = vlaneseq
      %v1712 = vshrl.u32 %v1711, 7
      %v1713 = vsub.s32 0, %v1712
      %v1714 = vrot.slane %v1305, %v1713
      %v1715 = vlaneseq
      %v1716 = vshrl.u32 %v1715, 7
      %v1717 = vsub.s32 0, %v1716
      %v1718 = vrot.slane %v1313, %v1717
      %v1719 = vlaneseq
      %v1720 = vshrl.u32 %v1719, 7
      %v1721 = vsub.s32 0, %v1720
      %v1722 = vrot.slane %v1315, %v1721
      %v1723 = vlaneseq
      %v1724 = vshrl.u32 %v1723, 7
      %v1725 = vsub.s32 0, %v1724
      %v1726 = vrot.slane %v1298, %v1725
      %v1727 = vlaneseq
      %v1728 = vshrl.u32 %v1727, 7
      %v1729 = vsub.s32 0, %v1728
      %v1730 = vrot.slane %v1312, %v1729
      %v1731 = vlaneseq
      %v1732 = vshrl.u32 %v1731, 7
      %v1733 = vsub.s32 0, %v1732
      %v1734 = vrot.slane %v1314, %v1733
      %v1735 = vlaneseq
      %v1736 = vshrl.u32 %v1735, 7
      %v1737 = vsub.s32 0, %v1736
      %v1738 = vrot.slane %v1316, %v1737
      %v1739 = vlaneseq
      %v1740 = vshrl.u32 %v1739, 7
      %v1741 = vsub.s32 0, %v1740
      %v1742 = vrot.slane %v1340, %v1741
      %v1743 = vlaneseq
      %v1744 = vshrl.u32 %v1743, 7
      %v1745 = vsub.s32 0, %v1744
      %v1746 = vrot.slane %v1354, %v1745
      %v1747 = vlaneseq
      %v1748 = vshrl.u32 %v1747, 7
      %v1749 = vsub.s32 0, %v1748
      %v1750 = vrot.slane %v1362, %v1749
      %v1751 = vlaneseq
      %v1752 = vshrl.u32 %v1751, 7
      %v1753 = vsub.s32 0, %v1752
      %v1754 = vrot.slane %v1364, %v1753
      %v1755 = vlaneseq
      %v1756 = vshrl.u32 %v1755, 7
      %v1757 = vsub.s32 0, %v1756
      %v1758 = vrot.slane %v1347, %v1757
      %v1759 = vlaneseq
      %v1760 = vshrl.u32 %v1759, 7
      %v1761 = vsub.s32 0, %v1760
      %v1762 = vrot.slane %v1361, %v1761
      %v1763 = vlaneseq
      %v1764 = vshrl.u32 %v1763, 7
      %v1765 = vsub.s32 0, %v1764
      %v1766 = vrot.slane %v1363, %v1765
      %v1767 = vlaneseq
      %v1768 = vshrl.u32 %v1767, 7
      %v1769 = vsub.s32 0, %v1768
      %v1770 = vrot.slane %v1365, %v1769
      %v1771 = vlaneseq
      %v1772 = vshrl.u32 %v1771, 7
      %v1773 = vsub.s32 0, %v1772
      %v1774 = vrot.slane %v1389, %v1773
      %v1775 = vlaneseq
      %v1776 = vshrl.u32 %v1775, 7
      %v1777 = vsub.s32 0, %v1776
      %v1778 = vrot.slane %v1403, %v1777
      %v1779 = vlaneseq
      %v1780 = vshrl.u32 %v1779, 7
      %v1781 = vsub.s32 0, %v1780
      %v1782 = vrot.slane %v1411, %v1781
      %v1783 = vlaneseq
      %v1784 = vshrl.u32 %v1783, 7
      %v1785 = vsub.s32 0, %v1784
      %v1786 = vrot.slane %v1413, %v1785
      %v1787 = vlaneseq
      %v1788 = vshrl.u32 %v1787, 7
      %v1789 = vsub.s32 0, %v1788
      %v1790 = vrot.slane %v1396, %v1789
      %v1791 = vlaneseq
      %v1792 = vshrl.u32 %v1791, 7
      %v1793 = vsub.s32 0, %v1792
      %v1794 = vrot.slane %v1410, %v1793
      %v1795 = vlaneseq
      %v1796 = vshrl.u32 %v1795, 7
      %v1797 = vsub.s32 0, %v1796
      %v1798 = vrot.slane %v1412, %v1797
      %v1799 = vlaneseq
      %v1800 = vshrl.u32 %v1799, 7
      %v1801 = vsub.s32 0, %v1800
      %v1802 = vrot.slane %v1414, %v1801
      %v1803 = vlaneseq
      %v1804 = vshrl.u32 %v1803, 7
      %v1805 = vsub.s32 0, %v1804
      %v1806 = vrot.slane %v1438, %v1805
      %v1807 = vlaneseq
      %v1808 = vshrl.u32 %v1807, 7
      %v1809 = vsub.s32 0, %v1808
      %v1810 = vrot.slane %v1452, %v1809
      %v1811 = vlaneseq
      %v1812 = vshrl.u32 %v1811, 7
      %v1813 = vsub.s32 0, %v1812
      %v1814 = vrot.slane %v1460, %v1813
      %v1815 = vlaneseq
      %v1816 = vshrl.u32 %v1815, 7
      %v1817 = vsub.s32 0, %v1816
      %v1818 = vrot.slane %v1462, %v1817
      %v1819 = vlaneseq
      %v1820 = vshrl.u32 %v1819, 7
      %v1821 = vsub.s32 0, %v1820
      %v1822 = vrot.slane %v1445, %v1821
      %v1823 = vlaneseq
      %v1824 = vshrl.u32 %v1823, 7
      %v1825 = vsub.s32 0, %v1824
      %v1826 = vrot.slane %v1459, %v1825
      %v1827 = vlaneseq
      %v1828 = vshrl.u32 %v1827, 7
      %v1829 = vsub.s32 0, %v1828
      %v1830 = vrot.slane %v1461, %v1829
      %v1831 = vlaneseq
      %v1832 = vshrl.u32 %v1831, 7
      %v1833 = vsub.s32 0, %v1832
      %v1834 = vrot.slane %v1463, %v1833
      %v1835 = vlaneseq
      %v1836 = vshrl.u32 %v1835, 7
      %v1837 = vsub.s32 0, %v1836
      %v1838 = vrot.slane %v1487, %v1837
      %v1839 = vlaneseq
      %v1840 = vshrl.u32 %v1839, 7
      %v1841 = vsub.s32 0, %v1840
      %v1842 = vrot.slane %v1501, %v1841
      %v1843 = vlaneseq
      %v1844 = vshrl.u32 %v1843, 7
      %v1845 = vsub.s32 0, %v1844
      %v1846 = vrot.slane %v1509, %v1845
      %v1847 = vlaneseq
      %v1848 = vshrl.u32 %v1847, 7
      %v1849 = vsub.s32 0, %v1848
      %v1850 = vrot.slane %v1511, %v1849
      %v1851 = vlaneseq
      %v1852 = vshrl.u32 %v1851, 7
      %v1853 = vsub.s32 0, %v1852
      %v1854 = vrot.slane %v1494, %v1853
      %v1855 = vlaneseq
      %v1856 = vshrl.u32 %v1855, 7
      %v1857 = vsub.s32 0, %v1856
      %v1858 = vrot.slane %v1508, %v1857
      %v1859 = vlaneseq
      %v1860 = vshrl.u32 %v1859, 7
      %v1861 = vsub.s32 0, %v1860
      %v1862 = vrot.slane %v1510, %v1861
      %v1863 = vlaneseq
      %v1864 = vshrl.u32 %v1863, 7
      %v1865 = vsub.s32 0, %v1864
      %v1866 = vrot.slane %v1512, %v1865
      %v1867 = vlaneseq
      %v1868 = vshrl.u32 %v1867, 7
      %v1869 = vsub.s32 0, %v1868
      %v1870 = vrot.slane %v1536, %v1869
      %v1871 = vlaneseq
      %v1872 = vshrl.u32 %v1871, 7
      %v1873 = vsub.s32 0, %v1872
      %v1874 = vrot.slane %v1550, %v1873
      %v1875 = vlaneseq
      %v1876 = vshrl.u32 %v1875, 7
      %v1877 = vsub.s32 0, %v1876
      %v1878 = vrot.slane %v1558, %v1877
      %v1879 = vlaneseq
      %v1880 = vshrl.u32 %v1879, 7
      %v1881 = vsub.s32 0, %v1880
      %v1882 = vrot.slane %v1560, %v1881
      %v1883 = vlaneseq
      %v1884 = vshrl.u32 %v1883, 7
      %v1885 = vsub.s32 0, %v1884
      %v1886 = vrot.slane %v1543, %v1885
      %v1887 = vlaneseq
      %v1888 = vshrl.u32 %v1887, 7
      %v1889 = vsub.s32 0, %v1888
      %v1890 = vrot.slane %v1557, %v1889
      %v1891 = vlaneseq
      %v1892 = vshrl.u32 %v1891, 7
      %v1893 = vsub.s32 0, %v1892
      %v1894 = vrot.slane %v1559, %v1893
      %v1895 = vlaneseq
      %v1896 = vshrl.u32 %v1895, 7
      %v1897 = vsub.s32 0, %v1896
      %v1898 = vrot.slane %v1561, %v1897
      %v1899 = vlaneseq
      %v1900 = vshrl.u32 %v1899, 7
      %v1901 = vsub.s32 0, %v1900
      %v1902 = vrot.slane %v1585, %v1901
      %v1903 = vlaneseq
      %v1904 = vshrl.u32 %v1903, 7
      %v1905 = vsub.s32 0, %v1904
      %v1906 = vrot.slane %v1599, %v1905
      %v1907 = vlaneseq
      %v1908 = vshrl.u32 %v1907, 7
      %v1909 = vsub.s32 0, %v1908
      %v1910 = vrot.slane %v1607, %v1909
      %v1911 = vlaneseq
      %v1912 = vshrl.u32 %v1911, 7
      %v1913 = vsub.s32 0, %v1912
      %v1914 = vrot.slane %v1609, %v1913
      %v1915 = vlaneseq
      %v1916 = vshrl.u32 %v1915, 7
      %v1917 = vsub.s32 0, %v1916
      %v1918 = vrot.slane %v1592, %v1917
      %v1919 = vlaneseq
      %v1920 = vshrl.u32 %v1919, 7
      %v1921 = vsub.s32 0, %v1920
      %v1922 = vrot.slane %v1606, %v1921
      %v1923 = vlaneseq
      %v1924 = vshrl.u32 %v1923, 7
      %v1925 = vsub.s32 0, %v1924
      %v1926 = vrot.slane %v1608, %v1925
      %v1927 = vlaneseq
      %v1928 = vshrl.u32 %v1927, 7
      %v1929 = vsub.s32 0, %v1928
      %v1930 = vrot.slane %v1610, %v1929
      %1931 = vrot.lane.b32.xlu0 %v1678, 124
      %v1932 = vpop.permute.xlu0 %1931
      %1933 = vrot.lane.b32.xlu0 %v1682, 124
      %v1934 = vpop.permute.xlu0 %1933
      %1935 = vrot.lane.b32.xlu0 %v1686, 124
      %v1936 = vpop.permute.xlu0 %1935
      %1937 = vrot.lane.b32.xlu0 %v1690, 124
      %v1938 = vpop.permute.xlu0 %1937
      %1939 = vrot.lane.b32.xlu0 %v1694, 124
      %v1940 = vpop.permute.xlu0 %1939
      %1941 = vrot.lane.b32.xlu0 %v1698, 124
      %v1942 = vpop.permute.xlu0 %1941
      %1943 = vrot.lane.b32.xlu0 %v1702, 124
      %v1944 = vpop.permute.xlu0 %1943
      %1945 = vrot.lane.b32.xlu0 %v1706, 124
      %v1946 = vpop.permute.xlu0 %1945
      %1947 = vrot.lane.b32.xlu0 %v1710, 124
      %v1948 = vpop.permute.xlu0 %1947
      %1949 = vrot.lane.b32.xlu0 %v1714, 124
      %v1950 = vpop.permute.xlu0 %1949
      %1951 = vrot.lane.b32.xlu0 %v1718, 124
      %v1952 = vpop.permute.xlu0 %1951
      %1953 = vrot.lane.b32.xlu0 %v1722, 124
      %v1954 = vpop.permute.xlu0 %1953
      %1955 = vrot.lane.b32.xlu0 %v1726, 124
      %v1956 = vpop.permute.xlu0 %1955
      %1957 = vrot.lane.b32.xlu0 %v1730, 124
      %v1958 = vpop.permute.xlu0 %1957
      %1959 = vrot.lane.b32.xlu0 %v1734, 124
      %v1960 = vpop.permute.xlu0 %1959
      %1961 = vrot.lane.b32.xlu0 %v1738, 124
      %v1962 = vpop.permute.xlu0 %1961
      %1963 = vrot.lane.b32.xlu0 %v1742, 124
      %v1964 = vpop.permute.xlu0 %1963
      %1965 = vrot.lane.b32.xlu0 %v1746, 124
      %v1966 = vpop.permute.xlu0 %1965
      %1967 = vrot.lane.b32.xlu0 %v1750, 124
      %v1968 = vpop.permute.xlu0 %1967
      %1969 = vrot.lane.b32.xlu0 %v1754, 124
      %v1970 = vpop.permute.xlu0 %1969
      %1971 = vrot.lane.b32.xlu0 %v1758, 124
      %v1972 = vpop.permute.xlu0 %1971
      %1973 = vrot.lane.b32.xlu0 %v1762, 124
      %v1974 = vpop.permute.xlu0 %1973
      %1975 = vrot.lane.b32.xlu0 %v1766, 124
      %v1976 = vpop.permute.xlu0 %1975
      %1977 = vrot.lane.b32.xlu0 %v1770, 124
      %v1978 = vpop.permute.xlu0 %1977
      %1979 = vrot.lane.b32.xlu0 %v1774, 124
      %v1980 = vpop.permute.xlu0 %1979
      %1981 = vrot.lane.b32.xlu0 %v1778, 124
      %v1982 = vpop.permute.xlu0 %1981
      %1983 = vrot.lane.b32.xlu0 %v1782, 124
      %v1984 = vpop.permute.xlu0 %1983
      %1985 = vrot.lane.b32.xlu0 %v1786, 124
      %v1986 = vpop.permute.xlu0 %1985
      %1987 = vrot.lane.b32.xlu0 %v1790, 124
      %v1988 = vpop.permute.xlu0 %1987
      %1989 = vrot.lane.b32.xlu0 %v1794, 124
      %v1990 = vpop.permute.xlu0 %1989
      %1991 = vrot.lane.b32.xlu0 %v1798, 124
      %v1992 = vpop.permute.xlu0 %1991
      %1993 = vrot.lane.b32.xlu0 %v1802, 124
      %v1994 = vpop.permute.xlu0 %1993
      %1995 = vrot.lane.b32.xlu0 %v1806, 124
      %v1996 = vpop.permute.xlu0 %1995
      %1997 = vrot.lane.b32.xlu0 %v1810, 124
      %v1998 = vpop.permute.xlu0 %1997
      %1999 = vrot.lane.b32.xlu0 %v1814, 124
      %v2000 = vpop.permute.xlu0 %1999
      %2001 = vrot.lane.b32.xlu0 %v1818, 124
      %v2002 = vpop.permute.xlu0 %2001
      %2003 = vrot.lane.b32.xlu0 %v1822, 124
      %v2004 = vpop.permute.xlu0 %2003
      %2005 = vrot.lane.b32.xlu0 %v1826, 124
      %v2006 = vpop.permute.xlu0 %2005
      %2007 = vrot.lane.b32.xlu0 %v1830, 124
      %v2008 = vpop.permute.xlu0 %2007
      %2009 = vrot.lane.b32.xlu0 %v1834, 124
      %v2010 = vpop.permute.xlu0 %2009
      %2011 = vrot.lane.b32.xlu0 %v1838, 124
      %v2012 = vpop.permute.xlu0 %2011
      %2013 = vrot.lane.b32.xlu0 %v1842, 124
      %v2014 = vpop.permute.xlu0 %2013
      %2015 = vrot.lane.b32.xlu0 %v1846, 124
      %v2016 = vpop.permute.xlu0 %2015
      %2017 = vrot.lane.b32.xlu0 %v1850, 124
      %v2018 = vpop.permute.xlu0 %2017
      %2019 = vrot.lane.b32.xlu0 %v1854, 124
      %v2020 = vpop.permute.xlu0 %2019
      %2021 = vrot.lane.b32.xlu0 %v1858, 124
      %v2022 = vpop.permute.xlu0 %2021
      %2023 = vrot.lane.b32.xlu0 %v1862, 124
      %v2024 = vpop.permute.xlu0 %2023
      %2025 = vrot.lane.b32.xlu0 %v1866, 124
      %v2026 = vpop.permute.xlu0 %2025
      %2027 = vrot.lane.b32.xlu0 %v1870, 124
      %v2028 = vpop.permute.xlu0 %2027
      %2029 = vrot.lane.b32.xlu0 %v1874, 124
      %v2030 = vpop.permute.xlu0 %2029
      %2031 = vrot.lane.b32.xlu0 %v1878, 124
      %v2032 = vpop.permute.xlu0 %2031
      %2033 = vrot.lane.b32.xlu0 %v1882, 124
      %v2034 = vpop.permute.xlu0 %2033
      %2035 = vrot.lane.b32.xlu0 %v1886, 124
      %v2036 = vpop.permute.xlu0 %2035
      %2037 = vrot.lane.b32.xlu0 %v1890, 124
      %v2038 = vpop.permute.xlu0 %2037
      %2039 = vrot.lane.b32.xlu0 %v1894, 124
      %v2040 = vpop.permute.xlu0 %2039
      %2041 = vrot.lane.b32.xlu0 %v1898, 124
      %v2042 = vpop.permute.xlu0 %2041
      %2043 = vrot.lane.b32.xlu0 %v1902, 124
      %v2044 = vpop.permute.xlu0 %2043
      %2045 = vrot.lane.b32.xlu0 %v1906, 124
      %v2046 = vpop.permute.xlu0 %2045
      %2047 = vrot.lane.b32.xlu0 %v1910, 124
      %v2048 = vpop.permute.xlu0 %2047
      %2049 = vrot.lane.b32.xlu0 %v1914, 124
      %v2050 = vpop.permute.xlu0 %2049
      %2051 = vrot.lane.b32.xlu0 %v1918, 124
      %v2052 = vpop.permute.xlu0 %2051
      %2053 = vrot.lane.b32.xlu0 %v1922, 124
      %v2054 = vpop.permute.xlu0 %2053
      %2055 = vrot.lane.b32.xlu0 %v1926, 124
      %v2056 = vpop.permute.xlu0 %2055
      %2057 = vrot.lane.b32.xlu0 %v1930, 124
      %v2058 = vpop.permute.xlu0 %2057
      %vm2123 = vcmask 1040384
      %v2124 = vsel %vm2123, %v1242, %v1932
      %v2125 = vsel %vm2123, %v1256, %v1934
      %v2126 = vsel %vm2123, %v1264, %v1936
      %v2127 = vsel %vm2123, %v1266, %v1938
      %v2128 = vsel %vm2123, %v1249, %v1940
      %v2129 = vsel %vm2123, %v1263, %v1942
      %v2130 = vsel %vm2123, %v1265, %v1944
      %v2131 = vsel %vm2123, %v1267, %v1946
      %v2132 = vsel %vm2123, %v1291, %v1948
      %v2133 = vsel %vm2123, %v1305, %v1950
      %v2134 = vsel %vm2123, %v1313, %v1952
      %v2135 = vsel %vm2123, %v1315, %v1954
      %v2136 = vsel %vm2123, %v1298, %v1956
      %v2137 = vsel %vm2123, %v1312, %v1958
      %v2138 = vsel %vm2123, %v1314, %v1960
      %v2139 = vsel %vm2123, %v1316, %v1962
      %v2140 = vsel %vm2123, %v1340, %v1964
      %v2141 = vsel %vm2123, %v1354, %v1966
      %v2142 = vsel %vm2123, %v1362, %v1968
      %v2143 = vsel %vm2123, %v1364, %v1970
      %v2144 = vsel %vm2123, %v1347, %v1972
      %v2145 = vsel %vm2123, %v1361, %v1974
      %v2146 = vsel %vm2123, %v1363, %v1976
      %v2147 = vsel %vm2123, %v1365, %v1978
      %v2148 = vsel %vm2123, %v1389, %v1980
      %v2149 = vsel %vm2123, %v1403, %v1982
      %v2150 = vsel %vm2123, %v1411, %v1984
      %v2151 = vsel %vm2123, %v1413, %v1986
      %v2152 = vsel %vm2123, %v1396, %v1988
      %v2153 = vsel %vm2123, %v1410, %v1990
      %v2154 = vsel %vm2123, %v1412, %v1992
      %v2155 = vsel %vm2123, %v1414, %v1994
      %v2156 = vsel %vm2123, %v1438, %v1996
      %v2157 = vsel %vm2123, %v1452, %v1998
      %v2158 = vsel %vm2123, %v1460, %v2000
      %v2159 = vsel %vm2123, %v1462, %v2002
      %v2160 = vsel %vm2123, %v1445, %v2004
      %v2161 = vsel %vm2123, %v1459, %v2006
      %v2162 = vsel %vm2123, %v1461, %v2008
      %v2163 = vsel %vm2123, %v1463, %v2010
      %v2164 = vsel %vm2123, %v1487, %v2012
      %v2165 = vsel %vm2123, %v1501, %v2014
      %v2166 = vsel %vm2123, %v1509, %v2016
      %v2167 = vsel %vm2123, %v1511, %v2018
      %v2168 = vsel %vm2123, %v1494, %v2020
      %v2169 = vsel %vm2123, %v1508, %v2022
      %v2170 = vsel %vm2123, %v1510, %v2024
      %v2171 = vsel %vm2123, %v1512, %v2026
      %v2172 = vsel %vm2123, %v1536, %v2028
      %v2173 = vsel %vm2123, %v1550, %v2030
      %v2174 = vsel %vm2123, %v1558, %v2032
      %v2175 = vsel %vm2123, %v1560, %v2034
      %v2176 = vsel %vm2123, %v1543, %v2036
      %v2177 = vsel %vm2123, %v1557, %v2038
      %v2178 = vsel %vm2123, %v1559, %v2040
      %v2179 = vsel %vm2123, %v1561, %v2042
      %v2180 = vsel %vm2123, %v1585, %v2044
      %v2181 = vsel %vm2123, %v1599, %v2046
      %v2182 = vsel %vm2123, %v1607, %v2048
      %v2183 = vsel %vm2123, %v1609, %v2050
      %v2184 = vsel %vm2123, %v1592, %v2052
      %v2185 = vsel %vm2123, %v1606, %v2054
      %v2186 = vsel %vm2123, %v1608, %v2056
      %v2187 = vsel %vm2123, %v1610, %v2058
      %s2188 = scalar_lea.vmem %s2, 16
      %v2189 = vld [vmem:[%s2188] sm:$0xf]
      %v2190 = vld [vmem:[%s2188 + $0x4] sm:$0xf]
      %v2191 = vld [vmem:[%s2188 + $0x8] sm:$0xf]
      %v2192 = vld [vmem:[%s2188 + $0xc] sm:$0xf]
      %v2197 = vunpack.c.l.b16 %v2189
      %v2198 = vunpack.c.l.b16 %v2190
      %v2199 = vunpack.c.l.b16 %v2191
      %v2200 = vunpack.c.l.b16 %v2192
      %v2201 = vpack.c.b16 %v2198, %v2197
      %v2202 = vpack.c.b16 %v2200, %v2199
      %2205 = vmatprep.subr.bf16.mxu0 0
      %2206 = vmatpush1.bf16.msra.mxu0 0
      %2207 = vmatprep.subr.bf16.mxu0 0
      %2208 = vmatpush1.bf16.msra.mxu0 0
      %2209 = vmatprep.subr.bf16.mxu0 0
      %2210 = vmatpush1.bf16.msra.mxu0 0
      %2211 = vmatprep.subr.bf16.mxu0 0
      %2212 = vmatpush1.bf16.msra.mxu0 0
      %2213 = vmatprep.subr.bf16.mxu0 0
      %2214 = vmatpush1.bf16.msra.mxu0 0
      %2215 = vmatprep.subr.bf16.mxu0 0
      %2216 = vmatpush1.bf16.msra.mxu0 0
      %2217 = vmatprep.subr.bf16.mxu0 0
      %2218 = vmatpush1.bf16.msra.mxu0 %v2202
      %2219 = vmatprep.subr.bf16.mxu0 0
      %2220 = vmatpush1.bf16.msra.mxu0 %v2201
      %2221 = vmatprep.subr.bf16.mxu0 0
      %2222 = vmatpush2.bf16.msra.mxu0 0
      %2223 = vmatprep.subr.bf16.mxu0 0
      %2224 = vmatpush2.bf16.msra.mxu0 0
      %2225 = vmatprep.subr.bf16.mxu0 0
      %2226 = vmatpush2.bf16.msra.mxu0 0
      %2227 = vmatprep.subr.bf16.mxu0 0
      %2228 = vmatpush2.bf16.msra.mxu0 0
      %2229 = vmatprep.subr.bf16.mxu0 0
      %2230 = vmatpush2.bf16.msra.mxu0 0
      %2231 = vmatprep.subr.bf16.mxu0 0
      %2232 = vmatpush2.bf16.msra.mxu0 0
      %2233 = vmatprep.subr.bf16.mxu0 0
      %2234 = vmatpush2.bf16.msra.mxu0 0
      %2235 = vmatprep.subr.bf16.mxu0 0
      %2236 = vmatpush2.bf16.msra.mxu0 0
      %2237 = vmatprep.mubr.bf16.mxu0 0
      %2238 = vmatmul.mubr.bf16.gmra.mxu0 %v1100
      %v2239 = vpop.f32.mrf.mxu0
      %v2240 = vadd.f32 0.0, %v2239
      %v2241 = vpop.f32.mrf.mxu0
      %v2242 = vpop.f32.mrf.mxu0
      %v2243 = vadd.f32 0.0, %v2242
      %v2244 = vpop.f32.mrf.mxu0
      %2245 = vmatprep.mubr.bf16.mxu0 0
      %2246 = vmatmul.mubr.bf16.gmra.mxu0 %v1102
      %v2247 = vpop.f32.mrf.mxu0
      %v2248 = vadd.f32 0.0, %v2247
      %v2249 = vpop.f32.mrf.mxu0
      %v2250 = vpop.f32.mrf.mxu0
      %v2251 = vadd.f32 0.0, %v2250
      %v2252 = vpop.f32.mrf.mxu0
      %2253 = vmatprep.mubr.bf16.mxu0 0
      %2254 = vmatmul.mubr.bf16.gmra.mxu0 %v1104
      %v2255 = vpop.f32.mrf.mxu0
      %v2256 = vadd.f32 0.0, %v2255
      %v2257 = vpop.f32.mrf.mxu0
      %v2258 = vpop.f32.mrf.mxu0
      %v2259 = vadd.f32 0.0, %v2258
      %v2260 = vpop.f32.mrf.mxu0
      %2261 = vmatprep.mubr.bf16.mxu0 0
      %2262 = vmatmul.mubr.bf16.gmra.mxu0 %v1106
      %v2263 = vpop.f32.mrf.mxu0
      %v2264 = vadd.f32 0.0, %v2263
      %v2265 = vpop.f32.mrf.mxu0
      %v2266 = vpop.f32.mrf.mxu0
      %v2267 = vadd.f32 0.0, %v2266
      %v2268 = vpop.f32.mrf.mxu0
      %2269 = vdwg.mxu0
      %v2270 = vmul.f32 %v2240, %v1178
      %v2271 = vmul.f32 %v2243, %v1178
      %v2272 = vmul.f32 %v2248, %v1178
      %v2273 = vmul.f32 %v2251, %v1178
      %v2274 = vmul.f32 %v2256, %v1178
      %v2275 = vmul.f32 %v2259, %v1178
      %v2276 = vmul.f32 %v2264, %v1178
      %v2277 = vmul.f32 %v2267, %v1178
      %v2278 = vadd.f32 %v2270, %v1193
      %v2279 = vadd.f32 %v2271, %v1193
      %v2280 = vadd.f32 %v2272, %v1193
      %v2281 = vadd.f32 %v2273, %v1193
      %v2282 = vadd.f32 %v2274, %v1193
      %v2283 = vadd.f32 %v2275, %v1193
      %v2284 = vadd.f32 %v2276, %v1193
      %v2285 = vadd.f32 %v2277, %v1193
      %v2286 = vmax.f32 %v2278, 0.0
      %v2287 = vmax.f32 %v2279, 0.0
      %v2288 = vmax.f32 %v2280, 0.0
      %v2289 = vmax.f32 %v2281, 0.0
      %v2290 = vmax.f32 %v2282, 0.0
      %v2291 = vmax.f32 %v2283, 0.0
      %v2292 = vmax.f32 %v2284, 0.0
      %v2293 = vmax.f32 %v2285, 0.0
      %v2302 = vcombine.high %v2286, %v2286
      %v2304 = vunpack.c.l.s4 1966171168
      %v2305 = vunpack.c.0.s8 %v2304
      %v2306 = vlaneseq
      %v2307 = vshrl.u32 %v2306, 7
      %v2308 = vsub.s32 %v2305, %v2307
      %v2309 = vrot.slane %v2286, %v2308
      %v2311 = vunpack.c.l.s4 1966171168
      %v2312 = vunpack.c.0.s8 %v2311
      %v2313 = vlaneseq
      %v2314 = vshrl.u32 %v2313, 7
      %v2315 = vsub.s32 %v2312, %v2314
      %v2316 = vrot.slane %v2302, %v2315
      %v2317 = vcombine.high %v2309, %v2309
      %v2318 = vcombine.high %v2316, %v2316
      %v2320 = vunpack.c.l.s4 1966171168
      %v2321 = vunpack.c.0.s8 %v2320
      %v2322 = vlaneseq
      %v2323 = vshrl.u32 %v2322, 7
      %v2324 = vsub.s32 %v2321, %v2323
      %v2325 = vrot.slane %v2309, %v2324
      %v2327 = vunpack.c.l.s4 1966171168
      %v2328 = vunpack.c.0.s8 %v2327
      %v2329 = vlaneseq
      %v2330 = vshrl.u32 %v2329, 7
      %v2331 = vsub.s32 %v2328, %v2330
      %v2332 = vrot.slane %v2316, %v2331
      %v2334 = vunpack.c.l.s4 1966171168
      %v2335 = vunpack.c.0.s8 %v2334
      %v2336 = vlaneseq
      %v2337 = vshrl.u32 %v2336, 7
      %v2338 = vsub.s32 %v2335, %v2337
      %v2339 = vrot.slane %v2317, %v2338
      %v2341 = vunpack.c.l.s4 1966171168
      %v2342 = vunpack.c.0.s8 %v2341
      %v2343 = vlaneseq
      %v2344 = vshrl.u32 %v2343, 7
      %v2345 = vsub.s32 %v2342, %v2344
      %v2346 = vrot.slane %v2318, %v2345
      %v2347 = vcombine.high %v2325, %v2325
      %v2348 = vcombine.high %v2332, %v2332
      %v2349 = vcombine.high %v2339, %v2339
      %v2350 = vcombine.high %v2346, %v2346
      %v2351 = vcombine.high %v2287, %v2287
      %v2353 = vunpack.c.l.s4 1966171168
      %v2354 = vunpack.c.0.s8 %v2353
      %v2355 = vlaneseq
      %v2356 = vshrl.u32 %v2355, 7
      %v2357 = vsub.s32 %v2354, %v2356
      %v2358 = vrot.slane %v2287, %v2357
      %v2360 = vunpack.c.l.s4 1966171168
      %v2361 = vunpack.c.0.s8 %v2360
      %v2362 = vlaneseq
      %v2363 = vshrl.u32 %v2362, 7
      %v2364 = vsub.s32 %v2361, %v2363
      %v2365 = vrot.slane %v2351, %v2364
      %v2366 = vcombine.high %v2358, %v2358
      %v2367 = vcombine.high %v2365, %v2365
      %v2369 = vunpack.c.l.s4 1966171168
      %v2370 = vunpack.c.0.s8 %v2369
      %v2371 = vlaneseq
      %v2372 = vshrl.u32 %v2371, 7
      %v2373 = vsub.s32 %v2370, %v2372
      %v2374 = vrot.slane %v2358, %v2373
      %v2376 = vunpack.c.l.s4 1966171168
      %v2377 = vunpack.c.0.s8 %v2376
      %v2378 = vlaneseq
      %v2379 = vshrl.u32 %v2378, 7
      %v2380 = vsub.s32 %v2377, %v2379
      %v2381 = vrot.slane %v2365, %v2380
      %v2383 = vunpack.c.l.s4 1966171168
      %v2384 = vunpack.c.0.s8 %v2383
      %v2385 = vlaneseq
      %v2386 = vshrl.u32 %v2385, 7
      %v2387 = vsub.s32 %v2384, %v2386
      %v2388 = vrot.slane %v2366, %v2387
      %v2390 = vunpack.c.l.s4 1966171168
      %v2391 = vunpack.c.0.s8 %v2390
      %v2392 = vlaneseq
      %v2393 = vshrl.u32 %v2392, 7
      %v2394 = vsub.s32 %v2391, %v2393
      %v2395 = vrot.slane %v2367, %v2394
      %v2396 = vcombine.high %v2374, %v2374
      %v2397 = vcombine.high %v2381, %v2381
      %v2398 = vcombine.high %v2388, %v2388
      %v2399 = vcombine.high %v2395, %v2395
      %v2400 = vcombine.high %v2288, %v2288
      %v2402 = vunpack.c.l.s4 1966171168
      %v2403 = vunpack.c.0.s8 %v2402
      %v2404 = vlaneseq
      %v2405 = vshrl.u32 %v2404, 7
      %v2406 = vsub.s32 %v2403, %v2405
      %v2407 = vrot.slane %v2288, %v2406
      %v2409 = vunpack.c.l.s4 1966171168
      %v2410 = vunpack.c.0.s8 %v2409
      %v2411 = vlaneseq
      %v2412 = vshrl.u32 %v2411, 7
      %v2413 = vsub.s32 %v2410, %v2412
      %v2414 = vrot.slane %v2400, %v2413
      %v2415 = vcombine.high %v2407, %v2407
      %v2416 = vcombine.high %v2414, %v2414
      %v2418 = vunpack.c.l.s4 1966171168
      %v2419 = vunpack.c.0.s8 %v2418
      %v2420 = vlaneseq
      %v2421 = vshrl.u32 %v2420, 7
      %v2422 = vsub.s32 %v2419, %v2421
      %v2423 = vrot.slane %v2407, %v2422
      %v2425 = vunpack.c.l.s4 1966171168
      %v2426 = vunpack.c.0.s8 %v2425
      %v2427 = vlaneseq
      %v2428 = vshrl.u32 %v2427, 7
      %v2429 = vsub.s32 %v2426, %v2428
      %v2430 = vrot.slane %v2414, %v2429
      %v2432 = vunpack.c.l.s4 1966171168
      %v2433 = vunpack.c.0.s8 %v2432
      %v2434 = vlaneseq
      %v2435 = vshrl.u32 %v2434, 7
      %v2436 = vsub.s32 %v2433, %v2435
      %v2437 = vrot.slane %v2415, %v2436
      %v2439 = vunpack.c.l.s4 1966171168
      %v2440 = vunpack.c.0.s8 %v2439
      %v2441 = vlaneseq
      %v2442 = vshrl.u32 %v2441, 7
      %v2443 = vsub.s32 %v2440, %v2442
      %v2444 = vrot.slane %v2416, %v2443
      %v2445 = vcombine.high %v2423, %v2423
      %v2446 = vcombine.high %v2430, %v2430
      %v2447 = vcombine.high %v2437, %v2437
      %v2448 = vcombine.high %v2444, %v2444
      %v2449 = vcombine.high %v2289, %v2289
      %v2451 = vunpack.c.l.s4 1966171168
      %v2452 = vunpack.c.0.s8 %v2451
      %v2453 = vlaneseq
      %v2454 = vshrl.u32 %v2453, 7
      %v2455 = vsub.s32 %v2452, %v2454
      %v2456 = vrot.slane %v2289, %v2455
      %v2458 = vunpack.c.l.s4 1966171168
      %v2459 = vunpack.c.0.s8 %v2458
      %v2460 = vlaneseq
      %v2461 = vshrl.u32 %v2460, 7
      %v2462 = vsub.s32 %v2459, %v2461
      %v2463 = vrot.slane %v2449, %v2462
      %v2464 = vcombine.high %v2456, %v2456
      %v2465 = vcombine.high %v2463, %v2463
      %v2467 = vunpack.c.l.s4 1966171168
      %v2468 = vunpack.c.0.s8 %v2467
      %v2469 = vlaneseq
      %v2470 = vshrl.u32 %v2469, 7
      %v2471 = vsub.s32 %v2468, %v2470
      %v2472 = vrot.slane %v2456, %v2471
      %v2474 = vunpack.c.l.s4 1966171168
      %v2475 = vunpack.c.0.s8 %v2474
      %v2476 = vlaneseq
      %v2477 = vshrl.u32 %v2476, 7
      %v2478 = vsub.s32 %v2475, %v2477
      %v2479 = vrot.slane %v2463, %v2478
      %v2481 = vunpack.c.l.s4 1966171168
      %v2482 = vunpack.c.0.s8 %v2481
      %v2483 = vlaneseq
      %v2484 = vshrl.u32 %v2483, 7
      %v2485 = vsub.s32 %v2482, %v2484
      %v2486 = vrot.slane %v2464, %v2485
      %v2488 = vunpack.c.l.s4 1966171168
      %v2489 = vunpack.c.0.s8 %v2488
      %v2490 = vlaneseq
      %v2491 = vshrl.u32 %v2490, 7
      %v2492 = vsub.s32 %v2489, %v2491
      %v2493 = vrot.slane %v2465, %v2492
      %v2494 = vcombine.high %v2472, %v2472
      %v2495 = vcombine.high %v2479, %v2479
      %v2496 = vcombine.high %v2486, %v2486
      %v2497 = vcombine.high %v2493, %v2493
      %v2498 = vcombine.high %v2290, %v2290
      %v2500 = vunpack.c.l.s4 1966171168
      %v2501 = vunpack.c.0.s8 %v2500
      %v2502 = vlaneseq
      %v2503 = vshrl.u32 %v2502, 7
      %v2504 = vsub.s32 %v2501, %v2503
      %v2505 = vrot.slane %v2290, %v2504
      %v2507 = vunpack.c.l.s4 1966171168
      %v2508 = vunpack.c.0.s8 %v2507
      %v2509 = vlaneseq
      %v2510 = vshrl.u32 %v2509, 7
      %v2511 = vsub.s32 %v2508, %v2510
      %v2512 = vrot.slane %v2498, %v2511
      %v2513 = vcombine.high %v2505, %v2505
      %v2514 = vcombine.high %v2512, %v2512
      %v2516 = vunpack.c.l.s4 1966171168
      %v2517 = vunpack.c.0.s8 %v2516
      %v2518 = vlaneseq
      %v2519 = vshrl.u32 %v2518, 7
      %v2520 = vsub.s32 %v2517, %v2519
      %v2521 = vrot.slane %v2505, %v2520
      %v2523 = vunpack.c.l.s4 1966171168
      %v2524 = vunpack.c.0.s8 %v2523
      %v2525 = vlaneseq
      %v2526 = vshrl.u32 %v2525, 7
      %v2527 = vsub.s32 %v2524, %v2526
      %v2528 = vrot.slane %v2512, %v2527
      %v2530 = vunpack.c.l.s4 1966171168
      %v2531 = vunpack.c.0.s8 %v2530
      %v2532 = vlaneseq
      %v2533 = vshrl.u32 %v2532, 7
      %v2534 = vsub.s32 %v2531, %v2533
      %v2535 = vrot.slane %v2513, %v2534
      %v2537 = vunpack.c.l.s4 1966171168
      %v2538 = vunpack.c.0.s8 %v2537
      %v2539 = vlaneseq
      %v2540 = vshrl.u32 %v2539, 7
      %v2541 = vsub.s32 %v2538, %v2540
      %v2542 = vrot.slane %v2514, %v2541
      %v2543 = vcombine.high %v2521, %v2521
      %v2544 = vcombine.high %v2528, %v2528
      %v2545 = vcombine.high %v2535, %v2535
      %v2546 = vcombine.high %v2542, %v2542
      %v2547 = vcombine.high %v2291, %v2291
      %v2549 = vunpack.c.l.s4 1966171168
      %v2550 = vunpack.c.0.s8 %v2549
      %v2551 = vlaneseq
      %v2552 = vshrl.u32 %v2551, 7
      %v2553 = vsub.s32 %v2550, %v2552
      %v2554 = vrot.slane %v2291, %v2553
      %v2556 = vunpack.c.l.s4 1966171168
      %v2557 = vunpack.c.0.s8 %v2556
      %v2558 = vlaneseq
      %v2559 = vshrl.u32 %v2558, 7
      %v2560 = vsub.s32 %v2557, %v2559
      %v2561 = vrot.slane %v2547, %v2560
      %v2562 = vcombine.high %v2554, %v2554
      %v2563 = vcombine.high %v2561, %v2561
      %v2565 = vunpack.c.l.s4 1966171168
      %v2566 = vunpack.c.0.s8 %v2565
      %v2567 = vlaneseq
      %v2568 = vshrl.u32 %v2567, 7
      %v2569 = vsub.s32 %v2566, %v2568
      %v2570 = vrot.slane %v2554, %v2569
      %v2572 = vunpack.c.l.s4 1966171168
      %v2573 = vunpack.c.0.s8 %v2572
      %v2574 = vlaneseq
      %v2575 = vshrl.u32 %v2574, 7
      %v2576 = vsub.s32 %v2573, %v2575
      %v2577 = vrot.slane %v2561, %v2576
      %v2579 = vunpack.c.l.s4 1966171168
      %v2580 = vunpack.c.0.s8 %v2579
      %v2581 = vlaneseq
      %v2582 = vshrl.u32 %v2581, 7
      %v2583 = vsub.s32 %v2580, %v2582
      %v2584 = vrot.slane %v2562, %v2583
      %v2586 = vunpack.c.l.s4 1966171168
      %v2587 = vunpack.c.0.s8 %v2586
      %v2588 = vlaneseq
      %v2589 = vshrl.u32 %v2588, 7
      %v2590 = vsub.s32 %v2587, %v2589
      %v2591 = vrot.slane %v2563, %v2590
      %v2592 = vcombine.high %v2570, %v2570
      %v2593 = vcombine.high %v2577, %v2577
      %v2594 = vcombine.high %v2584, %v2584
      %v2595 = vcombine.high %v2591, %v2591
      %v2596 = vcombine.high %v2292, %v2292
      %v2598 = vunpack.c.l.s4 1966171168
      %v2599 = vunpack.c.0.s8 %v2598
      %v2600 = vlaneseq
      %v2601 = vshrl.u32 %v2600, 7
      %v2602 = vsub.s32 %v2599, %v2601
      %v2603 = vrot.slane %v2292, %v2602
      %v2605 = vunpack.c.l.s4 1966171168
      %v2606 = vunpack.c.0.s8 %v2605
      %v2607 = vlaneseq
      %v2608 = vshrl.u32 %v2607, 7
      %v2609 = vsub.s32 %v2606, %v2608
      %v2610 = vrot.slane %v2596, %v2609
      %v2611 = vcombine.high %v2603, %v2603
      %v2612 = vcombine.high %v2610, %v2610
      %v2614 = vunpack.c.l.s4 1966171168
      %v2615 = vunpack.c.0.s8 %v2614
      %v2616 = vlaneseq
      %v2617 = vshrl.u32 %v2616, 7
      %v2618 = vsub.s32 %v2615, %v2617
      %v2619 = vrot.slane %v2603, %v2618
      %v2621 = vunpack.c.l.s4 1966171168
      %v2622 = vunpack.c.0.s8 %v2621
      %v2623 = vlaneseq
      %v2624 = vshrl.u32 %v2623, 7
      %v2625 = vsub.s32 %v2622, %v2624
      %v2626 = vrot.slane %v2610, %v2625
      %v2628 = vunpack.c.l.s4 1966171168
      %v2629 = vunpack.c.0.s8 %v2628
      %v2630 = vlaneseq
      %v2631 = vshrl.u32 %v2630, 7
      %v2632 = vsub.s32 %v2629, %v2631
      %v2633 = vrot.slane %v2611, %v2632
      %v2635 = vunpack.c.l.s4 1966171168
      %v2636 = vunpack.c.0.s8 %v2635
      %v2637 = vlaneseq
      %v2638 = vshrl.u32 %v2637, 7
      %v2639 = vsub.s32 %v2636, %v2638
      %v2640 = vrot.slane %v2612, %v2639
      %v2641 = vcombine.high %v2619, %v2619
      %v2642 = vcombine.high %v2626, %v2626
      %v2643 = vcombine.high %v2633, %v2633
      %v2644 = vcombine.high %v2640, %v2640
      %v2645 = vcombine.high %v2293, %v2293
      %v2647 = vunpack.c.l.s4 1966171168
      %v2648 = vunpack.c.0.s8 %v2647
      %v2649 = vlaneseq
      %v2650 = vshrl.u32 %v2649, 7
      %v2651 = vsub.s32 %v2648, %v2650
      %v2652 = vrot.slane %v2293, %v2651
      %v2654 = vunpack.c.l.s4 1966171168
      %v2655 = vunpack.c.0.s8 %v2654
      %v2656 = vlaneseq
      %v2657 = vshrl.u32 %v2656, 7
      %v2658 = vsub.s32 %v2655, %v2657
      %v2659 = vrot.slane %v2645, %v2658
      %v2660 = vcombine.high %v2652, %v2652
      %v2661 = vcombine.high %v2659, %v2659
      %v2663 = vunpack.c.l.s4 1966171168
      %v2664 = vunpack.c.0.s8 %v2663
      %v2665 = vlaneseq
      %v2666 = vshrl.u32 %v2665, 7
      %v2667 = vsub.s32 %v2664, %v2666
      %v2668 = vrot.slane %v2652, %v2667
      %v2670 = vunpack.c.l.s4 1966171168
      %v2671 = vunpack.c.0.s8 %v2670
      %v2672 = vlaneseq
      %v2673 = vshrl.u32 %v2672, 7
      %v2674 = vsub.s32 %v2671, %v2673
      %v2675 = vrot.slane %v2659, %v2674
      %v2677 = vunpack.c.l.s4 1966171168
      %v2678 = vunpack.c.0.s8 %v2677
      %v2679 = vlaneseq
      %v2680 = vshrl.u32 %v2679, 7
      %v2681 = vsub.s32 %v2678, %v2680
      %v2682 = vrot.slane %v2660, %v2681
      %v2684 = vunpack.c.l.s4 1966171168
      %v2685 = vunpack.c.0.s8 %v2684
      %v2686 = vlaneseq
      %v2687 = vshrl.u32 %v2686, 7
      %v2688 = vsub.s32 %v2685, %v2687
      %v2689 = vrot.slane %v2661, %v2688
      %v2690 = vcombine.high %v2668, %v2668
      %v2691 = vcombine.high %v2675, %v2675
      %v2692 = vcombine.high %v2682, %v2682
      %v2693 = vcombine.high %v2689, %v2689
      %v2758 = vlaneseq
      %v2759 = vshrl.u32 %v2758, 7
      %v2760 = vsub.s32 0, %v2759
      %v2761 = vrot.slane %v2325, %v2760
      %v2762 = vlaneseq
      %v2763 = vshrl.u32 %v2762, 7
      %v2764 = vsub.s32 0, %v2763
      %v2765 = vrot.slane %v2339, %v2764
      %v2766 = vlaneseq
      %v2767 = vshrl.u32 %v2766, 7
      %v2768 = vsub.s32 0, %v2767
      %v2769 = vrot.slane %v2347, %v2768
      %v2770 = vlaneseq
      %v2771 = vshrl.u32 %v2770, 7
      %v2772 = vsub.s32 0, %v2771
      %v2773 = vrot.slane %v2349, %v2772
      %v2774 = vlaneseq
      %v2775 = vshrl.u32 %v2774, 7
      %v2776 = vsub.s32 0, %v2775
      %v2777 = vrot.slane %v2332, %v2776
      %v2778 = vlaneseq
      %v2779 = vshrl.u32 %v2778, 7
      %v2780 = vsub.s32 0, %v2779
      %v2781 = vrot.slane %v2346, %v2780
      %v2782 = vlaneseq
      %v2783 = vshrl.u32 %v2782, 7
      %v2784 = vsub.s32 0, %v2783
      %v2785 = vrot.slane %v2348, %v2784
      %v2786 = vlaneseq
      %v2787 = vshrl.u32 %v2786, 7
      %v2788 = vsub.s32 0, %v2787
      %v2789 = vrot.slane %v2350, %v2788
      %v2790 = vlaneseq
      %v2791 = vshrl.u32 %v2790, 7
      %v2792 = vsub.s32 0, %v2791
      %v2793 = vrot.slane %v2374, %v2792
      %v2794 = vlaneseq
      %v2795 = vshrl.u32 %v2794, 7
      %v2796 = vsub.s32 0, %v2795
      %v2797 = vrot.slane %v2388, %v2796
      %v2798 = vlaneseq
      %v2799 = vshrl.u32 %v2798, 7
      %v2800 = vsub.s32 0, %v2799
      %v2801 = vrot.slane %v2396, %v2800
      %v2802 = vlaneseq
      %v2803 = vshrl.u32 %v2802, 7
      %v2804 = vsub.s32 0, %v2803
      %v2805 = vrot.slane %v2398, %v2804
      %v2806 = vlaneseq
      %v2807 = vshrl.u32 %v2806, 7
      %v2808 = vsub.s32 0, %v2807
      %v2809 = vrot.slane %v2381, %v2808
      %v2810 = vlaneseq
      %v2811 = vshrl.u32 %v2810, 7
      %v2812 = vsub.s32 0, %v2811
      %v2813 = vrot.slane %v2395, %v2812
      %v2814 = vlaneseq
      %v2815 = vshrl.u32 %v2814, 7
      %v2816 = vsub.s32 0, %v2815
      %v2817 = vrot.slane %v2397, %v2816
      %v2818 = vlaneseq
      %v2819 = vshrl.u32 %v2818, 7
      %v2820 = vsub.s32 0, %v2819
      %v2821 = vrot.slane %v2399, %v2820
      %v2822 = vlaneseq
      %v2823 = vshrl.u32 %v2822, 7
      %v2824 = vsub.s32 0, %v2823
      %v2825 = vrot.slane %v2423, %v2824
      %v2826 = vlaneseq
      %v2827 = vshrl.u32 %v2826, 7
      %v2828 = vsub.s32 0, %v2827
      %v2829 = vrot.slane %v2437, %v2828
      %v2830 = vlaneseq
      %v2831 = vshrl.u32 %v2830, 7
      %v2832 = vsub.s32 0, %v2831
      %v2833 = vrot.slane %v2445, %v2832
      %v2834 = vlaneseq
      %v2835 = vshrl.u32 %v2834, 7
      %v2836 = vsub.s32 0, %v2835
      %v2837 = vrot.slane %v2447, %v2836
      %v2838 = vlaneseq
      %v2839 = vshrl.u32 %v2838, 7
      %v2840 = vsub.s32 0, %v2839
      %v2841 = vrot.slane %v2430, %v2840
      %v2842 = vlaneseq
      %v2843 = vshrl.u32 %v2842, 7
      %v2844 = vsub.s32 0, %v2843
      %v2845 = vrot.slane %v2444, %v2844
      %v2846 = vlaneseq
      %v2847 = vshrl.u32 %v2846, 7
      %v2848 = vsub.s32 0, %v2847
      %v2849 = vrot.slane %v2446, %v2848
      %v2850 = vlaneseq
      %v2851 = vshrl.u32 %v2850, 7
      %v2852 = vsub.s32 0, %v2851
      %v2853 = vrot.slane %v2448, %v2852
      %v2854 = vlaneseq
      %v2855 = vshrl.u32 %v2854, 7
      %v2856 = vsub.s32 0, %v2855
      %v2857 = vrot.slane %v2472, %v2856
      %v2858 = vlaneseq
      %v2859 = vshrl.u32 %v2858, 7
      %v2860 = vsub.s32 0, %v2859
      %v2861 = vrot.slane %v2486, %v2860
      %v2862 = vlaneseq
      %v2863 = vshrl.u32 %v2862, 7
      %v2864 = vsub.s32 0, %v2863
      %v2865 = vrot.slane %v2494, %v2864
      %v2866 = vlaneseq
      %v2867 = vshrl.u32 %v2866, 7
      %v2868 = vsub.s32 0, %v2867
      %v2869 = vrot.slane %v2496, %v2868
      %v2870 = vlaneseq
      %v2871 = vshrl.u32 %v2870, 7
      %v2872 = vsub.s32 0, %v2871
      %v2873 = vrot.slane %v2479, %v2872
      %v2874 = vlaneseq
      %v2875 = vshrl.u32 %v2874, 7
      %v2876 = vsub.s32 0, %v2875
      %v2877 = vrot.slane %v2493, %v2876
      %v2878 = vlaneseq
      %v2879 = vshrl.u32 %v2878, 7
      %v2880 = vsub.s32 0, %v2879
      %v2881 = vrot.slane %v2495, %v2880
      %v2882 = vlaneseq
      %v2883 = vshrl.u32 %v2882, 7
      %v2884 = vsub.s32 0, %v2883
      %v2885 = vrot.slane %v2497, %v2884
      %v2886 = vlaneseq
      %v2887 = vshrl.u32 %v2886, 7
      %v2888 = vsub.s32 0, %v2887
      %v2889 = vrot.slane %v2521, %v2888
      %v2890 = vlaneseq
      %v2891 = vshrl.u32 %v2890, 7
      %v2892 = vsub.s32 0, %v2891
      %v2893 = vrot.slane %v2535, %v2892
      %v2894 = vlaneseq
      %v2895 = vshrl.u32 %v2894, 7
      %v2896 = vsub.s32 0, %v2895
      %v2897 = vrot.slane %v2543, %v2896
      %v2898 = vlaneseq
      %v2899 = vshrl.u32 %v2898, 7
      %v2900 = vsub.s32 0, %v2899
      %v2901 = vrot.slane %v2545, %v2900
      %v2902 = vlaneseq
      %v2903 = vshrl.u32 %v2902, 7
      %v2904 = vsub.s32 0, %v2903
      %v2905 = vrot.slane %v2528, %v2904
      %v2906 = vlaneseq
      %v2907 = vshrl.u32 %v2906, 7
      %v2908 = vsub.s32 0, %v2907
      %v2909 = vrot.slane %v2542, %v2908
      %v2910 = vlaneseq
      %v2911 = vshrl.u32 %v2910, 7
      %v2912 = vsub.s32 0, %v2911
      %v2913 = vrot.slane %v2544, %v2912
      %v2914 = vlaneseq
      %v2915 = vshrl.u32 %v2914, 7
      %v2916 = vsub.s32 0, %v2915
      %v2917 = vrot.slane %v2546, %v2916
      %v2918 = vlaneseq
      %v2919 = vshrl.u32 %v2918, 7
      %v2920 = vsub.s32 0, %v2919
      %v2921 = vrot.slane %v2570, %v2920
      %v2922 = vlaneseq
      %v2923 = vshrl.u32 %v2922, 7
      %v2924 = vsub.s32 0, %v2923
      %v2925 = vrot.slane %v2584, %v2924
      %v2926 = vlaneseq
      %v2927 = vshrl.u32 %v2926, 7
      %v2928 = vsub.s32 0, %v2927
      %v2929 = vrot.slane %v2592, %v2928
      %v2930 = vlaneseq
      %v2931 = vshrl.u32 %v2930, 7
      %v2932 = vsub.s32 0, %v2931
      %v2933 = vrot.slane %v2594, %v2932
      %v2934 = vlaneseq
      %v2935 = vshrl.u32 %v2934, 7
      %v2936 = vsub.s32 0, %v2935
      %v2937 = vrot.slane %v2577, %v2936
      %v2938 = vlaneseq
      %v2939 = vshrl.u32 %v2938, 7
      %v2940 = vsub.s32 0, %v2939
      %v2941 = vrot.slane %v2591, %v2940
      %v2942 = vlaneseq
      %v2943 = vshrl.u32 %v2942, 7
      %v2944 = vsub.s32 0, %v2943
      %v2945 = vrot.slane %v2593, %v2944
      %v2946 = vlaneseq
      %v2947 = vshrl.u32 %v2946, 7
      %v2948 = vsub.s32 0, %v2947
      %v2949 = vrot.slane %v2595, %v2948
      %v2950 = vlaneseq
      %v2951 = vshrl.u32 %v2950, 7
      %v2952 = vsub.s32 0, %v2951
      %v2953 = vrot.slane %v2619, %v2952
      %v2954 = vlaneseq
      %v2955 = vshrl.u32 %v2954, 7
      %v2956 = vsub.s32 0, %v2955
      %v2957 = vrot.slane %v2633, %v2956
      %v2958 = vlaneseq
      %v2959 = vshrl.u32 %v2958, 7
      %v2960 = vsub.s32 0, %v2959
      %v2961 = vrot.slane %v2641, %v2960
      %v2962 = vlaneseq
      %v2963 = vshrl.u32 %v2962, 7
      %v2964 = vsub.s32 0, %v2963
      %v2965 = vrot.slane %v2643, %v2964
      %v2966 = vlaneseq
      %v2967 = vshrl.u32 %v2966, 7
      %v2968 = vsub.s32 0, %v2967
      %v2969 = vrot.slane %v2626, %v2968
      %v2970 = vlaneseq
      %v2971 = vshrl.u32 %v2970, 7
      %v2972 = vsub.s32 0, %v2971
      %v2973 = vrot.slane %v2640, %v2972
      %v2974 = vlaneseq
      %v2975 = vshrl.u32 %v2974, 7
      %v2976 = vsub.s32 0, %v2975
      %v2977 = vrot.slane %v2642, %v2976
      %v2978 = vlaneseq
      %v2979 = vshrl.u32 %v2978, 7
      %v2980 = vsub.s32 0, %v2979
      %v2981 = vrot.slane %v2644, %v2980
      %v2982 = vlaneseq
      %v2983 = vshrl.u32 %v2982, 7
      %v2984 = vsub.s32 0, %v2983
      %v2985 = vrot.slane %v2668, %v2984
      %v2986 = vlaneseq
      %v2987 = vshrl.u32 %v2986, 7
      %v2988 = vsub.s32 0, %v2987
      %v2989 = vrot.slane %v2682, %v2988
      %v2990 = vlaneseq
      %v2991 = vshrl.u32 %v2990, 7
      %v2992 = vsub.s32 0, %v2991
      %v2993 = vrot.slane %v2690, %v2992
      %v2994 = vlaneseq
      %v2995 = vshrl.u32 %v2994, 7
      %v2996 = vsub.s32 0, %v2995
      %v2997 = vrot.slane %v2692, %v2996
      %v2998 = vlaneseq
      %v2999 = vshrl.u32 %v2998, 7
      %v3000 = vsub.s32 0, %v2999
      %v3001 = vrot.slane %v2675, %v3000
      %v3002 = vlaneseq
      %v3003 = vshrl.u32 %v3002, 7
      %v3004 = vsub.s32 0, %v3003
      %v3005 = vrot.slane %v2689, %v3004
      %v3006 = vlaneseq
      %v3007 = vshrl.u32 %v3006, 7
      %v3008 = vsub.s32 0, %v3007
      %v3009 = vrot.slane %v2691, %v3008
      %v3010 = vlaneseq
      %v3011 = vshrl.u32 %v3010, 7
      %v3012 = vsub.s32 0, %v3011
      %v3013 = vrot.slane %v2693, %v3012
      %3014 = vrot.lane.b32.xlu0 %v2761, 124
      %v3015 = vpop.permute.xlu0 %3014
      %3016 = vrot.lane.b32.xlu0 %v2765, 124
      %v3017 = vpop.permute.xlu0 %3016
      %3018 = vrot.lane.b32.xlu0 %v2769, 124
      %v3019 = vpop.permute.xlu0 %3018
      %3020 = vrot.lane.b32.xlu0 %v2773, 124
      %v3021 = vpop.permute.xlu0 %3020
      %3022 = vrot.lane.b32.xlu0 %v2777, 124
      %v3023 = vpop.permute.xlu0 %3022
      %3024 = vrot.lane.b32.xlu0 %v2781, 124
      %v3025 = vpop.permute.xlu0 %3024
      %3026 = vrot.lane.b32.xlu0 %v2785, 124
      %v3027 = vpop.permute.xlu0 %3026
      %3028 = vrot.lane.b32.xlu0 %v2789, 124
      %v3029 = vpop.permute.xlu0 %3028
      %3030 = vrot.lane.b32.xlu0 %v2793, 124
      %v3031 = vpop.permute.xlu0 %3030
      %3032 = vrot.lane.b32.xlu0 %v2797, 124
      %v3033 = vpop.permute.xlu0 %3032
      %3034 = vrot.lane.b32.xlu0 %v2801, 124
      %v3035 = vpop.permute.xlu0 %3034
      %3036 = vrot.lane.b32.xlu0 %v2805, 124
      %v3037 = vpop.permute.xlu0 %3036
      %3038 = vrot.lane.b32.xlu0 %v2809, 124
      %v3039 = vpop.permute.xlu0 %3038
      %3040 = vrot.lane.b32.xlu0 %v2813, 124
      %v3041 = vpop.permute.xlu0 %3040
      %3042 = vrot.lane.b32.xlu0 %v2817, 124
      %v3043 = vpop.permute.xlu0 %3042
      %3044 = vrot.lane.b32.xlu0 %v2821, 124
      %v3045 = vpop.permute.xlu0 %3044
      %3046 = vrot.lane.b32.xlu0 %v2825, 124
      %v3047 = vpop.permute.xlu0 %3046
      %3048 = vrot.lane.b32.xlu0 %v2829, 124
      %v3049 = vpop.permute.xlu0 %3048
      %3050 = vrot.lane.b32.xlu0 %v2833, 124
      %v3051 = vpop.permute.xlu0 %3050
      %3052 = vrot.lane.b32.xlu0 %v2837, 124
      %v3053 = vpop.permute.xlu0 %3052
      %3054 = vrot.lane.b32.xlu0 %v2841, 124
      %v3055 = vpop.permute.xlu0 %3054
      %3056 = vrot.lane.b32.xlu0 %v2845, 124
      %v3057 = vpop.permute.xlu0 %3056
      %3058 = vrot.lane.b32.xlu0 %v2849, 124
      %v3059 = vpop.permute.xlu0 %3058
      %3060 = vrot.lane.b32.xlu0 %v2853, 124
      %v3061 = vpop.permute.xlu0 %3060
      %3062 = vrot.lane.b32.xlu0 %v2857, 124
      %v3063 = vpop.permute.xlu0 %3062
      %3064 = vrot.lane.b32.xlu0 %v2861, 124
      %v3065 = vpop.permute.xlu0 %3064
      %3066 = vrot.lane.b32.xlu0 %v2865, 124
      %v3067 = vpop.permute.xlu0 %3066
      %3068 = vrot.lane.b32.xlu0 %v2869, 124
      %v3069 = vpop.permute.xlu0 %3068
      %3070 = vrot.lane.b32.xlu0 %v2873, 124
      %v3071 = vpop.permute.xlu0 %3070
      %3072 = vrot.lane.b32.xlu0 %v2877, 124
      %v3073 = vpop.permute.xlu0 %3072
      %3074 = vrot.lane.b32.xlu0 %v2881, 124
      %v3075 = vpop.permute.xlu0 %3074
      %3076 = vrot.lane.b32.xlu0 %v2885, 124
      %v3077 = vpop.permute.xlu0 %3076
      %3078 = vrot.lane.b32.xlu0 %v2889, 124
      %v3079 = vpop.permute.xlu0 %3078
      %3080 = vrot.lane.b32.xlu0 %v2893, 124
      %v3081 = vpop.permute.xlu0 %3080
      %3082 = vrot.lane.b32.xlu0 %v2897, 124
      %v3083 = vpop.permute.xlu0 %3082
      %3084 = vrot.lane.b32.xlu0 %v2901, 124
      %v3085 = vpop.permute.xlu0 %3084
      %3086 = vrot.lane.b32.xlu0 %v2905, 124
      %v3087 = vpop.permute.xlu0 %3086
      %3088 = vrot.lane.b32.xlu0 %v2909, 124
      %v3089 = vpop.permute.xlu0 %3088
      %3090 = vrot.lane.b32.xlu0 %v2913, 124
      %v3091 = vpop.permute.xlu0 %3090
      %3092 = vrot.lane.b32.xlu0 %v2917, 124
      %v3093 = vpop.permute.xlu0 %3092
      %3094 = vrot.lane.b32.xlu0 %v2921, 124
      %v3095 = vpop.permute.xlu0 %3094
      %3096 = vrot.lane.b32.xlu0 %v2925, 124
      %v3097 = vpop.permute.xlu0 %3096
      %3098 = vrot.lane.b32.xlu0 %v2929, 124
      %v3099 = vpop.permute.xlu0 %3098
      %3100 = vrot.lane.b32.xlu0 %v2933, 124
      %v3101 = vpop.permute.xlu0 %3100
      %3102 = vrot.lane.b32.xlu0 %v2937, 124
      %v3103 = vpop.permute.xlu0 %3102
      %3104 = vrot.lane.b32.xlu0 %v2941, 124
      %v3105 = vpop.permute.xlu0 %3104
      %3106 = vrot.lane.b32.xlu0 %v2945, 124
      %v3107 = vpop.permute.xlu0 %3106
      %3108 = vrot.lane.b32.xlu0 %v2949, 124
      %v3109 = vpop.permute.xlu0 %3108
      %3110 = vrot.lane.b32.xlu0 %v2953, 124
      %v3111 = vpop.permute.xlu0 %3110
      %3112 = vrot.lane.b32.xlu0 %v2957, 124
      %v3113 = vpop.permute.xlu0 %3112
      %3114 = vrot.lane.b32.xlu0 %v2961, 124
      %v3115 = vpop.permute.xlu0 %3114
      %3116 = vrot.lane.b32.xlu0 %v2965, 124
      %v3117 = vpop.permute.xlu0 %3116
      %3118 = vrot.lane.b32.xlu0 %v2969, 124
      %v3119 = vpop.permute.xlu0 %3118
      %3120 = vrot.lane.b32.xlu0 %v2973, 124
      %v3121 = vpop.permute.xlu0 %3120
      %3122 = vrot.lane.b32.xlu0 %v2977, 124
      %v3123 = vpop.permute.xlu0 %3122
      %3124 = vrot.lane.b32.xlu0 %v2981, 124
      %v3125 = vpop.permute.xlu0 %3124
      %3126 = vrot.lane.b32.xlu0 %v2985, 124
      %v3127 = vpop.permute.xlu0 %3126
      %3128 = vrot.lane.b32.xlu0 %v2989, 124
      %v3129 = vpop.permute.xlu0 %3128
      %3130 = vrot.lane.b32.xlu0 %v2993, 124
      %v3131 = vpop.permute.xlu0 %3130
      %3132 = vrot.lane.b32.xlu0 %v2997, 124
      %v3133 = vpop.permute.xlu0 %3132
      %3134 = vrot.lane.b32.xlu0 %v3001, 124
      %v3135 = vpop.permute.xlu0 %3134
      %3136 = vrot.lane.b32.xlu0 %v3005, 124
      %v3137 = vpop.permute.xlu0 %3136
      %3138 = vrot.lane.b32.xlu0 %v3009, 124
      %v3139 = vpop.permute.xlu0 %3138
      %3140 = vrot.lane.b32.xlu0 %v3013, 124
      %v3141 = vpop.permute.xlu0 %3140
      %v3206 = vsel %vm2123, %v2325, %v3015
      %v3207 = vsel %vm2123, %v2339, %v3017
      %v3208 = vsel %vm2123, %v2347, %v3019
      %v3209 = vsel %vm2123, %v2349, %v3021
      %v3210 = vsel %vm2123, %v2332, %v3023
      %v3211 = vsel %vm2123, %v2346, %v3025
      %v3212 = vsel %vm2123, %v2348, %v3027
      %v3213 = vsel %vm2123, %v2350, %v3029
      %v3214 = vsel %vm2123, %v2374, %v3031
      %v3215 = vsel %vm2123, %v2388, %v3033
      %v3216 = vsel %vm2123, %v2396, %v3035
      %v3217 = vsel %vm2123, %v2398, %v3037
      %v3218 = vsel %vm2123, %v2381, %v3039
      %v3219 = vsel %vm2123, %v2395, %v3041
      %v3220 = vsel %vm2123, %v2397, %v3043
      %v3221 = vsel %vm2123, %v2399, %v3045
      %v3222 = vsel %vm2123, %v2423, %v3047
      %v3223 = vsel %vm2123, %v2437, %v3049
      %v3224 = vsel %vm2123, %v2445, %v3051
      %v3225 = vsel %vm2123, %v2447, %v3053
      %v3226 = vsel %vm2123, %v2430, %v3055
      %v3227 = vsel %vm2123, %v2444, %v3057
      %v3228 = vsel %vm2123, %v2446, %v3059
      %v3229 = vsel %vm2123, %v2448, %v3061
      %v3230 = vsel %vm2123, %v2472, %v3063
      %v3231 = vsel %vm2123, %v2486, %v3065
      %v3232 = vsel %vm2123, %v2494, %v3067
      %v3233 = vsel %vm2123, %v2496, %v3069
      %v3234 = vsel %vm2123, %v2479, %v3071
      %v3235 = vsel %vm2123, %v2493, %v3073
      %v3236 = vsel %vm2123, %v2495, %v3075
      %v3237 = vsel %vm2123, %v2497, %v3077
      %v3238 = vsel %vm2123, %v2521, %v3079
      %v3239 = vsel %vm2123, %v2535, %v3081
      %v3240 = vsel %vm2123, %v2543, %v3083
      %v3241 = vsel %vm2123, %v2545, %v3085
      %v3242 = vsel %vm2123, %v2528, %v3087
      %v3243 = vsel %vm2123, %v2542, %v3089
      %v3244 = vsel %vm2123, %v2544, %v3091
      %v3245 = vsel %vm2123, %v2546, %v3093
      %v3246 = vsel %vm2123, %v2570, %v3095
      %v3247 = vsel %vm2123, %v2584, %v3097
      %v3248 = vsel %vm2123, %v2592, %v3099
      %v3249 = vsel %vm2123, %v2594, %v3101
      %v3250 = vsel %vm2123, %v2577, %v3103
      %v3251 = vsel %vm2123, %v2591, %v3105
      %v3252 = vsel %vm2123, %v2593, %v3107
      %v3253 = vsel %vm2123, %v2595, %v3109
      %v3254 = vsel %vm2123, %v2619, %v3111
      %v3255 = vsel %vm2123, %v2633, %v3113
      %v3256 = vsel %vm2123, %v2641, %v3115
      %v3257 = vsel %vm2123, %v2643, %v3117
      %v3258 = vsel %vm2123, %v2626, %v3119
      %v3259 = vsel %vm2123, %v2640, %v3121
      %v3260 = vsel %vm2123, %v2642, %v3123
      %v3261 = vsel %vm2123, %v2644, %v3125
      %v3262 = vsel %vm2123, %v2668, %v3127
      %v3263 = vsel %vm2123, %v2682, %v3129
      %v3264 = vsel %vm2123, %v2690, %v3131
      %v3265 = vsel %vm2123, %v2692, %v3133
      %v3266 = vsel %vm2123, %v2675, %v3135
      %v3267 = vsel %vm2123, %v2689, %v3137
      %v3268 = vsel %vm2123, %v2691, %v3139
      %v3269 = vsel %vm2123, %v2693, %v3141
      %v3398 = vcombine.low %v2124, %v2125
      %v3399 = vcombine.low %v2126, %v2127
      %v3401 = vunpack.c.l.s4 1983009808
      %v3402 = vunpack.c.0.s8 %v3401
      %v3403 = vlaneseq
      %v3404 = vshrl.u32 %v3403, 7
      %v3405 = vsub.s32 %v3402, %v3404
      %v3406 = vrot.slane %v3398, %v3405
      %v3408 = vunpack.c.l.s4 1983009808
      %v3409 = vunpack.c.0.s8 %v3408
      %v3410 = vlaneseq
      %v3411 = vshrl.u32 %v3410, 7
      %v3412 = vsub.s32 %v3409, %v3411
      %v3413 = vrot.slane %v3399, %v3412
      %v3414 = vcombine.low %v3406, %v3413
      %v3415 = vcombine.low %v2128, %v2129
      %v3416 = vcombine.low %v2130, %v2131
      %v3418 = vunpack.c.l.s4 1983009808
      %v3419 = vunpack.c.0.s8 %v3418
      %v3420 = vlaneseq
      %v3421 = vshrl.u32 %v3420, 7
      %v3422 = vsub.s32 %v3419, %v3421
      %v3423 = vrot.slane %v3415, %v3422
      %v3425 = vunpack.c.l.s4 1983009808
      %v3426 = vunpack.c.0.s8 %v3425
      %v3427 = vlaneseq
      %v3428 = vshrl.u32 %v3427, 7
      %v3429 = vsub.s32 %v3426, %v3428
      %v3430 = vrot.slane %v3416, %v3429
      %v3431 = vcombine.low %v3423, %v3430
      %v3432 = vcombine.low %v3206, %v3207
      %v3433 = vcombine.low %v3208, %v3209
      %v3435 = vunpack.c.l.s4 1983009808
      %v3436 = vunpack.c.0.s8 %v3435
      %v3437 = vlaneseq
      %v3438 = vshrl.u32 %v3437, 7
      %v3439 = vsub.s32 %v3436, %v3438
      %v3440 = vrot.slane %v3432, %v3439
      %v3442 = vunpack.c.l.s4 1983009808
      %v3443 = vunpack.c.0.s8 %v3442
      %v3444 = vlaneseq
      %v3445 = vshrl.u32 %v3444, 7
      %v3446 = vsub.s32 %v3443, %v3445
      %v3447 = vrot.slane %v3433, %v3446
      %v3448 = vcombine.low %v3440, %v3447
      %v3449 = vcombine.low %v3210, %v3211
      %v3450 = vcombine.low %v3212, %v3213
      %v3452 = vunpack.c.l.s4 1983009808
      %v3453 = vunpack.c.0.s8 %v3452
      %v3454 = vlaneseq
      %v3455 = vshrl.u32 %v3454, 7
      %v3456 = vsub.s32 %v3453, %v3455
      %v3457 = vrot.slane %v3449, %v3456
      %v3459 = vunpack.c.l.s4 1983009808
      %v3460 = vunpack.c.0.s8 %v3459
      %v3461 = vlaneseq
      %v3462 = vshrl.u32 %v3461, 7
      %v3463 = vsub.s32 %v3460, %v3462
      %v3464 = vrot.slane %v3450, %v3463
      %v3465 = vcombine.low %v3457, %v3464
      %v3466 = vcombine.low %v2132, %v2133
      %v3467 = vcombine.low %v2134, %v2135
      %v3469 = vunpack.c.l.s4 1983009808
      %v3470 = vunpack.c.0.s8 %v3469
      %v3471 = vlaneseq
      %v3472 = vshrl.u32 %v3471, 7
      %v3473 = vsub.s32 %v3470, %v3472
      %v3474 = vrot.slane %v3466, %v3473
      %v3476 = vunpack.c.l.s4 1983009808
      %v3477 = vunpack.c.0.s8 %v3476
      %v3478 = vlaneseq
      %v3479 = vshrl.u32 %v3478, 7
      %v3480 = vsub.s32 %v3477, %v3479
      %v3481 = vrot.slane %v3467, %v3480
      %v3482 = vcombine.low %v3474, %v3481
      %v3483 = vcombine.low %v2136, %v2137
      %v3484 = vcombine.low %v2138, %v2139
      %v3486 = vunpack.c.l.s4 1983009808
      %v3487 = vunpack.c.0.s8 %v3486
      %v3488 = vlaneseq
      %v3489 = vshrl.u32 %v3488, 7
      %v3490 = vsub.s32 %v3487, %v3489
      %v3491 = vrot.slane %v3483, %v3490
      %v3493 = vunpack.c.l.s4 1983009808
      %v3494 = vunpack.c.0.s8 %v3493
      %v3495 = vlaneseq
      %v3496 = vshrl.u32 %v3495, 7
      %v3497 = vsub.s32 %v3494, %v3496
      %v3498 = vrot.slane %v3484, %v3497
      %v3499 = vcombine.low %v3491, %v3498
      %v3500 = vcombine.low %v3214, %v3215
      %v3501 = vcombine.low %v3216, %v3217
      %v3503 = vunpack.c.l.s4 1983009808
      %v3504 = vunpack.c.0.s8 %v3503
      %v3505 = vlaneseq
      %v3506 = vshrl.u32 %v3505, 7
      %v3507 = vsub.s32 %v3504, %v3506
      %v3508 = vrot.slane %v3500, %v3507
      %v3510 = vunpack.c.l.s4 1983009808
      %v3511 = vunpack.c.0.s8 %v3510
      %v3512 = vlaneseq
      %v3513 = vshrl.u32 %v3512, 7
      %v3514 = vsub.s32 %v3511, %v3513
      %v3515 = vrot.slane %v3501, %v3514
      %v3516 = vcombine.low %v3508, %v3515
      %v3517 = vcombine.low %v3218, %v3219
      %v3518 = vcombine.low %v3220, %v3221
      %v3520 = vunpack.c.l.s4 1983009808
      %v3521 = vunpack.c.0.s8 %v3520
      %v3522 = vlaneseq
      %v3523 = vshrl.u32 %v3522, 7
      %v3524 = vsub.s32 %v3521, %v3523
      %v3525 = vrot.slane %v3517, %v3524
      %v3527 = vunpack.c.l.s4 1983009808
      %v3528 = vunpack.c.0.s8 %v3527
      %v3529 = vlaneseq
      %v3530 = vshrl.u32 %v3529, 7
      %v3531 = vsub.s32 %v3528, %v3530
      %v3532 = vrot.slane %v3518, %v3531
      %v3533 = vcombine.low %v3525, %v3532
      %v3534 = vcombine.low %v2140, %v2141
      %v3535 = vcombine.low %v2142, %v2143
      %v3537 = vunpack.c.l.s4 1983009808
      %v3538 = vunpack.c.0.s8 %v3537
      %v3539 = vlaneseq
      %v3540 = vshrl.u32 %v3539, 7
      %v3541 = vsub.s32 %v3538, %v3540
      %v3542 = vrot.slane %v3534, %v3541
      %v3544 = vunpack.c.l.s4 1983009808
      %v3545 = vunpack.c.0.s8 %v3544
      %v3546 = vlaneseq
      %v3547 = vshrl.u32 %v3546, 7
      %v3548 = vsub.s32 %v3545, %v3547
      %v3549 = vrot.slane %v3535, %v3548
      %v3550 = vcombine.low %v3542, %v3549
      %v3551 = vcombine.low %v2144, %v2145
      %v3552 = vcombine.low %v2146, %v2147
      %v3554 = vunpack.c.l.s4 1983009808
      %v3555 = vunpack.c.0.s8 %v3554
      %v3556 = vlaneseq
      %v3557 = vshrl.u32 %v3556, 7
      %v3558 = vsub.s32 %v3555, %v3557
      %v3559 = vrot.slane %v3551, %v3558
      %v3561 = vunpack.c.l.s4 1983009808
      %v3562 = vunpack.c.0.s8 %v3561
      %v3563 = vlaneseq
      %v3564 = vshrl.u32 %v3563, 7
      %v3565 = vsub.s32 %v3562, %v3564
      %v3566 = vrot.slane %v3552, %v3565
      %v3567 = vcombine.low %v3559, %v3566
      %v3568 = vcombine.low %v3222, %v3223
      %v3569 = vcombine.low %v3224, %v3225
      %v3571 = vunpack.c.l.s4 1983009808
      %v3572 = vunpack.c.0.s8 %v3571
      %v3573 = vlaneseq
      %v3574 = vshrl.u32 %v3573, 7
      %v3575 = vsub.s32 %v3572, %v3574
      %v3576 = vrot.slane %v3568, %v3575
      %v3578 = vunpack.c.l.s4 1983009808
      %v3579 = vunpack.c.0.s8 %v3578
      %v3580 = vlaneseq
      %v3581 = vshrl.u32 %v3580, 7
      %v3582 = vsub.s32 %v3579, %v3581
      %v3583 = vrot.slane %v3569, %v3582
      %v3584 = vcombine.low %v3576, %v3583
      %v3585 = vcombine.low %v3226, %v3227
      %v3586 = vcombine.low %v3228, %v3229
      %v3588 = vunpack.c.l.s4 1983009808
      %v3589 = vunpack.c.0.s8 %v3588
      %v3590 = vlaneseq
      %v3591 = vshrl.u32 %v3590, 7
      %v3592 = vsub.s32 %v3589, %v3591
      %v3593 = vrot.slane %v3585, %v3592
      %v3595 = vunpack.c.l.s4 1983009808
      %v3596 = vunpack.c.0.s8 %v3595
      %v3597 = vlaneseq
      %v3598 = vshrl.u32 %v3597, 7
      %v3599 = vsub.s32 %v3596, %v3598
      %v3600 = vrot.slane %v3586, %v3599
      %v3601 = vcombine.low %v3593, %v3600
      %v3602 = vcombine.low %v2148, %v2149
      %v3603 = vcombine.low %v2150, %v2151
      %v3605 = vunpack.c.l.s4 1983009808
      %v3606 = vunpack.c.0.s8 %v3605
      %v3607 = vlaneseq
      %v3608 = vshrl.u32 %v3607, 7
      %v3609 = vsub.s32 %v3606, %v3608
      %v3610 = vrot.slane %v3602, %v3609
      %v3612 = vunpack.c.l.s4 1983009808
      %v3613 = vunpack.c.0.s8 %v3612
      %v3614 = vlaneseq
      %v3615 = vshrl.u32 %v3614, 7
      %v3616 = vsub.s32 %v3613, %v3615
      %v3617 = vrot.slane %v3603, %v3616
      %v3618 = vcombine.low %v3610, %v3617
      %v3619 = vcombine.low %v2152, %v2153
      %v3620 = vcombine.low %v2154, %v2155
      %v3622 = vunpack.c.l.s4 1983009808
      %v3623 = vunpack.c.0.s8 %v3622
      %v3624 = vlaneseq
      %v3625 = vshrl.u32 %v3624, 7
      %v3626 = vsub.s32 %v3623, %v3625
      %v3627 = vrot.slane %v3619, %v3626
      %v3629 = vunpack.c.l.s4 1983009808
      %v3630 = vunpack.c.0.s8 %v3629
      %v3631 = vlaneseq
      %v3632 = vshrl.u32 %v3631, 7
      %v3633 = vsub.s32 %v3630, %v3632
      %v3634 = vrot.slane %v3620, %v3633
      %v3635 = vcombine.low %v3627, %v3634
      %v3636 = vcombine.low %v3230, %v3231
      %v3637 = vcombine.low %v3232, %v3233
      %v3639 = vunpack.c.l.s4 1983009808
      %v3640 = vunpack.c.0.s8 %v3639
      %v3641 = vlaneseq
      %v3642 = vshrl.u32 %v3641, 7
      %v3643 = vsub.s32 %v3640, %v3642
      %v3644 = vrot.slane %v3636, %v3643
      %v3646 = vunpack.c.l.s4 1983009808
      %v3647 = vunpack.c.0.s8 %v3646
      %v3648 = vlaneseq
      %v3649 = vshrl.u32 %v3648, 7
      %v3650 = vsub.s32 %v3647, %v3649
      %v3651 = vrot.slane %v3637, %v3650
      %v3652 = vcombine.low %v3644, %v3651
      %v3653 = vcombine.low %v3234, %v3235
      %v3654 = vcombine.low %v3236, %v3237
      %v3656 = vunpack.c.l.s4 1983009808
      %v3657 = vunpack.c.0.s8 %v3656
      %v3658 = vlaneseq
      %v3659 = vshrl.u32 %v3658, 7
      %v3660 = vsub.s32 %v3657, %v3659
      %v3661 = vrot.slane %v3653, %v3660
      %v3663 = vunpack.c.l.s4 1983009808
      %v3664 = vunpack.c.0.s8 %v3663
      %v3665 = vlaneseq
      %v3666 = vshrl.u32 %v3665, 7
      %v3667 = vsub.s32 %v3664, %v3666
      %v3668 = vrot.slane %v3654, %v3667
      %v3669 = vcombine.low %v3661, %v3668
      %v3670 = vcombine.low %v2156, %v2157
      %v3671 = vcombine.low %v2158, %v2159
      %v3673 = vunpack.c.l.s4 1983009808
      %v3674 = vunpack.c.0.s8 %v3673
      %v3675 = vlaneseq
      %v3676 = vshrl.u32 %v3675, 7
      %v3677 = vsub.s32 %v3674, %v3676
      %v3678 = vrot.slane %v3670, %v3677
      %v3680 = vunpack.c.l.s4 1983009808
      %v3681 = vunpack.c.0.s8 %v3680
      %v3682 = vlaneseq
      %v3683 = vshrl.u32 %v3682, 7
      %v3684 = vsub.s32 %v3681, %v3683
      %v3685 = vrot.slane %v3671, %v3684
      %v3686 = vcombine.low %v3678, %v3685
      %v3687 = vcombine.low %v2160, %v2161
      %v3688 = vcombine.low %v2162, %v2163
      %v3690 = vunpack.c.l.s4 1983009808
      %v3691 = vunpack.c.0.s8 %v3690
      %v3692 = vlaneseq
      %v3693 = vshrl.u32 %v3692, 7
      %v3694 = vsub.s32 %v3691, %v3693
      %v3695 = vrot.slane %v3687, %v3694
      %v3697 = vunpack.c.l.s4 1983009808
      %v3698 = vunpack.c.0.s8 %v3697
      %v3699 = vlaneseq
      %v3700 = vshrl.u32 %v3699, 7
      %v3701 = vsub.s32 %v3698, %v3700
      %v3702 = vrot.slane %v3688, %v3701
      %v3703 = vcombine.low %v3695, %v3702
      %v3704 = vcombine.low %v3238, %v3239
      %v3705 = vcombine.low %v3240, %v3241
      %v3707 = vunpack.c.l.s4 1983009808
      %v3708 = vunpack.c.0.s8 %v3707
      %v3709 = vlaneseq
      %v3710 = vshrl.u32 %v3709, 7
      %v3711 = vsub.s32 %v3708, %v3710
      %v3712 = vrot.slane %v3704, %v3711
      %v3714 = vunpack.c.l.s4 1983009808
      %v3715 = vunpack.c.0.s8 %v3714
      %v3716 = vlaneseq
      %v3717 = vshrl.u32 %v3716, 7
      %v3718 = vsub.s32 %v3715, %v3717
      %v3719 = vrot.slane %v3705, %v3718
      %v3720 = vcombine.low %v3712, %v3719
      %v3721 = vcombine.low %v3242, %v3243
      %v3722 = vcombine.low %v3244, %v3245
      %v3724 = vunpack.c.l.s4 1983009808
      %v3725 = vunpack.c.0.s8 %v3724
      %v3726 = vlaneseq
      %v3727 = vshrl.u32 %v3726, 7
      %v3728 = vsub.s32 %v3725, %v3727
      %v3729 = vrot.slane %v3721, %v3728
      %v3731 = vunpack.c.l.s4 1983009808
      %v3732 = vunpack.c.0.s8 %v3731
      %v3733 = vlaneseq
      %v3734 = vshrl.u32 %v3733, 7
      %v3735 = vsub.s32 %v3732, %v3734
      %v3736 = vrot.slane %v3722, %v3735
      %v3737 = vcombine.low %v3729, %v3736
      %v3738 = vcombine.low %v2164, %v2165
      %v3739 = vcombine.low %v2166, %v2167
      %v3741 = vunpack.c.l.s4 1983009808
      %v3742 = vunpack.c.0.s8 %v3741
      %v3743 = vlaneseq
      %v3744 = vshrl.u32 %v3743, 7
      %v3745 = vsub.s32 %v3742, %v3744
      %v3746 = vrot.slane %v3738, %v3745
      %v3748 = vunpack.c.l.s4 1983009808
      %v3749 = vunpack.c.0.s8 %v3748
      %v3750 = vlaneseq
      %v3751 = vshrl.u32 %v3750, 7
      %v3752 = vsub.s32 %v3749, %v3751
      %v3753 = vrot.slane %v3739, %v3752
      %v3754 = vcombine.low %v3746, %v3753
      %v3755 = vcombine.low %v2168, %v2169
      %v3756 = vcombine.low %v2170, %v2171
      %v3758 = vunpack.c.l.s4 1983009808
      %v3759 = vunpack.c.0.s8 %v3758
      %v3760 = vlaneseq
      %v3761 = vshrl.u32 %v3760, 7
      %v3762 = vsub.s32 %v3759, %v3761
      %v3763 = vrot.slane %v3755, %v3762
      %v3765 = vunpack.c.l.s4 1983009808
      %v3766 = vunpack.c.0.s8 %v3765
      %v3767 = vlaneseq
      %v3768 = vshrl.u32 %v3767, 7
      %v3769 = vsub.s32 %v3766, %v3768
      %v3770 = vrot.slane %v3756, %v3769
      %v3771 = vcombine.low %v3763, %v3770
      %v3772 = vcombine.low %v3246, %v3247
      %v3773 = vcombine.low %v3248, %v3249
      %v3775 = vunpack.c.l.s4 1983009808
      %v3776 = vunpack.c.0.s8 %v3775
      %v3777 = vlaneseq
      %v3778 = vshrl.u32 %v3777, 7
      %v3779 = vsub.s32 %v3776, %v3778
      %v3780 = vrot.slane %v3772, %v3779
      %v3782 = vunpack.c.l.s4 1983009808
      %v3783 = vunpack.c.0.s8 %v3782
      %v3784 = vlaneseq
      %v3785 = vshrl.u32 %v3784, 7
      %v3786 = vsub.s32 %v3783, %v3785
      %v3787 = vrot.slane %v3773, %v3786
      %v3788 = vcombine.low %v3780, %v3787
      %v3789 = vcombine.low %v3250, %v3251
      %v3790 = vcombine.low %v3252, %v3253
      %v3792 = vunpack.c.l.s4 1983009808
      %v3793 = vunpack.c.0.s8 %v3792
      %v3794 = vlaneseq
      %v3795 = vshrl.u32 %v3794, 7
      %v3796 = vsub.s32 %v3793, %v3795
      %v3797 = vrot.slane %v3789, %v3796
      %v3799 = vunpack.c.l.s4 1983009808
      %v3800 = vunpack.c.0.s8 %v3799
      %v3801 = vlaneseq
      %v3802 = vshrl.u32 %v3801, 7
      %v3803 = vsub.s32 %v3800, %v3802
      %v3804 = vrot.slane %v3790, %v3803
      %v3805 = vcombine.low %v3797, %v3804
      %v3806 = vcombine.low %v2172, %v2173
      %v3807 = vcombine.low %v2174, %v2175
      %v3809 = vunpack.c.l.s4 1983009808
      %v3810 = vunpack.c.0.s8 %v3809
      %v3811 = vlaneseq
      %v3812 = vshrl.u32 %v3811, 7
      %v3813 = vsub.s32 %v3810, %v3812
      %v3814 = vrot.slane %v3806, %v3813
      %v3816 = vunpack.c.l.s4 1983009808
      %v3817 = vunpack.c.0.s8 %v3816
      %v3818 = vlaneseq
      %v3819 = vshrl.u32 %v3818, 7
      %v3820 = vsub.s32 %v3817, %v3819
      %v3821 = vrot.slane %v3807, %v3820
      %v3822 = vcombine.low %v3814, %v3821
      %v3823 = vcombine.low %v2176, %v2177
      %v3824 = vcombine.low %v2178, %v2179
      %v3826 = vunpack.c.l.s4 1983009808
      %v3827 = vunpack.c.0.s8 %v3826
      %v3828 = vlaneseq
      %v3829 = vshrl.u32 %v3828, 7
      %v3830 = vsub.s32 %v3827, %v3829
      %v3831 = vrot.slane %v3823, %v3830
      %v3833 = vunpack.c.l.s4 1983009808
      %v3834 = vunpack.c.0.s8 %v3833
      %v3835 = vlaneseq
      %v3836 = vshrl.u32 %v3835, 7
      %v3837 = vsub.s32 %v3834, %v3836
      %v3838 = vrot.slane %v3824, %v3837
      %v3839 = vcombine.low %v3831, %v3838
      %v3840 = vcombine.low %v3254, %v3255
      %v3841 = vcombine.low %v3256, %v3257
      %v3843 = vunpack.c.l.s4 1983009808
      %v3844 = vunpack.c.0.s8 %v3843
      %v3845 = vlaneseq
      %v3846 = vshrl.u32 %v3845, 7
      %v3847 = vsub.s32 %v3844, %v3846
      %v3848 = vrot.slane %v3840, %v3847
      %v3850 = vunpack.c.l.s4 1983009808
      %v3851 = vunpack.c.0.s8 %v3850
      %v3852 = vlaneseq
      %v3853 = vshrl.u32 %v3852, 7
      %v3854 = vsub.s32 %v3851, %v3853
      %v3855 = vrot.slane %v3841, %v3854
      %v3856 = vcombine.low %v3848, %v3855
      %v3857 = vcombine.low %v3258, %v3259
      %v3858 = vcombine.low %v3260, %v3261
      %v3860 = vunpack.c.l.s4 1983009808
      %v3861 = vunpack.c.0.s8 %v3860
      %v3862 = vlaneseq
      %v3863 = vshrl.u32 %v3862, 7
      %v3864 = vsub.s32 %v3861, %v3863
      %v3865 = vrot.slane %v3857, %v3864
      %v3867 = vunpack.c.l.s4 1983009808
      %v3868 = vunpack.c.0.s8 %v3867
      %v3869 = vlaneseq
      %v3870 = vshrl.u32 %v3869, 7
      %v3871 = vsub.s32 %v3868, %v3870
      %v3872 = vrot.slane %v3858, %v3871
      %v3873 = vcombine.low %v3865, %v3872
      %v3874 = vcombine.low %v2180, %v2181
      %v3875 = vcombine.low %v2182, %v2183
      %v3877 = vunpack.c.l.s4 1983009808
      %v3878 = vunpack.c.0.s8 %v3877
      %v3879 = vlaneseq
      %v3880 = vshrl.u32 %v3879, 7
      %v3881 = vsub.s32 %v3878, %v3880
      %v3882 = vrot.slane %v3874, %v3881
      %v3884 = vunpack.c.l.s4 1983009808
      %v3885 = vunpack.c.0.s8 %v3884
      %v3886 = vlaneseq
      %v3887 = vshrl.u32 %v3886, 7
      %v3888 = vsub.s32 %v3885, %v3887
      %v3889 = vrot.slane %v3875, %v3888
      %v3890 = vcombine.low %v3882, %v3889
      %v3891 = vcombine.low %v2184, %v2185
      %v3892 = vcombine.low %v2186, %v2187
      %v3894 = vunpack.c.l.s4 1983009808
      %v3895 = vunpack.c.0.s8 %v3894
      %v3896 = vlaneseq
      %v3897 = vshrl.u32 %v3896, 7
      %v3898 = vsub.s32 %v3895, %v3897
      %v3899 = vrot.slane %v3891, %v3898
      %v3901 = vunpack.c.l.s4 1983009808
      %v3902 = vunpack.c.0.s8 %v3901
      %v3903 = vlaneseq
      %v3904 = vshrl.u32 %v3903, 7
      %v3905 = vsub.s32 %v3902, %v3904
      %v3906 = vrot.slane %v3892, %v3905
      %v3907 = vcombine.low %v3899, %v3906
      %v3908 = vcombine.low %v3262, %v3263
      %v3909 = vcombine.low %v3264, %v3265
      %v3911 = vunpack.c.l.s4 1983009808
      %v3912 = vunpack.c.0.s8 %v3911
      %v3913 = vlaneseq
      %v3914 = vshrl.u32 %v3913, 7
      %v3915 = vsub.s32 %v3912, %v3914
      %v3916 = vrot.slane %v3908, %v3915
      %v3918 = vunpack.c.l.s4 1983009808
      %v3919 = vunpack.c.0.s8 %v3918
      %v3920 = vlaneseq
      %v3921 = vshrl.u32 %v3920, 7
      %v3922 = vsub.s32 %v3919, %v3921
      %v3923 = vrot.slane %v3909, %v3922
      %v3924 = vcombine.low %v3916, %v3923
      %v3925 = vcombine.low %v3266, %v3267
      %v3926 = vcombine.low %v3268, %v3269
      %v3928 = vunpack.c.l.s4 1983009808
      %v3929 = vunpack.c.0.s8 %v3928
      %v3930 = vlaneseq
      %v3931 = vshrl.u32 %v3930, 7
      %v3932 = vsub.s32 %v3929, %v3931
      %v3933 = vrot.slane %v3925, %v3932
      %v3935 = vunpack.c.l.s4 1983009808
      %v3936 = vunpack.c.0.s8 %v3935
      %v3937 = vlaneseq
      %v3938 = vshrl.u32 %v3937, 7
      %v3939 = vsub.s32 %v3936, %v3938
      %v3940 = vrot.slane %v3926, %v3939
      %v3941 = vcombine.low %v3933, %v3940
      %v3974 = vpack.c.bf16 %v3431, %v3414
      %v3975 = vpack.c.bf16 %v3465, %v3448
      %v3976 = vpack.c.bf16 %v3499, %v3482
      %v3977 = vpack.c.bf16 %v3533, %v3516
      %v3978 = vpack.c.bf16 %v3567, %v3550
      %v3979 = vpack.c.bf16 %v3601, %v3584
      %v3980 = vpack.c.bf16 %v3635, %v3618
      %v3981 = vpack.c.bf16 %v3669, %v3652
      %v3982 = vpack.c.bf16 %v3703, %v3686
      %v3983 = vpack.c.bf16 %v3737, %v3720
      %v3984 = vpack.c.bf16 %v3771, %v3754
      %v3985 = vpack.c.bf16 %v3805, %v3788
      %v3986 = vpack.c.bf16 %v3839, %v3822
      %v3987 = vpack.c.bf16 %v3873, %v3856
      %v3988 = vpack.c.bf16 %v3907, %v3890
      %v3989 = vpack.c.bf16 %v3941, %v3924
      %v4006 = vunpack.c.l.b16 %v3974
      %v4007 = vunpack.c.h.b16 %v3974
      %v4008 = vunpack.c.l.b16 %v3975
      %v4009 = vunpack.c.h.b16 %v3975
      %v4010 = vunpack.c.l.b16 %v3976
      %v4011 = vunpack.c.h.b16 %v3976
      %v4012 = vunpack.c.l.b16 %v3977
      %v4013 = vunpack.c.h.b16 %v3977
      %v4014 = vunpack.c.l.b16 %v3978
      %v4015 = vunpack.c.h.b16 %v3978
      %v4016 = vunpack.c.l.b16 %v3979
      %v4017 = vunpack.c.h.b16 %v3979
      %v4018 = vunpack.c.l.b16 %v3980
      %v4019 = vunpack.c.h.b16 %v3980
      %v4020 = vunpack.c.l.b16 %v3981
      %v4021 = vunpack.c.h.b16 %v3981
      %v4022 = vunpack.c.l.b16 %v3982
      %v4023 = vunpack.c.h.b16 %v3982
      %v4024 = vunpack.c.l.b16 %v3983
      %v4025 = vunpack.c.h.b16 %v3983
      %v4026 = vunpack.c.l.b16 %v3984
      %v4027 = vunpack.c.h.b16 %v3984
      %v4028 = vunpack.c.l.b16 %v3985
      %v4029 = vunpack.c.h.b16 %v3985
      %v4030 = vunpack.c.l.b16 %v3986
      %v4031 = vunpack.c.h.b16 %v3986
      %v4032 = vunpack.c.l.b16 %v3987
      %v4033 = vunpack.c.h.b16 %v3987
      %v4034 = vunpack.c.l.b16 %v3988
      %v4035 = vunpack.c.h.b16 %v3988
      %v4036 = vunpack.c.l.b16 %v3989
      %v4037 = vunpack.c.h.b16 %v3989
      %v4038 = vpack.c.b16 %v4006, %v4006
      %v4039 = vpack.c.b16 %v4007, %v4007
      %v4040 = vpack.c.b16 %v4008, %v4008
      %v4041 = vpack.c.b16 %v4009, %v4009
      %v4042 = vpack.c.b16 %v4010, %v4010
      %v4043 = vpack.c.b16 %v4011, %v4011
      %v4044 = vpack.c.b16 %v4012, %v4012
      %v4045 = vpack.c.b16 %v4013, %v4013
      %v4046 = vpack.c.b16 %v4014, %v4014
      %v4047 = vpack.c.b16 %v4015, %v4015
      %v4048 = vpack.c.b16 %v4016, %v4016
      %v4049 = vpack.c.b16 %v4017, %v4017
      %v4050 = vpack.c.b16 %v4018, %v4018
      %v4051 = vpack.c.b16 %v4019, %v4019
      %v4052 = vpack.c.b16 %v4020, %v4020
      %v4053 = vpack.c.b16 %v4021, %v4021
      %v4054 = vpack.c.b16 %v4022, %v4022
      %v4055 = vpack.c.b16 %v4023, %v4023
      %v4056 = vpack.c.b16 %v4024, %v4024
      %v4057 = vpack.c.b16 %v4025, %v4025
      %v4058 = vpack.c.b16 %v4026, %v4026
      %v4059 = vpack.c.b16 %v4027, %v4027
      %v4060 = vpack.c.b16 %v4028, %v4028
      %v4061 = vpack.c.b16 %v4029, %v4029
      %v4062 = vpack.c.b16 %v4030, %v4030
      %v4063 = vpack.c.b16 %v4031, %v4031
      %v4064 = vpack.c.b16 %v4032, %v4032
      %v4065 = vpack.c.b16 %v4033, %v4033
      %v4066 = vpack.c.b16 %v4034, %v4034
      %v4067 = vpack.c.b16 %v4035, %v4035
      %v4068 = vpack.c.b16 %v4036, %v4036
      %v4069 = vpack.c.b16 %v4037, %v4037
      %vm4070 = vsmask.f32 4368
      %vm4071 = vmor %vm472, %vm4070
      %v4073 = vshrl.u32 %v4038, 16
      %v4075 = vrot.slane %v4073, 7
      %v4076 = vshll.u32 %v4038, 16
      %v4078 = vor.u32 %v4075, %v4076
      %v4079 = vrot.slane %v4075, 4
      %v4081 = vshrl.u32 %v4039, 16
      %v4083 = vrot.slane %v4081, 7
      %v4084 = vshll.u32 %v4039, 16
      %v4086 = vor.u32 %v4083, %v4084
      %v4087 = vsel %vm4071, %v4079, %v4086
      %v4088 = vrot.slane %v4083, 4
      %v4090 = vshrl.u32 %v4040, 16
      %v4092 = vrot.slane %v4090, 7
      %v4093 = vshll.u32 %v4040, 16
      %v4095 = vor.u32 %v4092, %v4093
      %v4096 = vrot.slane %v4092, 4
      %v4098 = vshrl.u32 %v4041, 16
      %v4100 = vrot.slane %v4098, 7
      %v4101 = vshll.u32 %v4041, 16
      %v4103 = vor.u32 %v4100, %v4101
      %v4104 = vsel %vm4071, %v4096, %v4103
      %v4105 = vrot.slane %v4100, 4
      %v4107 = vshrl.u32 %v4042, 16
      %v4109 = vrot.slane %v4107, 7
      %v4110 = vshll.u32 %v4042, 16
      %v4112 = vor.u32 %v4109, %v4110
      %v4113 = vrot.slane %v4109, 4
      %v4115 = vshrl.u32 %v4043, 16
      %v4117 = vrot.slane %v4115, 7
      %v4118 = vshll.u32 %v4043, 16
      %v4120 = vor.u32 %v4117, %v4118
      %v4121 = vsel %vm4071, %v4113, %v4120
      %v4122 = vrot.slane %v4117, 4
      %v4124 = vshrl.u32 %v4044, 16
      %v4126 = vrot.slane %v4124, 7
      %v4127 = vshll.u32 %v4044, 16
      %v4129 = vor.u32 %v4126, %v4127
      %v4130 = vrot.slane %v4126, 4
      %v4132 = vshrl.u32 %v4045, 16
      %v4134 = vrot.slane %v4132, 7
      %v4135 = vshll.u32 %v4045, 16
      %v4137 = vor.u32 %v4134, %v4135
      %v4138 = vsel %vm4071, %v4130, %v4137
      %v4139 = vrot.slane %v4134, 4
      %v4141 = vshrl.u32 %v4046, 16
      %v4143 = vrot.slane %v4141, 7
      %v4144 = vshll.u32 %v4046, 16
      %v4146 = vor.u32 %v4143, %v4144
      %v4147 = vrot.slane %v4143, 4
      %v4149 = vshrl.u32 %v4047, 16
      %v4151 = vrot.slane %v4149, 7
      %v4152 = vshll.u32 %v4047, 16
      %v4154 = vor.u32 %v4151, %v4152
      %v4155 = vsel %vm4071, %v4147, %v4154
      %v4156 = vrot.slane %v4151, 4
      %v4158 = vshrl.u32 %v4048, 16
      %v4160 = vrot.slane %v4158, 7
      %v4161 = vshll.u32 %v4048, 16
      %v4163 = vor.u32 %v4160, %v4161
      %v4164 = vrot.slane %v4160, 4
      %v4166 = vshrl.u32 %v4049, 16
      %v4168 = vrot.slane %v4166, 7
      %v4169 = vshll.u32 %v4049, 16
      %v4171 = vor.u32 %v4168, %v4169
      %v4172 = vsel %vm4071, %v4164, %v4171
      %v4173 = vrot.slane %v4168, 4
      %v4175 = vshrl.u32 %v4050, 16
      %v4177 = vrot.slane %v4175, 7
      %v4178 = vshll.u32 %v4050, 16
      %v4180 = vor.u32 %v4177, %v4178
      %v4181 = vrot.slane %v4177, 4
      %v4183 = vshrl.u32 %v4051, 16
      %v4185 = vrot.slane %v4183, 7
      %v4186 = vshll.u32 %v4051, 16
      %v4188 = vor.u32 %v4185, %v4186
      %v4189 = vsel %vm4071, %v4181, %v4188
      %v4190 = vrot.slane %v4185, 4
      %v4192 = vshrl.u32 %v4052, 16
      %v4194 = vrot.slane %v4192, 7
      %v4195 = vshll.u32 %v4052, 16
      %v4197 = vor.u32 %v4194, %v4195
      %v4198 = vrot.slane %v4194, 4
      %v4200 = vshrl.u32 %v4053, 16
      %v4202 = vrot.slane %v4200, 7
      %v4203 = vshll.u32 %v4053, 16
      %v4205 = vor.u32 %v4202, %v4203
      %v4206 = vsel %vm4071, %v4198, %v4205
      %v4207 = vrot.slane %v4202, 4
      %v4209 = vshrl.u32 %v4054, 16
      %v4211 = vrot.slane %v4209, 7
      %v4212 = vshll.u32 %v4054, 16
      %v4214 = vor.u32 %v4211, %v4212
      %v4215 = vrot.slane %v4211, 4
      %v4217 = vshrl.u32 %v4055, 16
      %v4219 = vrot.slane %v4217, 7
      %v4220 = vshll.u32 %v4055, 16
      %v4222 = vor.u32 %v4219, %v4220
      %v4223 = vsel %vm4071, %v4215, %v4222
      %v4224 = vrot.slane %v4219, 4
      %v4226 = vshrl.u32 %v4056, 16
      %v4228 = vrot.slane %v4226, 7
      %v4229 = vshll.u32 %v4056, 16
      %v4231 = vor.u32 %v4228, %v4229
      %v4232 = vrot.slane %v4228, 4
      %v4234 = vshrl.u32 %v4057, 16
      %v4236 = vrot.slane %v4234, 7
      %v4237 = vshll.u32 %v4057, 16
      %v4239 = vor.u32 %v4236, %v4237
      %v4240 = vsel %vm4071, %v4232, %v4239
      %v4241 = vrot.slane %v4236, 4
      %v4243 = vshrl.u32 %v4058, 16
      %v4245 = vrot.slane %v4243, 7
      %v4246 = vshll.u32 %v4058, 16
      %v4248 = vor.u32 %v4245, %v4246
      %v4249 = vrot.slane %v4245, 4
      %v4251 = vshrl.u32 %v4059, 16
      %v4253 = vrot.slane %v4251, 7
      %v4254 = vshll.u32 %v4059, 16
      %v4256 = vor.u32 %v4253, %v4254
      %v4257 = vsel %vm4071, %v4249, %v4256
      %v4258 = vrot.slane %v4253, 4
      %v4260 = vshrl.u32 %v4060, 16
      %v4262 = vrot.slane %v4260, 7
      %v4263 = vshll.u32 %v4060, 16
      %v4265 = vor.u32 %v4262, %v4263
      %v4266 = vrot.slane %v4262, 4
      %v4268 = vshrl.u32 %v4061, 16
      %v4270 = vrot.slane %v4268, 7
      %v4271 = vshll.u32 %v4061, 16
      %v4273 = vor.u32 %v4270, %v4271
      %v4274 = vsel %vm4071, %v4266, %v4273
      %v4275 = vrot.slane %v4270, 4
      %v4277 = vshrl.u32 %v4062, 16
      %v4279 = vrot.slane %v4277, 7
      %v4280 = vshll.u32 %v4062, 16
      %v4282 = vor.u32 %v4279, %v4280
      %v4283 = vrot.slane %v4279, 4
      %v4285 = vshrl.u32 %v4063, 16
      %v4287 = vrot.slane %v4285, 7
      %v4288 = vshll.u32 %v4063, 16
      %v4290 = vor.u32 %v4287, %v4288
      %v4291 = vsel %vm4071, %v4283, %v4290
      %v4292 = vrot.slane %v4287, 4
      %v4294 = vshrl.u32 %v4064, 16
      %v4296 = vrot.slane %v4294, 7
      %v4297 = vshll.u32 %v4064, 16
      %v4299 = vor.u32 %v4296, %v4297
      %v4300 = vrot.slane %v4296, 4
      %v4302 = vshrl.u32 %v4065, 16
      %v4304 = vrot.slane %v4302, 7
      %v4305 = vshll.u32 %v4065, 16
      %v4307 = vor.u32 %v4304, %v4305
      %v4308 = vsel %vm4071, %v4300, %v4307
      %v4309 = vrot.slane %v4304, 4
      %v4311 = vshrl.u32 %v4066, 16
      %v4313 = vrot.slane %v4311, 7
      %v4314 = vshll.u32 %v4066, 16
      %v4316 = vor.u32 %v4313, %v4314
      %v4317 = vrot.slane %v4313, 4
      %v4319 = vshrl.u32 %v4067, 16
      %v4321 = vrot.slane %v4319, 7
      %v4322 = vshll.u32 %v4067, 16
      %v4324 = vor.u32 %v4321, %v4322
      %v4325 = vsel %vm4071, %v4317, %v4324
      %v4326 = vrot.slane %v4321, 4
      %v4328 = vshrl.u32 %v4068, 16
      %v4330 = vrot.slane %v4328, 7
      %v4331 = vshll.u32 %v4068, 16
      %v4333 = vor.u32 %v4330, %v4331
      %v4334 = vrot.slane %v4330, 4
      %v4336 = vshrl.u32 %v4069, 16
      %v4338 = vrot.slane %v4336, 7
      %v4339 = vshll.u32 %v4069, 16
      %v4341 = vor.u32 %v4338, %v4339
      %v4342 = vsel %vm4071, %v4334, %v4341
      %v4343 = vrot.slane %v4338, 4
      %s4392 = scalar_lea.vmem [#allocation2], 12
      %vm4393 = vcmask 27648
      %vm4394 = vmand %vm4393, %vm528
      %v4395 = vld [vmem:[%s4392] sm:$0xf]
      %v4396 = vsel %vm4394, %v4078, %v4395
      %4397 = vst [vmem:[%s4392] sm:$0xf] %v4396
      %4398 = vst.msk [vmem:[%s4392 + $0x4] sm:$0xf] %vm584, %v4087
      %v4399 = vld [vmem:[%s4392 + $0x8] sm:$0x1]
      %v4400 = vsel %vm594, %v4088, %v4399
      %4401 = vst [vmem:[%s4392 + $0x8] sm:$0x1] %v4400
      %v4402 = vld [vmem:[%s4392 + $0xc] sm:$0xf]
      %v4403 = vsel %vm4394, %v4095, %v4402
      %4404 = vst [vmem:[%s4392 + $0xc] sm:$0xf] %v4403
      %4405 = vst.msk [vmem:[%s4392 + $0x10] sm:$0xf] %vm584, %v4104
      %v4406 = vld [vmem:[%s4392 + $0x14] sm:$0x1]
      %v4407 = vsel %vm594, %v4105, %v4406
      %4408 = vst [vmem:[%s4392 + $0x14] sm:$0x1] %v4407
      %v4409 = vld [vmem:[%s4392 + $0x18] sm:$0xf]
      %v4410 = vsel %vm4394, %v4112, %v4409
      %4411 = vst [vmem:[%s4392 + $0x18] sm:$0xf] %v4410
      %4412 = vst.msk [vmem:[%s4392 + $0x1c] sm:$0xf] %vm584, %v4121
      %v4413 = vld [vmem:[%s4392 + $0x20] sm:$0x1]
      %v4414 = vsel %vm594, %v4122, %v4413
      %4415 = vst [vmem:[%s4392 + $0x20] sm:$0x1] %v4414
      %v4416 = vld [vmem:[%s4392 + $0x24] sm:$0xf]
      %v4417 = vsel %vm4394, %v4129, %v4416
      %4418 = vst [vmem:[%s4392 + $0x24] sm:$0xf] %v4417
      %4419 = vst.msk [vmem:[%s4392 + $0x28] sm:$0xf] %vm584, %v4138
      %v4420 = vld [vmem:[%s4392 + $0x2c] sm:$0x1]
      %v4421 = vsel %vm594, %v4139, %v4420
      %4422 = vst [vmem:[%s4392 + $0x2c] sm:$0x1] %v4421
      %v4423 = vld [vmem:[%s4392 + $0x30] sm:$0xf]
      %v4424 = vsel %vm4394, %v4146, %v4423
      %4425 = vst [vmem:[%s4392 + $0x30] sm:$0xf] %v4424
      %4426 = vst.msk [vmem:[%s4392 + $0x34] sm:$0xf] %vm584, %v4155
      %v4427 = vld [vmem:[%s4392 + $0x38] sm:$0x1]
      %v4428 = vsel %vm594, %v4156, %v4427
      %4429 = vst [vmem:[%s4392 + $0x38] sm:$0x1] %v4428
      %v4430 = vld [vmem:[%s4392 + $0x3c] sm:$0xf]
      %v4431 = vsel %vm4394, %v4163, %v4430
      %4432 = vst [vmem:[%s4392 + $0x3c] sm:$0xf] %v4431
      %4433 = vst.msk [vmem:[%s4392 + $0x40] sm:$0xf] %vm584, %v4172
      %v4434 = vld [vmem:[%s4392 + $0x44] sm:$0x1]
      %v4435 = vsel %vm594, %v4173, %v4434
      %4436 = vst [vmem:[%s4392 + $0x44] sm:$0x1] %v4435
      %v4437 = vld [vmem:[%s4392 + $0x48] sm:$0xf]
      %v4438 = vsel %vm4394, %v4180, %v4437
      %4439 = vst [vmem:[%s4392 + $0x48] sm:$0xf] %v4438
      %4440 = vst.msk [vmem:[%s4392 + $0x4c] sm:$0xf] %vm584, %v4189
      %v4441 = vld [vmem:[%s4392 + $0x50] sm:$0x1]
      %v4442 = vsel %vm594, %v4190, %v4441
      %4443 = vst [vmem:[%s4392 + $0x50] sm:$0x1] %v4442
      %v4444 = vld [vmem:[%s4392 + $0x54] sm:$0xf]
      %v4445 = vsel %vm4394, %v4197, %v4444
      %4446 = vst [vmem:[%s4392 + $0x54] sm:$0xf] %v4445
      %4447 = vst.msk [vmem:[%s4392 + $0x58] sm:$0xf] %vm584, %v4206
      %v4448 = vld [vmem:[%s4392 + $0x5c] sm:$0x1]
      %v4449 = vsel %vm594, %v4207, %v4448
      %4450 = vst [vmem:[%s4392 + $0x5c] sm:$0x1] %v4449
      %v4451 = vld [vmem:[%s4392 + $0x60] sm:$0xf]
      %v4452 = vsel %vm4394, %v4214, %v4451
      %4453 = vst [vmem:[%s4392 + $0x60] sm:$0xf] %v4452
      %4454 = vst.msk [vmem:[%s4392 + $0x64] sm:$0xf] %vm584, %v4223
      %v4455 = vld [vmem:[%s4392 + $0x68] sm:$0x1]
      %v4456 = vsel %vm594, %v4224, %v4455
      %4457 = vst [vmem:[%s4392 + $0x68] sm:$0x1] %v4456
      %v4458 = vld [vmem:[%s4392 + $0x6c] sm:$0xf]
      %v4459 = vsel %vm4394, %v4231, %v4458
      %4460 = vst [vmem:[%s4392 + $0x6c] sm:$0xf] %v4459
      %4461 = vst.msk [vmem:[%s4392 + $0x70] sm:$0xf] %vm584, %v4240
      %v4462 = vld [vmem:[%s4392 + $0x74] sm:$0x1]
      %v4463 = vsel %vm594, %v4241, %v4462
      %4464 = vst [vmem:[%s4392 + $0x74] sm:$0x1] %v4463
      %v4465 = vld [vmem:[%s4392 + $0x78] sm:$0xf]
      %v4466 = vsel %vm4394, %v4248, %v4465
      %4467 = vst [vmem:[%s4392 + $0x78] sm:$0xf] %v4466
      %4468 = vst.msk [vmem:[%s4392 + $0x7c] sm:$0xf] %vm584, %v4257
      %v4469 = vld [vmem:[%s4392 + $0x80] sm:$0x1]
      %v4470 = vsel %vm594, %v4258, %v4469
      %4471 = vst [vmem:[%s4392 + $0x80] sm:$0x1] %v4470
      %v4472 = vld [vmem:[%s4392 + $0x84] sm:$0xf]
      %v4473 = vsel %vm4394, %v4265, %v4472
      %4474 = vst [vmem:[%s4392 + $0x84] sm:$0xf] %v4473
      %4475 = vst.msk [vmem:[%s4392 + $0x88] sm:$0xf] %vm584, %v4274
      %v4476 = vld [vmem:[%s4392 + $0x8c] sm:$0x1]
      %v4477 = vsel %vm594, %v4275, %v4476
      %4478 = vst [vmem:[%s4392 + $0x8c] sm:$0x1] %v4477
      %v4479 = vld [vmem:[%s4392 + $0x90] sm:$0xf]
      %v4480 = vsel %vm4394, %v4282, %v4479
      %4481 = vst [vmem:[%s4392 + $0x90] sm:$0xf] %v4480
      %4482 = vst.msk [vmem:[%s4392 + $0x94] sm:$0xf] %vm584, %v4291
      %v4483 = vld [vmem:[%s4392 + $0x98] sm:$0x1]
      %v4484 = vsel %vm594, %v4292, %v4483
      %4485 = vst [vmem:[%s4392 + $0x98] sm:$0x1] %v4484
      %v4486 = vld [vmem:[%s4392 + $0x9c] sm:$0xf]
      %v4487 = vsel %vm4394, %v4299, %v4486
      %4488 = vst [vmem:[%s4392 + $0x9c] sm:$0xf] %v4487
      %4489 = vst.msk [vmem:[%s4392 + $0xa0] sm:$0xf] %vm584, %v4308
      %v4490 = vld [vmem:[%s4392 + $0xa4] sm:$0x1]
      %v4491 = vsel %vm594, %v4309, %v4490
      %4492 = vst [vmem:[%s4392 + $0xa4] sm:$0x1] %v4491
      %v4493 = vld [vmem:[%s4392 + $0xa8] sm:$0xf]
      %v4494 = vsel %vm4394, %v4316, %v4493
      %4495 = vst [vmem:[%s4392 + $0xa8] sm:$0xf] %v4494
      %4496 = vst.msk [vmem:[%s4392 + $0xac] sm:$0xf] %vm584, %v4325
      %v4497 = vld [vmem:[%s4392 + $0xb0] sm:$0x1]
      %v4498 = vsel %vm594, %v4326, %v4497
      %4499 = vst [vmem:[%s4392 + $0xb0] sm:$0x1] %v4498
      %v4500 = vld [vmem:[%s4392 + $0xb4] sm:$0xf]
      %v4501 = vsel %vm4394, %v4333, %v4500
      %4502 = vst [vmem:[%s4392 + $0xb4] sm:$0xf] %v4501
      %4503 = vst.msk [vmem:[%s4392 + $0xb8] sm:$0xf] %vm584, %v4342
      %v4504 = vld [vmem:[%s4392 + $0xbc] sm:$0x1]
      %v4505 = vsel %vm594, %v4343, %v4504
      %4506 = vst [vmem:[%s4392 + $0xbc] sm:$0x1] %v4505
      %v4507 = vld [vmem:[%s455] sm:$0xf]
      %v4508 = vld [vmem:[%s455 + $0x4] sm:$0xf]
      %v4509 = vld [vmem:[%s455 + $0x8] sm:$0xf]
      %v4510 = vld [vmem:[%s455 + $0xc] sm:$0xf]
      %v4511 = vld [vmem:[%s455 + $0x10] sm:$0xf]
      %v4512 = vld [vmem:[%s455 + $0x14] sm:$0xf]
      %v4513 = vld [vmem:[%s455 + $0x18] sm:$0xf]
      %v4514 = vld [vmem:[%s455 + $0x1c] sm:$0xf]
      %v4515 = vld [vmem:[%s455 + $0x20] sm:$0xf]
      %v4516 = vld [vmem:[%s455 + $0x24] sm:$0xf]
      %v4517 = vld [vmem:[%s455 + $0x28] sm:$0xf]
      %v4518 = vld [vmem:[%s455 + $0x2c] sm:$0xf]
      %v4519 = vld [vmem:[%s455 + $0x30] sm:$0xf]
      %v4520 = vld [vmem:[%s455 + $0x34] sm:$0xf]
      %v4521 = vld [vmem:[%s455 + $0x38] sm:$0xf]
      %v4522 = vld [vmem:[%s455 + $0x3c] sm:$0xf]
      %v4523 = vld [vmem:[%s455 + $0x40] sm:$0xf]
      %v4524 = vld [vmem:[%s455 + $0x44] sm:$0xf]
      %v4525 = vld [vmem:[%s455 + $0x48] sm:$0xf]
      %v4526 = vld [vmem:[%s455 + $0x4c] sm:$0xf]
      %v4527 = vld [vmem:[%s455 + $0x50] sm:$0xf]
      %v4528 = vld [vmem:[%s455 + $0x54] sm:$0xf]
      %v4529 = vld [vmem:[%s455 + $0x58] sm:$0xf]
      %v4530 = vld [vmem:[%s455 + $0x5c] sm:$0xf]
      %v4531 = vld [vmem:[%s455 + $0x60] sm:$0xf]
      %v4532 = vld [vmem:[%s455 + $0x64] sm:$0xf]
      %v4533 = vld [vmem:[%s455 + $0x68] sm:$0xf]
      %v4534 = vld [vmem:[%s455 + $0x6c] sm:$0xf]
      %v4535 = vld [vmem:[%s455 + $0x70] sm:$0xf]
      %v4536 = vld [vmem:[%s455 + $0x74] sm:$0xf]
      %v4537 = vld [vmem:[%s455 + $0x78] sm:$0xf]
      %v4538 = vld [vmem:[%s455 + $0x7c] sm:$0xf]
      %v4540 = vshrl.u32 %v4507, 16
      %v4542 = vrot.slane %v4540, 7
      %v4543 = vshll.u32 %v4507, 16
      %v4545 = vor.u32 %v4542, %v4543
      %v4546 = vrot.slane %v4542, 4
      %v4548 = vshrl.u32 %v4508, 16
      %v4550 = vrot.slane %v4548, 7
      %v4551 = vshll.u32 %v4508, 16
      %v4553 = vor.u32 %v4550, %v4551
      %v4554 = vsel %vm4071, %v4546, %v4553
      %v4555 = vrot.slane %v4550, 4
      %v4557 = vshrl.u32 %v4509, 16
      %v4559 = vrot.slane %v4557, 7
      %v4560 = vshll.u32 %v4509, 16
      %v4562 = vor.u32 %v4559, %v4560
      %v4563 = vrot.slane %v4559, 4
      %v4565 = vshrl.u32 %v4510, 16
      %v4567 = vrot.slane %v4565, 7
      %v4568 = vshll.u32 %v4510, 16
      %v4570 = vor.u32 %v4567, %v4568
      %v4571 = vsel %vm4071, %v4563, %v4570
      %v4572 = vrot.slane %v4567, 4
      %v4574 = vshrl.u32 %v4511, 16
      %v4576 = vrot.slane %v4574, 7
      %v4577 = vshll.u32 %v4511, 16
      %v4579 = vor.u32 %v4576, %v4577
      %v4580 = vrot.slane %v4576, 4
      %v4582 = vshrl.u32 %v4512, 16
      %v4584 = vrot.slane %v4582, 7
      %v4585 = vshll.u32 %v4512, 16
      %v4587 = vor.u32 %v4584, %v4585
      %v4588 = vsel %vm4071, %v4580, %v4587
      %v4589 = vrot.slane %v4584, 4
      %v4591 = vshrl.u32 %v4513, 16
      %v4593 = vrot.slane %v4591, 7
      %v4594 = vshll.u32 %v4513, 16
      %v4596 = vor.u32 %v4593, %v4594
      %v4597 = vrot.slane %v4593, 4
      %v4599 = vshrl.u32 %v4514, 16
      %v4601 = vrot.slane %v4599, 7
      %v4602 = vshll.u32 %v4514, 16
      %v4604 = vor.u32 %v4601, %v4602
      %v4605 = vsel %vm4071, %v4597, %v4604
      %v4606 = vrot.slane %v4601, 4
      %v4608 = vshrl.u32 %v4515, 16
      %v4610 = vrot.slane %v4608, 7
      %v4611 = vshll.u32 %v4515, 16
      %v4613 = vor.u32 %v4610, %v4611
      %v4614 = vrot.slane %v4610, 4
      %v4616 = vshrl.u32 %v4516, 16
      %v4618 = vrot.slane %v4616, 7
      %v4619 = vshll.u32 %v4516, 16
      %v4621 = vor.u32 %v4618, %v4619
      %v4622 = vsel %vm4071, %v4614, %v4621
      %v4623 = vrot.slane %v4618, 4
      %v4625 = vshrl.u32 %v4517, 16
      %v4627 = vrot.slane %v4625, 7
      %v4628 = vshll.u32 %v4517, 16
      %v4630 = vor.u32 %v4627, %v4628
      %v4631 = vrot.slane %v4627, 4
      %v4633 = vshrl.u32 %v4518, 16
      %v4635 = vrot.slane %v4633, 7
      %v4636 = vshll.u32 %v4518, 16
      %v4638 = vor.u32 %v4635, %v4636
      %v4639 = vsel %vm4071, %v4631, %v4638
      %v4640 = vrot.slane %v4635, 4
      %v4642 = vshrl.u32 %v4519, 16
      %v4644 = vrot.slane %v4642, 7
      %v4645 = vshll.u32 %v4519, 16
      %v4647 = vor.u32 %v4644, %v4645
      %v4648 = vrot.slane %v4644, 4
      %v4650 = vshrl.u32 %v4520, 16
      %v4652 = vrot.slane %v4650, 7
      %v4653 = vshll.u32 %v4520, 16
      %v4655 = vor.u32 %v4652, %v4653
      %v4656 = vsel %vm4071, %v4648, %v4655
      %v4657 = vrot.slane %v4652, 4
      %v4659 = vshrl.u32 %v4521, 16
      %v4661 = vrot.slane %v4659, 7
      %v4662 = vshll.u32 %v4521, 16
      %v4664 = vor.u32 %v4661, %v4662
      %v4665 = vrot.slane %v4661, 4
      %v4667 = vshrl.u32 %v4522, 16
      %v4669 = vrot.slane %v4667, 7
      %v4670 = vshll.u32 %v4522, 16
      %v4672 = vor.u32 %v4669, %v4670
      %v4673 = vsel %vm4071, %v4665, %v4672
      %v4674 = vrot.slane %v4669, 4
      %v4676 = vshrl.u32 %v4523, 16
      %v4678 = vrot.slane %v4676, 7
      %v4679 = vshll.u32 %v4523, 16
      %v4681 = vor.u32 %v4678, %v4679
      %v4682 = vrot.slane %v4678, 4
      %v4684 = vshrl.u32 %v4524, 16
      %v4686 = vrot.slane %v4684, 7
      %v4687 = vshll.u32 %v4524, 16
      %v4689 = vor.u32 %v4686, %v4687
      %v4690 = vsel %vm4071, %v4682, %v4689
      %v4691 = vrot.slane %v4686, 4
      %v4693 = vshrl.u32 %v4525, 16
      %v4695 = vrot.slane %v4693, 7
      %v4696 = vshll.u32 %v4525, 16
      %v4698 = vor.u32 %v4695, %v4696
      %v4699 = vrot.slane %v4695, 4
      %v4701 = vshrl.u32 %v4526, 16
      %v4703 = vrot.slane %v4701, 7
      %v4704 = vshll.u32 %v4526, 16
      %v4706 = vor.u32 %v4703, %v4704
      %v4707 = vsel %vm4071, %v4699, %v4706
      %v4708 = vrot.slane %v4703, 4
      %v4710 = vshrl.u32 %v4527, 16
      %v4712 = vrot.slane %v4710, 7
      %v4713 = vshll.u32 %v4527, 16
      %v4715 = vor.u32 %v4712, %v4713
      %v4716 = vrot.slane %v4712, 4
      %v4718 = vshrl.u32 %v4528, 16
      %v4720 = vrot.slane %v4718, 7
      %v4721 = vshll.u32 %v4528, 16
      %v4723 = vor.u32 %v4720, %v4721
      %v4724 = vsel %vm4071, %v4716, %v4723
      %v4725 = vrot.slane %v4720, 4
      %v4727 = vshrl.u32 %v4529, 16
      %v4729 = vrot.slane %v4727, 7
      %v4730 = vshll.u32 %v4529, 16
      %v4732 = vor.u32 %v4729, %v4730
      %v4733 = vrot.slane %v4729, 4
      %v4735 = vshrl.u32 %v4530, 16
      %v4737 = vrot.slane %v4735, 7
      %v4738 = vshll.u32 %v4530, 16
      %v4740 = vor.u32 %v4737, %v4738
      %v4741 = vsel %vm4071, %v4733, %v4740
      %v4742 = vrot.slane %v4737, 4
      %v4744 = vshrl.u32 %v4531, 16
      %v4746 = vrot.slane %v4744, 7
      %v4747 = vshll.u32 %v4531, 16
      %v4749 = vor.u32 %v4746, %v4747
      %v4750 = vrot.slane %v4746, 4
      %v4752 = vshrl.u32 %v4532, 16
      %v4754 = vrot.slane %v4752, 7
      %v4755 = vshll.u32 %v4532, 16
      %v4757 = vor.u32 %v4754, %v4755
      %v4758 = vsel %vm4071, %v4750, %v4757
      %v4759 = vrot.slane %v4754, 4
      %v4761 = vshrl.u32 %v4533, 16
      %v4763 = vrot.slane %v4761, 7
      %v4764 = vshll.u32 %v4533, 16
      %v4766 = vor.u32 %v4763, %v4764
      %v4767 = vrot.slane %v4763, 4
      %v4769 = vshrl.u32 %v4534, 16
      %v4771 = vrot.slane %v4769, 7
      %v4772 = vshll.u32 %v4534, 16
      %v4774 = vor.u32 %v4771, %v4772
      %v4775 = vsel %vm4071, %v4767, %v4774
      %v4776 = vrot.slane %v4771, 4
      %v4778 = vshrl.u32 %v4535, 16
      %v4780 = vrot.slane %v4778, 7
      %v4781 = vshll.u32 %v4535, 16
      %v4783 = vor.u32 %v4780, %v4781
      %v4784 = vrot.slane %v4780, 4
      %v4786 = vshrl.u32 %v4536, 16
      %v4788 = vrot.slane %v4786, 7
      %v4789 = vshll.u32 %v4536, 16
      %v4791 = vor.u32 %v4788, %v4789
      %v4792 = vsel %vm4071, %v4784, %v4791
      %v4793 = vrot.slane %v4788, 4
      %v4795 = vshrl.u32 %v4537, 16
      %v4797 = vrot.slane %v4795, 7
      %v4798 = vshll.u32 %v4537, 16
      %v4800 = vor.u32 %v4797, %v4798
      %v4801 = vrot.slane %v4797, 4
      %v4803 = vshrl.u32 %v4538, 16
      %v4805 = vrot.slane %v4803, 7
      %v4806 = vshll.u32 %v4538, 16
      %v4808 = vor.u32 %v4805, %v4806
      %v4809 = vsel %vm4071, %v4801, %v4808
      %v4810 = vrot.slane %v4805, 4
      %4811 = vrot.lane.b32.xlu0 %v4545, 4
      %v4812 = vpop.permute.xlu0 %4811
      %4813 = vrot.lane.b32.xlu0 %v4554, 4
      %v4814 = vpop.permute.xlu0 %4813
      %4815 = vrot.lane.b32.xlu0 %v4555, 4
      %v4816 = vpop.permute.xlu0 %4815
      %4817 = vrot.lane.b32.xlu0 %v4562, 4
      %v4818 = vpop.permute.xlu0 %4817
      %4819 = vrot.lane.b32.xlu0 %v4571, 4
      %v4820 = vpop.permute.xlu0 %4819
      %4821 = vrot.lane.b32.xlu0 %v4572, 4
      %v4822 = vpop.permute.xlu0 %4821
      %4823 = vrot.lane.b32.xlu0 %v4579, 4
      %v4824 = vpop.permute.xlu0 %4823
      %4825 = vrot.lane.b32.xlu0 %v4588, 4
      %v4826 = vpop.permute.xlu0 %4825
      %4827 = vrot.lane.b32.xlu0 %v4589, 4
      %v4828 = vpop.permute.xlu0 %4827
      %4829 = vrot.lane.b32.xlu0 %v4596, 4
      %v4830 = vpop.permute.xlu0 %4829
      %4831 = vrot.lane.b32.xlu0 %v4605, 4
      %v4832 = vpop.permute.xlu0 %4831
      %4833 = vrot.lane.b32.xlu0 %v4606, 4
      %v4834 = vpop.permute.xlu0 %4833
      %4835 = vrot.lane.b32.xlu0 %v4613, 4
      %v4836 = vpop.permute.xlu0 %4835
      %4837 = vrot.lane.b32.xlu0 %v4622, 4
      %v4838 = vpop.permute.xlu0 %4837
      %4839 = vrot.lane.b32.xlu0 %v4623, 4
      %v4840 = vpop.permute.xlu0 %4839
      %4841 = vrot.lane.b32.xlu0 %v4630, 4
      %v4842 = vpop.permute.xlu0 %4841
      %4843 = vrot.lane.b32.xlu0 %v4639, 4
      %v4844 = vpop.permute.xlu0 %4843
      %4845 = vrot.lane.b32.xlu0 %v4640, 4
      %v4846 = vpop.permute.xlu0 %4845
      %4847 = vrot.lane.b32.xlu0 %v4647, 4
      %v4848 = vpop.permute.xlu0 %4847
      %4849 = vrot.lane.b32.xlu0 %v4656, 4
      %v4850 = vpop.permute.xlu0 %4849
      %4851 = vrot.lane.b32.xlu0 %v4657, 4
      %v4852 = vpop.permute.xlu0 %4851
      %4853 = vrot.lane.b32.xlu0 %v4664, 4
      %v4854 = vpop.permute.xlu0 %4853
      %4855 = vrot.lane.b32.xlu0 %v4673, 4
      %v4856 = vpop.permute.xlu0 %4855
      %4857 = vrot.lane.b32.xlu0 %v4674, 4
      %v4858 = vpop.permute.xlu0 %4857
      %4859 = vrot.lane.b32.xlu0 %v4681, 4
      %v4860 = vpop.permute.xlu0 %4859
      %4861 = vrot.lane.b32.xlu0 %v4690, 4
      %v4862 = vpop.permute.xlu0 %4861
      %4863 = vrot.lane.b32.xlu0 %v4691, 4
      %v4864 = vpop.permute.xlu0 %4863
      %4865 = vrot.lane.b32.xlu0 %v4698, 4
      %v4866 = vpop.permute.xlu0 %4865
      %4867 = vrot.lane.b32.xlu0 %v4707, 4
      %v4868 = vpop.permute.xlu0 %4867
      %4869 = vrot.lane.b32.xlu0 %v4708, 4
      %v4870 = vpop.permute.xlu0 %4869
      %4871 = vrot.lane.b32.xlu0 %v4715, 4
      %v4872 = vpop.permute.xlu0 %4871
      %4873 = vrot.lane.b32.xlu0 %v4724, 4
      %v4874 = vpop.permute.xlu0 %4873
      %4875 = vrot.lane.b32.xlu0 %v4725, 4
      %v4876 = vpop.permute.xlu0 %4875
      %4877 = vrot.lane.b32.xlu0 %v4732, 4
      %v4878 = vpop.permute.xlu0 %4877
      %4879 = vrot.lane.b32.xlu0 %v4741, 4
      %v4880 = vpop.permute.xlu0 %4879
      %4881 = vrot.lane.b32.xlu0 %v4742, 4
      %v4882 = vpop.permute.xlu0 %4881
      %4883 = vrot.lane.b32.xlu0 %v4749, 4
      %v4884 = vpop.permute.xlu0 %4883
      %4885 = vrot.lane.b32.xlu0 %v4758, 4
      %v4886 = vpop.permute.xlu0 %4885
      %4887 = vrot.lane.b32.xlu0 %v4759, 4
      %v4888 = vpop.permute.xlu0 %4887
      %4889 = vrot.lane.b32.xlu0 %v4766, 4
      %v4890 = vpop.permute.xlu0 %4889
      %4891 = vrot.lane.b32.xlu0 %v4775, 4
      %v4892 = vpop.permute.xlu0 %4891
      %4893 = vrot.lane.b32.xlu0 %v4776, 4
      %v4894 = vpop.permute.xlu0 %4893
      %4895 = vrot.lane.b32.xlu0 %v4783, 4
      %v4896 = vpop.permute.xlu0 %4895
      %4897 = vrot.lane.b32.xlu0 %v4792, 4
      %v4898 = vpop.permute.xlu0 %4897
      %4899 = vrot.lane.b32.xlu0 %v4793, 4
      %v4900 = vpop.permute.xlu0 %4899
      %4901 = vrot.lane.b32.xlu0 %v4800, 4
      %v4902 = vpop.permute.xlu0 %4901
      %4903 = vrot.lane.b32.xlu0 %v4809, 4
      %v4904 = vpop.permute.xlu0 %4903
      %4905 = vrot.lane.b32.xlu0 %v4810, 4
      %v4906 = vpop.permute.xlu0 %4905
      %vm4955 = vcmask 60448
      %vm4956 = vmand %vm4955, %vm528
      %v4957 = vld [vmem:[%s4392] sm:$0xf]
      %v4958 = vsel %vm4956, %v4812, %v4957
      %4959 = vst [vmem:[%s4392] sm:$0xf] %v4958
      %vm4960 = vcmask 60448
      %4961 = vst.msk [vmem:[%s4392 + $0x4] sm:$0xf] %vm4960, %v4814
      %vm4962 = vcmask 57376
      %vm4963 = vmand %vm4962, %vm472
      %v4964 = vld [vmem:[%s4392 + $0x8] sm:$0x1]
      %v4965 = vsel %vm4963, %v4816, %v4964
      %4966 = vst [vmem:[%s4392 + $0x8] sm:$0x1] %v4965
      %v4967 = vld [vmem:[%s4392 + $0xc] sm:$0xf]
      %v4968 = vsel %vm4956, %v4818, %v4967
      %4969 = vst [vmem:[%s4392 + $0xc] sm:$0xf] %v4968
      %4970 = vst.msk [vmem:[%s4392 + $0x10] sm:$0xf] %vm4960, %v4820
      %v4971 = vld [vmem:[%s4392 + $0x14] sm:$0x1]
      %v4972 = vsel %vm4963, %v4822, %v4971
      %4973 = vst [vmem:[%s4392 + $0x14] sm:$0x1] %v4972
      %v4974 = vld [vmem:[%s4392 + $0x18] sm:$0xf]
      %v4975 = vsel %vm4956, %v4824, %v4974
      %4976 = vst [vmem:[%s4392 + $0x18] sm:$0xf] %v4975
      %4977 = vst.msk [vmem:[%s4392 + $0x1c] sm:$0xf] %vm4960, %v4826
      %v4978 = vld [vmem:[%s4392 + $0x20] sm:$0x1]
      %v4979 = vsel %vm4963, %v4828, %v4978
      %4980 = vst [vmem:[%s4392 + $0x20] sm:$0x1] %v4979
      %v4981 = vld [vmem:[%s4392 + $0x24] sm:$0xf]
      %v4982 = vsel %vm4956, %v4830, %v4981
      %4983 = vst [vmem:[%s4392 + $0x24] sm:$0xf] %v4982
      %4984 = vst.msk [vmem:[%s4392 + $0x28] sm:$0xf] %vm4960, %v4832
      %v4985 = vld [vmem:[%s4392 + $0x2c] sm:$0x1]
      %v4986 = vsel %vm4963, %v4834, %v4985
      %4987 = vst [vmem:[%s4392 + $0x2c] sm:$0x1] %v4986
      %v4988 = vld [vmem:[%s4392 + $0x30] sm:$0xf]
      %v4989 = vsel %vm4956, %v4836, %v4988
      %4990 = vst [vmem:[%s4392 + $0x30] sm:$0xf] %v4989
      %4991 = vst.msk [vmem:[%s4392 + $0x34] sm:$0xf] %vm4960, %v4838
      %v4992 = vld [vmem:[%s4392 + $0x38] sm:$0x1]
      %v4993 = vsel %vm4963, %v4840, %v4992
      %4994 = vst [vmem:[%s4392 + $0x38] sm:$0x1] %v4993
      %v4995 = vld [vmem:[%s4392 + $0x3c] sm:$0xf]
      %v4996 = vsel %vm4956, %v4842, %v4995
      %4997 = vst [vmem:[%s4392 + $0x3c] sm:$0xf] %v4996
      %4998 = vst.msk [vmem:[%s4392 + $0x40] sm:$0xf] %vm4960, %v4844
      %v4999 = vld [vmem:[%s4392 + $0x44] sm:$0x1]
      %v5000 = vsel %vm4963, %v4846, %v4999
      %5001 = vst [vmem:[%s4392 + $0x44] sm:$0x1] %v5000
      %v5002 = vld [vmem:[%s4392 + $0x48] sm:$0xf]
      %v5003 = vsel %vm4956, %v4848, %v5002
      %5004 = vst [vmem:[%s4392 + $0x48] sm:$0xf] %v5003
      %5005 = vst.msk [vmem:[%s4392 + $0x4c] sm:$0xf] %vm4960, %v4850
      %v5006 = vld [vmem:[%s4392 + $0x50] sm:$0x1]
      %v5007 = vsel %vm4963, %v4852, %v5006
      %5008 = vst [vmem:[%s4392 + $0x50] sm:$0x1] %v5007
      %v5009 = vld [vmem:[%s4392 + $0x54] sm:$0xf]
      %v5010 = vsel %vm4956, %v4854, %v5009
      %5011 = vst [vmem:[%s4392 + $0x54] sm:$0xf] %v5010
      %5012 = vst.msk [vmem:[%s4392 + $0x58] sm:$0xf] %vm4960, %v4856
      %v5013 = vld [vmem:[%s4392 + $0x5c] sm:$0x1]
      %v5014 = vsel %vm4963, %v4858, %v5013
      %5015 = vst [vmem:[%s4392 + $0x5c] sm:$0x1] %v5014
      %v5016 = vld [vmem:[%s4392 + $0x60] sm:$0xf]
      %v5017 = vsel %vm4956, %v4860, %v5016
      %5018 = vst [vmem:[%s4392 + $0x60] sm:$0xf] %v5017
      %5019 = vst.msk [vmem:[%s4392 + $0x64] sm:$0xf] %vm4960, %v4862
      %v5020 = vld [vmem:[%s4392 + $0x68] sm:$0x1]
      %v5021 = vsel %vm4963, %v4864, %v5020
      %5022 = vst [vmem:[%s4392 + $0x68] sm:$0x1] %v5021
      %v5023 = vld [vmem:[%s4392 + $0x6c] sm:$0xf]
      %v5024 = vsel %vm4956, %v4866, %v5023
      %5025 = vst [vmem:[%s4392 + $0x6c] sm:$0xf] %v5024
      %5026 = vst.msk [vmem:[%s4392 + $0x70] sm:$0xf] %vm4960, %v4868
      %v5027 = vld [vmem:[%s4392 + $0x74] sm:$0x1]
      %v5028 = vsel %vm4963, %v4870, %v5027
      %5029 = vst [vmem:[%s4392 + $0x74] sm:$0x1] %v5028
      %v5030 = vld [vmem:[%s4392 + $0x78] sm:$0xf]
      %v5031 = vsel %vm4956, %v4872, %v5030
      %5032 = vst [vmem:[%s4392 + $0x78] sm:$0xf] %v5031
      %5033 = vst.msk [vmem:[%s4392 + $0x7c] sm:$0xf] %vm4960, %v4874
      %v5034 = vld [vmem:[%s4392 + $0x80] sm:$0x1]
      %v5035 = vsel %vm4963, %v4876, %v5034
      %5036 = vst [vmem:[%s4392 + $0x80] sm:$0x1] %v5035
      %v5037 = vld [vmem:[%s4392 + $0x84] sm:$0xf]
      %v5038 = vsel %vm4956, %v4878, %v5037
      %5039 = vst [vmem:[%s4392 + $0x84] sm:$0xf] %v5038
      %5040 = vst.msk [vmem:[%s4392 + $0x88] sm:$0xf] %vm4960, %v4880
      %v5041 = vld [vmem:[%s4392 + $0x8c] sm:$0x1]
      %v5042 = vsel %vm4963, %v4882, %v5041
      %5043 = vst [vmem:[%s4392 + $0x8c] sm:$0x1] %v5042
      %v5044 = vld [vmem:[%s4392 + $0x90] sm:$0xf]
      %v5045 = vsel %vm4956, %v4884, %v5044
      %5046 = vst [vmem:[%s4392 + $0x90] sm:$0xf] %v5045
      %5047 = vst.msk [vmem:[%s4392 + $0x94] sm:$0xf] %vm4960, %v4886
      %v5048 = vld [vmem:[%s4392 + $0x98] sm:$0x1]
      %v5049 = vsel %vm4963, %v4888, %v5048
      %5050 = vst [vmem:[%s4392 + $0x98] sm:$0x1] %v5049
      %v5051 = vld [vmem:[%s4392 + $0x9c] sm:$0xf]
      %v5052 = vsel %vm4956, %v4890, %v5051
      %5053 = vst [vmem:[%s4392 + $0x9c] sm:$0xf] %v5052
      %5054 = vst.msk [vmem:[%s4392 + $0xa0] sm:$0xf] %vm4960, %v4892
      %v5055 = vld [vmem:[%s4392 + $0xa4] sm:$0x1]
      %v5056 = vsel %vm4963, %v4894, %v5055
      %5057 = vst [vmem:[%s4392 + $0xa4] sm:$0x1] %v5056
      %v5058 = vld [vmem:[%s4392 + $0xa8] sm:$0xf]
      %v5059 = vsel %vm4956, %v4896, %v5058
      %5060 = vst [vmem:[%s4392 + $0xa8] sm:$0xf] %v5059
      %5061 = vst.msk [vmem:[%s4392 + $0xac] sm:$0xf] %vm4960, %v4898
      %v5062 = vld [vmem:[%s4392 + $0xb0] sm:$0x1]
      %v5063 = vsel %vm4963, %v4900, %v5062
      %5064 = vst [vmem:[%s4392 + $0xb0] sm:$0x1] %v5063
      %v5065 = vld [vmem:[%s4392 + $0xb4] sm:$0xf]
      %v5066 = vsel %vm4956, %v4902, %v5065
      %5067 = vst [vmem:[%s4392 + $0xb4] sm:$0xf] %v5066
      %5068 = vst.msk [vmem:[%s4392 + $0xb8] sm:$0xf] %vm4960, %v4904
      %v5069 = vld [vmem:[%s4392 + $0xbc] sm:$0x1]
      %v5070 = vsel %vm4963, %v4906, %v5069
      %5071 = vst [vmem:[%s4392 + $0xbc] sm:$0x1] %v5070
      %v5072 = vld [vmem:[#allocation2] sm:$0xf]
      %v5073 = vld [vmem:[#allocation2 + $0x4] sm:$0xf]
      %v5074 = vld [vmem:[#allocation2 + $0xc] sm:$0xf]
      %v5075 = vld [vmem:[#allocation2 + $0x10] sm:$0xf]
      %v5076 = vld [vmem:[#allocation2 + $0x18] sm:$0xf]
      %v5077 = vld [vmem:[#allocation2 + $0x1c] sm:$0xf]
      %v5078 = vld [vmem:[#allocation2 + $0x24] sm:$0xf]
      %v5079 = vld [vmem:[#allocation2 + $0x28] sm:$0xf]
      %v5080 = vld [vmem:[#allocation2 + $0x30] sm:$0xf]
      %v5081 = vld [vmem:[#allocation2 + $0x34] sm:$0xf]
      %v5082 = vld [vmem:[#allocation2 + $0x3c] sm:$0xf]
      %v5083 = vld [vmem:[#allocation2 + $0x40] sm:$0xf]
      %v5084 = vld [vmem:[#allocation2 + $0x48] sm:$0xf]
      %v5085 = vld [vmem:[#allocation2 + $0x4c] sm:$0xf]
      %v5086 = vld [vmem:[#allocation2 + $0x54] sm:$0xf]
      %v5087 = vld [vmem:[#allocation2 + $0x58] sm:$0xf]
      %v5088 = vld [vmem:[#allocation2 + $0x60] sm:$0xf]
      %v5089 = vld [vmem:[#allocation2 + $0x64] sm:$0xf]
      %v5090 = vld [vmem:[#allocation2 + $0x6c] sm:$0xf]
      %v5091 = vld [vmem:[#allocation2 + $0x70] sm:$0xf]
      %v5092 = vld [vmem:[#allocation2 + $0x78] sm:$0xf]
      %v5093 = vld [vmem:[#allocation2 + $0x7c] sm:$0xf]
      %v5094 = vld [vmem:[#allocation2 + $0x84] sm:$0xf]
      %v5095 = vld [vmem:[#allocation2 + $0x88] sm:$0xf]
      %v5096 = vld [vmem:[#allocation2 + $0x90] sm:$0xf]
      %v5097 = vld [vmem:[#allocation2 + $0x94] sm:$0xf]
      %v5098 = vld [vmem:[#allocation2 + $0x9c] sm:$0xf]
      %v5099 = vld [vmem:[#allocation2 + $0xa0] sm:$0xf]
      %v5100 = vld [vmem:[#allocation2 + $0xa8] sm:$0xf]
      %v5101 = vld [vmem:[#allocation2 + $0xac] sm:$0xf]
      %v5102 = vld [vmem:[#allocation2 + $0xb4] sm:$0xf]
      %v5103 = vld [vmem:[#allocation2 + $0xb8] sm:$0xf]
      %v5104 = vld [vmem:[#allocation2 + $0x8] sm:$0x1]
      %v5105 = vld [vmem:[#allocation2 + $0x14] sm:$0x1]
      %v5106 = vld [vmem:[#allocation2 + $0x20] sm:$0x1]
      %v5107 = vld [vmem:[#allocation2 + $0x2c] sm:$0x1]
      %v5108 = vld [vmem:[#allocation2 + $0x38] sm:$0x1]
      %v5109 = vld [vmem:[#allocation2 + $0x44] sm:$0x1]
      %v5110 = vld [vmem:[#allocation2 + $0x50] sm:$0x1]
      %v5111 = vld [vmem:[#allocation2 + $0x5c] sm:$0x1]
      %v5112 = vld [vmem:[#allocation2 + $0x68] sm:$0x1]
      %v5113 = vld [vmem:[#allocation2 + $0x74] sm:$0x1]
      %v5114 = vld [vmem:[#allocation2 + $0x80] sm:$0x1]
      %v5115 = vld [vmem:[#allocation2 + $0x8c] sm:$0x1]
      %v5116 = vld [vmem:[#allocation2 + $0x98] sm:$0x1]
      %v5117 = vld [vmem:[#allocation2 + $0xa4] sm:$0x1]
      %v5118 = vld [vmem:[#allocation2 + $0xb0] sm:$0x1]
      %v5119 = vld [vmem:[#allocation2 + $0xbc] sm:$0x1]
      %v5121 = vshrl.u32 %v5072, 16
      %v5123 = vrot.slane %v5121, 4
      %v5124 = vshll.u32 %v5072, 16
      %v5126 = vrot.slane %v5124, 5
      %v5127 = vor.u32 %v5123, %v5126
      %v5128 = vrot.slane %v5127, 4
      %v5130 = vshll.u32 %v5073, 16
      %v5132 = vrot.slane %v5130, 5
      %v5133 = vsel %vm722, %v5128, %v5132
      %v5134 = vshrl.u32 %v5073, 16
      %v5136 = vrot.slane %v5134, 4
      %v5137 = vor.u32 %v5136, %v5132
      %v5138 = vrot.slane %v5137, 4
      %v5140 = vshll.u32 %v5104, 16
      %v5142 = vrot.slane %v5140, 5
      %v5143 = vsel %vm722, %v5138, %v5142
      %v5145 = vshrl.u32 %v5074, 16
      %v5147 = vrot.slane %v5145, 4
      %v5148 = vshll.u32 %v5074, 16
      %v5150 = vrot.slane %v5148, 5
      %v5151 = vor.u32 %v5147, %v5150
      %v5152 = vrot.slane %v5151, 4
      %v5154 = vshll.u32 %v5075, 16
      %v5156 = vrot.slane %v5154, 5
      %v5157 = vsel %vm722, %v5152, %v5156
      %v5158 = vshrl.u32 %v5075, 16
      %v5160 = vrot.slane %v5158, 4
      %v5161 = vor.u32 %v5160, %v5156
      %v5162 = vrot.slane %v5161, 4
      %v5164 = vshll.u32 %v5105, 16
      %v5166 = vrot.slane %v5164, 5
      %v5167 = vsel %vm722, %v5162, %v5166
      %v5169 = vshrl.u32 %v5076, 16
      %v5171 = vrot.slane %v5169, 4
      %v5172 = vshll.u32 %v5076, 16
      %v5174 = vrot.slane %v5172, 5
      %v5175 = vor.u32 %v5171, %v5174
      %v5176 = vrot.slane %v5175, 4
      %v5178 = vshll.u32 %v5077, 16
      %v5180 = vrot.slane %v5178, 5
      %v5181 = vsel %vm722, %v5176, %v5180
      %v5182 = vshrl.u32 %v5077, 16
      %v5184 = vrot.slane %v5182, 4
      %v5185 = vor.u32 %v5184, %v5180
      %v5186 = vrot.slane %v5185, 4
      %v5188 = vshll.u32 %v5106, 16
      %v5190 = vrot.slane %v5188, 5
      %v5191 = vsel %vm722, %v5186, %v5190
      %v5193 = vshrl.u32 %v5078, 16
      %v5195 = vrot.slane %v5193, 4
      %v5196 = vshll.u32 %v5078, 16
      %v5198 = vrot.slane %v5196, 5
      %v5199 = vor.u32 %v5195, %v5198
      %v5200 = vrot.slane %v5199, 4
      %v5202 = vshll.u32 %v5079, 16
      %v5204 = vrot.slane %v5202, 5
      %v5205 = vsel %vm722, %v5200, %v5204
      %v5206 = vshrl.u32 %v5079, 16
      %v5208 = vrot.slane %v5206, 4
      %v5209 = vor.u32 %v5208, %v5204
      %v5210 = vrot.slane %v5209, 4
      %v5212 = vshll.u32 %v5107, 16
      %v5214 = vrot.slane %v5212, 5
      %v5215 = vsel %vm722, %v5210, %v5214
      %v5217 = vshrl.u32 %v5080, 16
      %v5219 = vrot.slane %v5217, 4
      %v5220 = vshll.u32 %v5080, 16
      %v5222 = vrot.slane %v5220, 5
      %v5223 = vor.u32 %v5219, %v5222
      %v5224 = vrot.slane %v5223, 4
      %v5226 = vshll.u32 %v5081, 16
      %v5228 = vrot.slane %v5226, 5
      %v5229 = vsel %vm722, %v5224, %v5228
      %v5230 = vshrl.u32 %v5081, 16
      %v5232 = vrot.slane %v5230, 4
      %v5233 = vor.u32 %v5232, %v5228
      %v5234 = vrot.slane %v5233, 4
      %v5236 = vshll.u32 %v5108, 16
      %v5238 = vrot.slane %v5236, 5
      %v5239 = vsel %vm722, %v5234, %v5238
      %v5241 = vshrl.u32 %v5082, 16
      %v5243 = vrot.slane %v5241, 4
      %v5244 = vshll.u32 %v5082, 16
      %v5246 = vrot.slane %v5244, 5
      %v5247 = vor.u32 %v5243, %v5246
      %v5248 = vrot.slane %v5247, 4
      %v5250 = vshll.u32 %v5083, 16
      %v5252 = vrot.slane %v5250, 5
      %v5253 = vsel %vm722, %v5248, %v5252
      %v5254 = vshrl.u32 %v5083, 16
      %v5256 = vrot.slane %v5254, 4
      %v5257 = vor.u32 %v5256, %v5252
      %v5258 = vrot.slane %v5257, 4
      %v5260 = vshll.u32 %v5109, 16
      %v5262 = vrot.slane %v5260, 5
      %v5263 = vsel %vm722, %v5258, %v5262
      %v5265 = vshrl.u32 %v5084, 16
      %v5267 = vrot.slane %v5265, 4
      %v5268 = vshll.u32 %v5084, 16
      %v5270 = vrot.slane %v5268, 5
      %v5271 = vor.u32 %v5267, %v5270
      %v5272 = vrot.slane %v5271, 4
      %v5274 = vshll.u32 %v5085, 16
      %v5276 = vrot.slane %v5274, 5
      %v5277 = vsel %vm722, %v5272, %v5276
      %v5278 = vshrl.u32 %v5085, 16
      %v5280 = vrot.slane %v5278, 4
      %v5281 = vor.u32 %v5280, %v5276
      %v5282 = vrot.slane %v5281, 4
      %v5284 = vshll.u32 %v5110, 16
      %v5286 = vrot.slane %v5284, 5
      %v5287 = vsel %vm722, %v5282, %v5286
      %v5289 = vshrl.u32 %v5086, 16
      %v5291 = vrot.slane %v5289, 4
      %v5292 = vshll.u32 %v5086, 16
      %v5294 = vrot.slane %v5292, 5
      %v5295 = vor.u32 %v5291, %v5294
      %v5296 = vrot.slane %v5295, 4
      %v5298 = vshll.u32 %v5087, 16
      %v5300 = vrot.slane %v5298, 5
      %v5301 = vsel %vm722, %v5296, %v5300
      %v5302 = vshrl.u32 %v5087, 16
      %v5304 = vrot.slane %v5302, 4
      %v5305 = vor.u32 %v5304, %v5300
      %v5306 = vrot.slane %v5305, 4
      %v5308 = vshll.u32 %v5111, 16
      %v5310 = vrot.slane %v5308, 5
      %v5311 = vsel %vm722, %v5306, %v5310
      %v5313 = vshrl.u32 %v5088, 16
      %v5315 = vrot.slane %v5313, 4
      %v5316 = vshll.u32 %v5088, 16
      %v5318 = vrot.slane %v5316, 5
      %v5319 = vor.u32 %v5315, %v5318
      %v5320 = vrot.slane %v5319, 4
      %v5322 = vshll.u32 %v5089, 16
      %v5324 = vrot.slane %v5322, 5
      %v5325 = vsel %vm722, %v5320, %v5324
      %v5326 = vshrl.u32 %v5089, 16
      %v5328 = vrot.slane %v5326, 4
      %v5329 = vor.u32 %v5328, %v5324
      %v5330 = vrot.slane %v5329, 4
      %v5332 = vshll.u32 %v5112, 16
      %v5334 = vrot.slane %v5332, 5
      %v5335 = vsel %vm722, %v5330, %v5334
      %v5337 = vshrl.u32 %v5090, 16
      %v5339 = vrot.slane %v5337, 4
      %v5340 = vshll.u32 %v5090, 16
      %v5342 = vrot.slane %v5340, 5
      %v5343 = vor.u32 %v5339, %v5342
      %v5344 = vrot.slane %v5343, 4
      %v5346 = vshll.u32 %v5091, 16
      %v5348 = vrot.slane %v5346, 5
      %v5349 = vsel %vm722, %v5344, %v5348
      %v5350 = vshrl.u32 %v5091, 16
      %v5352 = vrot.slane %v5350, 4
      %v5353 = vor.u32 %v5352, %v5348
      %v5354 = vrot.slane %v5353, 4
      %v5356 = vshll.u32 %v5113, 16
      %v5358 = vrot.slane %v5356, 5
      %v5359 = vsel %vm722, %v5354, %v5358
      %v5361 = vshrl.u32 %v5092, 16
      %v5363 = vrot.slane %v5361, 4
      %v5364 = vshll.u32 %v5092, 16
      %v5366 = vrot.slane %v5364, 5
      %v5367 = vor.u32 %v5363, %v5366
      %v5368 = vrot.slane %v5367, 4
      %v5370 = vshll.u32 %v5093, 16
      %v5372 = vrot.slane %v5370, 5
      %v5373 = vsel %vm722, %v5368, %v5372
      %v5374 = vshrl.u32 %v5093, 16
      %v5376 = vrot.slane %v5374, 4
      %v5377 = vor.u32 %v5376, %v5372
      %v5378 = vrot.slane %v5377, 4
      %v5380 = vshll.u32 %v5114, 16
      %v5382 = vrot.slane %v5380, 5
      %v5383 = vsel %vm722, %v5378, %v5382
      %v5385 = vshrl.u32 %v5094, 16
      %v5387 = vrot.slane %v5385, 4
      %v5388 = vshll.u32 %v5094, 16
      %v5390 = vrot.slane %v5388, 5
      %v5391 = vor.u32 %v5387, %v5390
      %v5392 = vrot.slane %v5391, 4
      %v5394 = vshll.u32 %v5095, 16
      %v5396 = vrot.slane %v5394, 5
      %v5397 = vsel %vm722, %v5392, %v5396
      %v5398 = vshrl.u32 %v5095, 16
      %v5400 = vrot.slane %v5398, 4
      %v5401 = vor.u32 %v5400, %v5396
      %v5402 = vrot.slane %v5401, 4
      %v5404 = vshll.u32 %v5115, 16
      %v5406 = vrot.slane %v5404, 5
      %v5407 = vsel %vm722, %v5402, %v5406
      %v5409 = vshrl.u32 %v5096, 16
      %v5411 = vrot.slane %v5409, 4
      %v5412 = vshll.u32 %v5096, 16
      %v5414 = vrot.slane %v5412, 5
      %v5415 = vor.u32 %v5411, %v5414
      %v5416 = vrot.slane %v5415, 4
      %v5418 = vshll.u32 %v5097, 16
      %v5420 = vrot.slane %v5418, 5
      %v5421 = vsel %vm722, %v5416, %v5420
      %v5422 = vshrl.u32 %v5097, 16
      %v5424 = vrot.slane %v5422, 4
      %v5425 = vor.u32 %v5424, %v5420
      %v5426 = vrot.slane %v5425, 4
      %v5428 = vshll.u32 %v5116, 16
      %v5430 = vrot.slane %v5428, 5
      %v5431 = vsel %vm722, %v5426, %v5430
      %v5433 = vshrl.u32 %v5098, 16
      %v5435 = vrot.slane %v5433, 4
      %v5436 = vshll.u32 %v5098, 16
      %v5438 = vrot.slane %v5436, 5
      %v5439 = vor.u32 %v5435, %v5438
      %v5440 = vrot.slane %v5439, 4
      %v5442 = vshll.u32 %v5099, 16
      %v5444 = vrot.slane %v5442, 5
      %v5445 = vsel %vm722, %v5440, %v5444
      %v5446 = vshrl.u32 %v5099, 16
      %v5448 = vrot.slane %v5446, 4
      %v5449 = vor.u32 %v5448, %v5444
      %v5450 = vrot.slane %v5449, 4
      %v5452 = vshll.u32 %v5117, 16
      %v5454 = vrot.slane %v5452, 5
      %v5455 = vsel %vm722, %v5450, %v5454
      %v5457 = vshrl.u32 %v5100, 16
      %v5459 = vrot.slane %v5457, 4
      %v5460 = vshll.u32 %v5100, 16
      %v5462 = vrot.slane %v5460, 5
      %v5463 = vor.u32 %v5459, %v5462
      %v5464 = vrot.slane %v5463, 4
      %v5466 = vshll.u32 %v5101, 16
      %v5468 = vrot.slane %v5466, 5
      %v5469 = vsel %vm722, %v5464, %v5468
      %v5470 = vshrl.u32 %v5101, 16
      %v5472 = vrot.slane %v5470, 4
      %v5473 = vor.u32 %v5472, %v5468
      %v5474 = vrot.slane %v5473, 4
      %v5476 = vshll.u32 %v5118, 16
      %v5478 = vrot.slane %v5476, 5
      %v5479 = vsel %vm722, %v5474, %v5478
      %v5481 = vshrl.u32 %v5102, 16
      %v5483 = vrot.slane %v5481, 4
      %v5484 = vshll.u32 %v5102, 16
      %v5486 = vrot.slane %v5484, 5
      %v5487 = vor.u32 %v5483, %v5486
      %v5488 = vrot.slane %v5487, 4
      %v5490 = vshll.u32 %v5103, 16
      %v5492 = vrot.slane %v5490, 5
      %v5493 = vsel %vm722, %v5488, %v5492
      %v5494 = vshrl.u32 %v5103, 16
      %v5496 = vrot.slane %v5494, 4
      %v5497 = vor.u32 %v5496, %v5492
      %v5498 = vrot.slane %v5497, 4
      %v5500 = vshll.u32 %v5119, 16
      %v5502 = vrot.slane %v5500, 5
      %v5503 = vsel %vm722, %v5498, %v5502
      %v5504 = vld [vmem:[#allocation2] sm:$0xe]
      %v5505 = vld [vmem:[#allocation2 + $0xc] sm:$0xe]
      %v5506 = vld [vmem:[#allocation2 + $0x18] sm:$0xe]
      %v5507 = vld [vmem:[#allocation2 + $0x24] sm:$0xe]
      %v5508 = vld [vmem:[#allocation2 + $0x30] sm:$0xe]
      %v5509 = vld [vmem:[#allocation2 + $0x3c] sm:$0xe]
      %v5510 = vld [vmem:[#allocation2 + $0x48] sm:$0xe]
      %v5511 = vld [vmem:[#allocation2 + $0x54] sm:$0xe]
      %v5512 = vld [vmem:[#allocation2 + $0x60] sm:$0xe]
      %v5513 = vld [vmem:[#allocation2 + $0x6c] sm:$0xe]
      %v5514 = vld [vmem:[#allocation2 + $0x78] sm:$0xe]
      %v5515 = vld [vmem:[#allocation2 + $0x84] sm:$0xe]
      %v5516 = vld [vmem:[#allocation2 + $0x90] sm:$0xe]
      %v5517 = vld [vmem:[#allocation2 + $0x9c] sm:$0xe]
      %v5518 = vld [vmem:[#allocation2 + $0xa8] sm:$0xe]
      %v5519 = vld [vmem:[#allocation2 + $0xb4] sm:$0xe]
      %vm5568 = vcmask 1042432
      %vm5569 = vcmask 1046532
      %vm5570 = vmor %vm5568, %vm5569
      %v5571 = vrot.slane %v5504, 5
      %v5572 = vrot.slane %v5571, 4
      %v5573 = vrot.slane %v5073, 5
      %v5574 = vsel %vm5570, %v5572, %v5573
      %v5575 = vrot.slane %v5573, 4
      %v5576 = vrot.slane %v5104, 5
      %v5577 = vsel %vm5570, %v5575, %v5576
      %v5578 = vrot.slane %v5505, 5
      %v5579 = vrot.slane %v5578, 4
      %v5580 = vrot.slane %v5075, 5
      %v5581 = vsel %vm5570, %v5579, %v5580
      %v5582 = vrot.slane %v5580, 4
      %v5583 = vrot.slane %v5105, 5
      %v5584 = vsel %vm5570, %v5582, %v5583
      %v5585 = vrot.slane %v5506, 5
      %v5586 = vrot.slane %v5585, 4
      %v5587 = vrot.slane %v5077, 5
      %v5588 = vsel %vm5570, %v5586, %v5587
      %v5589 = vrot.slane %v5587, 4
      %v5590 = vrot.slane %v5106, 5
      %v5591 = vsel %vm5570, %v5589, %v5590
      %v5592 = vrot.slane %v5507, 5
      %v5593 = vrot.slane %v5592, 4
      %v5594 = vrot.slane %v5079, 5
      %v5595 = vsel %vm5570, %v5593, %v5594
      %v5596 = vrot.slane %v5594, 4
      %v5597 = vrot.slane %v5107, 5
      %v5598 = vsel %vm5570, %v5596, %v5597
      %v5599 = vrot.slane %v5508, 5
      %v5600 = vrot.slane %v5599, 4
      %v5601 = vrot.slane %v5081, 5
      %v5602 = vsel %vm5570, %v5600, %v5601
      %v5603 = vrot.slane %v5601, 4
      %v5604 = vrot.slane %v5108, 5
      %v5605 = vsel %vm5570, %v5603, %v5604
      %v5606 = vrot.slane %v5509, 5
      %v5607 = vrot.slane %v5606, 4
      %v5608 = vrot.slane %v5083, 5
      %v5609 = vsel %vm5570, %v5607, %v5608
      %v5610 = vrot.slane %v5608, 4
      %v5611 = vrot.slane %v5109, 5
      %v5612 = vsel %vm5570, %v5610, %v5611
      %v5613 = vrot.slane %v5510, 5
      %v5614 = vrot.slane %v5613, 4
      %v5615 = vrot.slane %v5085, 5
      %v5616 = vsel %vm5570, %v5614, %v5615
      %v5617 = vrot.slane %v5615, 4
      %v5618 = vrot.slane %v5110, 5
      %v5619 = vsel %vm5570, %v5617, %v5618
      %v5620 = vrot.slane %v5511, 5
      %v5621 = vrot.slane %v5620, 4
      %v5622 = vrot.slane %v5087, 5
      %v5623 = vsel %vm5570, %v5621, %v5622
      %v5624 = vrot.slane %v5622, 4
      %v5625 = vrot.slane %v5111, 5
      %v5626 = vsel %vm5570, %v5624, %v5625
      %v5627 = vrot.slane %v5512, 5
      %v5628 = vrot.slane %v5627, 4
      %v5629 = vrot.slane %v5089, 5
      %v5630 = vsel %vm5570, %v5628, %v5629
      %v5631 = vrot.slane %v5629, 4
      %v5632 = vrot.slane %v5112, 5
      %v5633 = vsel %vm5570, %v5631, %v5632
      %v5634 = vrot.slane %v5513, 5
      %v5635 = vrot.slane %v5634, 4
      %v5636 = vrot.slane %v5091, 5
      %v5637 = vsel %vm5570, %v5635, %v5636
      %v5638 = vrot.slane %v5636, 4
      %v5639 = vrot.slane %v5113, 5
      %v5640 = vsel %vm5570, %v5638, %v5639
      %v5641 = vrot.slane %v5514, 5
      %v5642 = vrot.slane %v5641, 4
      %v5643 = vrot.slane %v5093, 5
      %v5644 = vsel %vm5570, %v5642, %v5643
      %v5645 = vrot.slane %v5643, 4
      %v5646 = vrot.slane %v5114, 5
      %v5647 = vsel %vm5570, %v5645, %v5646
      %v5648 = vrot.slane %v5515, 5
      %v5649 = vrot.slane %v5648, 4
      %v5650 = vrot.slane %v5095, 5
      %v5651 = vsel %vm5570, %v5649, %v5650
      %v5652 = vrot.slane %v5650, 4
      %v5653 = vrot.slane %v5115, 5
      %v5654 = vsel %vm5570, %v5652, %v5653
      %v5655 = vrot.slane %v5516, 5
      %v5656 = vrot.slane %v5655, 4
      %v5657 = vrot.slane %v5097, 5
      %v5658 = vsel %vm5570, %v5656, %v5657
      %v5659 = vrot.slane %v5657, 4
      %v5660 = vrot.slane %v5116, 5
      %v5661 = vsel %vm5570, %v5659, %v5660
      %v5662 = vrot.slane %v5517, 5
      %v5663 = vrot.slane %v5662, 4
      %v5664 = vrot.slane %v5099, 5
      %v5665 = vsel %vm5570, %v5663, %v5664
      %v5666 = vrot.slane %v5664, 4
      %v5667 = vrot.slane %v5117, 5
      %v5668 = vsel %vm5570, %v5666, %v5667
      %v5669 = vrot.slane %v5518, 5
      %v5670 = vrot.slane %v5669, 4
      %v5671 = vrot.slane %v5101, 5
      %v5672 = vsel %vm5570, %v5670, %v5671
      %v5673 = vrot.slane %v5671, 4
      %v5674 = vrot.slane %v5118, 5
      %v5675 = vsel %vm5570, %v5673, %v5674
      %v5676 = vrot.slane %v5519, 5
      %v5677 = vrot.slane %v5676, 4
      %v5678 = vrot.slane %v5103, 5
      %v5679 = vsel %vm5570, %v5677, %v5678
      %v5680 = vrot.slane %v5678, 4
      %v5681 = vrot.slane %v5119, 5
      %v5682 = vsel %vm5570, %v5680, %v5681
      %v5699 = vunpack.c.l.b16 %v5072
      %v5700 = vunpack.c.l.b16 %v5073
      %v5701 = vunpack.c.l.b16 %v5074
      %v5702 = vunpack.c.l.b16 %v5075
      %v5703 = vunpack.c.l.b16 %v5076
      %v5704 = vunpack.c.l.b16 %v5077
      %v5705 = vunpack.c.l.b16 %v5078
      %v5706 = vunpack.c.l.b16 %v5079
      %v5707 = vunpack.c.l.b16 %v5080
      %v5708 = vunpack.c.l.b16 %v5081
      %v5709 = vunpack.c.l.b16 %v5082
      %v5710 = vunpack.c.l.b16 %v5083
      %v5711 = vunpack.c.l.b16 %v5084
      %v5712 = vunpack.c.l.b16 %v5085
      %v5713 = vunpack.c.l.b16 %v5086
      %v5714 = vunpack.c.l.b16 %v5087
      %v5715 = vunpack.c.l.b16 %v5088
      %v5716 = vunpack.c.l.b16 %v5089
      %v5717 = vunpack.c.l.b16 %v5090
      %v5718 = vunpack.c.l.b16 %v5091
      %v5719 = vunpack.c.l.b16 %v5092
      %v5720 = vunpack.c.l.b16 %v5093
      %v5721 = vunpack.c.l.b16 %v5094
      %v5722 = vunpack.c.l.b16 %v5095
      %v5723 = vunpack.c.l.b16 %v5096
      %v5724 = vunpack.c.l.b16 %v5097
      %v5725 = vunpack.c.l.b16 %v5098
      %v5726 = vunpack.c.l.b16 %v5099
      %v5727 = vunpack.c.l.b16 %v5100
      %v5728 = vunpack.c.l.b16 %v5101
      %v5729 = vunpack.c.l.b16 %v5102
      %v5730 = vunpack.c.l.b16 %v5103
      %v5731 = vpack.c.b16 %v5700, %v5699
      %v5732 = vpack.c.b16 %v5702, %v5701
      %v5733 = vpack.c.b16 %v5704, %v5703
      %v5734 = vpack.c.b16 %v5706, %v5705
      %v5735 = vpack.c.b16 %v5708, %v5707
      %v5736 = vpack.c.b16 %v5710, %v5709
      %v5737 = vpack.c.b16 %v5712, %v5711
      %v5738 = vpack.c.b16 %v5714, %v5713
      %v5739 = vpack.c.b16 %v5716, %v5715
      %v5740 = vpack.c.b16 %v5718, %v5717
      %v5741 = vpack.c.b16 %v5720, %v5719
      %v5742 = vpack.c.b16 %v5722, %v5721
      %v5743 = vpack.c.b16 %v5724, %v5723
      %v5744 = vpack.c.b16 %v5726, %v5725
      %v5745 = vpack.c.b16 %v5728, %v5727
      %v5746 = vpack.c.b16 %v5730, %v5729
      %v5747 = vunpack.c.l.b16 %v5133
      %v5748 = vunpack.c.l.b16 %v5143
      %v5749 = vunpack.c.l.b16 %v5157
      %v5750 = vunpack.c.l.b16 %v5167
      %v5751 = vunpack.c.l.b16 %v5181
      %v5752 = vunpack.c.l.b16 %v5191
      %v5753 = vunpack.c.l.b16 %v5205
      %v5754 = vunpack.c.l.b16 %v5215
      %v5755 = vunpack.c.l.b16 %v5229
      %v5756 = vunpack.c.l.b16 %v5239
      %v5757 = vunpack.c.l.b16 %v5253
      %v5758 = vunpack.c.l.b16 %v5263
      %v5759 = vunpack.c.l.b16 %v5277
      %v5760 = vunpack.c.l.b16 %v5287
      %v5761 = vunpack.c.l.b16 %v5301
      %v5762 = vunpack.c.l.b16 %v5311
      %v5763 = vunpack.c.l.b16 %v5325
      %v5764 = vunpack.c.l.b16 %v5335
      %v5765 = vunpack.c.l.b16 %v5349
      %v5766 = vunpack.c.l.b16 %v5359
      %v5767 = vunpack.c.l.b16 %v5373
      %v5768 = vunpack.c.l.b16 %v5383
      %v5769 = vunpack.c.l.b16 %v5397
      %v5770 = vunpack.c.l.b16 %v5407
      %v5771 = vunpack.c.l.b16 %v5421
      %v5772 = vunpack.c.l.b16 %v5431
      %v5773 = vunpack.c.l.b16 %v5445
      %v5774 = vunpack.c.l.b16 %v5455
      %v5775 = vunpack.c.l.b16 %v5469
      %v5776 = vunpack.c.l.b16 %v5479
      %v5777 = vunpack.c.l.b16 %v5493
      %v5778 = vunpack.c.l.b16 %v5503
      %v5779 = vpack.c.b16 %v5748, %v5747
      %v5780 = vpack.c.b16 %v5750, %v5749
      %v5781 = vpack.c.b16 %v5752, %v5751
      %v5782 = vpack.c.b16 %v5754, %v5753
      %v5783 = vpack.c.b16 %v5756, %v5755
      %v5784 = vpack.c.b16 %v5758, %v5757
      %v5785 = vpack.c.b16 %v5760, %v5759
      %v5786 = vpack.c.b16 %v5762, %v5761
      %v5787 = vpack.c.b16 %v5764, %v5763
      %v5788 = vpack.c.b16 %v5766, %v5765
      %v5789 = vpack.c.b16 %v5768, %v5767
      %v5790 = vpack.c.b16 %v5770, %v5769
      %v5791 = vpack.c.b16 %v5772, %v5771
      %v5792 = vpack.c.b16 %v5774, %v5773
      %v5793 = vpack.c.b16 %v5776, %v5775
      %v5794 = vpack.c.b16 %v5778, %v5777
      %5795 = vrot.lane.b32.xlu0 %v5779, 8
      %v5796 = vpop.permute.xlu0 %5795
      %5797 = vrot.lane.b32.xlu0 %v5780, 8
      %v5798 = vpop.permute.xlu0 %5797
      %5799 = vrot.lane.b32.xlu0 %v5781, 8
      %v5800 = vpop.permute.xlu0 %5799
      %5801 = vrot.lane.b32.xlu0 %v5782, 8
      %v5802 = vpop.permute.xlu0 %5801
      %5803 = vrot.lane.b32.xlu0 %v5783, 8
      %v5804 = vpop.permute.xlu0 %5803
      %5805 = vrot.lane.b32.xlu0 %v5784, 8
      %v5806 = vpop.permute.xlu0 %5805
      %5807 = vrot.lane.b32.xlu0 %v5785, 8
      %v5808 = vpop.permute.xlu0 %5807
      %5809 = vrot.lane.b32.xlu0 %v5786, 8
      %v5810 = vpop.permute.xlu0 %5809
      %5811 = vrot.lane.b32.xlu0 %v5787, 8
      %v5812 = vpop.permute.xlu0 %5811
      %5813 = vrot.lane.b32.xlu0 %v5788, 8
      %v5814 = vpop.permute.xlu0 %5813
      %5815 = vrot.lane.b32.xlu0 %v5789, 8
      %v5816 = vpop.permute.xlu0 %5815
      %5817 = vrot.lane.b32.xlu0 %v5790, 8
      %v5818 = vpop.permute.xlu0 %5817
      %5819 = vrot.lane.b32.xlu0 %v5791, 8
      %v5820 = vpop.permute.xlu0 %5819
      %5821 = vrot.lane.b32.xlu0 %v5792, 8
      %v5822 = vpop.permute.xlu0 %5821
      %5823 = vrot.lane.b32.xlu0 %v5793, 8
      %v5824 = vpop.permute.xlu0 %5823
      %5825 = vrot.lane.b32.xlu0 %v5794, 8
      %v5826 = vpop.permute.xlu0 %5825
      %v5827 = vunpack.c.l.b16 %v5574
      %v5828 = vunpack.c.l.b16 %v5577
      %v5829 = vunpack.c.l.b16 %v5581
      %v5830 = vunpack.c.l.b16 %v5584
      %v5831 = vunpack.c.l.b16 %v5588
      %v5832 = vunpack.c.l.b16 %v5591
      %v5833 = vunpack.c.l.b16 %v5595
      %v5834 = vunpack.c.l.b16 %v5598
      %v5835 = vunpack.c.l.b16 %v5602
      %v5836 = vunpack.c.l.b16 %v5605
      %v5837 = vunpack.c.l.b16 %v5609
      %v5838 = vunpack.c.l.b16 %v5612
      %v5839 = vunpack.c.l.b16 %v5616
      %v5840 = vunpack.c.l.b16 %v5619
      %v5841 = vunpack.c.l.b16 %v5623
      %v5842 = vunpack.c.l.b16 %v5626
      %v5843 = vunpack.c.l.b16 %v5630
      %v5844 = vunpack.c.l.b16 %v5633
      %v5845 = vunpack.c.l.b16 %v5637
      %v5846 = vunpack.c.l.b16 %v5640
      %v5847 = vunpack.c.l.b16 %v5644
      %v5848 = vunpack.c.l.b16 %v5647
      %v5849 = vunpack.c.l.b16 %v5651
      %v5850 = vunpack.c.l.b16 %v5654
      %v5851 = vunpack.c.l.b16 %v5658
      %v5852 = vunpack.c.l.b16 %v5661
      %v5853 = vunpack.c.l.b16 %v5665
      %v5854 = vunpack.c.l.b16 %v5668
      %v5855 = vunpack.c.l.b16 %v5672
      %v5856 = vunpack.c.l.b16 %v5675
      %v5857 = vunpack.c.l.b16 %v5679
      %v5858 = vunpack.c.l.b16 %v5682
      %v5859 = vpack.c.b16 %v5828, %v5827
      %v5860 = vpack.c.b16 %v5830, %v5829
      %v5861 = vpack.c.b16 %v5832, %v5831
      %v5862 = vpack.c.b16 %v5834, %v5833
      %v5863 = vpack.c.b16 %v5836, %v5835
      %v5864 = vpack.c.b16 %v5838, %v5837
      %v5865 = vpack.c.b16 %v5840, %v5839
      %v5866 = vpack.c.b16 %v5842, %v5841
      %v5867 = vpack.c.b16 %v5844, %v5843
      %v5868 = vpack.c.b16 %v5846, %v5845
      %v5869 = vpack.c.b16 %v5848, %v5847
      %v5870 = vpack.c.b16 %v5850, %v5849
      %v5871 = vpack.c.b16 %v5852, %v5851
      %v5872 = vpack.c.b16 %v5854, %v5853
      %v5873 = vpack.c.b16 %v5856, %v5855
      %v5874 = vpack.c.b16 %v5858, %v5857
      %5875 = vrot.lane.b32.xlu0 %v5859, 16
      %v5876 = vpop.permute.xlu0 %5875
      %5877 = vrot.lane.b32.xlu0 %v5860, 16
      %v5878 = vpop.permute.xlu0 %5877
      %5879 = vrot.lane.b32.xlu0 %v5861, 16
      %v5880 = vpop.permute.xlu0 %5879
      %5881 = vrot.lane.b32.xlu0 %v5862, 16
      %v5882 = vpop.permute.xlu0 %5881
      %5883 = vrot.lane.b32.xlu0 %v5863, 16
      %v5884 = vpop.permute.xlu0 %5883
      %5885 = vrot.lane.b32.xlu0 %v5864, 16
      %v5886 = vpop.permute.xlu0 %5885
      %5887 = vrot.lane.b32.xlu0 %v5865, 16
      %v5888 = vpop.permute.xlu0 %5887
      %5889 = vrot.lane.b32.xlu0 %v5866, 16
      %v5890 = vpop.permute.xlu0 %5889
      %5891 = vrot.lane.b32.xlu0 %v5867, 16
      %v5892 = vpop.permute.xlu0 %5891
      %5893 = vrot.lane.b32.xlu0 %v5868, 16
      %v5894 = vpop.permute.xlu0 %5893
      %5895 = vrot.lane.b32.xlu0 %v5869, 16
      %v5896 = vpop.permute.xlu0 %5895
      %5897 = vrot.lane.b32.xlu0 %v5870, 16
      %v5898 = vpop.permute.xlu0 %5897
      %5899 = vrot.lane.b32.xlu0 %v5871, 16
      %v5900 = vpop.permute.xlu0 %5899
      %5901 = vrot.lane.b32.xlu0 %v5872, 16
      %v5902 = vpop.permute.xlu0 %5901
      %5903 = vrot.lane.b32.xlu0 %v5873, 16
      %v5904 = vpop.permute.xlu0 %5903
      %5905 = vrot.lane.b32.xlu0 %v5874, 16
      %v5906 = vpop.permute.xlu0 %5905
      %v5909 = vsel %vm1052, %v5731, %v5796
      %v5912 = vsel %vm1052, %v5732, %v5798
      %v5915 = vsel %vm1052, %v5733, %v5800
      %v5918 = vsel %vm1052, %v5734, %v5802
      %v5921 = vsel %vm1052, %v5735, %v5804
      %v5924 = vsel %vm1052, %v5736, %v5806
      %v5927 = vsel %vm1052, %v5737, %v5808
      %v5930 = vsel %vm1052, %v5738, %v5810
      %v5933 = vsel %vm1052, %v5739, %v5812
      %v5936 = vsel %vm1052, %v5740, %v5814
      %v5939 = vsel %vm1052, %v5741, %v5816
      %v5942 = vsel %vm1052, %v5742, %v5818
      %v5945 = vsel %vm1052, %v5743, %v5820
      %v5948 = vsel %vm1052, %v5744, %v5822
      %v5951 = vsel %vm1052, %v5745, %v5824
      %v5954 = vsel %vm1052, %v5746, %v5826
      %v5956 = vsel %vm1065, %v5909, %v5876
      %v5958 = vsel %vm1065, %v5912, %v5878
      %v5960 = vsel %vm1065, %v5915, %v5880
      %v5962 = vsel %vm1065, %v5918, %v5882
      %v5964 = vsel %vm1065, %v5921, %v5884
      %v5966 = vsel %vm1065, %v5924, %v5886
      %v5968 = vsel %vm1065, %v5927, %v5888
      %v5970 = vsel %vm1065, %v5930, %v5890
      %v5972 = vsel %vm1065, %v5933, %v5892
      %v5974 = vsel %vm1065, %v5936, %v5894
      %v5976 = vsel %vm1065, %v5939, %v5896
      %v5978 = vsel %vm1065, %v5942, %v5898
      %v5980 = vsel %vm1065, %v5945, %v5900
      %v5982 = vsel %vm1065, %v5948, %v5902
      %v5984 = vsel %vm1065, %v5951, %v5904
      %v5986 = vsel %vm1065, %v5954, %v5906
      %v5987 = vld [vmem:[%s5] sm:$0xf]
      %v5988 = vld [vmem:[%s5 + $0x4] sm:$0xf]
      %v5989 = vld [vmem:[%s5 + $0x8] sm:$0xf]
      %v5990 = vld [vmem:[%s4392] sm:$0xf]
      %v5991 = vld [vmem:[%s4392 + $0x4] sm:$0xf]
      %v5992 = vld [vmem:[%s4392 + $0xc] sm:$0xf]
      %v5993 = vld [vmem:[%s4392 + $0x10] sm:$0xf]
      %v5994 = vld [vmem:[%s4392 + $0x18] sm:$0xf]
      %v5995 = vld [vmem:[%s4392 + $0x1c] sm:$0xf]
      %v5996 = vld [vmem:[%s4392 + $0x24] sm:$0xf]
      %v5997 = vld [vmem:[%s4392 + $0x28] sm:$0xf]
      %v5998 = vld [vmem:[%s4392 + $0x30] sm:$0xf]
      %v5999 = vld [vmem:[%s4392 + $0x34] sm:$0xf]
      %v6000 = vld [vmem:[%s4392 + $0x3c] sm:$0xf]
      %v6001 = vld [vmem:[%s4392 + $0x40] sm:$0xf]
      %v6002 = vld [vmem:[%s4392 + $0x48] sm:$0xf]
      %v6003 = vld [vmem:[%s4392 + $0x4c] sm:$0xf]
      %v6004 = vld [vmem:[%s4392 + $0x54] sm:$0xf]
      %v6005 = vld [vmem:[%s4392 + $0x58] sm:$0xf]
      %v6006 = vld [vmem:[%s4392 + $0x60] sm:$0xf]
      %v6007 = vld [vmem:[%s4392 + $0x64] sm:$0xf]
      %v6008 = vld [vmem:[%s4392 + $0x6c] sm:$0xf]
      %v6009 = vld [vmem:[%s4392 + $0x70] sm:$0xf]
      %v6010 = vld [vmem:[%s4392 + $0x78] sm:$0xf]
      %v6011 = vld [vmem:[%s4392 + $0x7c] sm:$0xf]
      %v6012 = vld [vmem:[%s4392 + $0x84] sm:$0xf]
      %v6013 = vld [vmem:[%s4392 + $0x88] sm:$0xf]
      %v6014 = vld [vmem:[%s4392 + $0x90] sm:$0xf]
      %v6015 = vld [vmem:[%s4392 + $0x94] sm:$0xf]
      %v6016 = vld [vmem:[%s4392 + $0x9c] sm:$0xf]
      %v6017 = vld [vmem:[%s4392 + $0xa0] sm:$0xf]
      %v6018 = vld [vmem:[%s4392 + $0xa8] sm:$0xf]
      %v6019 = vld [vmem:[%s4392 + $0xac] sm:$0xf]
      %v6020 = vld [vmem:[%s4392 + $0xb4] sm:$0xf]
      %v6021 = vld [vmem:[%s4392 + $0xb8] sm:$0xf]
      %v6022 = vld [vmem:[%s4392 + $0x8] sm:$0x1]
      %v6023 = vld [vmem:[%s4392 + $0x14] sm:$0x1]
      %v6024 = vld [vmem:[%s4392 + $0x20] sm:$0x1]
      %v6025 = vld [vmem:[%s4392 + $0x2c] sm:$0x1]
      %v6026 = vld [vmem:[%s4392 + $0x38] sm:$0x1]
      %v6027 = vld [vmem:[%s4392 + $0x44] sm:$0x1]
      %v6028 = vld [vmem:[%s4392 + $0x50] sm:$0x1]
      %v6029 = vld [vmem:[%s4392 + $0x5c] sm:$0x1]
      %v6030 = vld [vmem:[%s4392 + $0x68] sm:$0x1]
      %v6031 = vld [vmem:[%s4392 + $0x74] sm:$0x1]
      %v6032 = vld [vmem:[%s4392 + $0x80] sm:$0x1]
      %v6033 = vld [vmem:[%s4392 + $0x8c] sm:$0x1]
      %v6034 = vld [vmem:[%s4392 + $0x98] sm:$0x1]
      %v6035 = vld [vmem:[%s4392 + $0xa4] sm:$0x1]
      %v6036 = vld [vmem:[%s4392 + $0xb0] sm:$0x1]
      %v6037 = vld [vmem:[%s4392 + $0xbc] sm:$0x1]
      %v6039 = vshrl.u32 %v5990, 16
      %v6041 = vrot.slane %v6039, 4
      %v6042 = vshll.u32 %v5990, 16
      %v6044 = vrot.slane %v6042, 5
      %v6045 = vor.u32 %v6041, %v6044
      %v6046 = vrot.slane %v6045, 4
      %v6048 = vshll.u32 %v5991, 16
      %v6050 = vrot.slane %v6048, 5
      %v6051 = vsel %vm722, %v6046, %v6050
      %v6052 = vshrl.u32 %v5991, 16
      %v6054 = vrot.slane %v6052, 4
      %v6055 = vor.u32 %v6054, %v6050
      %v6056 = vrot.slane %v6055, 4
      %v6058 = vshll.u32 %v6022, 16
      %v6060 = vrot.slane %v6058, 5
      %v6061 = vsel %vm722, %v6056, %v6060
      %v6063 = vshrl.u32 %v5992, 16
      %v6065 = vrot.slane %v6063, 4
      %v6066 = vshll.u32 %v5992, 16
      %v6068 = vrot.slane %v6066, 5
      %v6069 = vor.u32 %v6065, %v6068
      %v6070 = vrot.slane %v6069, 4
      %v6072 = vshll.u32 %v5993, 16
      %v6074 = vrot.slane %v6072, 5
      %v6075 = vsel %vm722, %v6070, %v6074
      %v6076 = vshrl.u32 %v5993, 16
      %v6078 = vrot.slane %v6076, 4
      %v6079 = vor.u32 %v6078, %v6074
      %v6080 = vrot.slane %v6079, 4
      %v6082 = vshll.u32 %v6023, 16
      %v6084 = vrot.slane %v6082, 5
      %v6085 = vsel %vm722, %v6080, %v6084
      %v6087 = vshrl.u32 %v5994, 16
      %v6089 = vrot.slane %v6087, 4
      %v6090 = vshll.u32 %v5994, 16
      %v6092 = vrot.slane %v6090, 5
      %v6093 = vor.u32 %v6089, %v6092
      %v6094 = vrot.slane %v6093, 4
      %v6096 = vshll.u32 %v5995, 16
      %v6098 = vrot.slane %v6096, 5
      %v6099 = vsel %vm722, %v6094, %v6098
      %v6100 = vshrl.u32 %v5995, 16
      %v6102 = vrot.slane %v6100, 4
      %v6103 = vor.u32 %v6102, %v6098
      %v6104 = vrot.slane %v6103, 4
      %v6106 = vshll.u32 %v6024, 16
      %v6108 = vrot.slane %v6106, 5
      %v6109 = vsel %vm722, %v6104, %v6108
      %v6111 = vshrl.u32 %v5996, 16
      %v6113 = vrot.slane %v6111, 4
      %v6114 = vshll.u32 %v5996, 16
      %v6116 = vrot.slane %v6114, 5
      %v6117 = vor.u32 %v6113, %v6116
      %v6118 = vrot.slane %v6117, 4
      %v6120 = vshll.u32 %v5997, 16
      %v6122 = vrot.slane %v6120, 5
      %v6123 = vsel %vm722, %v6118, %v6122
      %v6124 = vshrl.u32 %v5997, 16
      %v6126 = vrot.slane %v6124, 4
      %v6127 = vor.u32 %v6126, %v6122
      %v6128 = vrot.slane %v6127, 4
      %v6130 = vshll.u32 %v6025, 16
      %v6132 = vrot.slane %v6130, 5
      %v6133 = vsel %vm722, %v6128, %v6132
      %v6135 = vshrl.u32 %v5998, 16
      %v6137 = vrot.slane %v6135, 4
      %v6138 = vshll.u32 %v5998, 16
      %v6140 = vrot.slane %v6138, 5
      %v6141 = vor.u32 %v6137, %v6140
      %v6142 = vrot.slane %v6141, 4
      %v6144 = vshll.u32 %v5999, 16
      %v6146 = vrot.slane %v6144, 5
      %v6147 = vsel %vm722, %v6142, %v6146
      %v6148 = vshrl.u32 %v5999, 16
      %v6150 = vrot.slane %v6148, 4
      %v6151 = vor.u32 %v6150, %v6146
      %v6152 = vrot.slane %v6151, 4
      %v6154 = vshll.u32 %v6026, 16
      %v6156 = vrot.slane %v6154, 5
      %v6157 = vsel %vm722, %v6152, %v6156
      %v6159 = vshrl.u32 %v6000, 16
      %v6161 = vrot.slane %v6159, 4
      %v6162 = vshll.u32 %v6000, 16
      %v6164 = vrot.slane %v6162, 5
      %v6165 = vor.u32 %v6161, %v6164
      %v6166 = vrot.slane %v6165, 4
      %v6168 = vshll.u32 %v6001, 16
      %v6170 = vrot.slane %v6168, 5
      %v6171 = vsel %vm722, %v6166, %v6170
      %v6172 = vshrl.u32 %v6001, 16
      %v6174 = vrot.slane %v6172, 4
      %v6175 = vor.u32 %v6174, %v6170
      %v6176 = vrot.slane %v6175, 4
      %v6178 = vshll.u32 %v6027, 16
      %v6180 = vrot.slane %v6178, 5
      %v6181 = vsel %vm722, %v6176, %v6180
      %v6183 = vshrl.u32 %v6002, 16
      %v6185 = vrot.slane %v6183, 4
      %v6186 = vshll.u32 %v6002, 16
      %v6188 = vrot.slane %v6186, 5
      %v6189 = vor.u32 %v6185, %v6188
      %v6190 = vrot.slane %v6189, 4
      %v6192 = vshll.u32 %v6003, 16
      %v6194 = vrot.slane %v6192, 5
      %v6195 = vsel %vm722, %v6190, %v6194
      %v6196 = vshrl.u32 %v6003, 16
      %v6198 = vrot.slane %v6196, 4
      %v6199 = vor.u32 %v6198, %v6194
      %v6200 = vrot.slane %v6199, 4
      %v6202 = vshll.u32 %v6028, 16
      %v6204 = vrot.slane %v6202, 5
      %v6205 = vsel %vm722, %v6200, %v6204
      %v6207 = vshrl.u32 %v6004, 16
      %v6209 = vrot.slane %v6207, 4
      %v6210 = vshll.u32 %v6004, 16
      %v6212 = vrot.slane %v6210, 5
      %v6213 = vor.u32 %v6209, %v6212
      %v6214 = vrot.slane %v6213, 4
      %v6216 = vshll.u32 %v6005, 16
      %v6218 = vrot.slane %v6216, 5
      %v6219 = vsel %vm722, %v6214, %v6218
      %v6220 = vshrl.u32 %v6005, 16
      %v6222 = vrot.slane %v6220, 4
      %v6223 = vor.u32 %v6222, %v6218
      %v6224 = vrot.slane %v6223, 4
      %v6226 = vshll.u32 %v6029, 16
      %v6228 = vrot.slane %v6226, 5
      %v6229 = vsel %vm722, %v6224, %v6228
      %v6231 = vshrl.u32 %v6006, 16
      %v6233 = vrot.slane %v6231, 4
      %v6234 = vshll.u32 %v6006, 16
      %v6236 = vrot.slane %v6234, 5
      %v6237 = vor.u32 %v6233, %v6236
      %v6238 = vrot.slane %v6237, 4
      %v6240 = vshll.u32 %v6007, 16
      %v6242 = vrot.slane %v6240, 5
      %v6243 = vsel %vm722, %v6238, %v6242
      %v6244 = vshrl.u32 %v6007, 16
      %v6246 = vrot.slane %v6244, 4
      %v6247 = vor.u32 %v6246, %v6242
      %v6248 = vrot.slane %v6247, 4
      %v6250 = vshll.u32 %v6030, 16
      %v6252 = vrot.slane %v6250, 5
      %v6253 = vsel %vm722, %v6248, %v6252
      %v6255 = vshrl.u32 %v6008, 16
      %v6257 = vrot.slane %v6255, 4
      %v6258 = vshll.u32 %v6008, 16
      %v6260 = vrot.slane %v6258, 5
      %v6261 = vor.u32 %v6257, %v6260
      %v6262 = vrot.slane %v6261, 4
      %v6264 = vshll.u32 %v6009, 16
      %v6266 = vrot.slane %v6264, 5
      %v6267 = vsel %vm722, %v6262, %v6266
      %v6268 = vshrl.u32 %v6009, 16
      %v6270 = vrot.slane %v6268, 4
      %v6271 = vor.u32 %v6270, %v6266
      %v6272 = vrot.slane %v6271, 4
      %v6274 = vshll.u32 %v6031, 16
      %v6276 = vrot.slane %v6274, 5
      %v6277 = vsel %vm722, %v6272, %v6276
      %v6279 = vshrl.u32 %v6010, 16
      %v6281 = vrot.slane %v6279, 4
      %v6282 = vshll.u32 %v6010, 16
      %v6284 = vrot.slane %v6282, 5
      %v6285 = vor.u32 %v6281, %v6284
      %v6286 = vrot.slane %v6285, 4
      %v6288 = vshll.u32 %v6011, 16
      %v6290 = vrot.slane %v6288, 5
      %v6291 = vsel %vm722, %v6286, %v6290
      %v6292 = vshrl.u32 %v6011, 16
      %v6294 = vrot.slane %v6292, 4
      %v6295 = vor.u32 %v6294, %v6290
      %v6296 = vrot.slane %v6295, 4
      %v6298 = vshll.u32 %v6032, 16
      %v6300 = vrot.slane %v6298, 5
      %v6301 = vsel %vm722, %v6296, %v6300
      %v6303 = vshrl.u32 %v6012, 16
      %v6305 = vrot.slane %v6303, 4
      %v6306 = vshll.u32 %v6012, 16
      %v6308 = vrot.slane %v6306, 5
      %v6309 = vor.u32 %v6305, %v6308
      %v6310 = vrot.slane %v6309, 4
      %v6312 = vshll.u32 %v6013, 16
      %v6314 = vrot.slane %v6312, 5
      %v6315 = vsel %vm722, %v6310, %v6314
      %v6316 = vshrl.u32 %v6013, 16
      %v6318 = vrot.slane %v6316, 4
      %v6319 = vor.u32 %v6318, %v6314
      %v6320 = vrot.slane %v6319, 4
      %v6322 = vshll.u32 %v6033, 16
      %v6324 = vrot.slane %v6322, 5
      %v6325 = vsel %vm722, %v6320, %v6324
      %v6327 = vshrl.u32 %v6014, 16
      %v6329 = vrot.slane %v6327, 4
      %v6330 = vshll.u32 %v6014, 16
      %v6332 = vrot.slane %v6330, 5
      %v6333 = vor.u32 %v6329, %v6332
      %v6334 = vrot.slane %v6333, 4
      %v6336 = vshll.u32 %v6015, 16
      %v6338 = vrot.slane %v6336, 5
      %v6339 = vsel %vm722, %v6334, %v6338
      %v6340 = vshrl.u32 %v6015, 16
      %v6342 = vrot.slane %v6340, 4
      %v6343 = vor.u32 %v6342, %v6338
      %v6344 = vrot.slane %v6343, 4
      %v6346 = vshll.u32 %v6034, 16
      %v6348 = vrot.slane %v6346, 5
      %v6349 = vsel %vm722, %v6344, %v6348
      %v6351 = vshrl.u32 %v6016, 16
      %v6353 = vrot.slane %v6351, 4
      %v6354 = vshll.u32 %v6016, 16
      %v6356 = vrot.slane %v6354, 5
      %v6357 = vor.u32 %v6353, %v6356
      %v6358 = vrot.slane %v6357, 4
      %v6360 = vshll.u32 %v6017, 16
      %v6362 = vrot.slane %v6360, 5
      %v6363 = vsel %vm722, %v6358, %v6362
      %v6364 = vshrl.u32 %v6017, 16
      %v6366 = vrot.slane %v6364, 4
      %v6367 = vor.u32 %v6366, %v6362
      %v6368 = vrot.slane %v6367, 4
      %v6370 = vshll.u32 %v6035, 16
      %v6372 = vrot.slane %v6370, 5
      %v6373 = vsel %vm722, %v6368, %v6372
      %v6375 = vshrl.u32 %v6018, 16
      %v6377 = vrot.slane %v6375, 4
      %v6378 = vshll.u32 %v6018, 16
      %v6380 = vrot.slane %v6378, 5
      %v6381 = vor.u32 %v6377, %v6380
      %v6382 = vrot.slane %v6381, 4
      %v6384 = vshll.u32 %v6019, 16
      %v6386 = vrot.slane %v6384, 5
      %v6387 = vsel %vm722, %v6382, %v6386
      %v6388 = vshrl.u32 %v6019, 16
      %v6390 = vrot.slane %v6388, 4
      %v6391 = vor.u32 %v6390, %v6386
      %v6392 = vrot.slane %v6391, 4
      %v6394 = vshll.u32 %v6036, 16
      %v6396 = vrot.slane %v6394, 5
      %v6397 = vsel %vm722, %v6392, %v6396
      %v6399 = vshrl.u32 %v6020, 16
      %v6401 = vrot.slane %v6399, 4
      %v6402 = vshll.u32 %v6020, 16
      %v6404 = vrot.slane %v6402, 5
      %v6405 = vor.u32 %v6401, %v6404
      %v6406 = vrot.slane %v6405, 4
      %v6408 = vshll.u32 %v6021, 16
      %v6410 = vrot.slane %v6408, 5
      %v6411 = vsel %vm722, %v6406, %v6410
      %v6412 = vshrl.u32 %v6021, 16
      %v6414 = vrot.slane %v6412, 4
      %v6415 = vor.u32 %v6414, %v6410
      %v6416 = vrot.slane %v6415, 4
      %v6418 = vshll.u32 %v6037, 16
      %v6420 = vrot.slane %v6418, 5
      %v6421 = vsel %vm722, %v6416, %v6420
      %v6422 = vld [vmem:[%s4392] sm:$0xe]
      %v6423 = vld [vmem:[%s4392 + $0xc] sm:$0xe]
      %v6424 = vld [vmem:[%s4392 + $0x18] sm:$0xe]
      %v6425 = vld [vmem:[%s4392 + $0x24] sm:$0xe]
      %v6426 = vld [vmem:[%s4392 + $0x30] sm:$0xe]
      %v6427 = vld [vmem:[%s4392 + $0x3c] sm:$0xe]
      %v6428 = vld [vmem:[%s4392 + $0x48] sm:$0xe]
      %v6429 = vld [vmem:[%s4392 + $0x54] sm:$0xe]
      %v6430 = vld [vmem:[%s4392 + $0x60] sm:$0xe]
      %v6431 = vld [vmem:[%s4392 + $0x6c] sm:$0xe]
      %v6432 = vld [vmem:[%s4392 + $0x78] sm:$0xe]
      %v6433 = vld [vmem:[%s4392 + $0x84] sm:$0xe]
      %v6434 = vld [vmem:[%s4392 + $0x90] sm:$0xe]
      %v6435 = vld [vmem:[%s4392 + $0x9c] sm:$0xe]
      %v6436 = vld [vmem:[%s4392 + $0xa8] sm:$0xe]
      %v6437 = vld [vmem:[%s4392 + $0xb4] sm:$0xe]
      %v6486 = vrot.slane %v6422, 5
      %v6487 = vrot.slane %v6486, 4
      %v6488 = vrot.slane %v5991, 5
      %v6489 = vsel %vm5570, %v6487, %v6488
      %v6490 = vrot.slane %v6488, 4
      %v6491 = vrot.slane %v6022, 5
      %v6492 = vsel %vm5570, %v6490, %v6491
      %v6493 = vrot.slane %v6423, 5
      %v6494 = vrot.slane %v6493, 4
      %v6495 = vrot.slane %v5993, 5
      %v6496 = vsel %vm5570, %v6494, %v6495
      %v6497 = vrot.slane %v6495, 4
      %v6498 = vrot.slane %v6023, 5
      %v6499 = vsel %vm5570, %v6497, %v6498
      %v6500 = vrot.slane %v6424, 5
      %v6501 = vrot.slane %v6500, 4
      %v6502 = vrot.slane %v5995, 5
      %v6503 = vsel %vm5570, %v6501, %v6502
      %v6504 = vrot.slane %v6502, 4
      %v6505 = vrot.slane %v6024, 5
      %v6506 = vsel %vm5570, %v6504, %v6505
      %v6507 = vrot.slane %v6425, 5
      %v6508 = vrot.slane %v6507, 4
      %v6509 = vrot.slane %v5997, 5
      %v6510 = vsel %vm5570, %v6508, %v6509
      %v6511 = vrot.slane %v6509, 4
      %v6512 = vrot.slane %v6025, 5
      %v6513 = vsel %vm5570, %v6511, %v6512
      %v6514 = vrot.slane %v6426, 5
      %v6515 = vrot.slane %v6514, 4
      %v6516 = vrot.slane %v5999, 5
      %v6517 = vsel %vm5570, %v6515, %v6516
      %v6518 = vrot.slane %v6516, 4
      %v6519 = vrot.slane %v6026, 5
      %v6520 = vsel %vm5570, %v6518, %v6519
      %v6521 = vrot.slane %v6427, 5
      %v6522 = vrot.slane %v6521, 4
      %v6523 = vrot.slane %v6001, 5
      %v6524 = vsel %vm5570, %v6522, %v6523
      %v6525 = vrot.slane %v6523, 4
      %v6526 = vrot.slane %v6027, 5
      %v6527 = vsel %vm5570, %v6525, %v6526
      %v6528 = vrot.slane %v6428, 5
      %v6529 = vrot.slane %v6528, 4
      %v6530 = vrot.slane %v6003, 5
      %v6531 = vsel %vm5570, %v6529, %v6530
      %v6532 = vrot.slane %v6530, 4
      %v6533 = vrot.slane %v6028, 5
      %v6534 = vsel %vm5570, %v6532, %v6533
      %v6535 = vrot.slane %v6429, 5
      %v6536 = vrot.slane %v6535, 4
      %v6537 = vrot.slane %v6005, 5
      %v6538 = vsel %vm5570, %v6536, %v6537
      %v6539 = vrot.slane %v6537, 4
      %v6540 = vrot.slane %v6029, 5
      %v6541 = vsel %vm5570, %v6539, %v6540
      %v6542 = vrot.slane %v6430, 5
      %v6543 = vrot.slane %v6542, 4
      %v6544 = vrot.slane %v6007, 5
      %v6545 = vsel %vm5570, %v6543, %v6544
      %v6546 = vrot.slane %v6544, 4
      %v6547 = vrot.slane %v6030, 5
      %v6548 = vsel %vm5570, %v6546, %v6547
      %v6549 = vrot.slane %v6431, 5
      %v6550 = vrot.slane %v6549, 4
      %v6551 = vrot.slane %v6009, 5
      %v6552 = vsel %vm5570, %v6550, %v6551
      %v6553 = vrot.slane %v6551, 4
      %v6554 = vrot.slane %v6031, 5
      %v6555 = vsel %vm5570, %v6553, %v6554
      %v6556 = vrot.slane %v6432, 5
      %v6557 = vrot.slane %v6556, 4
      %v6558 = vrot.slane %v6011, 5
      %v6559 = vsel %vm5570, %v6557, %v6558
      %v6560 = vrot.slane %v6558, 4
      %v6561 = vrot.slane %v6032, 5
      %v6562 = vsel %vm5570, %v6560, %v6561
      %v6563 = vrot.slane %v6433, 5
      %v6564 = vrot.slane %v6563, 4
      %v6565 = vrot.slane %v6013, 5
      %v6566 = vsel %vm5570, %v6564, %v6565
      %v6567 = vrot.slane %v6565, 4
      %v6568 = vrot.slane %v6033, 5
      %v6569 = vsel %vm5570, %v6567, %v6568
      %v6570 = vrot.slane %v6434, 5
      %v6571 = vrot.slane %v6570, 4
      %v6572 = vrot.slane %v6015, 5
      %v6573 = vsel %vm5570, %v6571, %v6572
      %v6574 = vrot.slane %v6572, 4
      %v6575 = vrot.slane %v6034, 5
      %v6576 = vsel %vm5570, %v6574, %v6575
      %v6577 = vrot.slane %v6435, 5
      %v6578 = vrot.slane %v6577, 4
      %v6579 = vrot.slane %v6017, 5
      %v6580 = vsel %vm5570, %v6578, %v6579
      %v6581 = vrot.slane %v6579, 4
      %v6582 = vrot.slane %v6035, 5
      %v6583 = vsel %vm5570, %v6581, %v6582
      %v6584 = vrot.slane %v6436, 5
      %v6585 = vrot.slane %v6584, 4
      %v6586 = vrot.slane %v6019, 5
      %v6587 = vsel %vm5570, %v6585, %v6586
      %v6588 = vrot.slane %v6586, 4
      %v6589 = vrot.slane %v6036, 5
      %v6590 = vsel %vm5570, %v6588, %v6589
      %v6591 = vrot.slane %v6437, 5
      %v6592 = vrot.slane %v6591, 4
      %v6593 = vrot.slane %v6021, 5
      %v6594 = vsel %vm5570, %v6592, %v6593
      %v6595 = vrot.slane %v6593, 4
      %v6596 = vrot.slane %v6037, 5
      %v6597 = vsel %vm5570, %v6595, %v6596
      %v6614 = vunpack.c.l.b16 %v5990
      %v6615 = vunpack.c.l.b16 %v5991
      %v6616 = vunpack.c.l.b16 %v5992
      %v6617 = vunpack.c.l.b16 %v5993
      %v6618 = vunpack.c.l.b16 %v5994
      %v6619 = vunpack.c.l.b16 %v5995
      %v6620 = vunpack.c.l.b16 %v5996
      %v6621 = vunpack.c.l.b16 %v5997
      %v6622 = vunpack.c.l.b16 %v5998
      %v6623 = vunpack.c.l.b16 %v5999
      %v6624 = vunpack.c.l.b16 %v6000
      %v6625 = vunpack.c.l.b16 %v6001
      %v6626 = vunpack.c.l.b16 %v6002
      %v6627 = vunpack.c.l.b16 %v6003
      %v6628 = vunpack.c.l.b16 %v6004
      %v6629 = vunpack.c.l.b16 %v6005
      %v6630 = vunpack.c.l.b16 %v6006
      %v6631 = vunpack.c.l.b16 %v6007
      %v6632 = vunpack.c.l.b16 %v6008
      %v6633 = vunpack.c.l.b16 %v6009
      %v6634 = vunpack.c.l.b16 %v6010
      %v6635 = vunpack.c.l.b16 %v6011
      %v6636 = vunpack.c.l.b16 %v6012
      %v6637 = vunpack.c.l.b16 %v6013
      %v6638 = vunpack.c.l.b16 %v6014
      %v6639 = vunpack.c.l.b16 %v6015
      %v6640 = vunpack.c.l.b16 %v6016
      %v6641 = vunpack.c.l.b16 %v6017
      %v6642 = vunpack.c.l.b16 %v6018
      %v6643 = vunpack.c.l.b16 %v6019
      %v6644 = vunpack.c.l.b16 %v6020
      %v6645 = vunpack.c.l.b16 %v6021
      %v6646 = vpack.c.b16 %v6615, %v6614
      %v6647 = vpack.c.b16 %v6617, %v6616
      %v6648 = vpack.c.b16 %v6619, %v6618
      %v6649 = vpack.c.b16 %v6621, %v6620
      %v6650 = vpack.c.b16 %v6623, %v6622
      %v6651 = vpack.c.b16 %v6625, %v6624
      %v6652 = vpack.c.b16 %v6627, %v6626
      %v6653 = vpack.c.b16 %v6629, %v6628
      %v6654 = vpack.c.b16 %v6631, %v6630
      %v6655 = vpack.c.b16 %v6633, %v6632
      %v6656 = vpack.c.b16 %v6635, %v6634
      %v6657 = vpack.c.b16 %v6637, %v6636
      %v6658 = vpack.c.b16 %v6639, %v6638
      %v6659 = vpack.c.b16 %v6641, %v6640
      %v6660 = vpack.c.b16 %v6643, %v6642
      %v6661 = vpack.c.b16 %v6645, %v6644
      %v6662 = vunpack.c.l.b16 %v6051
      %v6663 = vunpack.c.l.b16 %v6061
      %v6664 = vunpack.c.l.b16 %v6075
      %v6665 = vunpack.c.l.b16 %v6085
      %v6666 = vunpack.c.l.b16 %v6099
      %v6667 = vunpack.c.l.b16 %v6109
      %v6668 = vunpack.c.l.b16 %v6123
      %v6669 = vunpack.c.l.b16 %v6133
      %v6670 = vunpack.c.l.b16 %v6147
      %v6671 = vunpack.c.l.b16 %v6157
      %v6672 = vunpack.c.l.b16 %v6171
      %v6673 = vunpack.c.l.b16 %v6181
      %v6674 = vunpack.c.l.b16 %v6195
      %v6675 = vunpack.c.l.b16 %v6205
      %v6676 = vunpack.c.l.b16 %v6219
      %v6677 = vunpack.c.l.b16 %v6229
      %v6678 = vunpack.c.l.b16 %v6243
      %v6679 = vunpack.c.l.b16 %v6253
      %v6680 = vunpack.c.l.b16 %v6267
      %v6681 = vunpack.c.l.b16 %v6277
      %v6682 = vunpack.c.l.b16 %v6291
      %v6683 = vunpack.c.l.b16 %v6301
      %v6684 = vunpack.c.l.b16 %v6315
      %v6685 = vunpack.c.l.b16 %v6325
      %v6686 = vunpack.c.l.b16 %v6339
      %v6687 = vunpack.c.l.b16 %v6349
      %v6688 = vunpack.c.l.b16 %v6363
      %v6689 = vunpack.c.l.b16 %v6373
      %v6690 = vunpack.c.l.b16 %v6387
      %v6691 = vunpack.c.l.b16 %v6397
      %v6692 = vunpack.c.l.b16 %v6411
      %v6693 = vunpack.c.l.b16 %v6421
      %v6694 = vpack.c.b16 %v6663, %v6662
      %v6695 = vpack.c.b16 %v6665, %v6664
      %v6696 = vpack.c.b16 %v6667, %v6666
      %v6697 = vpack.c.b16 %v6669, %v6668
      %v6698 = vpack.c.b16 %v6671, %v6670
      %v6699 = vpack.c.b16 %v6673, %v6672
      %v6700 = vpack.c.b16 %v6675, %v6674
      %v6701 = vpack.c.b16 %v6677, %v6676
      %v6702 = vpack.c.b16 %v6679, %v6678
      %v6703 = vpack.c.b16 %v6681, %v6680
      %v6704 = vpack.c.b16 %v6683, %v6682
      %v6705 = vpack.c.b16 %v6685, %v6684
      %v6706 = vpack.c.b16 %v6687, %v6686
      %v6707 = vpack.c.b16 %v6689, %v6688
      %v6708 = vpack.c.b16 %v6691, %v6690
      %v6709 = vpack.c.b16 %v6693, %v6692
      %6710 = vrot.lane.b32.xlu0 %v6694, 8
      %v6711 = vpop.permute.xlu0 %6710
      %6712 = vrot.lane.b32.xlu0 %v6695, 8
      %v6713 = vpop.permute.xlu0 %6712
      %6714 = vrot.lane.b32.xlu0 %v6696, 8
      %v6715 = vpop.permute.xlu0 %6714
      %6716 = vrot.lane.b32.xlu0 %v6697, 8
      %v6717 = vpop.permute.xlu0 %6716
      %6718 = vrot.lane.b32.xlu0 %v6698, 8
      %v6719 = vpop.permute.xlu0 %6718
      %6720 = vrot.lane.b32.xlu0 %v6699, 8
      %v6721 = vpop.permute.xlu0 %6720
      %6722 = vrot.lane.b32.xlu0 %v6700, 8
      %v6723 = vpop.permute.xlu0 %6722
      %6724 = vrot.lane.b32.xlu0 %v6701, 8
      %v6725 = vpop.permute.xlu0 %6724
      %6726 = vrot.lane.b32.xlu0 %v6702, 8
      %v6727 = vpop.permute.xlu0 %6726
      %6728 = vrot.lane.b32.xlu0 %v6703, 8
      %v6729 = vpop.permute.xlu0 %6728
      %6730 = vrot.lane.b32.xlu0 %v6704, 8
      %v6731 = vpop.permute.xlu0 %6730
      %6732 = vrot.lane.b32.xlu0 %v6705, 8
      %v6733 = vpop.permute.xlu0 %6732
      %6734 = vrot.lane.b32.xlu0 %v6706, 8
      %v6735 = vpop.permute.xlu0 %6734
      %6736 = vrot.lane.b32.xlu0 %v6707, 8
      %v6737 = vpop.permute.xlu0 %6736
      %6738 = vrot.lane.b32.xlu0 %v6708, 8
      %v6739 = vpop.permute.xlu0 %6738
      %6740 = vrot.lane.b32.xlu0 %v6709, 8
      %v6741 = vpop.permute.xlu0 %6740
      %v6742 = vunpack.c.l.b16 %v6489
      %v6743 = vunpack.c.l.b16 %v6492
      %v6744 = vunpack.c.l.b16 %v6496
      %v6745 = vunpack.c.l.b16 %v6499
      %v6746 = vunpack.c.l.b16 %v6503
      %v6747 = vunpack.c.l.b16 %v6506
      %v6748 = vunpack.c.l.b16 %v6510
      %v6749 = vunpack.c.l.b16 %v6513
      %v6750 = vunpack.c.l.b16 %v6517
      %v6751 = vunpack.c.l.b16 %v6520
      %v6752 = vunpack.c.l.b16 %v6524
      %v6753 = vunpack.c.l.b16 %v6527
      %v6754 = vunpack.c.l.b16 %v6531
      %v6755 = vunpack.c.l.b16 %v6534
      %v6756 = vunpack.c.l.b16 %v6538
      %v6757 = vunpack.c.l.b16 %v6541
      %v6758 = vunpack.c.l.b16 %v6545
      %v6759 = vunpack.c.l.b16 %v6548
      %v6760 = vunpack.c.l.b16 %v6552
      %v6761 = vunpack.c.l.b16 %v6555
      %v6762 = vunpack.c.l.b16 %v6559
      %v6763 = vunpack.c.l.b16 %v6562
      %v6764 = vunpack.c.l.b16 %v6566
      %v6765 = vunpack.c.l.b16 %v6569
      %v6766 = vunpack.c.l.b16 %v6573
      %v6767 = vunpack.c.l.b16 %v6576
      %v6768 = vunpack.c.l.b16 %v6580
      %v6769 = vunpack.c.l.b16 %v6583
      %v6770 = vunpack.c.l.b16 %v6587
      %v6771 = vunpack.c.l.b16 %v6590
      %v6772 = vunpack.c.l.b16 %v6594
      %v6773 = vunpack.c.l.b16 %v6597
      %v6774 = vpack.c.b16 %v6743, %v6742
      %v6775 = vpack.c.b16 %v6745, %v6744
      %v6776 = vpack.c.b16 %v6747, %v6746
      %v6777 = vpack.c.b16 %v6749, %v6748
      %v6778 = vpack.c.b16 %v6751, %v6750
      %v6779 = vpack.c.b16 %v6753, %v6752
      %v6780 = vpack.c.b16 %v6755, %v6754
      %v6781 = vpack.c.b16 %v6757, %v6756
      %v6782 = vpack.c.b16 %v6759, %v6758
      %v6783 = vpack.c.b16 %v6761, %v6760
      %v6784 = vpack.c.b16 %v6763, %v6762
      %v6785 = vpack.c.b16 %v6765, %v6764
      %v6786 = vpack.c.b16 %v6767, %v6766
      %v6787 = vpack.c.b16 %v6769, %v6768
      %v6788 = vpack.c.b16 %v6771, %v6770
      %v6789 = vpack.c.b16 %v6773, %v6772
      %6790 = vrot.lane.b32.xlu0 %v6774, 16
      %v6791 = vpop.permute.xlu0 %6790
      %6792 = vrot.lane.b32.xlu0 %v6775, 16
      %v6793 = vpop.permute.xlu0 %6792
      %6794 = vrot.lane.b32.xlu0 %v6776, 16
      %v6795 = vpop.permute.xlu0 %6794
      %6796 = vrot.lane.b32.xlu0 %v6777, 16
      %v6797 = vpop.permute.xlu0 %6796
      %6798 = vrot.lane.b32.xlu0 %v6778, 16
      %v6799 = vpop.permute.xlu0 %6798
      %6800 = vrot.lane.b32.xlu0 %v6779, 16
      %v6801 = vpop.permute.xlu0 %6800
      %6802 = vrot.lane.b32.xlu0 %v6780, 16
      %v6803 = vpop.permute.xlu0 %6802
      %6804 = vrot.lane.b32.xlu0 %v6781, 16
      %v6805 = vpop.permute.xlu0 %6804
      %6806 = vrot.lane.b32.xlu0 %v6782, 16
      %v6807 = vpop.permute.xlu0 %6806
      %6808 = vrot.lane.b32.xlu0 %v6783, 16
      %v6809 = vpop.permute.xlu0 %6808
      %6810 = vrot.lane.b32.xlu0 %v6784, 16
      %v6811 = vpop.permute.xlu0 %6810
      %6812 = vrot.lane.b32.xlu0 %v6785, 16
      %v6813 = vpop.permute.xlu0 %6812
      %6814 = vrot.lane.b32.xlu0 %v6786, 16
      %v6815 = vpop.permute.xlu0 %6814
      %6816 = vrot.lane.b32.xlu0 %v6787, 16
      %v6817 = vpop.permute.xlu0 %6816
      %6818 = vrot.lane.b32.xlu0 %v6788, 16
      %v6819 = vpop.permute.xlu0 %6818
      %6820 = vrot.lane.b32.xlu0 %v6789, 16
      %v6821 = vpop.permute.xlu0 %6820
      %v6824 = vsel %vm1052, %v6646, %v6711
      %v6827 = vsel %vm1052, %v6647, %v6713
      %v6830 = vsel %vm1052, %v6648, %v6715
      %v6833 = vsel %vm1052, %v6649, %v6717
      %v6836 = vsel %vm1052, %v6650, %v6719
      %v6839 = vsel %vm1052, %v6651, %v6721
      %v6842 = vsel %vm1052, %v6652, %v6723
      %v6845 = vsel %vm1052, %v6653, %v6725
      %v6848 = vsel %vm1052, %v6654, %v6727
      %v6851 = vsel %vm1052, %v6655, %v6729
      %v6854 = vsel %vm1052, %v6656, %v6731
      %v6857 = vsel %vm1052, %v6657, %v6733
      %v6860 = vsel %vm1052, %v6658, %v6735
      %v6863 = vsel %vm1052, %v6659, %v6737
      %v6866 = vsel %vm1052, %v6660, %v6739
      %v6869 = vsel %vm1052, %v6661, %v6741
      %v6871 = vsel %vm1065, %v6824, %v6791
      %v6873 = vsel %vm1065, %v6827, %v6793
      %v6875 = vsel %vm1065, %v6830, %v6795
      %v6877 = vsel %vm1065, %v6833, %v6797
      %v6879 = vsel %vm1065, %v6836, %v6799
      %v6881 = vsel %vm1065, %v6839, %v6801
      %v6883 = vsel %vm1065, %v6842, %v6803
      %v6885 = vsel %vm1065, %v6845, %v6805
      %v6887 = vsel %vm1065, %v6848, %v6807
      %v6889 = vsel %vm1065, %v6851, %v6809
      %v6891 = vsel %vm1065, %v6854, %v6811
      %v6893 = vsel %vm1065, %v6857, %v6813
      %v6895 = vsel %vm1065, %v6860, %v6815
      %v6897 = vsel %vm1065, %v6863, %v6817
      %v6899 = vsel %vm1065, %v6866, %v6819
      %v6901 = vsel %vm1065, %v6869, %v6821
      %s6902 = scalar_lea.vmem %s5, 12
      %v6903 = vld [vmem:[%s6902] sm:$0xf]
      %v6904 = vld [vmem:[%s6902 + $0x4] sm:$0xf]
      %v6905 = vld [vmem:[%s6902 + $0x8] sm:$0xf]
      %v6909 = vunpack.c.l.b16 %v6903
      %v6910 = vunpack.c.l.b16 %v6904
      %v6911 = vunpack.c.l.b16 %v6905
      %v6912 = vpack.c.b16 %v6910, %v6909
      %v6913 = vpack.c.b16 %v6911, %v6911
      %v6915 = vsel %vm1074, %v6871, 0
      %v6917 = vsel %vm1074, %v6873, 0
      %v6919 = vsel %vm1074, %v6875, 0
      %v6921 = vsel %vm1074, %v6877, 0
      %v6923 = vsel %vm1074, %v6879, 0
      %v6925 = vsel %vm1074, %v6881, 0
      %v6927 = vsel %vm1074, %v6883, 0
      %v6929 = vsel %vm1074, %v6885, 0
      %v6931 = vsel %vm1074, %v6887, 0
      %v6933 = vsel %vm1074, %v6889, 0
      %v6935 = vsel %vm1074, %v6891, 0
      %v6937 = vsel %vm1074, %v6893, 0
      %v6939 = vsel %vm1074, %v6895, 0
      %v6941 = vsel %vm1074, %v6897, 0
      %v6943 = vsel %vm1074, %v6899, 0
      %v6945 = vsel %vm1074, %v6901, 0
      %vm6947 = vcmask 1043456
      %v6949 = vsel %vm6947, %v6913, 0
      %6951 = vmatprep.subr.bf16.mxu0 0
      %6952 = vmatpush1.bf16.msra.mxu0 0
      %6953 = vmatprep.subr.bf16.mxu0 0
      %6954 = vmatpush1.bf16.msra.mxu0 0
      %6955 = vmatprep.subr.bf16.mxu0 0
      %6956 = vmatpush1.bf16.msra.mxu0 0
      %6957 = vmatprep.subr.bf16.mxu0 0
      %6958 = vmatpush1.bf16.msra.mxu0 0
      %6959 = vmatprep.subr.bf16.mxu0 0
      %6960 = vmatpush1.bf16.msra.mxu0 0
      %6961 = vmatprep.subr.bf16.mxu0 0
      %6962 = vmatpush1.bf16.msra.mxu0 0
      %6963 = vmatprep.subr.bf16.mxu0 0
      %6964 = vmatpush1.bf16.msra.mxu0 %v6949
      %6965 = vmatprep.subr.bf16.mxu0 0
      %6966 = vmatpush1.bf16.msra.mxu0 %v6912
      %6967 = vmatprep.subr.bf16.mxu0 0
      %6968 = vmatpush2.bf16.msra.mxu0 0
      %6969 = vmatprep.subr.bf16.mxu0 0
      %6970 = vmatpush2.bf16.msra.mxu0 0
      %6971 = vmatprep.subr.bf16.mxu0 0
      %6972 = vmatpush2.bf16.msra.mxu0 0
      %6973 = vmatprep.subr.bf16.mxu0 0
      %6974 = vmatpush2.bf16.msra.mxu0 0
      %6975 = vmatprep.subr.bf16.mxu0 0
      %6976 = vmatpush2.bf16.msra.mxu0 0
      %6977 = vmatprep.subr.bf16.mxu0 0
      %6978 = vmatpush2.bf16.msra.mxu0 0
      %6979 = vmatprep.subr.bf16.mxu0 0
      %6980 = vmatpush2.bf16.msra.mxu0 0
      %6981 = vmatprep.subr.bf16.mxu0 0
      %6982 = vmatpush2.bf16.msra.mxu0 0
      %6983 = vmatprep.mubr.bf16.mxu0 0
      %6984 = vmatmul.mubr.bf16.gmra.mxu0 %v6915
      %v6985 = vpop.f32.mrf.mxu0
      %v6986 = vadd.f32 0.0, %v6985
      %v6987 = vpop.f32.mrf.mxu0
      %v6988 = vpop.f32.mrf.mxu0
      %v6989 = vadd.f32 0.0, %v6988
      %v6990 = vpop.f32.mrf.mxu0
      %6991 = vmatprep.mubr.bf16.mxu0 0
      %6992 = vmatmul.mubr.bf16.gmra.mxu0 %v6917
      %v6993 = vpop.f32.mrf.mxu0
      %v6994 = vadd.f32 0.0, %v6993
      %v6995 = vpop.f32.mrf.mxu0
      %v6996 = vpop.f32.mrf.mxu0
      %v6997 = vadd.f32 0.0, %v6996
      %v6998 = vpop.f32.mrf.mxu0
      %6999 = vmatprep.mubr.bf16.mxu0 0
      %7000 = vmatmul.mubr.bf16.gmra.mxu0 %v6919
      %v7001 = vpop.f32.mrf.mxu0
      %v7002 = vadd.f32 0.0, %v7001
      %v7003 = vpop.f32.mrf.mxu0
      %v7004 = vpop.f32.mrf.mxu0
      %v7005 = vadd.f32 0.0, %v7004
      %v7006 = vpop.f32.mrf.mxu0
      %7007 = vmatprep.mubr.bf16.mxu0 0
      %7008 = vmatmul.mubr.bf16.gmra.mxu0 %v6921
      %v7009 = vpop.f32.mrf.mxu0
      %v7010 = vadd.f32 0.0, %v7009
      %v7011 = vpop.f32.mrf.mxu0
      %v7012 = vpop.f32.mrf.mxu0
      %v7013 = vadd.f32 0.0, %v7012
      %v7014 = vpop.f32.mrf.mxu0
      %7015 = vmatprep.mubr.bf16.mxu0 0
      %7016 = vmatmul.mubr.bf16.gmra.mxu0 %v6923
      %v7017 = vpop.f32.mrf.mxu0
      %v7018 = vadd.f32 0.0, %v7017
      %v7019 = vpop.f32.mrf.mxu0
      %v7020 = vpop.f32.mrf.mxu0
      %v7021 = vadd.f32 0.0, %v7020
      %v7022 = vpop.f32.mrf.mxu0
      %7023 = vmatprep.mubr.bf16.mxu0 0
      %7024 = vmatmul.mubr.bf16.gmra.mxu0 %v6925
      %v7025 = vpop.f32.mrf.mxu0
      %v7026 = vadd.f32 0.0, %v7025
      %v7027 = vpop.f32.mrf.mxu0
      %v7028 = vpop.f32.mrf.mxu0
      %v7029 = vadd.f32 0.0, %v7028
      %v7030 = vpop.f32.mrf.mxu0
      %7031 = vmatprep.mubr.bf16.mxu0 0
      %7032 = vmatmul.mubr.bf16.gmra.mxu0 %v6927
      %v7033 = vpop.f32.mrf.mxu0
      %v7034 = vadd.f32 0.0, %v7033
      %v7035 = vpop.f32.mrf.mxu0
      %v7036 = vpop.f32.mrf.mxu0
      %v7037 = vadd.f32 0.0, %v7036
      %v7038 = vpop.f32.mrf.mxu0
      %7039 = vmatprep.mubr.bf16.mxu0 0
      %7040 = vmatmul.mubr.bf16.gmra.mxu0 %v6929
      %v7041 = vpop.f32.mrf.mxu0
      %v7042 = vadd.f32 0.0, %v7041
      %v7043 = vpop.f32.mrf.mxu0
      %v7044 = vpop.f32.mrf.mxu0
      %v7045 = vadd.f32 0.0, %v7044
      %v7046 = vpop.f32.mrf.mxu0
      %7047 = vmatprep.mubr.bf16.mxu0 0
      %7048 = vmatmul.mubr.bf16.gmra.mxu0 %v6931
      %v7049 = vpop.f32.mrf.mxu0
      %v7050 = vadd.f32 0.0, %v7049
      %v7051 = vpop.f32.mrf.mxu0
      %v7052 = vpop.f32.mrf.mxu0
      %v7053 = vadd.f32 0.0, %v7052
      %v7054 = vpop.f32.mrf.mxu0
      %7055 = vmatprep.mubr.bf16.mxu0 0
      %7056 = vmatmul.mubr.bf16.gmra.mxu0 %v6933
      %v7057 = vpop.f32.mrf.mxu0
      %v7058 = vadd.f32 0.0, %v7057
      %v7059 = vpop.f32.mrf.mxu0
      %v7060 = vpop.f32.mrf.mxu0
      %v7061 = vadd.f32 0.0, %v7060
      %v7062 = vpop.f32.mrf.mxu0
      %7063 = vmatprep.mubr.bf16.mxu0 0
      %7064 = vmatmul.mubr.bf16.gmra.mxu0 %v6935
      %v7065 = vpop.f32.mrf.mxu0
      %v7066 = vadd.f32 0.0, %v7065
      %v7067 = vpop.f32.mrf.mxu0
      %v7068 = vpop.f32.mrf.mxu0
      %v7069 = vadd.f32 0.0, %v7068
      %v7070 = vpop.f32.mrf.mxu0
      %7071 = vmatprep.mubr.bf16.mxu0 0
      %7072 = vmatmul.mubr.bf16.gmra.mxu0 %v6937
      %v7073 = vpop.f32.mrf.mxu0
      %v7074 = vadd.f32 0.0, %v7073
      %v7075 = vpop.f32.mrf.mxu0
      %v7076 = vpop.f32.mrf.mxu0
      %v7077 = vadd.f32 0.0, %v7076
      %v7078 = vpop.f32.mrf.mxu0
      %7079 = vmatprep.mubr.bf16.mxu0 0
      %7080 = vmatmul.mubr.bf16.gmra.mxu0 %v6939
      %v7081 = vpop.f32.mrf.mxu0
      %v7082 = vadd.f32 0.0, %v7081
      %v7083 = vpop.f32.mrf.mxu0
      %v7084 = vpop.f32.mrf.mxu0
      %v7085 = vadd.f32 0.0, %v7084
      %v7086 = vpop.f32.mrf.mxu0
      %7087 = vmatprep.mubr.bf16.mxu0 0
      %7088 = vmatmul.mubr.bf16.gmra.mxu0 %v6941
      %v7089 = vpop.f32.mrf.mxu0
      %v7090 = vadd.f32 0.0, %v7089
      %v7091 = vpop.f32.mrf.mxu0
      %v7092 = vpop.f32.mrf.mxu0
      %v7093 = vadd.f32 0.0, %v7092
      %v7094 = vpop.f32.mrf.mxu0
      %7095 = vmatprep.mubr.bf16.mxu0 0
      %7096 = vmatmul.mubr.bf16.gmra.mxu0 %v6943
      %v7097 = vpop.f32.mrf.mxu0
      %v7098 = vadd.f32 0.0, %v7097
      %v7099 = vpop.f32.mrf.mxu0
      %v7100 = vpop.f32.mrf.mxu0
      %v7101 = vadd.f32 0.0, %v7100
      %v7102 = vpop.f32.mrf.mxu0
      %7103 = vmatprep.mubr.bf16.mxu0 0
      %7104 = vmatmul.mubr.bf16.gmra.mxu0 %v6945
      %v7105 = vpop.f32.mrf.mxu0
      %v7106 = vadd.f32 0.0, %v7105
      %v7107 = vpop.f32.mrf.mxu0
      %v7108 = vpop.f32.mrf.mxu0
      %v7109 = vadd.f32 0.0, %v7108
      %v7110 = vpop.f32.mrf.mxu0
      %7111 = vdwg.mxu0
      %v7115 = vunpack.c.l.b16 %v5987
      %v7116 = vunpack.c.l.b16 %v5988
      %v7117 = vunpack.c.l.b16 %v5989
      %v7118 = vpack.c.b16 %v7116, %v7115
      %v7119 = vpack.c.b16 %v7117, %v7117
      %v7121 = vsel %vm1074, %v5956, 0
      %v7123 = vsel %vm1074, %v5958, 0
      %v7125 = vsel %vm1074, %v5960, 0
      %v7127 = vsel %vm1074, %v5962, 0
      %v7129 = vsel %vm1074, %v5964, 0
      %v7131 = vsel %vm1074, %v5966, 0
      %v7133 = vsel %vm1074, %v5968, 0
      %v7135 = vsel %vm1074, %v5970, 0
      %v7137 = vsel %vm1074, %v5972, 0
      %v7139 = vsel %vm1074, %v5974, 0
      %v7141 = vsel %vm1074, %v5976, 0
      %v7143 = vsel %vm1074, %v5978, 0
      %v7145 = vsel %vm1074, %v5980, 0
      %v7147 = vsel %vm1074, %v5982, 0
      %v7149 = vsel %vm1074, %v5984, 0
      %v7151 = vsel %vm1074, %v5986, 0
      %v7154 = vsel %vm6947, %v7119, 0
      %7156 = vmatprep.subr.bf16.mxu0 0
      %7157 = vmatpush1.bf16.msra.mxu0 0
      %7158 = vmatprep.subr.bf16.mxu0 0
      %7159 = vmatpush1.bf16.msra.mxu0 0
      %7160 = vmatprep.subr.bf16.mxu0 0
      %7161 = vmatpush1.bf16.msra.mxu0 0
      %7162 = vmatprep.subr.bf16.mxu0 0
      %7163 = vmatpush1.bf16.msra.mxu0 0
      %7164 = vmatprep.subr.bf16.mxu0 0
      %7165 = vmatpush1.bf16.msra.mxu0 0
      %7166 = vmatprep.subr.bf16.mxu0 0
      %7167 = vmatpush1.bf16.msra.mxu0 0
      %7168 = vmatprep.subr.bf16.mxu0 0
      %7169 = vmatpush1.bf16.msra.mxu0 %v7154
      %7170 = vmatprep.subr.bf16.mxu0 0
      %7171 = vmatpush1.bf16.msra.mxu0 %v7118
      %7172 = vmatprep.subr.bf16.mxu0 0
      %7173 = vmatpush2.bf16.msra.mxu0 0
      %7174 = vmatprep.subr.bf16.mxu0 0
      %7175 = vmatpush2.bf16.msra.mxu0 0
      %7176 = vmatprep.subr.bf16.mxu0 0
      %7177 = vmatpush2.bf16.msra.mxu0 0
      %7178 = vmatprep.subr.bf16.mxu0 0
      %7179 = vmatpush2.bf16.msra.mxu0 0
      %7180 = vmatprep.subr.bf16.mxu0 0
      %7181 = vmatpush2.bf16.msra.mxu0 0
      %7182 = vmatprep.subr.bf16.mxu0 0
      %7183 = vmatpush2.bf16.msra.mxu0 0
      %7184 = vmatprep.subr.bf16.mxu0 0
      %7185 = vmatpush2.bf16.msra.mxu0 0
      %7186 = vmatprep.subr.bf16.mxu0 0
      %7187 = vmatpush2.bf16.msra.mxu0 0
      %7188 = vmatprep.mubr.bf16.mxu0 0
      %7189 = vmatmul.mubr.bf16.gmra.mxu0 %v7121
      %v7190 = vpop.f32.mrf.mxu0
      %v7191 = vadd.f32 %v6986, %v7190
      %v7192 = vpop.f32.mrf.mxu0
      %v7193 = vpop.f32.mrf.mxu0
      %v7194 = vadd.f32 %v6989, %v7193
      %v7195 = vpop.f32.mrf.mxu0
      %7196 = vmatprep.mubr.bf16.mxu0 0
      %7197 = vmatmul.mubr.bf16.gmra.mxu0 %v7123
      %v7198 = vpop.f32.mrf.mxu0
      %v7199 = vadd.f32 %v6994, %v7198
      %v7200 = vpop.f32.mrf.mxu0
      %v7201 = vpop.f32.mrf.mxu0
      %v7202 = vadd.f32 %v6997, %v7201
      %v7203 = vpop.f32.mrf.mxu0
      %7204 = vmatprep.mubr.bf16.mxu0 0
      %7205 = vmatmul.mubr.bf16.gmra.mxu0 %v7125
      %v7206 = vpop.f32.mrf.mxu0
      %v7207 = vadd.f32 %v7002, %v7206
      %v7208 = vpop.f32.mrf.mxu0
      %v7209 = vpop.f32.mrf.mxu0
      %v7210 = vadd.f32 %v7005, %v7209
      %v7211 = vpop.f32.mrf.mxu0
      %7212 = vmatprep.mubr.bf16.mxu0 0
      %7213 = vmatmul.mubr.bf16.gmra.mxu0 %v7127
      %v7214 = vpop.f32.mrf.mxu0
      %v7215 = vadd.f32 %v7010, %v7214
      %v7216 = vpop.f32.mrf.mxu0
      %v7217 = vpop.f32.mrf.mxu0
      %v7218 = vadd.f32 %v7013, %v7217
      %v7219 = vpop.f32.mrf.mxu0
      %7220 = vmatprep.mubr.bf16.mxu0 0
      %7221 = vmatmul.mubr.bf16.gmra.mxu0 %v7129
      %v7222 = vpop.f32.mrf.mxu0
      %v7223 = vadd.f32 %v7018, %v7222
      %v7224 = vpop.f32.mrf.mxu0
      %v7225 = vpop.f32.mrf.mxu0
      %v7226 = vadd.f32 %v7021, %v7225
      %v7227 = vpop.f32.mrf.mxu0
      %7228 = vmatprep.mubr.bf16.mxu0 0
      %7229 = vmatmul.mubr.bf16.gmra.mxu0 %v7131
      %v7230 = vpop.f32.mrf.mxu0
      %v7231 = vadd.f32 %v7026, %v7230
      %v7232 = vpop.f32.mrf.mxu0
      %v7233 = vpop.f32.mrf.mxu0
      %v7234 = vadd.f32 %v7029, %v7233
      %v7235 = vpop.f32.mrf.mxu0
      %7236 = vmatprep.mubr.bf16.mxu0 0
      %7237 = vmatmul.mubr.bf16.gmra.mxu0 %v7133
      %v7238 = vpop.f32.mrf.mxu0
      %v7239 = vadd.f32 %v7034, %v7238
      %v7240 = vpop.f32.mrf.mxu0
      %v7241 = vpop.f32.mrf.mxu0
      %v7242 = vadd.f32 %v7037, %v7241
      %v7243 = vpop.f32.mrf.mxu0
      %7244 = vmatprep.mubr.bf16.mxu0 0
      %7245 = vmatmul.mubr.bf16.gmra.mxu0 %v7135
      %v7246 = vpop.f32.mrf.mxu0
      %v7247 = vadd.f32 %v7042, %v7246
      %v7248 = vpop.f32.mrf.mxu0
      %v7249 = vpop.f32.mrf.mxu0
      %v7250 = vadd.f32 %v7045, %v7249
      %v7251 = vpop.f32.mrf.mxu0
      %7252 = vmatprep.mubr.bf16.mxu0 0
      %7253 = vmatmul.mubr.bf16.gmra.mxu0 %v7137
      %v7254 = vpop.f32.mrf.mxu0
      %v7255 = vadd.f32 %v7050, %v7254
      %v7256 = vpop.f32.mrf.mxu0
      %v7257 = vpop.f32.mrf.mxu0
      %v7258 = vadd.f32 %v7053, %v7257
      %v7259 = vpop.f32.mrf.mxu0
      %7260 = vmatprep.mubr.bf16.mxu0 0
      %7261 = vmatmul.mubr.bf16.gmra.mxu0 %v7139
      %v7262 = vpop.f32.mrf.mxu0
      %v7263 = vadd.f32 %v7058, %v7262
      %v7264 = vpop.f32.mrf.mxu0
      %v7265 = vpop.f32.mrf.mxu0
      %v7266 = vadd.f32 %v7061, %v7265
      %v7267 = vpop.f32.mrf.mxu0
      %7268 = vmatprep.mubr.bf16.mxu0 0
      %7269 = vmatmul.mubr.bf16.gmra.mxu0 %v7141
      %v7270 = vpop.f32.mrf.mxu0
      %v7271 = vadd.f32 %v7066, %v7270
      %v7272 = vpop.f32.mrf.mxu0
      %v7273 = vpop.f32.mrf.mxu0
      %v7274 = vadd.f32 %v7069, %v7273
      %v7275 = vpop.f32.mrf.mxu0
      %7276 = vmatprep.mubr.bf16.mxu0 0
      %7277 = vmatmul.mubr.bf16.gmra.mxu0 %v7143
      %v7278 = vpop.f32.mrf.mxu0
      %v7279 = vadd.f32 %v7074, %v7278
      %v7280 = vpop.f32.mrf.mxu0
      %v7281 = vpop.f32.mrf.mxu0
      %v7282 = vadd.f32 %v7077, %v7281
      %v7283 = vpop.f32.mrf.mxu0
      %7284 = vmatprep.mubr.bf16.mxu0 0
      %7285 = vmatmul.mubr.bf16.gmra.mxu0 %v7145
      %v7286 = vpop.f32.mrf.mxu0
      %v7287 = vadd.f32 %v7082, %v7286
      %v7288 = vpop.f32.mrf.mxu0
      %v7289 = vpop.f32.mrf.mxu0
      %v7290 = vadd.f32 %v7085, %v7289
      %v7291 = vpop.f32.mrf.mxu0
      %7292 = vmatprep.mubr.bf16.mxu0 0
      %7293 = vmatmul.mubr.bf16.gmra.mxu0 %v7147
      %v7294 = vpop.f32.mrf.mxu0
      %v7295 = vadd.f32 %v7090, %v7294
      %v7296 = vpop.f32.mrf.mxu0
      %v7297 = vpop.f32.mrf.mxu0
      %v7298 = vadd.f32 %v7093, %v7297
      %v7299 = vpop.f32.mrf.mxu0
      %7300 = vmatprep.mubr.bf16.mxu0 0
      %7301 = vmatmul.mubr.bf16.gmra.mxu0 %v7149
      %v7302 = vpop.f32.mrf.mxu0
      %v7303 = vadd.f32 %v7098, %v7302
      %v7304 = vpop.f32.mrf.mxu0
      %v7305 = vpop.f32.mrf.mxu0
      %v7306 = vadd.f32 %v7101, %v7305
      %v7307 = vpop.f32.mrf.mxu0
      %7308 = vmatprep.mubr.bf16.mxu0 0
      %7309 = vmatmul.mubr.bf16.gmra.mxu0 %v7151
      %v7310 = vpop.f32.mrf.mxu0
      %v7311 = vadd.f32 %v7106, %v7310
      %v7312 = vpop.f32.mrf.mxu0
      %v7313 = vpop.f32.mrf.mxu0
      %v7314 = vadd.f32 %v7109, %v7313
      %v7315 = vpop.f32.mrf.mxu0
      %7316 = vdwg.mxu0
      %s7317 = scalar_lea.vmem [#allocation2], 24
      %v7318 = vld [vmem:[%s7317] sm:$0xf]
      %v7319 = vld [vmem:[%s7317 + $0x4] sm:$0xf]
      %v7320 = vld [vmem:[%s7317 + $0xc] sm:$0xf]
      %v7321 = vld [vmem:[%s7317 + $0x10] sm:$0xf]
      %v7322 = vld [vmem:[%s7317 + $0x18] sm:$0xf]
      %v7323 = vld [vmem:[%s7317 + $0x1c] sm:$0xf]
      %v7324 = vld [vmem:[%s7317 + $0x24] sm:$0xf]
      %v7325 = vld [vmem:[%s7317 + $0x28] sm:$0xf]
      %v7326 = vld [vmem:[%s7317 + $0x30] sm:$0xf]
      %v7327 = vld [vmem:[%s7317 + $0x34] sm:$0xf]
      %v7328 = vld [vmem:[%s7317 + $0x3c] sm:$0xf]
      %v7329 = vld [vmem:[%s7317 + $0x40] sm:$0xf]
      %v7330 = vld [vmem:[%s7317 + $0x48] sm:$0xf]
      %v7331 = vld [vmem:[%s7317 + $0x4c] sm:$0xf]
      %v7332 = vld [vmem:[%s7317 + $0x54] sm:$0xf]
      %v7333 = vld [vmem:[%s7317 + $0x58] sm:$0xf]
      %v7334 = vld [vmem:[%s7317 + $0x60] sm:$0xf]
      %v7335 = vld [vmem:[%s7317 + $0x64] sm:$0xf]
      %v7336 = vld [vmem:[%s7317 + $0x6c] sm:$0xf]
      %v7337 = vld [vmem:[%s7317 + $0x70] sm:$0xf]
      %v7338 = vld [vmem:[%s7317 + $0x78] sm:$0xf]
      %v7339 = vld [vmem:[%s7317 + $0x7c] sm:$0xf]
      %v7340 = vld [vmem:[%s7317 + $0x84] sm:$0xf]
      %v7341 = vld [vmem:[%s7317 + $0x88] sm:$0xf]
      %v7342 = vld [vmem:[%s7317 + $0x90] sm:$0xf]
      %v7343 = vld [vmem:[%s7317 + $0x94] sm:$0xf]
      %v7344 = vld [vmem:[%s7317 + $0x9c] sm:$0xf]
      %v7345 = vld [vmem:[%s7317 + $0xa0] sm:$0xf]
      %v7346 = vld [vmem:[%s7317 + $0xa8] sm:$0xf]
      %v7347 = vld [vmem:[%s7317 + $0xac] sm:$0xf]
      %v7348 = vld [vmem:[%s7317 + $0xb4] sm:$0xf]
      %v7349 = vld [vmem:[%s7317 + $0xb8] sm:$0xf]
      %v7350 = vld [vmem:[%s7317 + $0x8] sm:$0x1]
      %v7351 = vld [vmem:[%s7317 + $0x14] sm:$0x1]
      %v7352 = vld [vmem:[%s7317 + $0x20] sm:$0x1]
      %v7353 = vld [vmem:[%s7317 + $0x2c] sm:$0x1]
      %v7354 = vld [vmem:[%s7317 + $0x38] sm:$0x1]
      %v7355 = vld [vmem:[%s7317 + $0x44] sm:$0x1]
      %v7356 = vld [vmem:[%s7317 + $0x50] sm:$0x1]
      %v7357 = vld [vmem:[%s7317 + $0x5c] sm:$0x1]
      %v7358 = vld [vmem:[%s7317 + $0x68] sm:$0x1]
      %v7359 = vld [vmem:[%s7317 + $0x74] sm:$0x1]
      %v7360 = vld [vmem:[%s7317 + $0x80] sm:$0x1]
      %v7361 = vld [vmem:[%s7317 + $0x8c] sm:$0x1]
      %v7362 = vld [vmem:[%s7317 + $0x98] sm:$0x1]
      %v7363 = vld [vmem:[%s7317 + $0xa4] sm:$0x1]
      %v7364 = vld [vmem:[%s7317 + $0xb0] sm:$0x1]
      %v7365 = vld [vmem:[%s7317 + $0xbc] sm:$0x1]
      %v7367 = vshrl.u32 %v7318, 16
      %v7369 = vrot.slane %v7367, 4
      %v7370 = vshll.u32 %v7318, 16
      %v7372 = vrot.slane %v7370, 5
      %v7373 = vor.u32 %v7369, %v7372
      %v7374 = vrot.slane %v7373, 4
      %v7376 = vshll.u32 %v7319, 16
      %v7378 = vrot.slane %v7376, 5
      %v7379 = vsel %vm722, %v7374, %v7378
      %v7380 = vshrl.u32 %v7319, 16
      %v7382 = vrot.slane %v7380, 4
      %v7383 = vor.u32 %v7382, %v7378
      %v7384 = vrot.slane %v7383, 4
      %v7386 = vshll.u32 %v7350, 16
      %v7388 = vrot.slane %v7386, 5
      %v7389 = vsel %vm722, %v7384, %v7388
      %v7391 = vshrl.u32 %v7320, 16
      %v7393 = vrot.slane %v7391, 4
      %v7394 = vshll.u32 %v7320, 16
      %v7396 = vrot.slane %v7394, 5
      %v7397 = vor.u32 %v7393, %v7396
      %v7398 = vrot.slane %v7397, 4
      %v7400 = vshll.u32 %v7321, 16
      %v7402 = vrot.slane %v7400, 5
      %v7403 = vsel %vm722, %v7398, %v7402
      %v7404 = vshrl.u32 %v7321, 16
      %v7406 = vrot.slane %v7404, 4
      %v7407 = vor.u32 %v7406, %v7402
      %v7408 = vrot.slane %v7407, 4
      %v7410 = vshll.u32 %v7351, 16
      %v7412 = vrot.slane %v7410, 5
      %v7413 = vsel %vm722, %v7408, %v7412
      %v7415 = vshrl.u32 %v7322, 16
      %v7417 = vrot.slane %v7415, 4
      %v7418 = vshll.u32 %v7322, 16
      %v7420 = vrot.slane %v7418, 5
      %v7421 = vor.u32 %v7417, %v7420
      %v7422 = vrot.slane %v7421, 4
      %v7424 = vshll.u32 %v7323, 16
      %v7426 = vrot.slane %v7424, 5
      %v7427 = vsel %vm722, %v7422, %v7426
      %v7428 = vshrl.u32 %v7323, 16
      %v7430 = vrot.slane %v7428, 4
      %v7431 = vor.u32 %v7430, %v7426
      %v7432 = vrot.slane %v7431, 4
      %v7434 = vshll.u32 %v7352, 16
      %v7436 = vrot.slane %v7434, 5
      %v7437 = vsel %vm722, %v7432, %v7436
      %v7439 = vshrl.u32 %v7324, 16
      %v7441 = vrot.slane %v7439, 4
      %v7442 = vshll.u32 %v7324, 16
      %v7444 = vrot.slane %v7442, 5
      %v7445 = vor.u32 %v7441, %v7444
      %v7446 = vrot.slane %v7445, 4
      %v7448 = vshll.u32 %v7325, 16
      %v7450 = vrot.slane %v7448, 5
      %v7451 = vsel %vm722, %v7446, %v7450
      %v7452 = vshrl.u32 %v7325, 16
      %v7454 = vrot.slane %v7452, 4
      %v7455 = vor.u32 %v7454, %v7450
      %v7456 = vrot.slane %v7455, 4
      %v7458 = vshll.u32 %v7353, 16
      %v7460 = vrot.slane %v7458, 5
      %v7461 = vsel %vm722, %v7456, %v7460
      %v7463 = vshrl.u32 %v7326, 16
      %v7465 = vrot.slane %v7463, 4
      %v7466 = vshll.u32 %v7326, 16
      %v7468 = vrot.slane %v7466, 5
      %v7469 = vor.u32 %v7465, %v7468
      %v7470 = vrot.slane %v7469, 4
      %v7472 = vshll.u32 %v7327, 16
      %v7474 = vrot.slane %v7472, 5
      %v7475 = vsel %vm722, %v7470, %v7474
      %v7476 = vshrl.u32 %v7327, 16
      %v7478 = vrot.slane %v7476, 4
      %v7479 = vor.u32 %v7478, %v7474
      %v7480 = vrot.slane %v7479, 4
      %v7482 = vshll.u32 %v7354, 16
      %v7484 = vrot.slane %v7482, 5
      %v7485 = vsel %vm722, %v7480, %v7484
      %v7487 = vshrl.u32 %v7328, 16
      %v7489 = vrot.slane %v7487, 4
      %v7490 = vshll.u32 %v7328, 16
      %v7492 = vrot.slane %v7490, 5
      %v7493 = vor.u32 %v7489, %v7492
      %v7494 = vrot.slane %v7493, 4
      %v7496 = vshll.u32 %v7329, 16
      %v7498 = vrot.slane %v7496, 5
      %v7499 = vsel %vm722, %v7494, %v7498
      %v7500 = vshrl.u32 %v7329, 16
      %v7502 = vrot.slane %v7500, 4
      %v7503 = vor.u32 %v7502, %v7498
      %v7504 = vrot.slane %v7503, 4
      %v7506 = vshll.u32 %v7355, 16
      %v7508 = vrot.slane %v7506, 5
      %v7509 = vsel %vm722, %v7504, %v7508
      %v7511 = vshrl.u32 %v7330, 16
      %v7513 = vrot.slane %v7511, 4
      %v7514 = vshll.u32 %v7330, 16
      %v7516 = vrot.slane %v7514, 5
      %v7517 = vor.u32 %v7513, %v7516
      %v7518 = vrot.slane %v7517, 4
      %v7520 = vshll.u32 %v7331, 16
      %v7522 = vrot.slane %v7520, 5
      %v7523 = vsel %vm722, %v7518, %v7522
      %v7524 = vshrl.u32 %v7331, 16
      %v7526 = vrot.slane %v7524, 4
      %v7527 = vor.u32 %v7526, %v7522
      %v7528 = vrot.slane %v7527, 4
      %v7530 = vshll.u32 %v7356, 16
      %v7532 = vrot.slane %v7530, 5
      %v7533 = vsel %vm722, %v7528, %v7532
      %v7535 = vshrl.u32 %v7332, 16
      %v7537 = vrot.slane %v7535, 4
      %v7538 = vshll.u32 %v7332, 16
      %v7540 = vrot.slane %v7538, 5
      %v7541 = vor.u32 %v7537, %v7540
      %v7542 = vrot.slane %v7541, 4
      %v7544 = vshll.u32 %v7333, 16
      %v7546 = vrot.slane %v7544, 5
      %v7547 = vsel %vm722, %v7542, %v7546
      %v7548 = vshrl.u32 %v7333, 16
      %v7550 = vrot.slane %v7548, 4
      %v7551 = vor.u32 %v7550, %v7546
      %v7552 = vrot.slane %v7551, 4
      %v7554 = vshll.u32 %v7357, 16
      %v7556 = vrot.slane %v7554, 5
      %v7557 = vsel %vm722, %v7552, %v7556
      %v7559 = vshrl.u32 %v7334, 16
      %v7561 = vrot.slane %v7559, 4
      %v7562 = vshll.u32 %v7334, 16
      %v7564 = vrot.slane %v7562, 5
      %v7565 = vor.u32 %v7561, %v7564
      %v7566 = vrot.slane %v7565, 4
      %v7568 = vshll.u32 %v7335, 16
      %v7570 = vrot.slane %v7568, 5
      %v7571 = vsel %vm722, %v7566, %v7570
      %v7572 = vshrl.u32 %v7335, 16
      %v7574 = vrot.slane %v7572, 4
      %v7575 = vor.u32 %v7574, %v7570
      %v7576 = vrot.slane %v7575, 4
      %v7578 = vshll.u32 %v7358, 16
      %v7580 = vrot.slane %v7578, 5
      %v7581 = vsel %vm722, %v7576, %v7580
      %v7583 = vshrl.u32 %v7336, 16
      %v7585 = vrot.slane %v7583, 4
      %v7586 = vshll.u32 %v7336, 16
      %v7588 = vrot.slane %v7586, 5
      %v7589 = vor.u32 %v7585, %v7588
      %v7590 = vrot.slane %v7589, 4
      %v7592 = vshll.u32 %v7337, 16
      %v7594 = vrot.slane %v7592, 5
      %v7595 = vsel %vm722, %v7590, %v7594
      %v7596 = vshrl.u32 %v7337, 16
      %v7598 = vrot.slane %v7596, 4
      %v7599 = vor.u32 %v7598, %v7594
      %v7600 = vrot.slane %v7599, 4
      %v7602 = vshll.u32 %v7359, 16
      %v7604 = vrot.slane %v7602, 5
      %v7605 = vsel %vm722, %v7600, %v7604
      %v7607 = vshrl.u32 %v7338, 16
      %v7609 = vrot.slane %v7607, 4
      %v7610 = vshll.u32 %v7338, 16
      %v7612 = vrot.slane %v7610, 5
      %v7613 = vor.u32 %v7609, %v7612
      %v7614 = vrot.slane %v7613, 4
      %v7616 = vshll.u32 %v7339, 16
      %v7618 = vrot.slane %v7616, 5
      %v7619 = vsel %vm722, %v7614, %v7618
      %v7620 = vshrl.u32 %v7339, 16
      %v7622 = vrot.slane %v7620, 4
      %v7623 = vor.u32 %v7622, %v7618
      %v7624 = vrot.slane %v7623, 4
      %v7626 = vshll.u32 %v7360, 16
      %v7628 = vrot.slane %v7626, 5
      %v7629 = vsel %vm722, %v7624, %v7628
      %v7631 = vshrl.u32 %v7340, 16
      %v7633 = vrot.slane %v7631, 4
      %v7634 = vshll.u32 %v7340, 16
      %v7636 = vrot.slane %v7634, 5
      %v7637 = vor.u32 %v7633, %v7636
      %v7638 = vrot.slane %v7637, 4
      %v7640 = vshll.u32 %v7341, 16
      %v7642 = vrot.slane %v7640, 5
      %v7643 = vsel %vm722, %v7638, %v7642
      %v7644 = vshrl.u32 %v7341, 16
      %v7646 = vrot.slane %v7644, 4
      %v7647 = vor.u32 %v7646, %v7642
      %v7648 = vrot.slane %v7647, 4
      %v7650 = vshll.u32 %v7361, 16
      %v7652 = vrot.slane %v7650, 5
      %v7653 = vsel %vm722, %v7648, %v7652
      %v7655 = vshrl.u32 %v7342, 16
      %v7657 = vrot.slane %v7655, 4
      %v7658 = vshll.u32 %v7342, 16
      %v7660 = vrot.slane %v7658, 5
      %v7661 = vor.u32 %v7657, %v7660
      %v7662 = vrot.slane %v7661, 4
      %v7664 = vshll.u32 %v7343, 16
      %v7666 = vrot.slane %v7664, 5
      %v7667 = vsel %vm722, %v7662, %v7666
      %v7668 = vshrl.u32 %v7343, 16
      %v7670 = vrot.slane %v7668, 4
      %v7671 = vor.u32 %v7670, %v7666
      %v7672 = vrot.slane %v7671, 4
      %v7674 = vshll.u32 %v7362, 16
      %v7676 = vrot.slane %v7674, 5
      %v7677 = vsel %vm722, %v7672, %v7676
      %v7679 = vshrl.u32 %v7344, 16
      %v7681 = vrot.slane %v7679, 4
      %v7682 = vshll.u32 %v7344, 16
      %v7684 = vrot.slane %v7682, 5
      %v7685 = vor.u32 %v7681, %v7684
      %v7686 = vrot.slane %v7685, 4
      %v7688 = vshll.u32 %v7345, 16
      %v7690 = vrot.slane %v7688, 5
      %v7691 = vsel %vm722, %v7686, %v7690
      %v7692 = vshrl.u32 %v7345, 16
      %v7694 = vrot.slane %v7692, 4
      %v7695 = vor.u32 %v7694, %v7690
      %v7696 = vrot.slane %v7695, 4
      %v7698 = vshll.u32 %v7363, 16
      %v7700 = vrot.slane %v7698, 5
      %v7701 = vsel %vm722, %v7696, %v7700
      %v7703 = vshrl.u32 %v7346, 16
      %v7705 = vrot.slane %v7703, 4
      %v7706 = vshll.u32 %v7346, 16
      %v7708 = vrot.slane %v7706, 5
      %v7709 = vor.u32 %v7705, %v7708
      %v7710 = vrot.slane %v7709, 4
      %v7712 = vshll.u32 %v7347, 16
      %v7714 = vrot.slane %v7712, 5
      %v7715 = vsel %vm722, %v7710, %v7714
      %v7716 = vshrl.u32 %v7347, 16
      %v7718 = vrot.slane %v7716, 4
      %v7719 = vor.u32 %v7718, %v7714
      %v7720 = vrot.slane %v7719, 4
      %v7722 = vshll.u32 %v7364, 16
      %v7724 = vrot.slane %v7722, 5
      %v7725 = vsel %vm722, %v7720, %v7724
      %v7727 = vshrl.u32 %v7348, 16
      %v7729 = vrot.slane %v7727, 4
      %v7730 = vshll.u32 %v7348, 16
      %v7732 = vrot.slane %v7730, 5
      %v7733 = vor.u32 %v7729, %v7732
      %v7734 = vrot.slane %v7733, 4
      %v7736 = vshll.u32 %v7349, 16
      %v7738 = vrot.slane %v7736, 5
      %v7739 = vsel %vm722, %v7734, %v7738
      %v7740 = vshrl.u32 %v7349, 16
      %v7742 = vrot.slane %v7740, 4
      %v7743 = vor.u32 %v7742, %v7738
      %v7744 = vrot.slane %v7743, 4
      %v7746 = vshll.u32 %v7365, 16
      %v7748 = vrot.slane %v7746, 5
      %v7749 = vsel %vm722, %v7744, %v7748
      %v7750 = vld [vmem:[%s7317] sm:$0xe]
      %v7751 = vld [vmem:[%s7317 + $0xc] sm:$0xe]
      %v7752 = vld [vmem:[%s7317 + $0x18] sm:$0xe]
      %v7753 = vld [vmem:[%s7317 + $0x24] sm:$0xe]
      %v7754 = vld [vmem:[%s7317 + $0x30] sm:$0xe]
      %v7755 = vld [vmem:[%s7317 + $0x3c] sm:$0xe]
      %v7756 = vld [vmem:[%s7317 + $0x48] sm:$0xe]
      %v7757 = vld [vmem:[%s7317 + $0x54] sm:$0xe]
      %v7758 = vld [vmem:[%s7317 + $0x60] sm:$0xe]
      %v7759 = vld [vmem:[%s7317 + $0x6c] sm:$0xe]
      %v7760 = vld [vmem:[%s7317 + $0x78] sm:$0xe]
      %v7761 = vld [vmem:[%s7317 + $0x84] sm:$0xe]
      %v7762 = vld [vmem:[%s7317 + $0x90] sm:$0xe]
      %v7763 = vld [vmem:[%s7317 + $0x9c] sm:$0xe]
      %v7764 = vld [vmem:[%s7317 + $0xa8] sm:$0xe]
      %v7765 = vld [vmem:[%s7317 + $0xb4] sm:$0xe]
      %v7814 = vrot.slane %v7750, 5
      %v7815 = vrot.slane %v7814, 4
      %v7816 = vrot.slane %v7319, 5
      %v7817 = vsel %vm5570, %v7815, %v7816
      %v7818 = vrot.slane %v7816, 4
      %v7819 = vrot.slane %v7350, 5
      %v7820 = vsel %vm5570, %v7818, %v7819
      %v7821 = vrot.slane %v7751, 5
      %v7822 = vrot.slane %v7821, 4
      %v7823 = vrot.slane %v7321, 5
      %v7824 = vsel %vm5570, %v7822, %v7823
      %v7825 = vrot.slane %v7823, 4
      %v7826 = vrot.slane %v7351, 5
      %v7827 = vsel %vm5570, %v7825, %v7826
      %v7828 = vrot.slane %v7752, 5
      %v7829 = vrot.slane %v7828, 4
      %v7830 = vrot.slane %v7323, 5
      %v7831 = vsel %vm5570, %v7829, %v7830
      %v7832 = vrot.slane %v7830, 4
      %v7833 = vrot.slane %v7352, 5
      %v7834 = vsel %vm5570, %v7832, %v7833
      %v7835 = vrot.slane %v7753, 5
      %v7836 = vrot.slane %v7835, 4
      %v7837 = vrot.slane %v7325, 5
      %v7838 = vsel %vm5570, %v7836, %v7837
      %v7839 = vrot.slane %v7837, 4
      %v7840 = vrot.slane %v7353, 5
      %v7841 = vsel %vm5570, %v7839, %v7840
      %v7842 = vrot.slane %v7754, 5
      %v7843 = vrot.slane %v7842, 4
      %v7844 = vrot.slane %v7327, 5
      %v7845 = vsel %vm5570, %v7843, %v7844
      %v7846 = vrot.slane %v7844, 4
      %v7847 = vrot.slane %v7354, 5
      %v7848 = vsel %vm5570, %v7846, %v7847
      %v7849 = vrot.slane %v7755, 5
      %v7850 = vrot.slane %v7849, 4
      %v7851 = vrot.slane %v7329, 5
      %v7852 = vsel %vm5570, %v7850, %v7851
      %v7853 = vrot.slane %v7851, 4
      %v7854 = vrot.slane %v7355, 5
      %v7855 = vsel %vm5570, %v7853, %v7854
      %v7856 = vrot.slane %v7756, 5
      %v7857 = vrot.slane %v7856, 4
      %v7858 = vrot.slane %v7331, 5
      %v7859 = vsel %vm5570, %v7857, %v7858
      %v7860 = vrot.slane %v7858, 4
      %v7861 = vrot.slane %v7356, 5
      %v7862 = vsel %vm5570, %v7860, %v7861
      %v7863 = vrot.slane %v7757, 5
      %v7864 = vrot.slane %v7863, 4
      %v7865 = vrot.slane %v7333, 5
      %v7866 = vsel %vm5570, %v7864, %v7865
      %v7867 = vrot.slane %v7865, 4
      %v7868 = vrot.slane %v7357, 5
      %v7869 = vsel %vm5570, %v7867, %v7868
      %v7870 = vrot.slane %v7758, 5
      %v7871 = vrot.slane %v7870, 4
      %v7872 = vrot.slane %v7335, 5
      %v7873 = vsel %vm5570, %v7871, %v7872
      %v7874 = vrot.slane %v7872, 4
      %v7875 = vrot.slane %v7358, 5
      %v7876 = vsel %vm5570, %v7874, %v7875
      %v7877 = vrot.slane %v7759, 5
      %v7878 = vrot.slane %v7877, 4
      %v7879 = vrot.slane %v7337, 5
      %v7880 = vsel %vm5570, %v7878, %v7879
      %v7881 = vrot.slane %v7879, 4
      %v7882 = vrot.slane %v7359, 5
      %v7883 = vsel %vm5570, %v7881, %v7882
      %v7884 = vrot.slane %v7760, 5
      %v7885 = vrot.slane %v7884, 4
      %v7886 = vrot.slane %v7339, 5
      %v7887 = vsel %vm5570, %v7885, %v7886
      %v7888 = vrot.slane %v7886, 4
      %v7889 = vrot.slane %v7360, 5
      %v7890 = vsel %vm5570, %v7888, %v7889
      %v7891 = vrot.slane %v7761, 5
      %v7892 = vrot.slane %v7891, 4
      %v7893 = vrot.slane %v7341, 5
      %v7894 = vsel %vm5570, %v7892, %v7893
      %v7895 = vrot.slane %v7893, 4
      %v7896 = vrot.slane %v7361, 5
      %v7897 = vsel %vm5570, %v7895, %v7896
      %v7898 = vrot.slane %v7762, 5
      %v7899 = vrot.slane %v7898, 4
      %v7900 = vrot.slane %v7343, 5
      %v7901 = vsel %vm5570, %v7899, %v7900
      %v7902 = vrot.slane %v7900, 4
      %v7903 = vrot.slane %v7362, 5
      %v7904 = vsel %vm5570, %v7902, %v7903
      %v7905 = vrot.slane %v7763, 5
      %v7906 = vrot.slane %v7905, 4
      %v7907 = vrot.slane %v7345, 5
      %v7908 = vsel %vm5570, %v7906, %v7907
      %v7909 = vrot.slane %v7907, 4
      %v7910 = vrot.slane %v7363, 5
      %v7911 = vsel %vm5570, %v7909, %v7910
      %v7912 = vrot.slane %v7764, 5
      %v7913 = vrot.slane %v7912, 4
      %v7914 = vrot.slane %v7347, 5
      %v7915 = vsel %vm5570, %v7913, %v7914
      %v7916 = vrot.slane %v7914, 4
      %v7917 = vrot.slane %v7364, 5
      %v7918 = vsel %vm5570, %v7916, %v7917
      %v7919 = vrot.slane %v7765, 5
      %v7920 = vrot.slane %v7919, 4
      %v7921 = vrot.slane %v7349, 5
      %v7922 = vsel %vm5570, %v7920, %v7921
      %v7923 = vrot.slane %v7921, 4
      %v7924 = vrot.slane %v7365, 5
      %v7925 = vsel %vm5570, %v7923, %v7924
      %v7942 = vunpack.c.l.b16 %v7318
      %v7943 = vunpack.c.l.b16 %v7319
      %v7944 = vunpack.c.l.b16 %v7320
      %v7945 = vunpack.c.l.b16 %v7321
      %v7946 = vunpack.c.l.b16 %v7322
      %v7947 = vunpack.c.l.b16 %v7323
      %v7948 = vunpack.c.l.b16 %v7324
      %v7949 = vunpack.c.l.b16 %v7325
      %v7950 = vunpack.c.l.b16 %v7326
      %v7951 = vunpack.c.l.b16 %v7327
      %v7952 = vunpack.c.l.b16 %v7328
      %v7953 = vunpack.c.l.b16 %v7329
      %v7954 = vunpack.c.l.b16 %v7330
      %v7955 = vunpack.c.l.b16 %v7331
      %v7956 = vunpack.c.l.b16 %v7332
      %v7957 = vunpack.c.l.b16 %v7333
      %v7958 = vunpack.c.l.b16 %v7334
      %v7959 = vunpack.c.l.b16 %v7335
      %v7960 = vunpack.c.l.b16 %v7336
      %v7961 = vunpack.c.l.b16 %v7337
      %v7962 = vunpack.c.l.b16 %v7338
      %v7963 = vunpack.c.l.b16 %v7339
      %v7964 = vunpack.c.l.b16 %v7340
      %v7965 = vunpack.c.l.b16 %v7341
      %v7966 = vunpack.c.l.b16 %v7342
      %v7967 = vunpack.c.l.b16 %v7343
      %v7968 = vunpack.c.l.b16 %v7344
      %v7969 = vunpack.c.l.b16 %v7345
      %v7970 = vunpack.c.l.b16 %v7346
      %v7971 = vunpack.c.l.b16 %v7347
      %v7972 = vunpack.c.l.b16 %v7348
      %v7973 = vunpack.c.l.b16 %v7349
      %v7974 = vpack.c.b16 %v7943, %v7942
      %v7975 = vpack.c.b16 %v7945, %v7944
      %v7976 = vpack.c.b16 %v7947, %v7946
      %v7977 = vpack.c.b16 %v7949, %v7948
      %v7978 = vpack.c.b16 %v7951, %v7950
      %v7979 = vpack.c.b16 %v7953, %v7952
      %v7980 = vpack.c.b16 %v7955, %v7954
      %v7981 = vpack.c.b16 %v7957, %v7956
      %v7982 = vpack.c.b16 %v7959, %v7958
      %v7983 = vpack.c.b16 %v7961, %v7960
      %v7984 = vpack.c.b16 %v7963, %v7962
      %v7985 = vpack.c.b16 %v7965, %v7964
      %v7986 = vpack.c.b16 %v7967, %v7966
      %v7987 = vpack.c.b16 %v7969, %v7968
      %v7988 = vpack.c.b16 %v7971, %v7970
      %v7989 = vpack.c.b16 %v7973, %v7972
      %v7990 = vunpack.c.l.b16 %v7379
      %v7991 = vunpack.c.l.b16 %v7389
      %v7992 = vunpack.c.l.b16 %v7403
      %v7993 = vunpack.c.l.b16 %v7413
      %v7994 = vunpack.c.l.b16 %v7427
      %v7995 = vunpack.c.l.b16 %v7437
      %v7996 = vunpack.c.l.b16 %v7451
      %v7997 = vunpack.c.l.b16 %v7461
      %v7998 = vunpack.c.l.b16 %v7475
      %v7999 = vunpack.c.l.b16 %v7485
      %v8000 = vunpack.c.l.b16 %v7499
      %v8001 = vunpack.c.l.b16 %v7509
      %v8002 = vunpack.c.l.b16 %v7523
      %v8003 = vunpack.c.l.b16 %v7533
      %v8004 = vunpack.c.l.b16 %v7547
      %v8005 = vunpack.c.l.b16 %v7557
      %v8006 = vunpack.c.l.b16 %v7571
      %v8007 = vunpack.c.l.b16 %v7581
      %v8008 = vunpack.c.l.b16 %v7595
      %v8009 = vunpack.c.l.b16 %v7605
      %v8010 = vunpack.c.l.b16 %v7619
      %v8011 = vunpack.c.l.b16 %v7629
      %v8012 = vunpack.c.l.b16 %v7643
      %v8013 = vunpack.c.l.b16 %v7653
      %v8014 = vunpack.c.l.b16 %v7667
      %v8015 = vunpack.c.l.b16 %v7677
      %v8016 = vunpack.c.l.b16 %v7691
      %v8017 = vunpack.c.l.b16 %v7701
      %v8018 = vunpack.c.l.b16 %v7715
      %v8019 = vunpack.c.l.b16 %v7725
      %v8020 = vunpack.c.l.b16 %v7739
      %v8021 = vunpack.c.l.b16 %v7749
      %v8022 = vpack.c.b16 %v7991, %v7990
      %v8023 = vpack.c.b16 %v7993, %v7992
      %v8024 = vpack.c.b16 %v7995, %v7994
      %v8025 = vpack.c.b16 %v7997, %v7996
      %v8026 = vpack.c.b16 %v7999, %v7998
      %v8027 = vpack.c.b16 %v8001, %v8000
      %v8028 = vpack.c.b16 %v8003, %v8002
      %v8029 = vpack.c.b16 %v8005, %v8004
      %v8030 = vpack.c.b16 %v8007, %v8006
      %v8031 = vpack.c.b16 %v8009, %v8008
      %v8032 = vpack.c.b16 %v8011, %v8010
      %v8033 = vpack.c.b16 %v8013, %v8012
      %v8034 = vpack.c.b16 %v8015, %v8014
      %v8035 = vpack.c.b16 %v8017, %v8016
      %v8036 = vpack.c.b16 %v8019, %v8018
      %v8037 = vpack.c.b16 %v8021, %v8020
      %8038 = vrot.lane.b32.xlu0 %v8022, 8
      %v8039 = vpop.permute.xlu0 %8038
      %8040 = vrot.lane.b32.xlu0 %v8023, 8
      %v8041 = vpop.permute.xlu0 %8040
      %8042 = vrot.lane.b32.xlu0 %v8024, 8
      %v8043 = vpop.permute.xlu0 %8042
      %8044 = vrot.lane.b32.xlu0 %v8025, 8
      %v8045 = vpop.permute.xlu0 %8044
      %8046 = vrot.lane.b32.xlu0 %v8026, 8
      %v8047 = vpop.permute.xlu0 %8046
      %8048 = vrot.lane.b32.xlu0 %v8027, 8
      %v8049 = vpop.permute.xlu0 %8048
      %8050 = vrot.lane.b32.xlu0 %v8028, 8
      %v8051 = vpop.permute.xlu0 %8050
      %8052 = vrot.lane.b32.xlu0 %v8029, 8
      %v8053 = vpop.permute.xlu0 %8052
      %8054 = vrot.lane.b32.xlu0 %v8030, 8
      %v8055 = vpop.permute.xlu0 %8054
      %8056 = vrot.lane.b32.xlu0 %v8031, 8
      %v8057 = vpop.permute.xlu0 %8056
      %8058 = vrot.lane.b32.xlu0 %v8032, 8
      %v8059 = vpop.permute.xlu0 %8058
      %8060 = vrot.lane.b32.xlu0 %v8033, 8
      %v8061 = vpop.permute.xlu0 %8060
      %8062 = vrot.lane.b32.xlu0 %v8034, 8
      %v8063 = vpop.permute.xlu0 %8062
      %8064 = vrot.lane.b32.xlu0 %v8035, 8
      %v8065 = vpop.permute.xlu0 %8064
      %8066 = vrot.lane.b32.xlu0 %v8036, 8
      %v8067 = vpop.permute.xlu0 %8066
      %8068 = vrot.lane.b32.xlu0 %v8037, 8
      %v8069 = vpop.permute.xlu0 %8068
      %v8070 = vunpack.c.l.b16 %v7817
      %v8071 = vunpack.c.l.b16 %v7820
      %v8072 = vunpack.c.l.b16 %v7824
      %v8073 = vunpack.c.l.b16 %v7827
      %v8074 = vunpack.c.l.b16 %v7831
      %v8075 = vunpack.c.l.b16 %v7834
      %v8076 = vunpack.c.l.b16 %v7838
      %v8077 = vunpack.c.l.b16 %v7841
      %v8078 = vunpack.c.l.b16 %v7845
      %v8079 = vunpack.c.l.b16 %v7848
      %v8080 = vunpack.c.l.b16 %v7852
      %v8081 = vunpack.c.l.b16 %v7855
      %v8082 = vunpack.c.l.b16 %v7859
      %v8083 = vunpack.c.l.b16 %v7862
      %v8084 = vunpack.c.l.b16 %v7866
      %v8085 = vunpack.c.l.b16 %v7869
      %v8086 = vunpack.c.l.b16 %v7873
      %v8087 = vunpack.c.l.b16 %v7876
      %v8088 = vunpack.c.l.b16 %v7880
      %v8089 = vunpack.c.l.b16 %v7883
      %v8090 = vunpack.c.l.b16 %v7887
      %v8091 = vunpack.c.l.b16 %v7890
      %v8092 = vunpack.c.l.b16 %v7894
      %v8093 = vunpack.c.l.b16 %v7897
      %v8094 = vunpack.c.l.b16 %v7901
      %v8095 = vunpack.c.l.b16 %v7904
      %v8096 = vunpack.c.l.b16 %v7908
      %v8097 = vunpack.c.l.b16 %v7911
      %v8098 = vunpack.c.l.b16 %v7915
      %v8099 = vunpack.c.l.b16 %v7918
      %v8100 = vunpack.c.l.b16 %v7922
      %v8101 = vunpack.c.l.b16 %v7925
      %v8102 = vpack.c.b16 %v8071, %v8070
      %v8103 = vpack.c.b16 %v8073, %v8072
      %v8104 = vpack.c.b16 %v8075, %v8074
      %v8105 = vpack.c.b16 %v8077, %v8076
      %v8106 = vpack.c.b16 %v8079, %v8078
      %v8107 = vpack.c.b16 %v8081, %v8080
      %v8108 = vpack.c.b16 %v8083, %v8082
      %v8109 = vpack.c.b16 %v8085, %v8084
      %v8110 = vpack.c.b16 %v8087, %v8086
      %v8111 = vpack.c.b16 %v8089, %v8088
      %v8112 = vpack.c.b16 %v8091, %v8090
      %v8113 = vpack.c.b16 %v8093, %v8092
      %v8114 = vpack.c.b16 %v8095, %v8094
      %v8115 = vpack.c.b16 %v8097, %v8096
      %v8116 = vpack.c.b16 %v8099, %v8098
      %v8117 = vpack.c.b16 %v8101, %v8100
      %8118 = vrot.lane.b32.xlu0 %v8102, 16
      %v8119 = vpop.permute.xlu0 %8118
      %8120 = vrot.lane.b32.xlu0 %v8103, 16
      %v8121 = vpop.permute.xlu0 %8120
      %8122 = vrot.lane.b32.xlu0 %v8104, 16
      %v8123 = vpop.permute.xlu0 %8122
      %8124 = vrot.lane.b32.xlu0 %v8105, 16
      %v8125 = vpop.permute.xlu0 %8124
      %8126 = vrot.lane.b32.xlu0 %v8106, 16
      %v8127 = vpop.permute.xlu0 %8126
      %8128 = vrot.lane.b32.xlu0 %v8107, 16
      %v8129 = vpop.permute.xlu0 %8128
      %8130 = vrot.lane.b32.xlu0 %v8108, 16
      %v8131 = vpop.permute.xlu0 %8130
      %8132 = vrot.lane.b32.xlu0 %v8109, 16
      %v8133 = vpop.permute.xlu0 %8132
      %8134 = vrot.lane.b32.xlu0 %v8110, 16
      %v8135 = vpop.permute.xlu0 %8134
      %8136 = vrot.lane.b32.xlu0 %v8111, 16
      %v8137 = vpop.permute.xlu0 %8136
      %8138 = vrot.lane.b32.xlu0 %v8112, 16
      %v8139 = vpop.permute.xlu0 %8138
      %8140 = vrot.lane.b32.xlu0 %v8113, 16
      %v8141 = vpop.permute.xlu0 %8140
      %8142 = vrot.lane.b32.xlu0 %v8114, 16
      %v8143 = vpop.permute.xlu0 %8142
      %8144 = vrot.lane.b32.xlu0 %v8115, 16
      %v8145 = vpop.permute.xlu0 %8144
      %8146 = vrot.lane.b32.xlu0 %v8116, 16
      %v8147 = vpop.permute.xlu0 %8146
      %8148 = vrot.lane.b32.xlu0 %v8117, 16
      %v8149 = vpop.permute.xlu0 %8148
      %v8152 = vsel %vm1052, %v7974, %v8039
      %v8155 = vsel %vm1052, %v7975, %v8041
      %v8158 = vsel %vm1052, %v7976, %v8043
      %v8161 = vsel %vm1052, %v7977, %v8045
      %v8164 = vsel %vm1052, %v7978, %v8047
      %v8167 = vsel %vm1052, %v7979, %v8049
      %v8170 = vsel %vm1052, %v7980, %v8051
      %v8173 = vsel %vm1052, %v7981, %v8053
      %v8176 = vsel %vm1052, %v7982, %v8055
      %v8179 = vsel %vm1052, %v7983, %v8057
      %v8182 = vsel %vm1052, %v7984, %v8059
      %v8185 = vsel %vm1052, %v7985, %v8061
      %v8188 = vsel %vm1052, %v7986, %v8063
      %v8191 = vsel %vm1052, %v7987, %v8065
      %v8194 = vsel %vm1052, %v7988, %v8067
      %v8197 = vsel %vm1052, %v7989, %v8069
      %v8199 = vsel %vm1065, %v8152, %v8119
      %v8201 = vsel %vm1065, %v8155, %v8121
      %v8203 = vsel %vm1065, %v8158, %v8123
      %v8205 = vsel %vm1065, %v8161, %v8125
      %v8207 = vsel %vm1065, %v8164, %v8127
      %v8209 = vsel %vm1065, %v8167, %v8129
      %v8211 = vsel %vm1065, %v8170, %v8131
      %v8213 = vsel %vm1065, %v8173, %v8133
      %v8215 = vsel %vm1065, %v8176, %v8135
      %v8217 = vsel %vm1065, %v8179, %v8137
      %v8219 = vsel %vm1065, %v8182, %v8139
      %v8221 = vsel %vm1065, %v8185, %v8141
      %v8223 = vsel %vm1065, %v8188, %v8143
      %v8225 = vsel %vm1065, %v8191, %v8145
      %v8227 = vsel %vm1065, %v8194, %v8147
      %v8229 = vsel %vm1065, %v8197, %v8149
      %s8230 = scalar_lea.vmem %s5, 24
      %v8231 = vld [vmem:[%s8230] sm:$0xf]
      %v8232 = vld [vmem:[%s8230 + $0x4] sm:$0xf]
      %v8233 = vld [vmem:[%s8230 + $0x8] sm:$0xf]
      %v8237 = vunpack.c.l.b16 %v8231
      %v8238 = vunpack.c.l.b16 %v8232
      %v8239 = vunpack.c.l.b16 %v8233
      %v8240 = vpack.c.b16 %v8238, %v8237
      %v8241 = vpack.c.b16 %v8239, %v8239
      %v8243 = vsel %vm1074, %v8199, 0
      %v8245 = vsel %vm1074, %v8201, 0
      %v8247 = vsel %vm1074, %v8203, 0
      %v8249 = vsel %vm1074, %v8205, 0
      %v8251 = vsel %vm1074, %v8207, 0
      %v8253 = vsel %vm1074, %v8209, 0
      %v8255 = vsel %vm1074, %v8211, 0
      %v8257 = vsel %vm1074, %v8213, 0
      %v8259 = vsel %vm1074, %v8215, 0
      %v8261 = vsel %vm1074, %v8217, 0
      %v8263 = vsel %vm1074, %v8219, 0
      %v8265 = vsel %vm1074, %v8221, 0
      %v8267 = vsel %vm1074, %v8223, 0
      %v8269 = vsel %vm1074, %v8225, 0
      %v8271 = vsel %vm1074, %v8227, 0
      %v8273 = vsel %vm1074, %v8229, 0
      %v8276 = vsel %vm6947, %v8241, 0
      %8278 = vmatprep.subr.bf16.mxu0 0
      %8279 = vmatpush1.bf16.msra.mxu0 0
      %8280 = vmatprep.subr.bf16.mxu0 0
      %8281 = vmatpush1.bf16.msra.mxu0 0
      %8282 = vmatprep.subr.bf16.mxu0 0
      %8283 = vmatpush1.bf16.msra.mxu0 0
      %8284 = vmatprep.subr.bf16.mxu0 0
      %8285 = vmatpush1.bf16.msra.mxu0 0
      %8286 = vmatprep.subr.bf16.mxu0 0
      %8287 = vmatpush1.bf16.msra.mxu0 0
      %8288 = vmatprep.subr.bf16.mxu0 0
      %8289 = vmatpush1.bf16.msra.mxu0 0
      %8290 = vmatprep.subr.bf16.mxu0 0
      %8291 = vmatpush1.bf16.msra.mxu0 %v8276
      %8292 = vmatprep.subr.bf16.mxu0 0
      %8293 = vmatpush1.bf16.msra.mxu0 %v8240
      %8294 = vmatprep.subr.bf16.mxu0 0
      %8295 = vmatpush2.bf16.msra.mxu0 0
      %8296 = vmatprep.subr.bf16.mxu0 0
      %8297 = vmatpush2.bf16.msra.mxu0 0
      %8298 = vmatprep.subr.bf16.mxu0 0
      %8299 = vmatpush2.bf16.msra.mxu0 0
      %8300 = vmatprep.subr.bf16.mxu0 0
      %8301 = vmatpush2.bf16.msra.mxu0 0
      %8302 = vmatprep.subr.bf16.mxu0 0
      %8303 = vmatpush2.bf16.msra.mxu0 0
      %8304 = vmatprep.subr.bf16.mxu0 0
      %8305 = vmatpush2.bf16.msra.mxu0 0
      %8306 = vmatprep.subr.bf16.mxu0 0
      %8307 = vmatpush2.bf16.msra.mxu0 0
      %8308 = vmatprep.subr.bf16.mxu0 0
      %8309 = vmatpush2.bf16.msra.mxu0 0
      %8310 = vmatprep.mubr.bf16.mxu0 0
      %8311 = vmatmul.mubr.bf16.gmra.mxu0 %v8243
      %v8312 = vpop.f32.mrf.mxu0
      %v8313 = vadd.f32 0.0, %v8312
      %v8314 = vpop.f32.mrf.mxu0
      %v8315 = vpop.f32.mrf.mxu0
      %v8316 = vadd.f32 0.0, %v8315
      %v8317 = vpop.f32.mrf.mxu0
      %8318 = vmatprep.mubr.bf16.mxu0 0
      %8319 = vmatmul.mubr.bf16.gmra.mxu0 %v8245
      %v8320 = vpop.f32.mrf.mxu0
      %v8321 = vadd.f32 0.0, %v8320
      %v8322 = vpop.f32.mrf.mxu0
      %v8323 = vpop.f32.mrf.mxu0
      %v8324 = vadd.f32 0.0, %v8323
      %v8325 = vpop.f32.mrf.mxu0
      %8326 = vmatprep.mubr.bf16.mxu0 0
      %8327 = vmatmul.mubr.bf16.gmra.mxu0 %v8247
      %v8328 = vpop.f32.mrf.mxu0
      %v8329 = vadd.f32 0.0, %v8328
      %v8330 = vpop.f32.mrf.mxu0
      %v8331 = vpop.f32.mrf.mxu0
      %v8332 = vadd.f32 0.0, %v8331
      %v8333 = vpop.f32.mrf.mxu0
      %8334 = vmatprep.mubr.bf16.mxu0 0
      %8335 = vmatmul.mubr.bf16.gmra.mxu0 %v8249
      %v8336 = vpop.f32.mrf.mxu0
      %v8337 = vadd.f32 0.0, %v8336
      %v8338 = vpop.f32.mrf.mxu0
      %v8339 = vpop.f32.mrf.mxu0
      %v8340 = vadd.f32 0.0, %v8339
      %v8341 = vpop.f32.mrf.mxu0
      %8342 = vmatprep.mubr.bf16.mxu0 0
      %8343 = vmatmul.mubr.bf16.gmra.mxu0 %v8251
      %v8344 = vpop.f32.mrf.mxu0
      %v8345 = vadd.f32 0.0, %v8344
      %v8346 = vpop.f32.mrf.mxu0
      %v8347 = vpop.f32.mrf.mxu0
      %v8348 = vadd.f32 0.0, %v8347
      %v8349 = vpop.f32.mrf.mxu0
      %8350 = vmatprep.mubr.bf16.mxu0 0
      %8351 = vmatmul.mubr.bf16.gmra.mxu0 %v8253
      %v8352 = vpop.f32.mrf.mxu0
      %v8353 = vadd.f32 0.0, %v8352
      %v8354 = vpop.f32.mrf.mxu0
      %v8355 = vpop.f32.mrf.mxu0
      %v8356 = vadd.f32 0.0, %v8355
      %v8357 = vpop.f32.mrf.mxu0
      %8358 = vmatprep.mubr.bf16.mxu0 0
      %8359 = vmatmul.mubr.bf16.gmra.mxu0 %v8255
      %v8360 = vpop.f32.mrf.mxu0
      %v8361 = vadd.f32 0.0, %v8360
      %v8362 = vpop.f32.mrf.mxu0
      %v8363 = vpop.f32.mrf.mxu0
      %v8364 = vadd.f32 0.0, %v8363
      %v8365 = vpop.f32.mrf.mxu0
      %8366 = vmatprep.mubr.bf16.mxu0 0
      %8367 = vmatmul.mubr.bf16.gmra.mxu0 %v8257
      %v8368 = vpop.f32.mrf.mxu0
      %v8369 = vadd.f32 0.0, %v8368
      %v8370 = vpop.f32.mrf.mxu0
      %v8371 = vpop.f32.mrf.mxu0
      %v8372 = vadd.f32 0.0, %v8371
      %v8373 = vpop.f32.mrf.mxu0
      %8374 = vmatprep.mubr.bf16.mxu0 0
      %8375 = vmatmul.mubr.bf16.gmra.mxu0 %v8259
      %v8376 = vpop.f32.mrf.mxu0
      %v8377 = vadd.f32 0.0, %v8376
      %v8378 = vpop.f32.mrf.mxu0
      %v8379 = vpop.f32.mrf.mxu0
      %v8380 = vadd.f32 0.0, %v8379
      %v8381 = vpop.f32.mrf.mxu0
      %8382 = vmatprep.mubr.bf16.mxu0 0
      %8383 = vmatmul.mubr.bf16.gmra.mxu0 %v8261
      %v8384 = vpop.f32.mrf.mxu0
      %v8385 = vadd.f32 0.0, %v8384
      %v8386 = vpop.f32.mrf.mxu0
      %v8387 = vpop.f32.mrf.mxu0
      %v8388 = vadd.f32 0.0, %v8387
      %v8389 = vpop.f32.mrf.mxu0
      %8390 = vmatprep.mubr.bf16.mxu0 0
      %8391 = vmatmul.mubr.bf16.gmra.mxu0 %v8263
      %v8392 = vpop.f32.mrf.mxu0
      %v8393 = vadd.f32 0.0, %v8392
      %v8394 = vpop.f32.mrf.mxu0
      %v8395 = vpop.f32.mrf.mxu0
      %v8396 = vadd.f32 0.0, %v8395
      %v8397 = vpop.f32.mrf.mxu0
      %8398 = vmatprep.mubr.bf16.mxu0 0
      %8399 = vmatmul.mubr.bf16.gmra.mxu0 %v8265
      %v8400 = vpop.f32.mrf.mxu0
      %v8401 = vadd.f32 0.0, %v8400
      %v8402 = vpop.f32.mrf.mxu0
      %v8403 = vpop.f32.mrf.mxu0
      %v8404 = vadd.f32 0.0, %v8403
      %v8405 = vpop.f32.mrf.mxu0
      %8406 = vmatprep.mubr.bf16.mxu0 0
      %8407 = vmatmul.mubr.bf16.gmra.mxu0 %v8267
      %v8408 = vpop.f32.mrf.mxu0
      %v8409 = vadd.f32 0.0, %v8408
      %v8410 = vpop.f32.mrf.mxu0
      %v8411 = vpop.f32.mrf.mxu0
      %v8412 = vadd.f32 0.0, %v8411
      %v8413 = vpop.f32.mrf.mxu0
      %8414 = vmatprep.mubr.bf16.mxu0 0
      %8415 = vmatmul.mubr.bf16.gmra.mxu0 %v8269
      %v8416 = vpop.f32.mrf.mxu0
      %v8417 = vadd.f32 0.0, %v8416
      %v8418 = vpop.f32.mrf.mxu0
      %v8419 = vpop.f32.mrf.mxu0
      %v8420 = vadd.f32 0.0, %v8419
      %v8421 = vpop.f32.mrf.mxu0
      %8422 = vmatprep.mubr.bf16.mxu0 0
      %8423 = vmatmul.mubr.bf16.gmra.mxu0 %v8271
      %v8424 = vpop.f32.mrf.mxu0
      %v8425 = vadd.f32 0.0, %v8424
      %v8426 = vpop.f32.mrf.mxu0
      %v8427 = vpop.f32.mrf.mxu0
      %v8428 = vadd.f32 0.0, %v8427
      %v8429 = vpop.f32.mrf.mxu0
      %8430 = vmatprep.mubr.bf16.mxu0 0
      %8431 = vmatmul.mubr.bf16.gmra.mxu0 %v8273
      %v8432 = vpop.f32.mrf.mxu0
      %v8433 = vadd.f32 0.0, %v8432
      %v8434 = vpop.f32.mrf.mxu0
      %v8435 = vpop.f32.mrf.mxu0
      %v8436 = vadd.f32 0.0, %v8435
      %v8437 = vpop.f32.mrf.mxu0
      %8438 = vdwg.mxu0
      %v8439 = vadd.f32 %v7191, %v8313
      %v8440 = vadd.f32 %v7194, %v8316
      %v8441 = vadd.f32 %v7199, %v8321
      %v8442 = vadd.f32 %v7202, %v8324
      %v8443 = vadd.f32 %v7207, %v8329
      %v8444 = vadd.f32 %v7210, %v8332
      %v8445 = vadd.f32 %v7215, %v8337
      %v8446 = vadd.f32 %v7218, %v8340
      %v8447 = vadd.f32 %v7223, %v8345
      %v8448 = vadd.f32 %v7226, %v8348
      %v8449 = vadd.f32 %v7231, %v8353
      %v8450 = vadd.f32 %v7234, %v8356
      %v8451 = vadd.f32 %v7239, %v8361
      %v8452 = vadd.f32 %v7242, %v8364
      %v8453 = vadd.f32 %v7247, %v8369
      %v8454 = vadd.f32 %v7250, %v8372
      %v8455 = vadd.f32 %v7255, %v8377
      %v8456 = vadd.f32 %v7258, %v8380
      %v8457 = vadd.f32 %v7263, %v8385
      %v8458 = vadd.f32 %v7266, %v8388
      %v8459 = vadd.f32 %v7271, %v8393
      %v8460 = vadd.f32 %v7274, %v8396
      %v8461 = vadd.f32 %v7279, %v8401
      %v8462 = vadd.f32 %v7282, %v8404
      %v8463 = vadd.f32 %v7287, %v8409
      %v8464 = vadd.f32 %v7290, %v8412
      %v8465 = vadd.f32 %v7295, %v8417
      %v8466 = vadd.f32 %v7298, %v8420
      %v8467 = vadd.f32 %v7303, %v8425
      %v8468 = vadd.f32 %v7306, %v8428
      %v8469 = vadd.f32 %v7311, %v8433
      %v8470 = vadd.f32 %v7314, %v8436
      %v8471 = vld [vmem:[%s6] sm:$0x1]
      %v8473 = vlaneseq
      %v8474 = vshrl.u32 %v8473, 7
      %v8475 = vsub.s32 0, %v8474
      %v8476 = vrot.slane %v8471, %v8475
      %v8478 = vmul.f32 %v8439, %v8476
      %v8479 = vmul.f32 %v8440, %v8476
      %v8480 = vmul.f32 %v8441, %v8476
      %v8481 = vmul.f32 %v8442, %v8476
      %v8482 = vmul.f32 %v8443, %v8476
      %v8483 = vmul.f32 %v8444, %v8476
      %v8484 = vmul.f32 %v8445, %v8476
      %v8485 = vmul.f32 %v8446, %v8476
      %v8486 = vmul.f32 %v8447, %v8476
      %v8487 = vmul.f32 %v8448, %v8476
      %v8488 = vmul.f32 %v8449, %v8476
      %v8489 = vmul.f32 %v8450, %v8476
      %v8490 = vmul.f32 %v8451, %v8476
      %v8491 = vmul.f32 %v8452, %v8476
      %v8492 = vmul.f32 %v8453, %v8476
      %v8493 = vmul.f32 %v8454, %v8476
      %v8494 = vmul.f32 %v8455, %v8476
      %v8495 = vmul.f32 %v8456, %v8476
      %v8496 = vmul.f32 %v8457, %v8476
      %v8497 = vmul.f32 %v8458, %v8476
      %v8498 = vmul.f32 %v8459, %v8476
      %v8499 = vmul.f32 %v8460, %v8476
      %v8500 = vmul.f32 %v8461, %v8476
      %v8501 = vmul.f32 %v8462, %v8476
      %v8502 = vmul.f32 %v8463, %v8476
      %v8503 = vmul.f32 %v8464, %v8476
      %v8504 = vmul.f32 %v8465, %v8476
      %v8505 = vmul.f32 %v8466, %v8476
      %v8506 = vmul.f32 %v8467, %v8476
      %v8507 = vmul.f32 %v8468, %v8476
      %v8508 = vmul.f32 %v8469, %v8476
      %v8509 = vmul.f32 %v8470, %v8476
      %v8510 = vld [vmem:[%s7] sm:$0x1]
      %v8512 = vlaneseq
      %v8513 = vshrl.u32 %v8512, 7
      %v8514 = vsub.s32 0, %v8513
      %v8515 = vrot.slane %v8510, %v8514
      %v8517 = vadd.f32 %v8478, %v8515
      %v8518 = vadd.f32 %v8479, %v8515
      %v8519 = vadd.f32 %v8480, %v8515
      %v8520 = vadd.f32 %v8481, %v8515
      %v8521 = vadd.f32 %v8482, %v8515
      %v8522 = vadd.f32 %v8483, %v8515
      %v8523 = vadd.f32 %v8484, %v8515
      %v8524 = vadd.f32 %v8485, %v8515
      %v8525 = vadd.f32 %v8486, %v8515
      %v8526 = vadd.f32 %v8487, %v8515
      %v8527 = vadd.f32 %v8488, %v8515
      %v8528 = vadd.f32 %v8489, %v8515
      %v8529 = vadd.f32 %v8490, %v8515
      %v8530 = vadd.f32 %v8491, %v8515
      %v8531 = vadd.f32 %v8492, %v8515
      %v8532 = vadd.f32 %v8493, %v8515
      %v8533 = vadd.f32 %v8494, %v8515
      %v8534 = vadd.f32 %v8495, %v8515
      %v8535 = vadd.f32 %v8496, %v8515
      %v8536 = vadd.f32 %v8497, %v8515
      %v8537 = vadd.f32 %v8498, %v8515
      %v8538 = vadd.f32 %v8499, %v8515
      %v8539 = vadd.f32 %v8500, %v8515
      %v8540 = vadd.f32 %v8501, %v8515
      %v8541 = vadd.f32 %v8502, %v8515
      %v8542 = vadd.f32 %v8503, %v8515
      %v8543 = vadd.f32 %v8504, %v8515
      %v8544 = vadd.f32 %v8505, %v8515
      %v8545 = vadd.f32 %v8506, %v8515
      %v8546 = vadd.f32 %v8507, %v8515
      %v8547 = vadd.f32 %v8508, %v8515
      %v8548 = vadd.f32 %v8509, %v8515
      %v8549 = vmax.f32 %v8517, 0.0
      %v8550 = vmax.f32 %v8518, 0.0
      %v8551 = vmax.f32 %v8519, 0.0
      %v8552 = vmax.f32 %v8520, 0.0
      %v8553 = vmax.f32 %v8521, 0.0
      %v8554 = vmax.f32 %v8522, 0.0
      %v8555 = vmax.f32 %v8523, 0.0
      %v8556 = vmax.f32 %v8524, 0.0
      %v8557 = vmax.f32 %v8525, 0.0
      %v8558 = vmax.f32 %v8526, 0.0
      %v8559 = vmax.f32 %v8527, 0.0
      %v8560 = vmax.f32 %v8528, 0.0
      %v8561 = vmax.f32 %v8529, 0.0
      %v8562 = vmax.f32 %v8530, 0.0
      %v8563 = vmax.f32 %v8531, 0.0
      %v8564 = vmax.f32 %v8532, 0.0
      %v8565 = vmax.f32 %v8533, 0.0
      %v8566 = vmax.f32 %v8534, 0.0
      %v8567 = vmax.f32 %v8535, 0.0
      %v8568 = vmax.f32 %v8536, 0.0
      %v8569 = vmax.f32 %v8537, 0.0
      %v8570 = vmax.f32 %v8538, 0.0
      %v8571 = vmax.f32 %v8539, 0.0
      %v8572 = vmax.f32 %v8540, 0.0
      %v8573 = vmax.f32 %v8541, 0.0
      %v8574 = vmax.f32 %v8542, 0.0
      %v8575 = vmax.f32 %v8543, 0.0
      %v8576 = vmax.f32 %v8544, 0.0
      %v8577 = vmax.f32 %v8545, 0.0
      %v8578 = vmax.f32 %v8546, 0.0
      %v8579 = vmax.f32 %v8547, 0.0
      %v8580 = vmax.f32 %v8548, 0.0
      %v8581 = vpack.c.bf16 %v8550, %v8549
      %v8582 = vpack.c.bf16 %v8552, %v8551
      %v8583 = vpack.c.bf16 %v8554, %v8553
      %v8584 = vpack.c.bf16 %v8556, %v8555
      %v8585 = vpack.c.bf16 %v8558, %v8557
      %v8586 = vpack.c.bf16 %v8560, %v8559
      %v8587 = vpack.c.bf16 %v8562, %v8561
      %v8588 = vpack.c.bf16 %v8564, %v8563
      %v8589 = vpack.c.bf16 %v8566, %v8565
      %v8590 = vpack.c.bf16 %v8568, %v8567
      %v8591 = vpack.c.bf16 %v8570, %v8569
      %v8592 = vpack.c.bf16 %v8572, %v8571
      %v8593 = vpack.c.bf16 %v8574, %v8573
      %v8594 = vpack.c.bf16 %v8576, %v8575
      %v8595 = vpack.c.bf16 %v8578, %v8577
      %v8596 = vpack.c.bf16 %v8580, %v8579
      %v8613 = vunpack.c.l.b16 %v8581
      %v8614 = vunpack.c.h.b16 %v8581
      %v8615 = vunpack.c.l.b16 %v8582
      %v8616 = vunpack.c.h.b16 %v8582
      %v8617 = vunpack.c.l.b16 %v8583
      %v8618 = vunpack.c.h.b16 %v8583
      %v8619 = vunpack.c.l.b16 %v8584
      %v8620 = vunpack.c.h.b16 %v8584
      %v8621 = vunpack.c.l.b16 %v8585
      %v8622 = vunpack.c.h.b16 %v8585
      %v8623 = vunpack.c.l.b16 %v8586
      %v8624 = vunpack.c.h.b16 %v8586
      %v8625 = vunpack.c.l.b16 %v8587
      %v8626 = vunpack.c.h.b16 %v8587
      %v8627 = vunpack.c.l.b16 %v8588
      %v8628 = vunpack.c.h.b16 %v8588
      %v8629 = vunpack.c.l.b16 %v8589
      %v8630 = vunpack.c.h.b16 %v8589
      %v8631 = vunpack.c.l.b16 %v8590
      %v8632 = vunpack.c.h.b16 %v8590
      %v8633 = vunpack.c.l.b16 %v8591
      %v8634 = vunpack.c.h.b16 %v8591
      %v8635 = vunpack.c.l.b16 %v8592
      %v8636 = vunpack.c.h.b16 %v8592
      %v8637 = vunpack.c.l.b16 %v8593
      %v8638 = vunpack.c.h.b16 %v8593
      %v8639 = vunpack.c.l.b16 %v8594
      %v8640 = vunpack.c.h.b16 %v8594
      %v8641 = vunpack.c.l.b16 %v8595
      %v8642 = vunpack.c.h.b16 %v8595
      %v8643 = vunpack.c.l.b16 %v8596
      %v8644 = vunpack.c.h.b16 %v8596
      %v8645 = vpack.c.b16 %v8613, %v8613
      %v8646 = vpack.c.b16 %v8614, %v8614
      %v8647 = vpack.c.b16 %v8615, %v8615
      %v8648 = vpack.c.b16 %v8616, %v8616
      %v8649 = vpack.c.b16 %v8617, %v8617
      %v8650 = vpack.c.b16 %v8618, %v8618
      %v8651 = vpack.c.b16 %v8619, %v8619
      %v8652 = vpack.c.b16 %v8620, %v8620
      %v8653 = vpack.c.b16 %v8621, %v8621
      %v8654 = vpack.c.b16 %v8622, %v8622
      %v8655 = vpack.c.b16 %v8623, %v8623
      %v8656 = vpack.c.b16 %v8624, %v8624
      %v8657 = vpack.c.b16 %v8625, %v8625
      %v8658 = vpack.c.b16 %v8626, %v8626
      %v8659 = vpack.c.b16 %v8627, %v8627
      %v8660 = vpack.c.b16 %v8628, %v8628
      %v8661 = vpack.c.b16 %v8629, %v8629
      %v8662 = vpack.c.b16 %v8630, %v8630
      %v8663 = vpack.c.b16 %v8631, %v8631
      %v8664 = vpack.c.b16 %v8632, %v8632
      %v8665 = vpack.c.b16 %v8633, %v8633
      %v8666 = vpack.c.b16 %v8634, %v8634
      %v8667 = vpack.c.b16 %v8635, %v8635
      %v8668 = vpack.c.b16 %v8636, %v8636
      %v8669 = vpack.c.b16 %v8637, %v8637
      %v8670 = vpack.c.b16 %v8638, %v8638
      %v8671 = vpack.c.b16 %v8639, %v8639
      %v8672 = vpack.c.b16 %v8640, %v8640
      %v8673 = vpack.c.b16 %v8641, %v8641
      %v8674 = vpack.c.b16 %v8642, %v8642
      %v8675 = vpack.c.b16 %v8643, %v8643
      %v8676 = vpack.c.b16 %v8644, %v8644
      %v8678 = vshrl.u32 %v8645, 16
      %v8680 = vrot.slane %v8678, 7
      %v8681 = vshll.u32 %v8645, 16
      %v8683 = vor.u32 %v8680, %v8681
      %v8684 = vrot.slane %v8680, 4
      %v8686 = vshrl.u32 %v8646, 16
      %v8688 = vrot.slane %v8686, 7
      %v8689 = vshll.u32 %v8646, 16
      %v8691 = vor.u32 %v8688, %v8689
      %v8692 = vsel %vm4071, %v8684, %v8691
      %v8693 = vrot.slane %v8688, 4
      %v8695 = vshrl.u32 %v8647, 16
      %v8697 = vrot.slane %v8695, 7
      %v8698 = vshll.u32 %v8647, 16
      %v8700 = vor.u32 %v8697, %v8698
      %v8701 = vrot.slane %v8697, 4
      %v8703 = vshrl.u32 %v8648, 16
      %v8705 = vrot.slane %v8703, 7
      %v8706 = vshll.u32 %v8648, 16
      %v8708 = vor.u32 %v8705, %v8706
      %v8709 = vsel %vm4071, %v8701, %v8708
      %v8710 = vrot.slane %v8705, 4
      %v8712 = vshrl.u32 %v8649, 16
      %v8714 = vrot.slane %v8712, 7
      %v8715 = vshll.u32 %v8649, 16
      %v8717 = vor.u32 %v8714, %v8715
      %v8718 = vrot.slane %v8714, 4
      %v8720 = vshrl.u32 %v8650, 16
      %v8722 = vrot.slane %v8720, 7
      %v8723 = vshll.u32 %v8650, 16
      %v8725 = vor.u32 %v8722, %v8723
      %v8726 = vsel %vm4071, %v8718, %v8725
      %v8727 = vrot.slane %v8722, 4
      %v8729 = vshrl.u32 %v8651, 16
      %v8731 = vrot.slane %v8729, 7
      %v8732 = vshll.u32 %v8651, 16
      %v8734 = vor.u32 %v8731, %v8732
      %v8735 = vrot.slane %v8731, 4
      %v8737 = vshrl.u32 %v8652, 16
      %v8739 = vrot.slane %v8737, 7
      %v8740 = vshll.u32 %v8652, 16
      %v8742 = vor.u32 %v8739, %v8740
      %v8743 = vsel %vm4071, %v8735, %v8742
      %v8744 = vrot.slane %v8739, 4
      %v8746 = vshrl.u32 %v8653, 16
      %v8748 = vrot.slane %v8746, 7
      %v8749 = vshll.u32 %v8653, 16
      %v8751 = vor.u32 %v8748, %v8749
      %v8752 = vrot.slane %v8748, 4
      %v8754 = vshrl.u32 %v8654, 16
      %v8756 = vrot.slane %v8754, 7
      %v8757 = vshll.u32 %v8654, 16
      %v8759 = vor.u32 %v8756, %v8757
      %v8760 = vsel %vm4071, %v8752, %v8759
      %v8761 = vrot.slane %v8756, 4
      %v8763 = vshrl.u32 %v8655, 16
      %v8765 = vrot.slane %v8763, 7
      %v8766 = vshll.u32 %v8655, 16
      %v8768 = vor.u32 %v8765, %v8766
      %v8769 = vrot.slane %v8765, 4
      %v8771 = vshrl.u32 %v8656, 16
      %v8773 = vrot.slane %v8771, 7
      %v8774 = vshll.u32 %v8656, 16
      %v8776 = vor.u32 %v8773, %v8774
      %v8777 = vsel %vm4071, %v8769, %v8776
      %v8778 = vrot.slane %v8773, 4
      %v8780 = vshrl.u32 %v8657, 16
      %v8782 = vrot.slane %v8780, 7
      %v8783 = vshll.u32 %v8657, 16
      %v8785 = vor.u32 %v8782, %v8783
      %v8786 = vrot.slane %v8782, 4
      %v8788 = vshrl.u32 %v8658, 16
      %v8790 = vrot.slane %v8788, 7
      %v8791 = vshll.u32 %v8658, 16
      %v8793 = vor.u32 %v8790, %v8791
      %v8794 = vsel %vm4071, %v8786, %v8793
      %v8795 = vrot.slane %v8790, 4
      %v8797 = vshrl.u32 %v8659, 16
      %v8799 = vrot.slane %v8797, 7
      %v8800 = vshll.u32 %v8659, 16
      %v8802 = vor.u32 %v8799, %v8800
      %v8803 = vrot.slane %v8799, 4
      %v8805 = vshrl.u32 %v8660, 16
      %v8807 = vrot.slane %v8805, 7
      %v8808 = vshll.u32 %v8660, 16
      %v8810 = vor.u32 %v8807, %v8808
      %v8811 = vsel %vm4071, %v8803, %v8810
      %v8812 = vrot.slane %v8807, 4
      %v8814 = vshrl.u32 %v8661, 16
      %v8816 = vrot.slane %v8814, 7
      %v8817 = vshll.u32 %v8661, 16
      %v8819 = vor.u32 %v8816, %v8817
      %v8820 = vrot.slane %v8816, 4
      %v8822 = vshrl.u32 %v8662, 16
      %v8824 = vrot.slane %v8822, 7
      %v8825 = vshll.u32 %v8662, 16
      %v8827 = vor.u32 %v8824, %v8825
      %v8828 = vsel %vm4071, %v8820, %v8827
      %v8829 = vrot.slane %v8824, 4
      %v8831 = vshrl.u32 %v8663, 16
      %v8833 = vrot.slane %v8831, 7
      %v8834 = vshll.u32 %v8663, 16
      %v8836 = vor.u32 %v8833, %v8834
      %v8837 = vrot.slane %v8833, 4
      %v8839 = vshrl.u32 %v8664, 16
      %v8841 = vrot.slane %v8839, 7
      %v8842 = vshll.u32 %v8664, 16
      %v8844 = vor.u32 %v8841, %v8842
      %v8845 = vsel %vm4071, %v8837, %v8844
      %v8846 = vrot.slane %v8841, 4
      %v8848 = vshrl.u32 %v8665, 16
      %v8850 = vrot.slane %v8848, 7
      %v8851 = vshll.u32 %v8665, 16
      %v8853 = vor.u32 %v8850, %v8851
      %v8854 = vrot.slane %v8850, 4
      %v8856 = vshrl.u32 %v8666, 16
      %v8858 = vrot.slane %v8856, 7
      %v8859 = vshll.u32 %v8666, 16
      %v8861 = vor.u32 %v8858, %v8859
      %v8862 = vsel %vm4071, %v8854, %v8861
      %v8863 = vrot.slane %v8858, 4
      %v8865 = vshrl.u32 %v8667, 16
      %v8867 = vrot.slane %v8865, 7
      %v8868 = vshll.u32 %v8667, 16
      %v8870 = vor.u32 %v8867, %v8868
      %v8871 = vrot.slane %v8867, 4
      %v8873 = vshrl.u32 %v8668, 16
      %v8875 = vrot.slane %v8873, 7
      %v8876 = vshll.u32 %v8668, 16
      %v8878 = vor.u32 %v8875, %v8876
      %v8879 = vsel %vm4071, %v8871, %v8878
      %v8880 = vrot.slane %v8875, 4
      %v8882 = vshrl.u32 %v8669, 16
      %v8884 = vrot.slane %v8882, 7
      %v8885 = vshll.u32 %v8669, 16
      %v8887 = vor.u32 %v8884, %v8885
      %v8888 = vrot.slane %v8884, 4
      %v8890 = vshrl.u32 %v8670, 16
      %v8892 = vrot.slane %v8890, 7
      %v8893 = vshll.u32 %v8670, 16
      %v8895 = vor.u32 %v8892, %v8893
      %v8896 = vsel %vm4071, %v8888, %v8895
      %v8897 = vrot.slane %v8892, 4
      %v8899 = vshrl.u32 %v8671, 16
      %v8901 = vrot.slane %v8899, 7
      %v8902 = vshll.u32 %v8671, 16
      %v8904 = vor.u32 %v8901, %v8902
      %v8905 = vrot.slane %v8901, 4
      %v8907 = vshrl.u32 %v8672, 16
      %v8909 = vrot.slane %v8907, 7
      %v8910 = vshll.u32 %v8672, 16
      %v8912 = vor.u32 %v8909, %v8910
      %v8913 = vsel %vm4071, %v8905, %v8912
      %v8914 = vrot.slane %v8909, 4
      %v8916 = vshrl.u32 %v8673, 16
      %v8918 = vrot.slane %v8916, 7
      %v8919 = vshll.u32 %v8673, 16
      %v8921 = vor.u32 %v8918, %v8919
      %v8922 = vrot.slane %v8918, 4
      %v8924 = vshrl.u32 %v8674, 16
      %v8926 = vrot.slane %v8924, 7
      %v8927 = vshll.u32 %v8674, 16
      %v8929 = vor.u32 %v8926, %v8927
      %v8930 = vsel %vm4071, %v8922, %v8929
      %v8931 = vrot.slane %v8926, 4
      %v8933 = vshrl.u32 %v8675, 16
      %v8935 = vrot.slane %v8933, 7
      %v8936 = vshll.u32 %v8675, 16
      %v8938 = vor.u32 %v8935, %v8936
      %v8939 = vrot.slane %v8935, 4
      %v8941 = vshrl.u32 %v8676, 16
      %v8943 = vrot.slane %v8941, 7
      %v8944 = vshll.u32 %v8676, 16
      %v8946 = vor.u32 %v8943, %v8944
      %v8947 = vsel %vm4071, %v8939, %v8946
      %v8948 = vrot.slane %v8943, 4
      %s8997 = scalar_lea.vmem [#allocation3], 12
      %v8998 = vld [vmem:[%s8997] sm:$0xf]
      %v8999 = vsel %vm4394, %v8683, %v8998
      %9000 = vst [vmem:[%s8997] sm:$0xf] %v8999
      %9001 = vst.msk [vmem:[%s8997 + $0x4] sm:$0xf] %vm584, %v8692
      %v9002 = vld [vmem:[%s8997 + $0x8] sm:$0x1]
      %v9003 = vsel %vm594, %v8693, %v9002
      %9004 = vst [vmem:[%s8997 + $0x8] sm:$0x1] %v9003
      %v9005 = vld [vmem:[%s8997 + $0xc] sm:$0xf]
      %v9006 = vsel %vm4394, %v8700, %v9005
      %9007 = vst [vmem:[%s8997 + $0xc] sm:$0xf] %v9006
      %9008 = vst.msk [vmem:[%s8997 + $0x10] sm:$0xf] %vm584, %v8709
      %v9009 = vld [vmem:[%s8997 + $0x14] sm:$0x1]
      %v9010 = vsel %vm594, %v8710, %v9009
      %9011 = vst [vmem:[%s8997 + $0x14] sm:$0x1] %v9010
      %v9012 = vld [vmem:[%s8997 + $0x18] sm:$0xf]
      %v9013 = vsel %vm4394, %v8717, %v9012
      %9014 = vst [vmem:[%s8997 + $0x18] sm:$0xf] %v9013
      %9015 = vst.msk [vmem:[%s8997 + $0x1c] sm:$0xf] %vm584, %v8726
      %v9016 = vld [vmem:[%s8997 + $0x20] sm:$0x1]
      %v9017 = vsel %vm594, %v8727, %v9016
      %9018 = vst [vmem:[%s8997 + $0x20] sm:$0x1] %v9017
      %v9019 = vld [vmem:[%s8997 + $0x24] sm:$0xf]
      %v9020 = vsel %vm4394, %v8734, %v9019
      %9021 = vst [vmem:[%s8997 + $0x24] sm:$0xf] %v9020
      %9022 = vst.msk [vmem:[%s8997 + $0x28] sm:$0xf] %vm584, %v8743
      %v9023 = vld [vmem:[%s8997 + $0x2c] sm:$0x1]
      %v9024 = vsel %vm594, %v8744, %v9023
      %9025 = vst [vmem:[%s8997 + $0x2c] sm:$0x1] %v9024
      %v9026 = vld [vmem:[%s8997 + $0x30] sm:$0xf]
      %v9027 = vsel %vm4394, %v8751, %v9026
      %9028 = vst [vmem:[%s8997 + $0x30] sm:$0xf] %v9027
      %9029 = vst.msk [vmem:[%s8997 + $0x34] sm:$0xf] %vm584, %v8760
      %v9030 = vld [vmem:[%s8997 + $0x38] sm:$0x1]
      %v9031 = vsel %vm594, %v8761, %v9030
      %9032 = vst [vmem:[%s8997 + $0x38] sm:$0x1] %v9031
      %v9033 = vld [vmem:[%s8997 + $0x3c] sm:$0xf]
      %v9034 = vsel %vm4394, %v8768, %v9033
      %9035 = vst [vmem:[%s8997 + $0x3c] sm:$0xf] %v9034
      %9036 = vst.msk [vmem:[%s8997 + $0x40] sm:$0xf] %vm584, %v8777
      %v9037 = vld [vmem:[%s8997 + $0x44] sm:$0x1]
      %v9038 = vsel %vm594, %v8778, %v9037
      %9039 = vst [vmem:[%s8997 + $0x44] sm:$0x1] %v9038
      %v9040 = vld [vmem:[%s8997 + $0x48] sm:$0xf]
      %v9041 = vsel %vm4394, %v8785, %v9040
      %9042 = vst [vmem:[%s8997 + $0x48] sm:$0xf] %v9041
      %9043 = vst.msk [vmem:[%s8997 + $0x4c] sm:$0xf] %vm584, %v8794
      %v9044 = vld [vmem:[%s8997 + $0x50] sm:$0x1]
      %v9045 = vsel %vm594, %v8795, %v9044
      %9046 = vst [vmem:[%s8997 + $0x50] sm:$0x1] %v9045
      %v9047 = vld [vmem:[%s8997 + $0x54] sm:$0xf]
      %v9048 = vsel %vm4394, %v8802, %v9047
      %9049 = vst [vmem:[%s8997 + $0x54] sm:$0xf] %v9048
      %9050 = vst.msk [vmem:[%s8997 + $0x58] sm:$0xf] %vm584, %v8811
      %v9051 = vld [vmem:[%s8997 + $0x5c] sm:$0x1]
      %v9052 = vsel %vm594, %v8812, %v9051
      %9053 = vst [vmem:[%s8997 + $0x5c] sm:$0x1] %v9052
      %v9054 = vld [vmem:[%s8997 + $0x60] sm:$0xf]
      %v9055 = vsel %vm4394, %v8819, %v9054
      %9056 = vst [vmem:[%s8997 + $0x60] sm:$0xf] %v9055
      %9057 = vst.msk [vmem:[%s8997 + $0x64] sm:$0xf] %vm584, %v8828
      %v9058 = vld [vmem:[%s8997 + $0x68] sm:$0x1]
      %v9059 = vsel %vm594, %v8829, %v9058
      %9060 = vst [vmem:[%s8997 + $0x68] sm:$0x1] %v9059
      %v9061 = vld [vmem:[%s8997 + $0x6c] sm:$0xf]
      %v9062 = vsel %vm4394, %v8836, %v9061
      %9063 = vst [vmem:[%s8997 + $0x6c] sm:$0xf] %v9062
      %9064 = vst.msk [vmem:[%s8997 + $0x70] sm:$0xf] %vm584, %v8845
      %v9065 = vld [vmem:[%s8997 + $0x74] sm:$0x1]
      %v9066 = vsel %vm594, %v8846, %v9065
      %9067 = vst [vmem:[%s8997 + $0x74] sm:$0x1] %v9066
      %v9068 = vld [vmem:[%s8997 + $0x78] sm:$0xf]
      %v9069 = vsel %vm4394, %v8853, %v9068
      %9070 = vst [vmem:[%s8997 + $0x78] sm:$0xf] %v9069
      %9071 = vst.msk [vmem:[%s8997 + $0x7c] sm:$0xf] %vm584, %v8862
      %v9072 = vld [vmem:[%s8997 + $0x80] sm:$0x1]
      %v9073 = vsel %vm594, %v8863, %v9072
      %9074 = vst [vmem:[%s8997 + $0x80] sm:$0x1] %v9073
      %v9075 = vld [vmem:[%s8997 + $0x84] sm:$0xf]
      %v9076 = vsel %vm4394, %v8870, %v9075
      %9077 = vst [vmem:[%s8997 + $0x84] sm:$0xf] %v9076
      %9078 = vst.msk [vmem:[%s8997 + $0x88] sm:$0xf] %vm584, %v8879
      %v9079 = vld [vmem:[%s8997 + $0x8c] sm:$0x1]
      %v9080 = vsel %vm594, %v8880, %v9079
      %9081 = vst [vmem:[%s8997 + $0x8c] sm:$0x1] %v9080
      %v9082 = vld [vmem:[%s8997 + $0x90] sm:$0xf]
      %v9083 = vsel %vm4394, %v8887, %v9082
      %9084 = vst [vmem:[%s8997 + $0x90] sm:$0xf] %v9083
      %9085 = vst.msk [vmem:[%s8997 + $0x94] sm:$0xf] %vm584, %v8896
      %v9086 = vld [vmem:[%s8997 + $0x98] sm:$0x1]
      %v9087 = vsel %vm594, %v8897, %v9086
      %9088 = vst [vmem:[%s8997 + $0x98] sm:$0x1] %v9087
      %v9089 = vld [vmem:[%s8997 + $0x9c] sm:$0xf]
      %v9090 = vsel %vm4394, %v8904, %v9089
      %9091 = vst [vmem:[%s8997 + $0x9c] sm:$0xf] %v9090
      %9092 = vst.msk [vmem:[%s8997 + $0xa0] sm:$0xf] %vm584, %v8913
      %v9093 = vld [vmem:[%s8997 + $0xa4] sm:$0x1]
      %v9094 = vsel %vm594, %v8914, %v9093
      %9095 = vst [vmem:[%s8997 + $0xa4] sm:$0x1] %v9094
      %v9096 = vld [vmem:[%s8997 + $0xa8] sm:$0xf]
      %v9097 = vsel %vm4394, %v8921, %v9096
      %9098 = vst [vmem:[%s8997 + $0xa8] sm:$0xf] %v9097
      %9099 = vst.msk [vmem:[%s8997 + $0xac] sm:$0xf] %vm584, %v8930
      %v9100 = vld [vmem:[%s8997 + $0xb0] sm:$0x1]
      %v9101 = vsel %vm594, %v8931, %v9100
      %9102 = vst [vmem:[%s8997 + $0xb0] sm:$0x1] %v9101
      %v9103 = vld [vmem:[%s8997 + $0xb4] sm:$0xf]
      %v9104 = vsel %vm4394, %v8938, %v9103
      %9105 = vst [vmem:[%s8997 + $0xb4] sm:$0xf] %v9104
      %9106 = vst.msk [vmem:[%s8997 + $0xb8] sm:$0xf] %vm584, %v8947
      %v9107 = vld [vmem:[%s8997 + $0xbc] sm:$0x1]
      %v9108 = vsel %vm594, %v8948, %v9107
      %9109 = vst [vmem:[%s8997 + $0xbc] sm:$0x1] %v9108
      %v9110 = vld [vmem:[%s4392] sm:$0xf]
      %v9111 = vld [vmem:[%s4392 + $0x4] sm:$0xf]
      %v9112 = vld [vmem:[%s4392 + $0x8] sm:$0x1]
      %v9113 = vld [vmem:[%s4392 + $0xc] sm:$0xf]
      %v9114 = vld [vmem:[%s4392 + $0x10] sm:$0xf]
      %v9115 = vld [vmem:[%s4392 + $0x14] sm:$0x1]
      %v9116 = vld [vmem:[%s4392 + $0x18] sm:$0xf]
      %v9117 = vld [vmem:[%s4392 + $0x1c] sm:$0xf]
      %v9118 = vld [vmem:[%s4392 + $0x20] sm:$0x1]
      %v9119 = vld [vmem:[%s4392 + $0x24] sm:$0xf]
      %v9120 = vld [vmem:[%s4392 + $0x28] sm:$0xf]
      %v9121 = vld [vmem:[%s4392 + $0x2c] sm:$0x1]
      %v9122 = vld [vmem:[%s4392 + $0x30] sm:$0xf]
      %v9123 = vld [vmem:[%s4392 + $0x34] sm:$0xf]
      %v9124 = vld [vmem:[%s4392 + $0x38] sm:$0x1]
      %v9125 = vld [vmem:[%s4392 + $0x3c] sm:$0xf]
      %v9126 = vld [vmem:[%s4392 + $0x40] sm:$0xf]
      %v9127 = vld [vmem:[%s4392 + $0x44] sm:$0x1]
      %v9128 = vld [vmem:[%s4392 + $0x48] sm:$0xf]
      %v9129 = vld [vmem:[%s4392 + $0x4c] sm:$0xf]
      %v9130 = vld [vmem:[%s4392 + $0x50] sm:$0x1]
      %v9131 = vld [vmem:[%s4392 + $0x54] sm:$0xf]
      %v9132 = vld [vmem:[%s4392 + $0x58] sm:$0xf]
      %v9133 = vld [vmem:[%s4392 + $0x5c] sm:$0x1]
      %v9134 = vld [vmem:[%s4392 + $0x60] sm:$0xf]
      %v9135 = vld [vmem:[%s4392 + $0x64] sm:$0xf]
      %v9136 = vld [vmem:[%s4392 + $0x68] sm:$0x1]
      %v9137 = vld [vmem:[%s4392 + $0x6c] sm:$0xf]
      %v9138 = vld [vmem:[%s4392 + $0x70] sm:$0xf]
      %v9139 = vld [vmem:[%s4392 + $0x74] sm:$0x1]
      %v9140 = vld [vmem:[%s4392 + $0x78] sm:$0xf]
      %v9141 = vld [vmem:[%s4392 + $0x7c] sm:$0xf]
      %v9142 = vld [vmem:[%s4392 + $0x80] sm:$0x1]
      %v9143 = vld [vmem:[%s4392 + $0x84] sm:$0xf]
      %v9144 = vld [vmem:[%s4392 + $0x88] sm:$0xf]
      %v9145 = vld [vmem:[%s4392 + $0x8c] sm:$0x1]
      %v9146 = vld [vmem:[%s4392 + $0x90] sm:$0xf]
      %v9147 = vld [vmem:[%s4392 + $0x94] sm:$0xf]
      %v9148 = vld [vmem:[%s4392 + $0x98] sm:$0x1]
      %v9149 = vld [vmem:[%s4392 + $0x9c] sm:$0xf]
      %v9150 = vld [vmem:[%s4392 + $0xa0] sm:$0xf]
      %v9151 = vld [vmem:[%s4392 + $0xa4] sm:$0x1]
      %v9152 = vld [vmem:[%s4392 + $0xa8] sm:$0xf]
      %v9153 = vld [vmem:[%s4392 + $0xac] sm:$0xf]
      %v9154 = vld [vmem:[%s4392 + $0xb0] sm:$0x1]
      %v9155 = vld [vmem:[%s4392 + $0xb4] sm:$0xf]
      %v9156 = vld [vmem:[%s4392 + $0xb8] sm:$0xf]
      %v9157 = vld [vmem:[%s4392 + $0xbc] sm:$0x1]
      %v9159 = vshrl.u32 %v9110, 16
      %v9161 = vrot.slane %v9159, 4
      %v9162 = vshll.u32 %v9110, 16
      %v9164 = vrot.slane %v9162, 5
      %v9165 = vor.u32 %v9161, %v9164
      %v9166 = vrot.slane %v9165, 4
      %v9168 = vshll.u32 %v9111, 16
      %v9170 = vrot.slane %v9168, 5
      %v9171 = vsel %vm722, %v9166, %v9170
      %v9172 = vshrl.u32 %v9111, 16
      %v9174 = vrot.slane %v9172, 4
      %v9175 = vor.u32 %v9174, %v9170
      %v9176 = vrot.slane %v9175, 4
      %v9178 = vshll.u32 %v9112, 16
      %v9180 = vrot.slane %v9178, 5
      %v9181 = vsel %vm722, %v9176, %v9180
      %v9183 = vshrl.u32 %v9113, 16
      %v9185 = vrot.slane %v9183, 4
      %v9186 = vshll.u32 %v9113, 16
      %v9188 = vrot.slane %v9186, 5
      %v9189 = vor.u32 %v9185, %v9188
      %v9190 = vrot.slane %v9189, 4
      %v9192 = vshll.u32 %v9114, 16
      %v9194 = vrot.slane %v9192, 5
      %v9195 = vsel %vm722, %v9190, %v9194
      %v9196 = vshrl.u32 %v9114, 16
      %v9198 = vrot.slane %v9196, 4
      %v9199 = vor.u32 %v9198, %v9194
      %v9200 = vrot.slane %v9199, 4
      %v9202 = vshll.u32 %v9115, 16
      %v9204 = vrot.slane %v9202, 5
      %v9205 = vsel %vm722, %v9200, %v9204
      %v9207 = vshrl.u32 %v9116, 16
      %v9209 = vrot.slane %v9207, 4
      %v9210 = vshll.u32 %v9116, 16
      %v9212 = vrot.slane %v9210, 5
      %v9213 = vor.u32 %v9209, %v9212
      %v9214 = vrot.slane %v9213, 4
      %v9216 = vshll.u32 %v9117, 16
      %v9218 = vrot.slane %v9216, 5
      %v9219 = vsel %vm722, %v9214, %v9218
      %v9220 = vshrl.u32 %v9117, 16
      %v9222 = vrot.slane %v9220, 4
      %v9223 = vor.u32 %v9222, %v9218
      %v9224 = vrot.slane %v9223, 4
      %v9226 = vshll.u32 %v9118, 16
      %v9228 = vrot.slane %v9226, 5
      %v9229 = vsel %vm722, %v9224, %v9228
      %v9231 = vshrl.u32 %v9119, 16
      %v9233 = vrot.slane %v9231, 4
      %v9234 = vshll.u32 %v9119, 16
      %v9236 = vrot.slane %v9234, 5
      %v9237 = vor.u32 %v9233, %v9236
      %v9238 = vrot.slane %v9237, 4
      %v9240 = vshll.u32 %v9120, 16
      %v9242 = vrot.slane %v9240, 5
      %v9243 = vsel %vm722, %v9238, %v9242
      %v9244 = vshrl.u32 %v9120, 16
      %v9246 = vrot.slane %v9244, 4
      %v9247 = vor.u32 %v9246, %v9242
      %v9248 = vrot.slane %v9247, 4
      %v9250 = vshll.u32 %v9121, 16
      %v9252 = vrot.slane %v9250, 5
      %v9253 = vsel %vm722, %v9248, %v9252
      %v9255 = vshrl.u32 %v9122, 16
      %v9257 = vrot.slane %v9255, 4
      %v9258 = vshll.u32 %v9122, 16
      %v9260 = vrot.slane %v9258, 5
      %v9261 = vor.u32 %v9257, %v9260
      %v9262 = vrot.slane %v9261, 4
      %v9264 = vshll.u32 %v9123, 16
      %v9266 = vrot.slane %v9264, 5
      %v9267 = vsel %vm722, %v9262, %v9266
      %v9268 = vshrl.u32 %v9123, 16
      %v9270 = vrot.slane %v9268, 4
      %v9271 = vor.u32 %v9270, %v9266
      %v9272 = vrot.slane %v9271, 4
      %v9274 = vshll.u32 %v9124, 16
      %v9276 = vrot.slane %v9274, 5
      %v9277 = vsel %vm722, %v9272, %v9276
      %v9279 = vshrl.u32 %v9125, 16
      %v9281 = vrot.slane %v9279, 4
      %v9282 = vshll.u32 %v9125, 16
      %v9284 = vrot.slane %v9282, 5
      %v9285 = vor.u32 %v9281, %v9284
      %v9286 = vrot.slane %v9285, 4
      %v9288 = vshll.u32 %v9126, 16
      %v9290 = vrot.slane %v9288, 5
      %v9291 = vsel %vm722, %v9286, %v9290
      %v9292 = vshrl.u32 %v9126, 16
      %v9294 = vrot.slane %v9292, 4
      %v9295 = vor.u32 %v9294, %v9290
      %v9296 = vrot.slane %v9295, 4
      %v9298 = vshll.u32 %v9127, 16
      %v9300 = vrot.slane %v9298, 5
      %v9301 = vsel %vm722, %v9296, %v9300
      %v9303 = vshrl.u32 %v9128, 16
      %v9305 = vrot.slane %v9303, 4
      %v9306 = vshll.u32 %v9128, 16
      %v9308 = vrot.slane %v9306, 5
      %v9309 = vor.u32 %v9305, %v9308
      %v9310 = vrot.slane %v9309, 4
      %v9312 = vshll.u32 %v9129, 16
      %v9314 = vrot.slane %v9312, 5
      %v9315 = vsel %vm722, %v9310, %v9314
      %v9316 = vshrl.u32 %v9129, 16
      %v9318 = vrot.slane %v9316, 4
      %v9319 = vor.u32 %v9318, %v9314
      %v9320 = vrot.slane %v9319, 4
      %v9322 = vshll.u32 %v9130, 16
      %v9324 = vrot.slane %v9322, 5
      %v9325 = vsel %vm722, %v9320, %v9324
      %v9327 = vshrl.u32 %v9131, 16
      %v9329 = vrot.slane %v9327, 4
      %v9330 = vshll.u32 %v9131, 16
      %v9332 = vrot.slane %v9330, 5
      %v9333 = vor.u32 %v9329, %v9332
      %v9334 = vrot.slane %v9333, 4
      %v9336 = vshll.u32 %v9132, 16
      %v9338 = vrot.slane %v9336, 5
      %v9339 = vsel %vm722, %v9334, %v9338
      %v9340 = vshrl.u32 %v9132, 16
      %v9342 = vrot.slane %v9340, 4
      %v9343 = vor.u32 %v9342, %v9338
      %v9344 = vrot.slane %v9343, 4
      %v9346 = vshll.u32 %v9133, 16
      %v9348 = vrot.slane %v9346, 5
      %v9349 = vsel %vm722, %v9344, %v9348
      %v9351 = vshrl.u32 %v9134, 16
      %v9353 = vrot.slane %v9351, 4
      %v9354 = vshll.u32 %v9134, 16
      %v9356 = vrot.slane %v9354, 5
      %v9357 = vor.u32 %v9353, %v9356
      %v9358 = vrot.slane %v9357, 4
      %v9360 = vshll.u32 %v9135, 16
      %v9362 = vrot.slane %v9360, 5
      %v9363 = vsel %vm722, %v9358, %v9362
      %v9364 = vshrl.u32 %v9135, 16
      %v9366 = vrot.slane %v9364, 4
      %v9367 = vor.u32 %v9366, %v9362
      %v9368 = vrot.slane %v9367, 4
      %v9370 = vshll.u32 %v9136, 16
      %v9372 = vrot.slane %v9370, 5
      %v9373 = vsel %vm722, %v9368, %v9372
      %v9375 = vshrl.u32 %v9137, 16
      %v9377 = vrot.slane %v9375, 4
      %v9378 = vshll.u32 %v9137, 16
      %v9380 = vrot.slane %v9378, 5
      %v9381 = vor.u32 %v9377, %v9380
      %v9382 = vrot.slane %v9381, 4
      %v9384 = vshll.u32 %v9138, 16
      %v9386 = vrot.slane %v9384, 5
      %v9387 = vsel %vm722, %v9382, %v9386
      %v9388 = vshrl.u32 %v9138, 16
      %v9390 = vrot.slane %v9388, 4
      %v9391 = vor.u32 %v9390, %v9386
      %v9392 = vrot.slane %v9391, 4
      %v9394 = vshll.u32 %v9139, 16
      %v9396 = vrot.slane %v9394, 5
      %v9397 = vsel %vm722, %v9392, %v9396
      %v9399 = vshrl.u32 %v9140, 16
      %v9401 = vrot.slane %v9399, 4
      %v9402 = vshll.u32 %v9140, 16
      %v9404 = vrot.slane %v9402, 5
      %v9405 = vor.u32 %v9401, %v9404
      %v9406 = vrot.slane %v9405, 4
      %v9408 = vshll.u32 %v9141, 16
      %v9410 = vrot.slane %v9408, 5
      %v9411 = vsel %vm722, %v9406, %v9410
      %v9412 = vshrl.u32 %v9141, 16
      %v9414 = vrot.slane %v9412, 4
      %v9415 = vor.u32 %v9414, %v9410
      %v9416 = vrot.slane %v9415, 4
      %v9418 = vshll.u32 %v9142, 16
      %v9420 = vrot.slane %v9418, 5
      %v9421 = vsel %vm722, %v9416, %v9420
      %v9423 = vshrl.u32 %v9143, 16
      %v9425 = vrot.slane %v9423, 4
      %v9426 = vshll.u32 %v9143, 16
      %v9428 = vrot.slane %v9426, 5
      %v9429 = vor.u32 %v9425, %v9428
      %v9430 = vrot.slane %v9429, 4
      %v9432 = vshll.u32 %v9144, 16
      %v9434 = vrot.slane %v9432, 5
      %v9435 = vsel %vm722, %v9430, %v9434
      %v9436 = vshrl.u32 %v9144, 16
      %v9438 = vrot.slane %v9436, 4
      %v9439 = vor.u32 %v9438, %v9434
      %v9440 = vrot.slane %v9439, 4
      %v9442 = vshll.u32 %v9145, 16
      %v9444 = vrot.slane %v9442, 5
      %v9445 = vsel %vm722, %v9440, %v9444
      %v9447 = vshrl.u32 %v9146, 16
      %v9449 = vrot.slane %v9447, 4
      %v9450 = vshll.u32 %v9146, 16
      %v9452 = vrot.slane %v9450, 5
      %v9453 = vor.u32 %v9449, %v9452
      %v9454 = vrot.slane %v9453, 4
      %v9456 = vshll.u32 %v9147, 16
      %v9458 = vrot.slane %v9456, 5
      %v9459 = vsel %vm722, %v9454, %v9458
      %v9460 = vshrl.u32 %v9147, 16
      %v9462 = vrot.slane %v9460, 4
      %v9463 = vor.u32 %v9462, %v9458
      %v9464 = vrot.slane %v9463, 4
      %v9466 = vshll.u32 %v9148, 16
      %v9468 = vrot.slane %v9466, 5
      %v9469 = vsel %vm722, %v9464, %v9468
      %v9471 = vshrl.u32 %v9149, 16
      %v9473 = vrot.slane %v9471, 4
      %v9474 = vshll.u32 %v9149, 16
      %v9476 = vrot.slane %v9474, 5
      %v9477 = vor.u32 %v9473, %v9476
      %v9478 = vrot.slane %v9477, 4
      %v9480 = vshll.u32 %v9150, 16
      %v9482 = vrot.slane %v9480, 5
      %v9483 = vsel %vm722, %v9478, %v9482
      %v9484 = vshrl.u32 %v9150, 16
      %v9486 = vrot.slane %v9484, 4
      %v9487 = vor.u32 %v9486, %v9482
      %v9488 = vrot.slane %v9487, 4
      %v9490 = vshll.u32 %v9151, 16
      %v9492 = vrot.slane %v9490, 5
      %v9493 = vsel %vm722, %v9488, %v9492
      %v9495 = vshrl.u32 %v9152, 16
      %v9497 = vrot.slane %v9495, 4
      %v9498 = vshll.u32 %v9152, 16
      %v9500 = vrot.slane %v9498, 5
      %v9501 = vor.u32 %v9497, %v9500
      %v9502 = vrot.slane %v9501, 4
      %v9504 = vshll.u32 %v9153, 16
      %v9506 = vrot.slane %v9504, 5
      %v9507 = vsel %vm722, %v9502, %v9506
      %v9508 = vshrl.u32 %v9153, 16
      %v9510 = vrot.slane %v9508, 4
      %v9511 = vor.u32 %v9510, %v9506
      %v9512 = vrot.slane %v9511, 4
      %v9514 = vshll.u32 %v9154, 16
      %v9516 = vrot.slane %v9514, 5
      %v9517 = vsel %vm722, %v9512, %v9516
      %v9519 = vshrl.u32 %v9155, 16
      %v9521 = vrot.slane %v9519, 4
      %v9522 = vshll.u32 %v9155, 16
      %v9524 = vrot.slane %v9522, 5
      %v9525 = vor.u32 %v9521, %v9524
      %v9526 = vrot.slane %v9525, 4
      %v9528 = vshll.u32 %v9156, 16
      %v9530 = vrot.slane %v9528, 5
      %v9531 = vsel %vm722, %v9526, %v9530
      %v9532 = vshrl.u32 %v9156, 16
      %v9534 = vrot.slane %v9532, 4
      %v9535 = vor.u32 %v9534, %v9530
      %v9536 = vrot.slane %v9535, 4
      %v9538 = vshll.u32 %v9157, 16
      %v9540 = vrot.slane %v9538, 5
      %v9541 = vsel %vm722, %v9536, %v9540
      %v9542 = vld [vmem:[%s8] sm:$0x3]
      %v9543 = vld [vmem:[%s9] sm:$0xf]
      %9545 = vset.pattern.permute.xlu0 0
      %9546 = vperm.xlu0 %9545, %v9543
      %v9547 = vpop.permute.xlu0 %9546
      %v9549 = vunpack.c.l.b16 %v9171
      %v9550 = vunpack.c.l.b16 %v9181
      %v9551 = vunpack.c.l.b16 %v9195
      %v9552 = vunpack.c.l.b16 %v9205
      %v9553 = vunpack.c.l.b16 %v9219
      %v9554 = vunpack.c.l.b16 %v9229
      %v9555 = vunpack.c.l.b16 %v9243
      %v9556 = vunpack.c.l.b16 %v9253
      %v9557 = vunpack.c.l.b16 %v9267
      %v9558 = vunpack.c.l.b16 %v9277
      %v9559 = vunpack.c.l.b16 %v9291
      %v9560 = vunpack.c.l.b16 %v9301
      %v9561 = vunpack.c.l.b16 %v9315
      %v9562 = vunpack.c.l.b16 %v9325
      %v9563 = vunpack.c.l.b16 %v9339
      %v9564 = vunpack.c.l.b16 %v9349
      %v9565 = vunpack.c.l.b16 %v9363
      %v9566 = vunpack.c.l.b16 %v9373
      %v9567 = vunpack.c.l.b16 %v9387
      %v9568 = vunpack.c.l.b16 %v9397
      %v9569 = vunpack.c.l.b16 %v9411
      %v9570 = vunpack.c.l.b16 %v9421
      %v9571 = vunpack.c.l.b16 %v9435
      %v9572 = vunpack.c.l.b16 %v9445
      %v9573 = vunpack.c.l.b16 %v9459
      %v9574 = vunpack.c.l.b16 %v9469
      %v9575 = vunpack.c.l.b16 %v9483
      %v9576 = vunpack.c.l.b16 %v9493
      %v9577 = vunpack.c.l.b16 %v9507
      %v9578 = vunpack.c.l.b16 %v9517
      %v9579 = vunpack.c.l.b16 %v9531
      %v9580 = vunpack.c.l.b16 %v9541
      %v9581 = vpack.c.b16 %v9550, %v9549
      %v9582 = vpack.c.b16 %v9552, %v9551
      %v9583 = vpack.c.b16 %v9554, %v9553
      %v9584 = vpack.c.b16 %v9556, %v9555
      %v9585 = vpack.c.b16 %v9558, %v9557
      %v9586 = vpack.c.b16 %v9560, %v9559
      %v9587 = vpack.c.b16 %v9562, %v9561
      %v9588 = vpack.c.b16 %v9564, %v9563
      %v9589 = vpack.c.b16 %v9566, %v9565
      %v9590 = vpack.c.b16 %v9568, %v9567
      %v9591 = vpack.c.b16 %v9570, %v9569
      %v9592 = vpack.c.b16 %v9572, %v9571
      %v9593 = vpack.c.b16 %v9574, %v9573
      %v9594 = vpack.c.b16 %v9576, %v9575
      %v9595 = vpack.c.b16 %v9578, %v9577
      %v9596 = vpack.c.b16 %v9580, %v9579
      %v9598 = vsel %vm1052, %v9542, 0
      %v9601 = vsel %vm1052, %v9581, 0
      %v9604 = vsel %vm1052, %v9582, 0
      %v9607 = vsel %vm1052, %v9583, 0
      %v9610 = vsel %vm1052, %v9584, 0
      %v9613 = vsel %vm1052, %v9585, 0
      %v9616 = vsel %vm1052, %v9586, 0
      %v9619 = vsel %vm1052, %v9587, 0
      %v9622 = vsel %vm1052, %v9588, 0
      %v9625 = vsel %vm1052, %v9589, 0
      %v9628 = vsel %vm1052, %v9590, 0
      %v9631 = vsel %vm1052, %v9591, 0
      %v9634 = vsel %vm1052, %v9592, 0
      %v9637 = vsel %vm1052, %v9593, 0
      %v9640 = vsel %vm1052, %v9594, 0
      %v9643 = vsel %vm1052, %v9595, 0
      %v9646 = vsel %vm1052, %v9596, 0
      %9648 = vmatprep.subr.bf16.mxu0 0
      %9649 = vmatpush1.bf16.xpose.msra.mxu0 %v9622
      %9650 = vmatprep.subr.bf16.mxu0 0
      %9651 = vmatpush1.bf16.xpose.msra.mxu0 %v9619
      %9652 = vmatprep.subr.bf16.mxu0 0
      %9653 = vmatpush1.bf16.xpose.msra.mxu0 %v9616
      %9654 = vmatprep.subr.bf16.mxu0 0
      %9655 = vmatpush1.bf16.xpose.msra.mxu0 %v9613
      %9656 = vmatprep.subr.bf16.mxu0 0
      %9657 = vmatpush1.bf16.xpose.msra.mxu0 %v9610
      %9658 = vmatprep.subr.bf16.mxu0 0
      %9659 = vmatpush1.bf16.xpose.msra.mxu0 %v9607
      %9660 = vmatprep.subr.bf16.mxu0 0
      %9661 = vmatpush1.bf16.xpose.msra.mxu0 %v9604
      %9662 = vmatprep.subr.bf16.mxu0 0
      %9663 = vmatpush1.bf16.xpose.msra.mxu0 %v9601
      %9664 = vmatprep.subr.bf16.mxu0 0
      %9665 = vmatpush2.bf16.xpose.msra.mxu0 %v9646
      %9666 = vmatprep.subr.bf16.mxu0 0
      %9667 = vmatpush2.bf16.xpose.msra.mxu0 %v9643
      %9668 = vmatprep.subr.bf16.mxu0 0
      %9669 = vmatpush2.bf16.xpose.msra.mxu0 %v9640
      %9670 = vmatprep.subr.bf16.mxu0 0
      %9671 = vmatpush2.bf16.xpose.msra.mxu0 %v9637
      %9672 = vmatprep.subr.bf16.mxu0 0
      %9673 = vmatpush2.bf16.xpose.msra.mxu0 %v9634
      %9674 = vmatprep.subr.bf16.mxu0 0
      %9675 = vmatpush2.bf16.xpose.msra.mxu0 %v9631
      %9676 = vmatprep.subr.bf16.mxu0 0
      %9677 = vmatpush2.bf16.xpose.msra.mxu0 %v9628
      %9678 = vmatprep.subr.bf16.mxu0 0
      %9679 = vmatpush2.bf16.xpose.msra.mxu0 %v9625
      %9680 = vmatprep.mubr.bf16.mxu0 0
      %9681 = vmatmul.mubr.bf16.gmra.mxu0 %v9598
      %v9682 = vpop.f32.mrf.mxu0
      %v9683 = vadd.f32 %v9547, %v9682
      %v9684 = vpop.f32.mrf.mxu0
      %v9685 = vadd.f32 %v9547, %v9684
      %v9686 = vpop.f32.mrf.mxu0
      %v9687 = vpop.f32.mrf.mxu0
      %9688 = vdwg.mxu0
      %v9689 = vld [vmem:[#allocation3] sm:$0xf]
      %v9690 = vld [vmem:[#allocation3 + $0x4] sm:$0xf]
      %v9691 = vld [vmem:[#allocation3 + $0xc] sm:$0xf]
      %v9692 = vld [vmem:[#allocation3 + $0x10] sm:$0xf]
      %v9693 = vld [vmem:[#allocation3 + $0x18] sm:$0xf]
      %v9694 = vld [vmem:[#allocation3 + $0x1c] sm:$0xf]
      %v9695 = vld [vmem:[#allocation3 + $0x24] sm:$0xf]
      %v9696 = vld [vmem:[#allocation3 + $0x28] sm:$0xf]
      %v9697 = vld [vmem:[#allocation3 + $0x30] sm:$0xf]
      %v9698 = vld [vmem:[#allocation3 + $0x34] sm:$0xf]
      %v9699 = vld [vmem:[#allocation3 + $0x3c] sm:$0xf]
      %v9700 = vld [vmem:[#allocation3 + $0x40] sm:$0xf]
      %v9701 = vld [vmem:[#allocation3 + $0x48] sm:$0xf]
      %v9702 = vld [vmem:[#allocation3 + $0x4c] sm:$0xf]
      %v9703 = vld [vmem:[#allocation3 + $0x54] sm:$0xf]
      %v9704 = vld [vmem:[#allocation3 + $0x58] sm:$0xf]
      %v9705 = vld [vmem:[#allocation3 + $0x60] sm:$0xf]
      %v9706 = vld [vmem:[#allocation3 + $0x64] sm:$0xf]
      %v9707 = vld [vmem:[#allocation3 + $0x6c] sm:$0xf]
      %v9708 = vld [vmem:[#allocation3 + $0x70] sm:$0xf]
      %v9709 = vld [vmem:[#allocation3 + $0x78] sm:$0xf]
      %v9710 = vld [vmem:[#allocation3 + $0x7c] sm:$0xf]
      %v9711 = vld [vmem:[#allocation3 + $0x84] sm:$0xf]
      %v9712 = vld [vmem:[#allocation3 + $0x88] sm:$0xf]
      %v9713 = vld [vmem:[#allocation3 + $0x90] sm:$0xf]
      %v9714 = vld [vmem:[#allocation3 + $0x94] sm:$0xf]
      %v9715 = vld [vmem:[#allocation3 + $0x9c] sm:$0xf]
      %v9716 = vld [vmem:[#allocation3 + $0xa0] sm:$0xf]
      %v9717 = vld [vmem:[#allocation3 + $0xa8] sm:$0xf]
      %v9718 = vld [vmem:[#allocation3 + $0xac] sm:$0xf]
      %v9719 = vld [vmem:[#allocation3 + $0xb4] sm:$0xf]
      %v9720 = vld [vmem:[#allocation3 + $0xb8] sm:$0xf]
      %v9721 = vld [vmem:[#allocation3 + $0x8] sm:$0x1]
      %v9722 = vld [vmem:[#allocation3 + $0x14] sm:$0x1]
      %v9723 = vld [vmem:[#allocation3 + $0x20] sm:$0x1]
      %v9724 = vld [vmem:[#allocation3 + $0x2c] sm:$0x1]
      %v9725 = vld [vmem:[#allocation3 + $0x38] sm:$0x1]
      %v9726 = vld [vmem:[#allocation3 + $0x44] sm:$0x1]
      %v9727 = vld [vmem:[#allocation3 + $0x50] sm:$0x1]
      %v9728 = vld [vmem:[#allocation3 + $0x5c] sm:$0x1]
      %v9729 = vld [vmem:[#allocation3 + $0x68] sm:$0x1]
      %v9730 = vld [vmem:[#allocation3 + $0x74] sm:$0x1]
      %v9731 = vld [vmem:[#allocation3 + $0x80] sm:$0x1]
      %v9732 = vld [vmem:[#allocation3 + $0x8c] sm:$0x1]
      %v9733 = vld [vmem:[#allocation3 + $0x98] sm:$0x1]
      %v9734 = vld [vmem:[#allocation3 + $0xa4] sm:$0x1]
      %v9735 = vld [vmem:[#allocation3 + $0xb0] sm:$0x1]
      %v9736 = vld [vmem:[#allocation3 + $0xbc] sm:$0x1]
      %v9738 = vshrl.u32 %v9689, 16
      %v9740 = vrot.slane %v9738, 4
      %v9741 = vshll.u32 %v9689, 16
      %v9743 = vrot.slane %v9741, 5
      %v9744 = vor.u32 %v9740, %v9743
      %v9745 = vrot.slane %v9744, 4
      %v9747 = vshll.u32 %v9690, 16
      %v9749 = vrot.slane %v9747, 5
      %v9750 = vsel %vm722, %v9745, %v9749
      %v9751 = vshrl.u32 %v9690, 16
      %v9753 = vrot.slane %v9751, 4
      %v9754 = vor.u32 %v9753, %v9749
      %v9755 = vrot.slane %v9754, 4
      %v9757 = vshll.u32 %v9721, 16
      %v9759 = vrot.slane %v9757, 5
      %v9760 = vsel %vm722, %v9755, %v9759
      %v9762 = vshrl.u32 %v9691, 16
      %v9764 = vrot.slane %v9762, 4
      %v9765 = vshll.u32 %v9691, 16
      %v9767 = vrot.slane %v9765, 5
      %v9768 = vor.u32 %v9764, %v9767
      %v9769 = vrot.slane %v9768, 4
      %v9771 = vshll.u32 %v9692, 16
      %v9773 = vrot.slane %v9771, 5
      %v9774 = vsel %vm722, %v9769, %v9773
      %v9775 = vshrl.u32 %v9692, 16
      %v9777 = vrot.slane %v9775, 4
      %v9778 = vor.u32 %v9777, %v9773
      %v9779 = vrot.slane %v9778, 4
      %v9781 = vshll.u32 %v9722, 16
      %v9783 = vrot.slane %v9781, 5
      %v9784 = vsel %vm722, %v9779, %v9783
      %v9786 = vshrl.u32 %v9693, 16
      %v9788 = vrot.slane %v9786, 4
      %v9789 = vshll.u32 %v9693, 16
      %v9791 = vrot.slane %v9789, 5
      %v9792 = vor.u32 %v9788, %v9791
      %v9793 = vrot.slane %v9792, 4
      %v9795 = vshll.u32 %v9694, 16
      %v9797 = vrot.slane %v9795, 5
      %v9798 = vsel %vm722, %v9793, %v9797
      %v9799 = vshrl.u32 %v9694, 16
      %v9801 = vrot.slane %v9799, 4
      %v9802 = vor.u32 %v9801, %v9797
      %v9803 = vrot.slane %v9802, 4
      %v9805 = vshll.u32 %v9723, 16
      %v9807 = vrot.slane %v9805, 5
      %v9808 = vsel %vm722, %v9803, %v9807
      %v9810 = vshrl.u32 %v9695, 16
      %v9812 = vrot.slane %v9810, 4
      %v9813 = vshll.u32 %v9695, 16
      %v9815 = vrot.slane %v9813, 5
      %v9816 = vor.u32 %v9812, %v9815
      %v9817 = vrot.slane %v9816, 4
      %v9819 = vshll.u32 %v9696, 16
      %v9821 = vrot.slane %v9819, 5
      %v9822 = vsel %vm722, %v9817, %v9821
      %v9823 = vshrl.u32 %v9696, 16
      %v9825 = vrot.slane %v9823, 4
      %v9826 = vor.u32 %v9825, %v9821
      %v9827 = vrot.slane %v9826, 4
      %v9829 = vshll.u32 %v9724, 16
      %v9831 = vrot.slane %v9829, 5
      %v9832 = vsel %vm722, %v9827, %v9831
      %v9834 = vshrl.u32 %v9697, 16
      %v9836 = vrot.slane %v9834, 4
      %v9837 = vshll.u32 %v9697, 16
      %v9839 = vrot.slane %v9837, 5
      %v9840 = vor.u32 %v9836, %v9839
      %v9841 = vrot.slane %v9840, 4
      %v9843 = vshll.u32 %v9698, 16
      %v9845 = vrot.slane %v9843, 5
      %v9846 = vsel %vm722, %v9841, %v9845
      %v9847 = vshrl.u32 %v9698, 16
      %v9849 = vrot.slane %v9847, 4
      %v9850 = vor.u32 %v9849, %v9845
      %v9851 = vrot.slane %v9850, 4
      %v9853 = vshll.u32 %v9725, 16
      %v9855 = vrot.slane %v9853, 5
      %v9856 = vsel %vm722, %v9851, %v9855
      %v9858 = vshrl.u32 %v9699, 16
      %v9860 = vrot.slane %v9858, 4
      %v9861 = vshll.u32 %v9699, 16
      %v9863 = vrot.slane %v9861, 5
      %v9864 = vor.u32 %v9860, %v9863
      %v9865 = vrot.slane %v9864, 4
      %v9867 = vshll.u32 %v9700, 16
      %v9869 = vrot.slane %v9867, 5
      %v9870 = vsel %vm722, %v9865, %v9869
      %v9871 = vshrl.u32 %v9700, 16
      %v9873 = vrot.slane %v9871, 4
      %v9874 = vor.u32 %v9873, %v9869
      %v9875 = vrot.slane %v9874, 4
      %v9877 = vshll.u32 %v9726, 16
      %v9879 = vrot.slane %v9877, 5
      %v9880 = vsel %vm722, %v9875, %v9879
      %v9882 = vshrl.u32 %v9701, 16
      %v9884 = vrot.slane %v9882, 4
      %v9885 = vshll.u32 %v9701, 16
      %v9887 = vrot.slane %v9885, 5
      %v9888 = vor.u32 %v9884, %v9887
      %v9889 = vrot.slane %v9888, 4
      %v9891 = vshll.u32 %v9702, 16
      %v9893 = vrot.slane %v9891, 5
      %v9894 = vsel %vm722, %v9889, %v9893
      %v9895 = vshrl.u32 %v9702, 16
      %v9897 = vrot.slane %v9895, 4
      %v9898 = vor.u32 %v9897, %v9893
      %v9899 = vrot.slane %v9898, 4
      %v9901 = vshll.u32 %v9727, 16
      %v9903 = vrot.slane %v9901, 5
      %v9904 = vsel %vm722, %v9899, %v9903
      %v9906 = vshrl.u32 %v9703, 16
      %v9908 = vrot.slane %v9906, 4
      %v9909 = vshll.u32 %v9703, 16
      %v9911 = vrot.slane %v9909, 5
      %v9912 = vor.u32 %v9908, %v9911
      %v9913 = vrot.slane %v9912, 4
      %v9915 = vshll.u32 %v9704, 16
      %v9917 = vrot.slane %v9915, 5
      %v9918 = vsel %vm722, %v9913, %v9917
      %v9919 = vshrl.u32 %v9704, 16
      %v9921 = vrot.slane %v9919, 4
      %v9922 = vor.u32 %v9921, %v9917
      %v9923 = vrot.slane %v9922, 4
      %v9925 = vshll.u32 %v9728, 16
      %v9927 = vrot.slane %v9925, 5
      %v9928 = vsel %vm722, %v9923, %v9927
      %v9930 = vshrl.u32 %v9705, 16
      %v9932 = vrot.slane %v9930, 4
      %v9933 = vshll.u32 %v9705, 16
      %v9935 = vrot.slane %v9933, 5
      %v9936 = vor.u32 %v9932, %v9935
      %v9937 = vrot.slane %v9936, 4
      %v9939 = vshll.u32 %v9706, 16
      %v9941 = vrot.slane %v9939, 5
      %v9942 = vsel %vm722, %v9937, %v9941
      %v9943 = vshrl.u32 %v9706, 16
      %v9945 = vrot.slane %v9943, 4
      %v9946 = vor.u32 %v9945, %v9941
      %v9947 = vrot.slane %v9946, 4
      %v9949 = vshll.u32 %v9729, 16
      %v9951 = vrot.slane %v9949, 5
      %v9952 = vsel %vm722, %v9947, %v9951
      %v9954 = vshrl.u32 %v9707, 16
      %v9956 = vrot.slane %v9954, 4
      %v9957 = vshll.u32 %v9707, 16
      %v9959 = vrot.slane %v9957, 5
      %v9960 = vor.u32 %v9956, %v9959
      %v9961 = vrot.slane %v9960, 4
      %v9963 = vshll.u32 %v9708, 16
      %v9965 = vrot.slane %v9963, 5
      %v9966 = vsel %vm722, %v9961, %v9965
      %v9967 = vshrl.u32 %v9708, 16
      %v9969 = vrot.slane %v9967, 4
      %v9970 = vor.u32 %v9969, %v9965
      %v9971 = vrot.slane %v9970, 4
      %v9973 = vshll.u32 %v9730, 16
      %v9975 = vrot.slane %v9973, 5
      %v9976 = vsel %vm722, %v9971, %v9975
      %v9978 = vshrl.u32 %v9709, 16
      %v9980 = vrot.slane %v9978, 4
      %v9981 = vshll.u32 %v9709, 16
      %v9983 = vrot.slane %v9981, 5
      %v9984 = vor.u32 %v9980, %v9983
      %v9985 = vrot.slane %v9984, 4
      %v9987 = vshll.u32 %v9710, 16
      %v9989 = vrot.slane %v9987, 5
      %v9990 = vsel %vm722, %v9985, %v9989
      %v9991 = vshrl.u32 %v9710, 16
      %v9993 = vrot.slane %v9991, 4
      %v9994 = vor.u32 %v9993, %v9989
      %v9995 = vrot.slane %v9994, 4
      %v9997 = vshll.u32 %v9731, 16
      %v9999 = vrot.slane %v9997, 5
      %v10000 = vsel %vm722, %v9995, %v9999
      %v10002 = vshrl.u32 %v9711, 16
      %v10004 = vrot.slane %v10002, 4
      %v10005 = vshll.u32 %v9711, 16
      %v10007 = vrot.slane %v10005, 5
      %v10008 = vor.u32 %v10004, %v10007
      %v10009 = vrot.slane %v10008, 4
      %v10011 = vshll.u32 %v9712, 16
      %v10013 = vrot.slane %v10011, 5
      %v10014 = vsel %vm722, %v10009, %v10013
      %v10015 = vshrl.u32 %v9712, 16
      %v10017 = vrot.slane %v10015, 4
      %v10018 = vor.u32 %v10017, %v10013
      %v10019 = vrot.slane %v10018, 4
      %v10021 = vshll.u32 %v9732, 16
      %v10023 = vrot.slane %v10021, 5
      %v10024 = vsel %vm722, %v10019, %v10023
      %v10026 = vshrl.u32 %v9713, 16
      %v10028 = vrot.slane %v10026, 4
      %v10029 = vshll.u32 %v9713, 16
      %v10031 = vrot.slane %v10029, 5
      %v10032 = vor.u32 %v10028, %v10031
      %v10033 = vrot.slane %v10032, 4
      %v10035 = vshll.u32 %v9714, 16
      %v10037 = vrot.slane %v10035, 5
      %v10038 = vsel %vm722, %v10033, %v10037
      %v10039 = vshrl.u32 %v9714, 16
      %v10041 = vrot.slane %v10039, 4
      %v10042 = vor.u32 %v10041, %v10037
      %v10043 = vrot.slane %v10042, 4
      %v10045 = vshll.u32 %v9733, 16
      %v10047 = vrot.slane %v10045, 5
      %v10048 = vsel %vm722, %v10043, %v10047
      %v10050 = vshrl.u32 %v9715, 16
      %v10052 = vrot.slane %v10050, 4
      %v10053 = vshll.u32 %v9715, 16
      %v10055 = vrot.slane %v10053, 5
      %v10056 = vor.u32 %v10052, %v10055
      %v10057 = vrot.slane %v10056, 4
      %v10059 = vshll.u32 %v9716, 16
      %v10061 = vrot.slane %v10059, 5
      %v10062 = vsel %vm722, %v10057, %v10061
      %v10063 = vshrl.u32 %v9716, 16
      %v10065 = vrot.slane %v10063, 4
      %v10066 = vor.u32 %v10065, %v10061
      %v10067 = vrot.slane %v10066, 4
      %v10069 = vshll.u32 %v9734, 16
      %v10071 = vrot.slane %v10069, 5
      %v10072 = vsel %vm722, %v10067, %v10071
      %v10074 = vshrl.u32 %v9717, 16
      %v10076 = vrot.slane %v10074, 4
      %v10077 = vshll.u32 %v9717, 16
      %v10079 = vrot.slane %v10077, 5
      %v10080 = vor.u32 %v10076, %v10079
      %v10081 = vrot.slane %v10080, 4
      %v10083 = vshll.u32 %v9718, 16
      %v10085 = vrot.slane %v10083, 5
      %v10086 = vsel %vm722, %v10081, %v10085
      %v10087 = vshrl.u32 %v9718, 16
      %v10089 = vrot.slane %v10087, 4
      %v10090 = vor.u32 %v10089, %v10085
      %v10091 = vrot.slane %v10090, 4
      %v10093 = vshll.u32 %v9735, 16
      %v10095 = vrot.slane %v10093, 5
      %v10096 = vsel %vm722, %v10091, %v10095
      %v10098 = vshrl.u32 %v9719, 16
      %v10100 = vrot.slane %v10098, 4
      %v10101 = vshll.u32 %v9719, 16
      %v10103 = vrot.slane %v10101, 5
      %v10104 = vor.u32 %v10100, %v10103
      %v10105 = vrot.slane %v10104, 4
      %v10107 = vshll.u32 %v9720, 16
      %v10109 = vrot.slane %v10107, 5
      %v10110 = vsel %vm722, %v10105, %v10109
      %v10111 = vshrl.u32 %v9720, 16
      %v10113 = vrot.slane %v10111, 4
      %v10114 = vor.u32 %v10113, %v10109
      %v10115 = vrot.slane %v10114, 4
      %v10117 = vshll.u32 %v9736, 16
      %v10119 = vrot.slane %v10117, 5
      %v10120 = vsel %vm722, %v10115, %v10119
      %v10121 = vld [vmem:[#allocation3] sm:$0xe]
      %v10122 = vld [vmem:[#allocation3 + $0xc] sm:$0xe]
      %v10123 = vld [vmem:[#allocation3 + $0x18] sm:$0xe]
      %v10124 = vld [vmem:[#allocation3 + $0x24] sm:$0xe]
      %v10125 = vld [vmem:[#allocation3 + $0x30] sm:$0xe]
      %v10126 = vld [vmem:[#allocation3 + $0x3c] sm:$0xe]
      %v10127 = vld [vmem:[#allocation3 + $0x48] sm:$0xe]
      %v10128 = vld [vmem:[#allocation3 + $0x54] sm:$0xe]
      %v10129 = vld [vmem:[#allocation3 + $0x60] sm:$0xe]
      %v10130 = vld [vmem:[#allocation3 + $0x6c] sm:$0xe]
      %v10131 = vld [vmem:[#allocation3 + $0x78] sm:$0xe]
      %v10132 = vld [vmem:[#allocation3 + $0x84] sm:$0xe]
      %v10133 = vld [vmem:[#allocation3 + $0x90] sm:$0xe]
      %v10134 = vld [vmem:[#allocation3 + $0x9c] sm:$0xe]
      %v10135 = vld [vmem:[#allocation3 + $0xa8] sm:$0xe]
      %v10136 = vld [vmem:[#allocation3 + $0xb4] sm:$0xe]
      %v10185 = vrot.slane %v10121, 5
      %v10186 = vrot.slane %v10185, 4
      %v10187 = vrot.slane %v9690, 5
      %v10188 = vsel %vm5570, %v10186, %v10187
      %v10189 = vrot.slane %v10187, 4
      %v10190 = vrot.slane %v9721, 5
      %v10191 = vsel %vm5570, %v10189, %v10190
      %v10192 = vrot.slane %v10122, 5
      %v10193 = vrot.slane %v10192, 4
      %v10194 = vrot.slane %v9692, 5
      %v10195 = vsel %vm5570, %v10193, %v10194
      %v10196 = vrot.slane %v10194, 4
      %v10197 = vrot.slane %v9722, 5
      %v10198 = vsel %vm5570, %v10196, %v10197
      %v10199 = vrot.slane %v10123, 5
      %v10200 = vrot.slane %v10199, 4
      %v10201 = vrot.slane %v9694, 5
      %v10202 = vsel %vm5570, %v10200, %v10201
      %v10203 = vrot.slane %v10201, 4
      %v10204 = vrot.slane %v9723, 5
      %v10205 = vsel %vm5570, %v10203, %v10204
      %v10206 = vrot.slane %v10124, 5
      %v10207 = vrot.slane %v10206, 4
      %v10208 = vrot.slane %v9696, 5
      %v10209 = vsel %vm5570, %v10207, %v10208
      %v10210 = vrot.slane %v10208, 4
      %v10211 = vrot.slane %v9724, 5
      %v10212 = vsel %vm5570, %v10210, %v10211
      %v10213 = vrot.slane %v10125, 5
      %v10214 = vrot.slane %v10213, 4
      %v10215 = vrot.slane %v9698, 5
      %v10216 = vsel %vm5570, %v10214, %v10215
      %v10217 = vrot.slane %v10215, 4
      %v10218 = vrot.slane %v9725, 5
      %v10219 = vsel %vm5570, %v10217, %v10218
      %v10220 = vrot.slane %v10126, 5
      %v10221 = vrot.slane %v10220, 4
      %v10222 = vrot.slane %v9700, 5
      %v10223 = vsel %vm5570, %v10221, %v10222
      %v10224 = vrot.slane %v10222, 4
      %v10225 = vrot.slane %v9726, 5
      %v10226 = vsel %vm5570, %v10224, %v10225
      %v10227 = vrot.slane %v10127, 5
      %v10228 = vrot.slane %v10227, 4
      %v10229 = vrot.slane %v9702, 5
      %v10230 = vsel %vm5570, %v10228, %v10229
      %v10231 = vrot.slane %v10229, 4
      %v10232 = vrot.slane %v9727, 5
      %v10233 = vsel %vm5570, %v10231, %v10232
      %v10234 = vrot.slane %v10128, 5
      %v10235 = vrot.slane %v10234, 4
      %v10236 = vrot.slane %v9704, 5
      %v10237 = vsel %vm5570, %v10235, %v10236
      %v10238 = vrot.slane %v10236, 4
      %v10239 = vrot.slane %v9728, 5
      %v10240 = vsel %vm5570, %v10238, %v10239
      %v10241 = vrot.slane %v10129, 5
      %v10242 = vrot.slane %v10241, 4
      %v10243 = vrot.slane %v9706, 5
      %v10244 = vsel %vm5570, %v10242, %v10243
      %v10245 = vrot.slane %v10243, 4
      %v10246 = vrot.slane %v9729, 5
      %v10247 = vsel %vm5570, %v10245, %v10246
      %v10248 = vrot.slane %v10130, 5
      %v10249 = vrot.slane %v10248, 4
      %v10250 = vrot.slane %v9708, 5
      %v10251 = vsel %vm5570, %v10249, %v10250
      %v10252 = vrot.slane %v10250, 4
      %v10253 = vrot.slane %v9730, 5
      %v10254 = vsel %vm5570, %v10252, %v10253
      %v10255 = vrot.slane %v10131, 5
      %v10256 = vrot.slane %v10255, 4
      %v10257 = vrot.slane %v9710, 5
      %v10258 = vsel %vm5570, %v10256, %v10257
      %v10259 = vrot.slane %v10257, 4
      %v10260 = vrot.slane %v9731, 5
      %v10261 = vsel %vm5570, %v10259, %v10260
      %v10262 = vrot.slane %v10132, 5
      %v10263 = vrot.slane %v10262, 4
      %v10264 = vrot.slane %v9712, 5
      %v10265 = vsel %vm5570, %v10263, %v10264
      %v10266 = vrot.slane %v10264, 4
      %v10267 = vrot.slane %v9732, 5
      %v10268 = vsel %vm5570, %v10266, %v10267
      %v10269 = vrot.slane %v10133, 5
      %v10270 = vrot.slane %v10269, 4
      %v10271 = vrot.slane %v9714, 5
      %v10272 = vsel %vm5570, %v10270, %v10271
      %v10273 = vrot.slane %v10271, 4
      %v10274 = vrot.slane %v9733, 5
      %v10275 = vsel %vm5570, %v10273, %v10274
      %v10276 = vrot.slane %v10134, 5
      %v10277 = vrot.slane %v10276, 4
      %v10278 = vrot.slane %v9716, 5
      %v10279 = vsel %vm5570, %v10277, %v10278
      %v10280 = vrot.slane %v10278, 4
      %v10281 = vrot.slane %v9734, 5
      %v10282 = vsel %vm5570, %v10280, %v10281
      %v10283 = vrot.slane %v10135, 5
      %v10284 = vrot.slane %v10283, 4
      %v10285 = vrot.slane %v9718, 5
      %v10286 = vsel %vm5570, %v10284, %v10285
      %v10287 = vrot.slane %v10285, 4
      %v10288 = vrot.slane %v9735, 5
      %v10289 = vsel %vm5570, %v10287, %v10288
      %v10290 = vrot.slane %v10136, 5
      %v10291 = vrot.slane %v10290, 4
      %v10292 = vrot.slane %v9720, 5
      %v10293 = vsel %vm5570, %v10291, %v10292
      %v10294 = vrot.slane %v10292, 4
      %v10295 = vrot.slane %v9736, 5
      %v10296 = vsel %vm5570, %v10294, %v10295
      %v10313 = vunpack.c.l.b16 %v9689
      %v10314 = vunpack.c.l.b16 %v9690
      %v10315 = vunpack.c.l.b16 %v9691
      %v10316 = vunpack.c.l.b16 %v9692
      %v10317 = vunpack.c.l.b16 %v9693
      %v10318 = vunpack.c.l.b16 %v9694
      %v10319 = vunpack.c.l.b16 %v9695
      %v10320 = vunpack.c.l.b16 %v9696
      %v10321 = vunpack.c.l.b16 %v9697
      %v10322 = vunpack.c.l.b16 %v9698
      %v10323 = vunpack.c.l.b16 %v9699
      %v10324 = vunpack.c.l.b16 %v9700
      %v10325 = vunpack.c.l.b16 %v9701
      %v10326 = vunpack.c.l.b16 %v9702
      %v10327 = vunpack.c.l.b16 %v9703
      %v10328 = vunpack.c.l.b16 %v9704
      %v10329 = vunpack.c.l.b16 %v9705
      %v10330 = vunpack.c.l.b16 %v9706
      %v10331 = vunpack.c.l.b16 %v9707
      %v10332 = vunpack.c.l.b16 %v9708
      %v10333 = vunpack.c.l.b16 %v9709
      %v10334 = vunpack.c.l.b16 %v9710
      %v10335 = vunpack.c.l.b16 %v9711
      %v10336 = vunpack.c.l.b16 %v9712
      %v10337 = vunpack.c.l.b16 %v9713
      %v10338 = vunpack.c.l.b16 %v9714
      %v10339 = vunpack.c.l.b16 %v9715
      %v10340 = vunpack.c.l.b16 %v9716
      %v10341 = vunpack.c.l.b16 %v9717
      %v10342 = vunpack.c.l.b16 %v9718
      %v10343 = vunpack.c.l.b16 %v9719
      %v10344 = vunpack.c.l.b16 %v9720
      %v10345 = vpack.c.b16 %v10314, %v10313
      %v10346 = vpack.c.b16 %v10316, %v10315
      %v10347 = vpack.c.b16 %v10318, %v10317
      %v10348 = vpack.c.b16 %v10320, %v10319
      %v10349 = vpack.c.b16 %v10322, %v10321
      %v10350 = vpack.c.b16 %v10324, %v10323
      %v10351 = vpack.c.b16 %v10326, %v10325
      %v10352 = vpack.c.b16 %v10328, %v10327
      %v10353 = vpack.c.b16 %v10330, %v10329
      %v10354 = vpack.c.b16 %v10332, %v10331
      %v10355 = vpack.c.b16 %v10334, %v10333
      %v10356 = vpack.c.b16 %v10336, %v10335
      %v10357 = vpack.c.b16 %v10338, %v10337
      %v10358 = vpack.c.b16 %v10340, %v10339
      %v10359 = vpack.c.b16 %v10342, %v10341
      %v10360 = vpack.c.b16 %v10344, %v10343
      %v10361 = vunpack.c.l.b16 %v9750
      %v10362 = vunpack.c.l.b16 %v9760
      %v10363 = vunpack.c.l.b16 %v9774
      %v10364 = vunpack.c.l.b16 %v9784
      %v10365 = vunpack.c.l.b16 %v9798
      %v10366 = vunpack.c.l.b16 %v9808
      %v10367 = vunpack.c.l.b16 %v9822
      %v10368 = vunpack.c.l.b16 %v9832
      %v10369 = vunpack.c.l.b16 %v9846
      %v10370 = vunpack.c.l.b16 %v9856
      %v10371 = vunpack.c.l.b16 %v9870
      %v10372 = vunpack.c.l.b16 %v9880
      %v10373 = vunpack.c.l.b16 %v9894
      %v10374 = vunpack.c.l.b16 %v9904
      %v10375 = vunpack.c.l.b16 %v9918
      %v10376 = vunpack.c.l.b16 %v9928
      %v10377 = vunpack.c.l.b16 %v9942
      %v10378 = vunpack.c.l.b16 %v9952
      %v10379 = vunpack.c.l.b16 %v9966
      %v10380 = vunpack.c.l.b16 %v9976
      %v10381 = vunpack.c.l.b16 %v9990
      %v10382 = vunpack.c.l.b16 %v10000
      %v10383 = vunpack.c.l.b16 %v10014
      %v10384 = vunpack.c.l.b16 %v10024
      %v10385 = vunpack.c.l.b16 %v10038
      %v10386 = vunpack.c.l.b16 %v10048
      %v10387 = vunpack.c.l.b16 %v10062
      %v10388 = vunpack.c.l.b16 %v10072
      %v10389 = vunpack.c.l.b16 %v10086
      %v10390 = vunpack.c.l.b16 %v10096
      %v10391 = vunpack.c.l.b16 %v10110
      %v10392 = vunpack.c.l.b16 %v10120
      %v10393 = vpack.c.b16 %v10362, %v10361
      %v10394 = vpack.c.b16 %v10364, %v10363
      %v10395 = vpack.c.b16 %v10366, %v10365
      %v10396 = vpack.c.b16 %v10368, %v10367
      %v10397 = vpack.c.b16 %v10370, %v10369
      %v10398 = vpack.c.b16 %v10372, %v10371
      %v10399 = vpack.c.b16 %v10374, %v10373
      %v10400 = vpack.c.b16 %v10376, %v10375
      %v10401 = vpack.c.b16 %v10378, %v10377
      %v10402 = vpack.c.b16 %v10380, %v10379
      %v10403 = vpack.c.b16 %v10382, %v10381
      %v10404 = vpack.c.b16 %v10384, %v10383
      %v10405 = vpack.c.b16 %v10386, %v10385
      %v10406 = vpack.c.b16 %v10388, %v10387
      %v10407 = vpack.c.b16 %v10390, %v10389
      %v10408 = vpack.c.b16 %v10392, %v10391
      %10409 = vrot.lane.b32.xlu0 %v10393, 4
      %v10410 = vpop.permute.xlu0 %10409
      %10411 = vrot.lane.b32.xlu0 %v10394, 4
      %v10412 = vpop.permute.xlu0 %10411
      %10413 = vrot.lane.b32.xlu0 %v10395, 4
      %v10414 = vpop.permute.xlu0 %10413
      %10415 = vrot.lane.b32.xlu0 %v10396, 4
      %v10416 = vpop.permute.xlu0 %10415
      %10417 = vrot.lane.b32.xlu0 %v10397, 4
      %v10418 = vpop.permute.xlu0 %10417
      %10419 = vrot.lane.b32.xlu0 %v10398, 4
      %v10420 = vpop.permute.xlu0 %10419
      %10421 = vrot.lane.b32.xlu0 %v10399, 4
      %v10422 = vpop.permute.xlu0 %10421
      %10423 = vrot.lane.b32.xlu0 %v10400, 4
      %v10424 = vpop.permute.xlu0 %10423
      %10425 = vrot.lane.b32.xlu0 %v10401, 4
      %v10426 = vpop.permute.xlu0 %10425
      %10427 = vrot.lane.b32.xlu0 %v10402, 4
      %v10428 = vpop.permute.xlu0 %10427
      %10429 = vrot.lane.b32.xlu0 %v10403, 4
      %v10430 = vpop.permute.xlu0 %10429
      %10431 = vrot.lane.b32.xlu0 %v10404, 4
      %v10432 = vpop.permute.xlu0 %10431
      %10433 = vrot.lane.b32.xlu0 %v10405, 4
      %v10434 = vpop.permute.xlu0 %10433
      %10435 = vrot.lane.b32.xlu0 %v10406, 4
      %v10436 = vpop.permute.xlu0 %10435
      %10437 = vrot.lane.b32.xlu0 %v10407, 4
      %v10438 = vpop.permute.xlu0 %10437
      %10439 = vrot.lane.b32.xlu0 %v10408, 4
      %v10440 = vpop.permute.xlu0 %10439
      %v10441 = vunpack.c.l.b16 %v10188
      %v10442 = vunpack.c.l.b16 %v10191
      %v10443 = vunpack.c.l.b16 %v10195
      %v10444 = vunpack.c.l.b16 %v10198
      %v10445 = vunpack.c.l.b16 %v10202
      %v10446 = vunpack.c.l.b16 %v10205
      %v10447 = vunpack.c.l.b16 %v10209
      %v10448 = vunpack.c.l.b16 %v10212
      %v10449 = vunpack.c.l.b16 %v10216
      %v10450 = vunpack.c.l.b16 %v10219
      %v10451 = vunpack.c.l.b16 %v10223
      %v10452 = vunpack.c.l.b16 %v10226
      %v10453 = vunpack.c.l.b16 %v10230
      %v10454 = vunpack.c.l.b16 %v10233
      %v10455 = vunpack.c.l.b16 %v10237
      %v10456 = vunpack.c.l.b16 %v10240
      %v10457 = vunpack.c.l.b16 %v10244
      %v10458 = vunpack.c.l.b16 %v10247
      %v10459 = vunpack.c.l.b16 %v10251
      %v10460 = vunpack.c.l.b16 %v10254
      %v10461 = vunpack.c.l.b16 %v10258
      %v10462 = vunpack.c.l.b16 %v10261
      %v10463 = vunpack.c.l.b16 %v10265
      %v10464 = vunpack.c.l.b16 %v10268
      %v10465 = vunpack.c.l.b16 %v10272
      %v10466 = vunpack.c.l.b16 %v10275
      %v10467 = vunpack.c.l.b16 %v10279
      %v10468 = vunpack.c.l.b16 %v10282
      %v10469 = vunpack.c.l.b16 %v10286
      %v10470 = vunpack.c.l.b16 %v10289
      %v10471 = vunpack.c.l.b16 %v10293
      %v10472 = vunpack.c.l.b16 %v10296
      %v10473 = vpack.c.b16 %v10442, %v10441
      %v10474 = vpack.c.b16 %v10444, %v10443
      %v10475 = vpack.c.b16 %v10446, %v10445
      %v10476 = vpack.c.b16 %v10448, %v10447
      %v10477 = vpack.c.b16 %v10450, %v10449
      %v10478 = vpack.c.b16 %v10452, %v10451
      %v10479 = vpack.c.b16 %v10454, %v10453
      %v10480 = vpack.c.b16 %v10456, %v10455
      %v10481 = vpack.c.b16 %v10458, %v10457
      %v10482 = vpack.c.b16 %v10460, %v10459
      %v10483 = vpack.c.b16 %v10462, %v10461
      %v10484 = vpack.c.b16 %v10464, %v10463
      %v10485 = vpack.c.b16 %v10466, %v10465
      %v10486 = vpack.c.b16 %v10468, %v10467
      %v10487 = vpack.c.b16 %v10470, %v10469
      %v10488 = vpack.c.b16 %v10472, %v10471
      %10489 = vrot.lane.b32.xlu0 %v10473, 8
      %v10490 = vpop.permute.xlu0 %10489
      %10491 = vrot.lane.b32.xlu0 %v10474, 8
      %v10492 = vpop.permute.xlu0 %10491
      %10493 = vrot.lane.b32.xlu0 %v10475, 8
      %v10494 = vpop.permute.xlu0 %10493
      %10495 = vrot.lane.b32.xlu0 %v10476, 8
      %v10496 = vpop.permute.xlu0 %10495
      %10497 = vrot.lane.b32.xlu0 %v10477, 8
      %v10498 = vpop.permute.xlu0 %10497
      %10499 = vrot.lane.b32.xlu0 %v10478, 8
      %v10500 = vpop.permute.xlu0 %10499
      %10501 = vrot.lane.b32.xlu0 %v10479, 8
      %v10502 = vpop.permute.xlu0 %10501
      %10503 = vrot.lane.b32.xlu0 %v10480, 8
      %v10504 = vpop.permute.xlu0 %10503
      %10505 = vrot.lane.b32.xlu0 %v10481, 8
      %v10506 = vpop.permute.xlu0 %10505
      %10507 = vrot.lane.b32.xlu0 %v10482, 8
      %v10508 = vpop.permute.xlu0 %10507
      %10509 = vrot.lane.b32.xlu0 %v10483, 8
      %v10510 = vpop.permute.xlu0 %10509
      %10511 = vrot.lane.b32.xlu0 %v10484, 8
      %v10512 = vpop.permute.xlu0 %10511
      %10513 = vrot.lane.b32.xlu0 %v10485, 8
      %v10514 = vpop.permute.xlu0 %10513
      %10515 = vrot.lane.b32.xlu0 %v10486, 8
      %v10516 = vpop.permute.xlu0 %10515
      %10517 = vrot.lane.b32.xlu0 %v10487, 8
      %v10518 = vpop.permute.xlu0 %10517
      %10519 = vrot.lane.b32.xlu0 %v10488, 8
      %v10520 = vpop.permute.xlu0 %10519
      %vm10521 = vcmask 31744
      %v10524 = vsel %vm10521, %v10345, %v10410
      %v10527 = vsel %vm10521, %v10346, %v10412
      %v10530 = vsel %vm10521, %v10347, %v10414
      %v10533 = vsel %vm10521, %v10348, %v10416
      %v10536 = vsel %vm10521, %v10349, %v10418
      %v10539 = vsel %vm10521, %v10350, %v10420
      %v10542 = vsel %vm10521, %v10351, %v10422
      %v10545 = vsel %vm10521, %v10352, %v10424
      %v10548 = vsel %vm10521, %v10353, %v10426
      %v10551 = vsel %vm10521, %v10354, %v10428
      %v10554 = vsel %vm10521, %v10355, %v10430
      %v10557 = vsel %vm10521, %v10356, %v10432
      %v10560 = vsel %vm10521, %v10357, %v10434
      %v10563 = vsel %vm10521, %v10358, %v10436
      %v10566 = vsel %vm10521, %v10359, %v10438
      %v10569 = vsel %vm10521, %v10360, %v10440
      %v10571 = vsel %vm1052, %v10524, %v10490
      %v10573 = vsel %vm1052, %v10527, %v10492
      %v10575 = vsel %vm1052, %v10530, %v10494
      %v10577 = vsel %vm1052, %v10533, %v10496
      %v10579 = vsel %vm1052, %v10536, %v10498
      %v10581 = vsel %vm1052, %v10539, %v10500
      %v10583 = vsel %vm1052, %v10542, %v10502
      %v10585 = vsel %vm1052, %v10545, %v10504
      %v10587 = vsel %vm1052, %v10548, %v10506
      %v10589 = vsel %vm1052, %v10551, %v10508
      %v10591 = vsel %vm1052, %v10554, %v10510
      %v10593 = vsel %vm1052, %v10557, %v10512
      %v10595 = vsel %vm1052, %v10560, %v10514
      %v10597 = vsel %vm1052, %v10563, %v10516
      %v10599 = vsel %vm1052, %v10566, %v10518
      %v10601 = vsel %vm1052, %v10569, %v10520
      %v10602 = vld [vmem:[%s10] sm:$0x3]
      %v10603 = vld [vmem:[%s8997] sm:$0xf]
      %v10604 = vld [vmem:[%s8997 + $0x4] sm:$0xf]
      %v10605 = vld [vmem:[%s8997 + $0xc] sm:$0xf]
      %v10606 = vld [vmem:[%s8997 + $0x10] sm:$0xf]
      %v10607 = vld [vmem:[%s8997 + $0x18] sm:$0xf]
      %v10608 = vld [vmem:[%s8997 + $0x1c] sm:$0xf]
      %v10609 = vld [vmem:[%s8997 + $0x24] sm:$0xf]
      %v10610 = vld [vmem:[%s8997 + $0x28] sm:$0xf]
      %v10611 = vld [vmem:[%s8997 + $0x30] sm:$0xf]
      %v10612 = vld [vmem:[%s8997 + $0x34] sm:$0xf]
      %v10613 = vld [vmem:[%s8997 + $0x3c] sm:$0xf]
      %v10614 = vld [vmem:[%s8997 + $0x40] sm:$0xf]
      %v10615 = vld [vmem:[%s8997 + $0x48] sm:$0xf]
      %v10616 = vld [vmem:[%s8997 + $0x4c] sm:$0xf]
      %v10617 = vld [vmem:[%s8997 + $0x54] sm:$0xf]
      %v10618 = vld [vmem:[%s8997 + $0x58] sm:$0xf]
      %v10619 = vld [vmem:[%s8997 + $0x60] sm:$0xf]
      %v10620 = vld [vmem:[%s8997 + $0x64] sm:$0xf]
      %v10621 = vld [vmem:[%s8997 + $0x6c] sm:$0xf]
      %v10622 = vld [vmem:[%s8997 + $0x70] sm:$0xf]
      %v10623 = vld [vmem:[%s8997 + $0x78] sm:$0xf]
      %v10624 = vld [vmem:[%s8997 + $0x7c] sm:$0xf]
      %v10625 = vld [vmem:[%s8997 + $0x84] sm:$0xf]
      %v10626 = vld [vmem:[%s8997 + $0x88] sm:$0xf]
      %v10627 = vld [vmem:[%s8997 + $0x90] sm:$0xf]
      %v10628 = vld [vmem:[%s8997 + $0x94] sm:$0xf]
      %v10629 = vld [vmem:[%s8997 + $0x9c] sm:$0xf]
      %v10630 = vld [vmem:[%s8997 + $0xa0] sm:$0xf]
      %v10631 = vld [vmem:[%s8997 + $0xa8] sm:$0xf]
      %v10632 = vld [vmem:[%s8997 + $0xac] sm:$0xf]
      %v10633 = vld [vmem:[%s8997 + $0xb4] sm:$0xf]
      %v10634 = vld [vmem:[%s8997 + $0xb8] sm:$0xf]
      %v10635 = vld [vmem:[%s8997 + $0x8] sm:$0x1]
      %v10636 = vld [vmem:[%s8997 + $0x14] sm:$0x1]
      %v10637 = vld [vmem:[%s8997 + $0x20] sm:$0x1]
      %v10638 = vld [vmem:[%s8997 + $0x2c] sm:$0x1]
      %v10639 = vld [vmem:[%s8997 + $0x38] sm:$0x1]
      %v10640 = vld [vmem:[%s8997 + $0x44] sm:$0x1]
      %v10641 = vld [vmem:[%s8997 + $0x50] sm:$0x1]
      %v10642 = vld [vmem:[%s8997 + $0x5c] sm:$0x1]
      %v10643 = vld [vmem:[%s8997 + $0x68] sm:$0x1]
      %v10644 = vld [vmem:[%s8997 + $0x74] sm:$0x1]
      %v10645 = vld [vmem:[%s8997 + $0x80] sm:$0x1]
      %v10646 = vld [vmem:[%s8997 + $0x8c] sm:$0x1]
      %v10647 = vld [vmem:[%s8997 + $0x98] sm:$0x1]
      %v10648 = vld [vmem:[%s8997 + $0xa4] sm:$0x1]
      %v10649 = vld [vmem:[%s8997 + $0xb0] sm:$0x1]
      %v10650 = vld [vmem:[%s8997 + $0xbc] sm:$0x1]
      %v10652 = vshrl.u32 %v10603, 16
      %v10654 = vrot.slane %v10652, 4
      %v10655 = vshll.u32 %v10603, 16
      %v10657 = vrot.slane %v10655, 5
      %v10658 = vor.u32 %v10654, %v10657
      %v10659 = vrot.slane %v10658, 4
      %v10661 = vshll.u32 %v10604, 16
      %v10663 = vrot.slane %v10661, 5
      %v10664 = vsel %vm722, %v10659, %v10663
      %v10665 = vshrl.u32 %v10604, 16
      %v10667 = vrot.slane %v10665, 4
      %v10668 = vor.u32 %v10667, %v10663
      %v10669 = vrot.slane %v10668, 4
      %v10671 = vshll.u32 %v10635, 16
      %v10673 = vrot.slane %v10671, 5
      %v10674 = vsel %vm722, %v10669, %v10673
      %v10676 = vshrl.u32 %v10605, 16
      %v10678 = vrot.slane %v10676, 4
      %v10679 = vshll.u32 %v10605, 16
      %v10681 = vrot.slane %v10679, 5
      %v10682 = vor.u32 %v10678, %v10681
      %v10683 = vrot.slane %v10682, 4
      %v10685 = vshll.u32 %v10606, 16
      %v10687 = vrot.slane %v10685, 5
      %v10688 = vsel %vm722, %v10683, %v10687
      %v10689 = vshrl.u32 %v10606, 16
      %v10691 = vrot.slane %v10689, 4
      %v10692 = vor.u32 %v10691, %v10687
      %v10693 = vrot.slane %v10692, 4
      %v10695 = vshll.u32 %v10636, 16
      %v10697 = vrot.slane %v10695, 5
      %v10698 = vsel %vm722, %v10693, %v10697
      %v10700 = vshrl.u32 %v10607, 16
      %v10702 = vrot.slane %v10700, 4
      %v10703 = vshll.u32 %v10607, 16
      %v10705 = vrot.slane %v10703, 5
      %v10706 = vor.u32 %v10702, %v10705
      %v10707 = vrot.slane %v10706, 4
      %v10709 = vshll.u32 %v10608, 16
      %v10711 = vrot.slane %v10709, 5
      %v10712 = vsel %vm722, %v10707, %v10711
      %v10713 = vshrl.u32 %v10608, 16
      %v10715 = vrot.slane %v10713, 4
      %v10716 = vor.u32 %v10715, %v10711
      %v10717 = vrot.slane %v10716, 4
      %v10719 = vshll.u32 %v10637, 16
      %v10721 = vrot.slane %v10719, 5
      %v10722 = vsel %vm722, %v10717, %v10721
      %v10724 = vshrl.u32 %v10609, 16
      %v10726 = vrot.slane %v10724, 4
      %v10727 = vshll.u32 %v10609, 16
      %v10729 = vrot.slane %v10727, 5
      %v10730 = vor.u32 %v10726, %v10729
      %v10731 = vrot.slane %v10730, 4
      %v10733 = vshll.u32 %v10610, 16
      %v10735 = vrot.slane %v10733, 5
      %v10736 = vsel %vm722, %v10731, %v10735
      %v10737 = vshrl.u32 %v10610, 16
      %v10739 = vrot.slane %v10737, 4
      %v10740 = vor.u32 %v10739, %v10735
      %v10741 = vrot.slane %v10740, 4
      %v10743 = vshll.u32 %v10638, 16
      %v10745 = vrot.slane %v10743, 5
      %v10746 = vsel %vm722, %v10741, %v10745
      %v10748 = vshrl.u32 %v10611, 16
      %v10750 = vrot.slane %v10748, 4
      %v10751 = vshll.u32 %v10611, 16
      %v10753 = vrot.slane %v10751, 5
      %v10754 = vor.u32 %v10750, %v10753
      %v10755 = vrot.slane %v10754, 4
      %v10757 = vshll.u32 %v10612, 16
      %v10759 = vrot.slane %v10757, 5
      %v10760 = vsel %vm722, %v10755, %v10759
      %v10761 = vshrl.u32 %v10612, 16
      %v10763 = vrot.slane %v10761, 4
      %v10764 = vor.u32 %v10763, %v10759
      %v10765 = vrot.slane %v10764, 4
      %v10767 = vshll.u32 %v10639, 16
      %v10769 = vrot.slane %v10767, 5
      %v10770 = vsel %vm722, %v10765, %v10769
      %v10772 = vshrl.u32 %v10613, 16
      %v10774 = vrot.slane %v10772, 4
      %v10775 = vshll.u32 %v10613, 16
      %v10777 = vrot.slane %v10775, 5
      %v10778 = vor.u32 %v10774, %v10777
      %v10779 = vrot.slane %v10778, 4
      %v10781 = vshll.u32 %v10614, 16
      %v10783 = vrot.slane %v10781, 5
      %v10784 = vsel %vm722, %v10779, %v10783
      %v10785 = vshrl.u32 %v10614, 16
      %v10787 = vrot.slane %v10785, 4
      %v10788 = vor.u32 %v10787, %v10783
      %v10789 = vrot.slane %v10788, 4
      %v10791 = vshll.u32 %v10640, 16
      %v10793 = vrot.slane %v10791, 5
      %v10794 = vsel %vm722, %v10789, %v10793
      %v10796 = vshrl.u32 %v10615, 16
      %v10798 = vrot.slane %v10796, 4
      %v10799 = vshll.u32 %v10615, 16
      %v10801 = vrot.slane %v10799, 5
      %v10802 = vor.u32 %v10798, %v10801
      %v10803 = vrot.slane %v10802, 4
      %v10805 = vshll.u32 %v10616, 16
      %v10807 = vrot.slane %v10805, 5
      %v10808 = vsel %vm722, %v10803, %v10807
      %v10809 = vshrl.u32 %v10616, 16
      %v10811 = vrot.slane %v10809, 4
      %v10812 = vor.u32 %v10811, %v10807
      %v10813 = vrot.slane %v10812, 4
      %v10815 = vshll.u32 %v10641, 16
      %v10817 = vrot.slane %v10815, 5
      %v10818 = vsel %vm722, %v10813, %v10817
      %v10820 = vshrl.u32 %v10617, 16
      %v10822 = vrot.slane %v10820, 4
      %v10823 = vshll.u32 %v10617, 16
      %v10825 = vrot.slane %v10823, 5
      %v10826 = vor.u32 %v10822, %v10825
      %v10827 = vrot.slane %v10826, 4
      %v10829 = vshll.u32 %v10618, 16
      %v10831 = vrot.slane %v10829, 5
      %v10832 = vsel %vm722, %v10827, %v10831
      %v10833 = vshrl.u32 %v10618, 16
      %v10835 = vrot.slane %v10833, 4
      %v10836 = vor.u32 %v10835, %v10831
      %v10837 = vrot.slane %v10836, 4
      %v10839 = vshll.u32 %v10642, 16
      %v10841 = vrot.slane %v10839, 5
      %v10842 = vsel %vm722, %v10837, %v10841
      %v10844 = vshrl.u32 %v10619, 16
      %v10846 = vrot.slane %v10844, 4
      %v10847 = vshll.u32 %v10619, 16
      %v10849 = vrot.slane %v10847, 5
      %v10850 = vor.u32 %v10846, %v10849
      %v10851 = vrot.slane %v10850, 4
      %v10853 = vshll.u32 %v10620, 16
      %v10855 = vrot.slane %v10853, 5
      %v10856 = vsel %vm722, %v10851, %v10855
      %v10857 = vshrl.u32 %v10620, 16
      %v10859 = vrot.slane %v10857, 4
      %v10860 = vor.u32 %v10859, %v10855
      %v10861 = vrot.slane %v10860, 4
      %v10863 = vshll.u32 %v10643, 16
      %v10865 = vrot.slane %v10863, 5
      %v10866 = vsel %vm722, %v10861, %v10865
      %v10868 = vshrl.u32 %v10621, 16
      %v10870 = vrot.slane %v10868, 4
      %v10871 = vshll.u32 %v10621, 16
      %v10873 = vrot.slane %v10871, 5
      %v10874 = vor.u32 %v10870, %v10873
      %v10875 = vrot.slane %v10874, 4
      %v10877 = vshll.u32 %v10622, 16
      %v10879 = vrot.slane %v10877, 5
      %v10880 = vsel %vm722, %v10875, %v10879
      %v10881 = vshrl.u32 %v10622, 16
      %v10883 = vrot.slane %v10881, 4
      %v10884 = vor.u32 %v10883, %v10879
      %v10885 = vrot.slane %v10884, 4
      %v10887 = vshll.u32 %v10644, 16
      %v10889 = vrot.slane %v10887, 5
      %v10890 = vsel %vm722, %v10885, %v10889
      %v10892 = vshrl.u32 %v10623, 16
      %v10894 = vrot.slane %v10892, 4
      %v10895 = vshll.u32 %v10623, 16
      %v10897 = vrot.slane %v10895, 5
      %v10898 = vor.u32 %v10894, %v10897
      %v10899 = vrot.slane %v10898, 4
      %v10901 = vshll.u32 %v10624, 16
      %v10903 = vrot.slane %v10901, 5
      %v10904 = vsel %vm722, %v10899, %v10903
      %v10905 = vshrl.u32 %v10624, 16
      %v10907 = vrot.slane %v10905, 4
      %v10908 = vor.u32 %v10907, %v10903
      %v10909 = vrot.slane %v10908, 4
      %v10911 = vshll.u32 %v10645, 16
      %v10913 = vrot.slane %v10911, 5
      %v10914 = vsel %vm722, %v10909, %v10913
      %v10916 = vshrl.u32 %v10625, 16
      %v10918 = vrot.slane %v10916, 4
      %v10919 = vshll.u32 %v10625, 16
      %v10921 = vrot.slane %v10919, 5
      %v10922 = vor.u32 %v10918, %v10921
      %v10923 = vrot.slane %v10922, 4
      %v10925 = vshll.u32 %v10626, 16
      %v10927 = vrot.slane %v10925, 5
      %v10928 = vsel %vm722, %v10923, %v10927
      %v10929 = vshrl.u32 %v10626, 16
      %v10931 = vrot.slane %v10929, 4
      %v10932 = vor.u32 %v10931, %v10927
      %v10933 = vrot.slane %v10932, 4
      %v10935 = vshll.u32 %v10646, 16
      %v10937 = vrot.slane %v10935, 5
      %v10938 = vsel %vm722, %v10933, %v10937
      %v10940 = vshrl.u32 %v10627, 16
      %v10942 = vrot.slane %v10940, 4
      %v10943 = vshll.u32 %v10627, 16
      %v10945 = vrot.slane %v10943, 5
      %v10946 = vor.u32 %v10942, %v10945
      %v10947 = vrot.slane %v10946, 4
      %v10949 = vshll.u32 %v10628, 16
      %v10951 = vrot.slane %v10949, 5
      %v10952 = vsel %vm722, %v10947, %v10951
      %v10953 = vshrl.u32 %v10628, 16
      %v10955 = vrot.slane %v10953, 4
      %v10956 = vor.u32 %v10955, %v10951
      %v10957 = vrot.slane %v10956, 4
      %v10959 = vshll.u32 %v10647, 16
      %v10961 = vrot.slane %v10959, 5
      %v10962 = vsel %vm722, %v10957, %v10961
      %v10964 = vshrl.u32 %v10629, 16
      %v10966 = vrot.slane %v10964, 4
      %v10967 = vshll.u32 %v10629, 16
      %v10969 = vrot.slane %v10967, 5
      %v10970 = vor.u32 %v10966, %v10969
      %v10971 = vrot.slane %v10970, 4
      %v10973 = vshll.u32 %v10630, 16
      %v10975 = vrot.slane %v10973, 5
      %v10976 = vsel %vm722, %v10971, %v10975
      %v10977 = vshrl.u32 %v10630, 16
      %v10979 = vrot.slane %v10977, 4
      %v10980 = vor.u32 %v10979, %v10975
      %v10981 = vrot.slane %v10980, 4
      %v10983 = vshll.u32 %v10648, 16
      %v10985 = vrot.slane %v10983, 5
      %v10986 = vsel %vm722, %v10981, %v10985
      %v10988 = vshrl.u32 %v10631, 16
      %v10990 = vrot.slane %v10988, 4
      %v10991 = vshll.u32 %v10631, 16
      %v10993 = vrot.slane %v10991, 5
      %v10994 = vor.u32 %v10990, %v10993
      %v10995 = vrot.slane %v10994, 4
      %v10997 = vshll.u32 %v10632, 16
      %v10999 = vrot.slane %v10997, 5
      %v11000 = vsel %vm722, %v10995, %v10999
      %v11001 = vshrl.u32 %v10632, 16
      %v11003 = vrot.slane %v11001, 4
      %v11004 = vor.u32 %v11003, %v10999
      %v11005 = vrot.slane %v11004, 4
      %v11007 = vshll.u32 %v10649, 16
      %v11009 = vrot.slane %v11007, 5
      %v11010 = vsel %vm722, %v11005, %v11009
      %v11012 = vshrl.u32 %v10633, 16
      %v11014 = vrot.slane %v11012, 4
      %v11015 = vshll.u32 %v10633, 16
      %v11017 = vrot.slane %v11015, 5
      %v11018 = vor.u32 %v11014, %v11017
      %v11019 = vrot.slane %v11018, 4
      %v11021 = vshll.u32 %v10634, 16
      %v11023 = vrot.slane %v11021, 5
      %v11024 = vsel %vm722, %v11019, %v11023
      %v11025 = vshrl.u32 %v10634, 16
      %v11027 = vrot.slane %v11025, 4
      %v11028 = vor.u32 %v11027, %v11023
      %v11029 = vrot.slane %v11028, 4
      %v11031 = vshll.u32 %v10650, 16
      %v11033 = vrot.slane %v11031, 5
      %v11034 = vsel %vm722, %v11029, %v11033
      %v11035 = vld [vmem:[%s8997] sm:$0xe]
      %v11036 = vld [vmem:[%s8997 + $0xc] sm:$0xe]
      %v11037 = vld [vmem:[%s8997 + $0x18] sm:$0xe]
      %v11038 = vld [vmem:[%s8997 + $0x24] sm:$0xe]
      %v11039 = vld [vmem:[%s8997 + $0x30] sm:$0xe]
      %v11040 = vld [vmem:[%s8997 + $0x3c] sm:$0xe]
      %v11041 = vld [vmem:[%s8997 + $0x48] sm:$0xe]
      %v11042 = vld [vmem:[%s8997 + $0x54] sm:$0xe]
      %v11043 = vld [vmem:[%s8997 + $0x60] sm:$0xe]
      %v11044 = vld [vmem:[%s8997 + $0x6c] sm:$0xe]
      %v11045 = vld [vmem:[%s8997 + $0x78] sm:$0xe]
      %v11046 = vld [vmem:[%s8997 + $0x84] sm:$0xe]
      %v11047 = vld [vmem:[%s8997 + $0x90] sm:$0xe]
      %v11048 = vld [vmem:[%s8997 + $0x9c] sm:$0xe]
      %v11049 = vld [vmem:[%s8997 + $0xa8] sm:$0xe]
      %v11050 = vld [vmem:[%s8997 + $0xb4] sm:$0xe]
      %v11099 = vrot.slane %v11035, 5
      %v11100 = vrot.slane %v11099, 4
      %v11101 = vrot.slane %v10604, 5
      %v11102 = vsel %vm5570, %v11100, %v11101
      %v11103 = vrot.slane %v11101, 4
      %v11104 = vrot.slane %v10635, 5
      %v11105 = vsel %vm5570, %v11103, %v11104
      %v11106 = vrot.slane %v11036, 5
      %v11107 = vrot.slane %v11106, 4
      %v11108 = vrot.slane %v10606, 5
      %v11109 = vsel %vm5570, %v11107, %v11108
      %v11110 = vrot.slane %v11108, 4
      %v11111 = vrot.slane %v10636, 5
      %v11112 = vsel %vm5570, %v11110, %v11111
      %v11113 = vrot.slane %v11037, 5
      %v11114 = vrot.slane %v11113, 4
      %v11115 = vrot.slane %v10608, 5
      %v11116 = vsel %vm5570, %v11114, %v11115
      %v11117 = vrot.slane %v11115, 4
      %v11118 = vrot.slane %v10637, 5
      %v11119 = vsel %vm5570, %v11117, %v11118
      %v11120 = vrot.slane %v11038, 5
      %v11121 = vrot.slane %v11120, 4
      %v11122 = vrot.slane %v10610, 5
      %v11123 = vsel %vm5570, %v11121, %v11122
      %v11124 = vrot.slane %v11122, 4
      %v11125 = vrot.slane %v10638, 5
      %v11126 = vsel %vm5570, %v11124, %v11125
      %v11127 = vrot.slane %v11039, 5
      %v11128 = vrot.slane %v11127, 4
      %v11129 = vrot.slane %v10612, 5
      %v11130 = vsel %vm5570, %v11128, %v11129
      %v11131 = vrot.slane %v11129, 4
      %v11132 = vrot.slane %v10639, 5
      %v11133 = vsel %vm5570, %v11131, %v11132
      %v11134 = vrot.slane %v11040, 5
      %v11135 = vrot.slane %v11134, 4
      %v11136 = vrot.slane %v10614, 5
      %v11137 = vsel %vm5570, %v11135, %v11136
      %v11138 = vrot.slane %v11136, 4
      %v11139 = vrot.slane %v10640, 5
      %v11140 = vsel %vm5570, %v11138, %v11139
      %v11141 = vrot.slane %v11041, 5
      %v11142 = vrot.slane %v11141, 4
      %v11143 = vrot.slane %v10616, 5
      %v11144 = vsel %vm5570, %v11142, %v11143
      %v11145 = vrot.slane %v11143, 4
      %v11146 = vrot.slane %v10641, 5
      %v11147 = vsel %vm5570, %v11145, %v11146
      %v11148 = vrot.slane %v11042, 5
      %v11149 = vrot.slane %v11148, 4
      %v11150 = vrot.slane %v10618, 5
      %v11151 = vsel %vm5570, %v11149, %v11150
      %v11152 = vrot.slane %v11150, 4
      %v11153 = vrot.slane %v10642, 5
      %v11154 = vsel %vm5570, %v11152, %v11153
      %v11155 = vrot.slane %v11043, 5
      %v11156 = vrot.slane %v11155, 4
      %v11157 = vrot.slane %v10620, 5
      %v11158 = vsel %vm5570, %v11156, %v11157
      %v11159 = vrot.slane %v11157, 4
      %v11160 = vrot.slane %v10643, 5
      %v11161 = vsel %vm5570, %v11159, %v11160
      %v11162 = vrot.slane %v11044, 5
      %v11163 = vrot.slane %v11162, 4
      %v11164 = vrot.slane %v10622, 5
      %v11165 = vsel %vm5570, %v11163, %v11164
      %v11166 = vrot.slane %v11164, 4
      %v11167 = vrot.slane %v10644, 5
      %v11168 = vsel %vm5570, %v11166, %v11167
      %v11169 = vrot.slane %v11045, 5
      %v11170 = vrot.slane %v11169, 4
      %v11171 = vrot.slane %v10624, 5
      %v11172 = vsel %vm5570, %v11170, %v11171
      %v11173 = vrot.slane %v11171, 4
      %v11174 = vrot.slane %v10645, 5
      %v11175 = vsel %vm5570, %v11173, %v11174
      %v11176 = vrot.slane %v11046, 5
      %v11177 = vrot.slane %v11176, 4
      %v11178 = vrot.slane %v10626, 5
      %v11179 = vsel %vm5570, %v11177, %v11178
      %v11180 = vrot.slane %v11178, 4
      %v11181 = vrot.slane %v10646, 5
      %v11182 = vsel %vm5570, %v11180, %v11181
      %v11183 = vrot.slane %v11047, 5
      %v11184 = vrot.slane %v11183, 4
      %v11185 = vrot.slane %v10628, 5
      %v11186 = vsel %vm5570, %v11184, %v11185
      %v11187 = vrot.slane %v11185, 4
      %v11188 = vrot.slane %v10647, 5
      %v11189 = vsel %vm5570, %v11187, %v11188
      %v11190 = vrot.slane %v11048, 5
      %v11191 = vrot.slane %v11190, 4
      %v11192 = vrot.slane %v10630, 5
      %v11193 = vsel %vm5570, %v11191, %v11192
      %v11194 = vrot.slane %v11192, 4
      %v11195 = vrot.slane %v10648, 5
      %v11196 = vsel %vm5570, %v11194, %v11195
      %v11197 = vrot.slane %v11049, 5
      %v11198 = vrot.slane %v11197, 4
      %v11199 = vrot.slane %v10632, 5
      %v11200 = vsel %vm5570, %v11198, %v11199
      %v11201 = vrot.slane %v11199, 4
      %v11202 = vrot.slane %v10649, 5
      %v11203 = vsel %vm5570, %v11201, %v11202
      %v11204 = vrot.slane %v11050, 5
      %v11205 = vrot.slane %v11204, 4
      %v11206 = vrot.slane %v10634, 5
      %v11207 = vsel %vm5570, %v11205, %v11206
      %v11208 = vrot.slane %v11206, 4
      %v11209 = vrot.slane %v10650, 5
      %v11210 = vsel %vm5570, %v11208, %v11209
      %v11227 = vunpack.c.l.b16 %v10603
      %v11228 = vunpack.c.l.b16 %v10604
      %v11229 = vunpack.c.l.b16 %v10605
      %v11230 = vunpack.c.l.b16 %v10606
      %v11231 = vunpack.c.l.b16 %v10607
      %v11232 = vunpack.c.l.b16 %v10608
      %v11233 = vunpack.c.l.b16 %v10609
      %v11234 = vunpack.c.l.b16 %v10610
      %v11235 = vunpack.c.l.b16 %v10611
      %v11236 = vunpack.c.l.b16 %v10612
      %v11237 = vunpack.c.l.b16 %v10613
      %v11238 = vunpack.c.l.b16 %v10614
      %v11239 = vunpack.c.l.b16 %v10615
      %v11240 = vunpack.c.l.b16 %v10616
      %v11241 = vunpack.c.l.b16 %v10617
      %v11242 = vunpack.c.l.b16 %v10618
      %v11243 = vunpack.c.l.b16 %v10619
      %v11244 = vunpack.c.l.b16 %v10620
      %v11245 = vunpack.c.l.b16 %v10621
      %v11246 = vunpack.c.l.b16 %v10622
      %v11247 = vunpack.c.l.b16 %v10623
      %v11248 = vunpack.c.l.b16 %v10624
      %v11249 = vunpack.c.l.b16 %v10625
      %v11250 = vunpack.c.l.b16 %v10626
      %v11251 = vunpack.c.l.b16 %v10627
      %v11252 = vunpack.c.l.b16 %v10628
      %v11253 = vunpack.c.l.b16 %v10629
      %v11254 = vunpack.c.l.b16 %v10630
      %v11255 = vunpack.c.l.b16 %v10631
      %v11256 = vunpack.c.l.b16 %v10632
      %v11257 = vunpack.c.l.b16 %v10633
      %v11258 = vunpack.c.l.b16 %v10634
      %v11259 = vpack.c.b16 %v11228, %v11227
      %v11260 = vpack.c.b16 %v11230, %v11229
      %v11261 = vpack.c.b16 %v11232, %v11231
      %v11262 = vpack.c.b16 %v11234, %v11233
      %v11263 = vpack.c.b16 %v11236, %v11235
      %v11264 = vpack.c.b16 %v11238, %v11237
      %v11265 = vpack.c.b16 %v11240, %v11239
      %v11266 = vpack.c.b16 %v11242, %v11241
      %v11267 = vpack.c.b16 %v11244, %v11243
      %v11268 = vpack.c.b16 %v11246, %v11245
      %v11269 = vpack.c.b16 %v11248, %v11247
      %v11270 = vpack.c.b16 %v11250, %v11249
      %v11271 = vpack.c.b16 %v11252, %v11251
      %v11272 = vpack.c.b16 %v11254, %v11253
      %v11273 = vpack.c.b16 %v11256, %v11255
      %v11274 = vpack.c.b16 %v11258, %v11257
      %v11275 = vunpack.c.l.b16 %v10664
      %v11276 = vunpack.c.l.b16 %v10674
      %v11277 = vunpack.c.l.b16 %v10688
      %v11278 = vunpack.c.l.b16 %v10698
      %v11279 = vunpack.c.l.b16 %v10712
      %v11280 = vunpack.c.l.b16 %v10722
      %v11281 = vunpack.c.l.b16 %v10736
      %v11282 = vunpack.c.l.b16 %v10746
      %v11283 = vunpack.c.l.b16 %v10760
      %v11284 = vunpack.c.l.b16 %v10770
      %v11285 = vunpack.c.l.b16 %v10784
      %v11286 = vunpack.c.l.b16 %v10794
      %v11287 = vunpack.c.l.b16 %v10808
      %v11288 = vunpack.c.l.b16 %v10818
      %v11289 = vunpack.c.l.b16 %v10832
      %v11290 = vunpack.c.l.b16 %v10842
      %v11291 = vunpack.c.l.b16 %v10856
      %v11292 = vunpack.c.l.b16 %v10866
      %v11293 = vunpack.c.l.b16 %v10880
      %v11294 = vunpack.c.l.b16 %v10890
      %v11295 = vunpack.c.l.b16 %v10904
      %v11296 = vunpack.c.l.b16 %v10914
      %v11297 = vunpack.c.l.b16 %v10928
      %v11298 = vunpack.c.l.b16 %v10938
      %v11299 = vunpack.c.l.b16 %v10952
      %v11300 = vunpack.c.l.b16 %v10962
      %v11301 = vunpack.c.l.b16 %v10976
      %v11302 = vunpack.c.l.b16 %v10986
      %v11303 = vunpack.c.l.b16 %v11000
      %v11304 = vunpack.c.l.b16 %v11010
      %v11305 = vunpack.c.l.b16 %v11024
      %v11306 = vunpack.c.l.b16 %v11034
      %v11307 = vpack.c.b16 %v11276, %v11275
      %v11308 = vpack.c.b16 %v11278, %v11277
      %v11309 = vpack.c.b16 %v11280, %v11279
      %v11310 = vpack.c.b16 %v11282, %v11281
      %v11311 = vpack.c.b16 %v11284, %v11283
      %v11312 = vpack.c.b16 %v11286, %v11285
      %v11313 = vpack.c.b16 %v11288, %v11287
      %v11314 = vpack.c.b16 %v11290, %v11289
      %v11315 = vpack.c.b16 %v11292, %v11291
      %v11316 = vpack.c.b16 %v11294, %v11293
      %v11317 = vpack.c.b16 %v11296, %v11295
      %v11318 = vpack.c.b16 %v11298, %v11297
      %v11319 = vpack.c.b16 %v11300, %v11299
      %v11320 = vpack.c.b16 %v11302, %v11301
      %v11321 = vpack.c.b16 %v11304, %v11303
      %v11322 = vpack.c.b16 %v11306, %v11305
      %11323 = vrot.lane.b32.xlu0 %v11307, 4
      %v11324 = vpop.permute.xlu0 %11323
      %11325 = vrot.lane.b32.xlu0 %v11308, 4
      %v11326 = vpop.permute.xlu0 %11325
      %11327 = vrot.lane.b32.xlu0 %v11309, 4
      %v11328 = vpop.permute.xlu0 %11327
      %11329 = vrot.lane.b32.xlu0 %v11310, 4
      %v11330 = vpop.permute.xlu0 %11329
      %11331 = vrot.lane.b32.xlu0 %v11311, 4
      %v11332 = vpop.permute.xlu0 %11331
      %11333 = vrot.lane.b32.xlu0 %v11312, 4
      %v11334 = vpop.permute.xlu0 %11333
      %11335 = vrot.lane.b32.xlu0 %v11313, 4
      %v11336 = vpop.permute.xlu0 %11335
      %11337 = vrot.lane.b32.xlu0 %v11314, 4
      %v11338 = vpop.permute.xlu0 %11337
      %11339 = vrot.lane.b32.xlu0 %v11315, 4
      %v11340 = vpop.permute.xlu0 %11339
      %11341 = vrot.lane.b32.xlu0 %v11316, 4
      %v11342 = vpop.permute.xlu0 %11341
      %11343 = vrot.lane.b32.xlu0 %v11317, 4
      %v11344 = vpop.permute.xlu0 %11343
      %11345 = vrot.lane.b32.xlu0 %v11318, 4
      %v11346 = vpop.permute.xlu0 %11345
      %11347 = vrot.lane.b32.xlu0 %v11319, 4
      %v11348 = vpop.permute.xlu0 %11347
      %11349 = vrot.lane.b32.xlu0 %v11320, 4
      %v11350 = vpop.permute.xlu0 %11349
      %11351 = vrot.lane.b32.xlu0 %v11321, 4
      %v11352 = vpop.permute.xlu0 %11351
      %11353 = vrot.lane.b32.xlu0 %v11322, 4
      %v11354 = vpop.permute.xlu0 %11353
      %v11355 = vunpack.c.l.b16 %v11102
      %v11356 = vunpack.c.l.b16 %v11105
      %v11357 = vunpack.c.l.b16 %v11109
      %v11358 = vunpack.c.l.b16 %v11112
      %v11359 = vunpack.c.l.b16 %v11116
      %v11360 = vunpack.c.l.b16 %v11119
      %v11361 = vunpack.c.l.b16 %v11123
      %v11362 = vunpack.c.l.b16 %v11126
      %v11363 = vunpack.c.l.b16 %v11130
      %v11364 = vunpack.c.l.b16 %v11133
      %v11365 = vunpack.c.l.b16 %v11137
      %v11366 = vunpack.c.l.b16 %v11140
      %v11367 = vunpack.c.l.b16 %v11144
      %v11368 = vunpack.c.l.b16 %v11147
      %v11369 = vunpack.c.l.b16 %v11151
      %v11370 = vunpack.c.l.b16 %v11154
      %v11371 = vunpack.c.l.b16 %v11158
      %v11372 = vunpack.c.l.b16 %v11161
      %v11373 = vunpack.c.l.b16 %v11165
      %v11374 = vunpack.c.l.b16 %v11168
      %v11375 = vunpack.c.l.b16 %v11172
      %v11376 = vunpack.c.l.b16 %v11175
      %v11377 = vunpack.c.l.b16 %v11179
      %v11378 = vunpack.c.l.b16 %v11182
      %v11379 = vunpack.c.l.b16 %v11186
      %v11380 = vunpack.c.l.b16 %v11189
      %v11381 = vunpack.c.l.b16 %v11193
      %v11382 = vunpack.c.l.b16 %v11196
      %v11383 = vunpack.c.l.b16 %v11200
      %v11384 = vunpack.c.l.b16 %v11203
      %v11385 = vunpack.c.l.b16 %v11207
      %v11386 = vunpack.c.l.b16 %v11210
      %v11387 = vpack.c.b16 %v11356, %v11355
      %v11388 = vpack.c.b16 %v11358, %v11357
      %v11389 = vpack.c.b16 %v11360, %v11359
      %v11390 = vpack.c.b16 %v11362, %v11361
      %v11391 = vpack.c.b16 %v11364, %v11363
      %v11392 = vpack.c.b16 %v11366, %v11365
      %v11393 = vpack.c.b16 %v11368, %v11367
      %v11394 = vpack.c.b16 %v11370, %v11369
      %v11395 = vpack.c.b16 %v11372, %v11371
      %v11396 = vpack.c.b16 %v11374, %v11373
      %v11397 = vpack.c.b16 %v11376, %v11375
      %v11398 = vpack.c.b16 %v11378, %v11377
      %v11399 = vpack.c.b16 %v11380, %v11379
      %v11400 = vpack.c.b16 %v11382, %v11381
      %v11401 = vpack.c.b16 %v11384, %v11383
      %v11402 = vpack.c.b16 %v11386, %v11385
      %11403 = vrot.lane.b32.xlu0 %v11387, 8
      %v11404 = vpop.permute.xlu0 %11403
      %11405 = vrot.lane.b32.xlu0 %v11388, 8
      %v11406 = vpop.permute.xlu0 %11405
      %11407 = vrot.lane.b32.xlu0 %v11389, 8
      %v11408 = vpop.permute.xlu0 %11407
      %11409 = vrot.lane.b32.xlu0 %v11390, 8
      %v11410 = vpop.permute.xlu0 %11409
      %11411 = vrot.lane.b32.xlu0 %v11391, 8
      %v11412 = vpop.permute.xlu0 %11411
      %11413 = vrot.lane.b32.xlu0 %v11392, 8
      %v11414 = vpop.permute.xlu0 %11413
      %11415 = vrot.lane.b32.xlu0 %v11393, 8
      %v11416 = vpop.permute.xlu0 %11415
      %11417 = vrot.lane.b32.xlu0 %v11394, 8
      %v11418 = vpop.permute.xlu0 %11417
      %11419 = vrot.lane.b32.xlu0 %v11395, 8
      %v11420 = vpop.permute.xlu0 %11419
      %11421 = vrot.lane.b32.xlu0 %v11396, 8
      %v11422 = vpop.permute.xlu0 %11421
      %11423 = vrot.lane.b32.xlu0 %v11397, 8
      %v11424 = vpop.permute.xlu0 %11423
      %11425 = vrot.lane.b32.xlu0 %v11398, 8
      %v11426 = vpop.permute.xlu0 %11425
      %11427 = vrot.lane.b32.xlu0 %v11399, 8
      %v11428 = vpop.permute.xlu0 %11427
      %11429 = vrot.lane.b32.xlu0 %v11400, 8
      %v11430 = vpop.permute.xlu0 %11429
      %11431 = vrot.lane.b32.xlu0 %v11401, 8
      %v11432 = vpop.permute.xlu0 %11431
      %11433 = vrot.lane.b32.xlu0 %v11402, 8
      %v11434 = vpop.permute.xlu0 %11433
      %v11437 = vsel %vm10521, %v11259, %v11324
      %v11440 = vsel %vm10521, %v11260, %v11326
      %v11443 = vsel %vm10521, %v11261, %v11328
      %v11446 = vsel %vm10521, %v11262, %v11330
      %v11449 = vsel %vm10521, %v11263, %v11332
      %v11452 = vsel %vm10521, %v11264, %v11334
      %v11455 = vsel %vm10521, %v11265, %v11336
      %v11458 = vsel %vm10521, %v11266, %v11338
      %v11461 = vsel %vm10521, %v11267, %v11340
      %v11464 = vsel %vm10521, %v11268, %v11342
      %v11467 = vsel %vm10521, %v11269, %v11344
      %v11470 = vsel %vm10521, %v11270, %v11346
      %v11473 = vsel %vm10521, %v11271, %v11348
      %v11476 = vsel %vm10521, %v11272, %v11350
      %v11479 = vsel %vm10521, %v11273, %v11352
      %v11482 = vsel %vm10521, %v11274, %v11354
      %v11484 = vsel %vm1052, %v11437, %v11404
      %v11486 = vsel %vm1052, %v11440, %v11406
      %v11488 = vsel %vm1052, %v11443, %v11408
      %v11490 = vsel %vm1052, %v11446, %v11410
      %v11492 = vsel %vm1052, %v11449, %v11412
      %v11494 = vsel %vm1052, %v11452, %v11414
      %v11496 = vsel %vm1052, %v11455, %v11416
      %v11498 = vsel %vm1052, %v11458, %v11418
      %v11500 = vsel %vm1052, %v11461, %v11420
      %v11502 = vsel %vm1052, %v11464, %v11422
      %v11504 = vsel %vm1052, %v11467, %v11424
      %v11506 = vsel %vm1052, %v11470, %v11426
      %v11508 = vsel %vm1052, %v11473, %v11428
      %v11510 = vsel %vm1052, %v11476, %v11430
      %v11512 = vsel %vm1052, %v11479, %v11432
      %v11514 = vsel %vm1052, %v11482, %v11434
      %s11515 = scalar_lea.vmem %s10, 2
      %v11516 = vld [vmem:[%s11515] sm:$0x3]
      %vm11517 = vcmask 97280
      %v11519 = vsel %vm11517, %v11516, 0
      %v11521 = vsel %vm11517, %v11484, 0
      %v11523 = vsel %vm11517, %v11486, 0
      %v11525 = vsel %vm11517, %v11488, 0
      %v11527 = vsel %vm11517, %v11490, 0
      %v11529 = vsel %vm11517, %v11492, 0
      %v11531 = vsel %vm11517, %v11494, 0
      %v11533 = vsel %vm11517, %v11496, 0
      %v11535 = vsel %vm11517, %v11498, 0
      %v11537 = vsel %vm11517, %v11500, 0
      %v11539 = vsel %vm11517, %v11502, 0
      %v11541 = vsel %vm11517, %v11504, 0
      %v11543 = vsel %vm11517, %v11506, 0
      %v11545 = vsel %vm11517, %v11508, 0
      %v11547 = vsel %vm11517, %v11510, 0
      %v11549 = vsel %vm11517, %v11512, 0
      %v11551 = vsel %vm11517, %v11514, 0
      %11553 = vmatprep.subr.bf16.mxu0 0
      %11554 = vmatpush1.bf16.xpose.msra.mxu0 %v11535
      %11555 = vmatprep.subr.bf16.mxu0 0
      %11556 = vmatpush1.bf16.xpose.msra.mxu0 %v11533
      %11557 = vmatprep.subr.bf16.mxu0 0
      %11558 = vmatpush1.bf16.xpose.msra.mxu0 %v11531
      %11559 = vmatprep.subr.bf16.mxu0 0
      %11560 = vmatpush1.bf16.xpose.msra.mxu0 %v11529
      %11561 = vmatprep.subr.bf16.mxu0 0
      %11562 = vmatpush1.bf16.xpose.msra.mxu0 %v11527
      %11563 = vmatprep.subr.bf16.mxu0 0
      %11564 = vmatpush1.bf16.xpose.msra.mxu0 %v11525
      %11565 = vmatprep.subr.bf16.mxu0 0
      %11566 = vmatpush1.bf16.xpose.msra.mxu0 %v11523
      %11567 = vmatprep.subr.bf16.mxu0 0
      %11568 = vmatpush1.bf16.xpose.msra.mxu0 %v11521
      %11569 = vmatprep.subr.bf16.mxu0 0
      %11570 = vmatpush2.bf16.xpose.msra.mxu0 %v11551
      %11571 = vmatprep.subr.bf16.mxu0 0
      %11572 = vmatpush2.bf16.xpose.msra.mxu0 %v11549
      %11573 = vmatprep.subr.bf16.mxu0 0
      %11574 = vmatpush2.bf16.xpose.msra.mxu0 %v11547
      %11575 = vmatprep.subr.bf16.mxu0 0
      %11576 = vmatpush2.bf16.xpose.msra.mxu0 %v11545
      %11577 = vmatprep.subr.bf16.mxu0 0
      %11578 = vmatpush2.bf16.xpose.msra.mxu0 %v11543
      %11579 = vmatprep.subr.bf16.mxu0 0
      %11580 = vmatpush2.bf16.xpose.msra.mxu0 %v11541
      %11581 = vmatprep.subr.bf16.mxu0 0
      %11582 = vmatpush2.bf16.xpose.msra.mxu0 %v11539
      %11583 = vmatprep.subr.bf16.mxu0 0
      %11584 = vmatpush2.bf16.xpose.msra.mxu0 %v11537
      %11585 = vmatprep.mubr.bf16.mxu0 0
      %11586 = vmatmul.mubr.bf16.gmra.mxu0 %v11519
      %v11587 = vpop.f32.mrf.mxu0
      %v11588 = vadd.f32 0.0, %v11587
      %v11589 = vpop.f32.mrf.mxu0
      %v11590 = vadd.f32 0.0, %v11589
      %v11591 = vpop.f32.mrf.mxu0
      %v11592 = vpop.f32.mrf.mxu0
      %11593 = vdwg.mxu0
      %v11595 = vsel %vm11517, %v10602, 0
      %v11597 = vsel %vm11517, %v10571, 0
      %v11599 = vsel %vm11517, %v10573, 0
      %v11601 = vsel %vm11517, %v10575, 0
      %v11603 = vsel %vm11517, %v10577, 0
      %v11605 = vsel %vm11517, %v10579, 0
      %v11607 = vsel %vm11517, %v10581, 0
      %v11609 = vsel %vm11517, %v10583, 0
      %v11611 = vsel %vm11517, %v10585, 0
      %v11613 = vsel %vm11517, %v10587, 0
      %v11615 = vsel %vm11517, %v10589, 0
      %v11617 = vsel %vm11517, %v10591, 0
      %v11619 = vsel %vm11517, %v10593, 0
      %v11621 = vsel %vm11517, %v10595, 0
      %v11623 = vsel %vm11517, %v10597, 0
      %v11625 = vsel %vm11517, %v10599, 0
      %v11627 = vsel %vm11517, %v10601, 0
      %11629 = vmatprep.subr.bf16.mxu0 0
      %11630 = vmatpush1.bf16.xpose.msra.mxu0 %v11611
      %11631 = vmatprep.subr.bf16.mxu0 0
      %11632 = vmatpush1.bf16.xpose.msra.mxu0 %v11609
      %11633 = vmatprep.subr.bf16.mxu0 0
      %11634 = vmatpush1.bf16.xpose.msra.mxu0 %v11607
      %11635 = vmatprep.subr.bf16.mxu0 0
      %11636 = vmatpush1.bf16.xpose.msra.mxu0 %v11605
      %11637 = vmatprep.subr.bf16.mxu0 0
      %11638 = vmatpush1.bf16.xpose.msra.mxu0 %v11603
      %11639 = vmatprep.subr.bf16.mxu0 0
      %11640 = vmatpush1.bf16.xpose.msra.mxu0 %v11601
      %11641 = vmatprep.subr.bf16.mxu0 0
      %11642 = vmatpush1.bf16.xpose.msra.mxu0 %v11599
      %11643 = vmatprep.subr.bf16.mxu0 0
      %11644 = vmatpush1.bf16.xpose.msra.mxu0 %v11597
      %11645 = vmatprep.subr.bf16.mxu0 0
      %11646 = vmatpush2.bf16.xpose.msra.mxu0 %v11627
      %11647 = vmatprep.subr.bf16.mxu0 0
      %11648 = vmatpush2.bf16.xpose.msra.mxu0 %v11625
      %11649 = vmatprep.subr.bf16.mxu0 0
      %11650 = vmatpush2.bf16.xpose.msra.mxu0 %v11623
      %11651 = vmatprep.subr.bf16.mxu0 0
      %11652 = vmatpush2.bf16.xpose.msra.mxu0 %v11621
      %11653 = vmatprep.subr.bf16.mxu0 0
      %11654 = vmatpush2.bf16.xpose.msra.mxu0 %v11619
      %11655 = vmatprep.subr.bf16.mxu0 0
      %11656 = vmatpush2.bf16.xpose.msra.mxu0 %v11617
      %11657 = vmatprep.subr.bf16.mxu0 0
      %11658 = vmatpush2.bf16.xpose.msra.mxu0 %v11615
      %11659 = vmatprep.subr.bf16.mxu0 0
      %11660 = vmatpush2.bf16.xpose.msra.mxu0 %v11613
      %11661 = vmatprep.mubr.bf16.mxu0 0
      %11662 = vmatmul.mubr.bf16.gmra.mxu0 %v11595
      %v11663 = vpop.f32.mrf.mxu0
      %v11664 = vadd.f32 %v11588, %v11663
      %v11665 = vpop.f32.mrf.mxu0
      %v11666 = vadd.f32 %v11590, %v11665
      %v11667 = vpop.f32.mrf.mxu0
      %v11668 = vpop.f32.mrf.mxu0
      %11669 = vdwg.mxu0
      %s11670 = scalar_lea.vmem [#allocation3], 24
      %v11671 = vld [vmem:[%s11670] sm:$0xf]
      %v11672 = vld [vmem:[%s11670 + $0x4] sm:$0xf]
      %v11673 = vld [vmem:[%s11670 + $0xc] sm:$0xf]
      %v11674 = vld [vmem:[%s11670 + $0x10] sm:$0xf]
      %v11675 = vld [vmem:[%s11670 + $0x18] sm:$0xf]
      %v11676 = vld [vmem:[%s11670 + $0x1c] sm:$0xf]
      %v11677 = vld [vmem:[%s11670 + $0x24] sm:$0xf]
      %v11678 = vld [vmem:[%s11670 + $0x28] sm:$0xf]
      %v11679 = vld [vmem:[%s11670 + $0x30] sm:$0xf]
      %v11680 = vld [vmem:[%s11670 + $0x34] sm:$0xf]
      %v11681 = vld [vmem:[%s11670 + $0x3c] sm:$0xf]
      %v11682 = vld [vmem:[%s11670 + $0x40] sm:$0xf]
      %v11683 = vld [vmem:[%s11670 + $0x48] sm:$0xf]
      %v11684 = vld [vmem:[%s11670 + $0x4c] sm:$0xf]
      %v11685 = vld [vmem:[%s11670 + $0x54] sm:$0xf]
      %v11686 = vld [vmem:[%s11670 + $0x58] sm:$0xf]
      %v11687 = vld [vmem:[%s11670 + $0x60] sm:$0xf]
      %v11688 = vld [vmem:[%s11670 + $0x64] sm:$0xf]
      %v11689 = vld [vmem:[%s11670 + $0x6c] sm:$0xf]
      %v11690 = vld [vmem:[%s11670 + $0x70] sm:$0xf]
      %v11691 = vld [vmem:[%s11670 + $0x78] sm:$0xf]
      %v11692 = vld [vmem:[%s11670 + $0x7c] sm:$0xf]
      %v11693 = vld [vmem:[%s11670 + $0x84] sm:$0xf]
      %v11694 = vld [vmem:[%s11670 + $0x88] sm:$0xf]
      %v11695 = vld [vmem:[%s11670 + $0x90] sm:$0xf]
      %v11696 = vld [vmem:[%s11670 + $0x94] sm:$0xf]
      %v11697 = vld [vmem:[%s11670 + $0x9c] sm:$0xf]
      %v11698 = vld [vmem:[%s11670 + $0xa0] sm:$0xf]
      %v11699 = vld [vmem:[%s11670 + $0xa8] sm:$0xf]
      %v11700 = vld [vmem:[%s11670 + $0xac] sm:$0xf]
      %v11701 = vld [vmem:[%s11670 + $0xb4] sm:$0xf]
      %v11702 = vld [vmem:[%s11670 + $0xb8] sm:$0xf]
      %v11703 = vld [vmem:[%s11670 + $0x8] sm:$0x1]
      %v11704 = vld [vmem:[%s11670 + $0x14] sm:$0x1]
      %v11705 = vld [vmem:[%s11670 + $0x20] sm:$0x1]
      %v11706 = vld [vmem:[%s11670 + $0x2c] sm:$0x1]
      %v11707 = vld [vmem:[%s11670 + $0x38] sm:$0x1]
      %v11708 = vld [vmem:[%s11670 + $0x44] sm:$0x1]
      %v11709 = vld [vmem:[%s11670 + $0x50] sm:$0x1]
      %v11710 = vld [vmem:[%s11670 + $0x5c] sm:$0x1]
      %v11711 = vld [vmem:[%s11670 + $0x68] sm:$0x1]
      %v11712 = vld [vmem:[%s11670 + $0x74] sm:$0x1]
      %v11713 = vld [vmem:[%s11670 + $0x80] sm:$0x1]
      %v11714 = vld [vmem:[%s11670 + $0x8c] sm:$0x1]
      %v11715 = vld [vmem:[%s11670 + $0x98] sm:$0x1]
      %v11716 = vld [vmem:[%s11670 + $0xa4] sm:$0x1]
      %v11717 = vld [vmem:[%s11670 + $0xb0] sm:$0x1]
      %v11718 = vld [vmem:[%s11670 + $0xbc] sm:$0x1]
      %v11720 = vshrl.u32 %v11671, 16
      %v11722 = vrot.slane %v11720, 4
      %v11723 = vshll.u32 %v11671, 16
      %v11725 = vrot.slane %v11723, 5
      %v11726 = vor.u32 %v11722, %v11725
      %v11727 = vrot.slane %v11726, 4
      %v11729 = vshll.u32 %v11672, 16
      %v11731 = vrot.slane %v11729, 5
      %v11732 = vsel %vm722, %v11727, %v11731
      %v11733 = vshrl.u32 %v11672, 16
      %v11735 = vrot.slane %v11733, 4
      %v11736 = vor.u32 %v11735, %v11731
      %v11737 = vrot.slane %v11736, 4
      %v11739 = vshll.u32 %v11703, 16
      %v11741 = vrot.slane %v11739, 5
      %v11742 = vsel %vm722, %v11737, %v11741
      %v11744 = vshrl.u32 %v11673, 16
      %v11746 = vrot.slane %v11744, 4
      %v11747 = vshll.u32 %v11673, 16
      %v11749 = vrot.slane %v11747, 5
      %v11750 = vor.u32 %v11746, %v11749
      %v11751 = vrot.slane %v11750, 4
      %v11753 = vshll.u32 %v11674, 16
      %v11755 = vrot.slane %v11753, 5
      %v11756 = vsel %vm722, %v11751, %v11755
      %v11757 = vshrl.u32 %v11674, 16
      %v11759 = vrot.slane %v11757, 4
      %v11760 = vor.u32 %v11759, %v11755
      %v11761 = vrot.slane %v11760, 4
      %v11763 = vshll.u32 %v11704, 16
      %v11765 = vrot.slane %v11763, 5
      %v11766 = vsel %vm722, %v11761, %v11765
      %v11768 = vshrl.u32 %v11675, 16
      %v11770 = vrot.slane %v11768, 4
      %v11771 = vshll.u32 %v11675, 16
      %v11773 = vrot.slane %v11771, 5
      %v11774 = vor.u32 %v11770, %v11773
      %v11775 = vrot.slane %v11774, 4
      %v11777 = vshll.u32 %v11676, 16
      %v11779 = vrot.slane %v11777, 5
      %v11780 = vsel %vm722, %v11775, %v11779
      %v11781 = vshrl.u32 %v11676, 16
      %v11783 = vrot.slane %v11781, 4
      %v11784 = vor.u32 %v11783, %v11779
      %v11785 = vrot.slane %v11784, 4
      %v11787 = vshll.u32 %v11705, 16
      %v11789 = vrot.slane %v11787, 5
      %v11790 = vsel %vm722, %v11785, %v11789
      %v11792 = vshrl.u32 %v11677, 16
      %v11794 = vrot.slane %v11792, 4
      %v11795 = vshll.u32 %v11677, 16
      %v11797 = vrot.slane %v11795, 5
      %v11798 = vor.u32 %v11794, %v11797
      %v11799 = vrot.slane %v11798, 4
      %v11801 = vshll.u32 %v11678, 16
      %v11803 = vrot.slane %v11801, 5
      %v11804 = vsel %vm722, %v11799, %v11803
      %v11805 = vshrl.u32 %v11678, 16
      %v11807 = vrot.slane %v11805, 4
      %v11808 = vor.u32 %v11807, %v11803
      %v11809 = vrot.slane %v11808, 4
      %v11811 = vshll.u32 %v11706, 16
      %v11813 = vrot.slane %v11811, 5
      %v11814 = vsel %vm722, %v11809, %v11813
      %v11816 = vshrl.u32 %v11679, 16
      %v11818 = vrot.slane %v11816, 4
      %v11819 = vshll.u32 %v11679, 16
      %v11821 = vrot.slane %v11819, 5
      %v11822 = vor.u32 %v11818, %v11821
      %v11823 = vrot.slane %v11822, 4
      %v11825 = vshll.u32 %v11680, 16
      %v11827 = vrot.slane %v11825, 5
      %v11828 = vsel %vm722, %v11823, %v11827
      %v11829 = vshrl.u32 %v11680, 16
      %v11831 = vrot.slane %v11829, 4
      %v11832 = vor.u32 %v11831, %v11827
      %v11833 = vrot.slane %v11832, 4
      %v11835 = vshll.u32 %v11707, 16
      %v11837 = vrot.slane %v11835, 5
      %v11838 = vsel %vm722, %v11833, %v11837
      %v11840 = vshrl.u32 %v11681, 16
      %v11842 = vrot.slane %v11840, 4
      %v11843 = vshll.u32 %v11681, 16
      %v11845 = vrot.slane %v11843, 5
      %v11846 = vor.u32 %v11842, %v11845
      %v11847 = vrot.slane %v11846, 4
      %v11849 = vshll.u32 %v11682, 16
      %v11851 = vrot.slane %v11849, 5
      %v11852 = vsel %vm722, %v11847, %v11851
      %v11853 = vshrl.u32 %v11682, 16
      %v11855 = vrot.slane %v11853, 4
      %v11856 = vor.u32 %v11855, %v11851
      %v11857 = vrot.slane %v11856, 4
      %v11859 = vshll.u32 %v11708, 16
      %v11861 = vrot.slane %v11859, 5
      %v11862 = vsel %vm722, %v11857, %v11861
      %v11864 = vshrl.u32 %v11683, 16
      %v11866 = vrot.slane %v11864, 4
      %v11867 = vshll.u32 %v11683, 16
      %v11869 = vrot.slane %v11867, 5
      %v11870 = vor.u32 %v11866, %v11869
      %v11871 = vrot.slane %v11870, 4
      %v11873 = vshll.u32 %v11684, 16
      %v11875 = vrot.slane %v11873, 5
      %v11876 = vsel %vm722, %v11871, %v11875
      %v11877 = vshrl.u32 %v11684, 16
      %v11879 = vrot.slane %v11877, 4
      %v11880 = vor.u32 %v11879, %v11875
      %v11881 = vrot.slane %v11880, 4
      %v11883 = vshll.u32 %v11709, 16
      %v11885 = vrot.slane %v11883, 5
      %v11886 = vsel %vm722, %v11881, %v11885
      %v11888 = vshrl.u32 %v11685, 16
      %v11890 = vrot.slane %v11888, 4
      %v11891 = vshll.u32 %v11685, 16
      %v11893 = vrot.slane %v11891, 5
      %v11894 = vor.u32 %v11890, %v11893
      %v11895 = vrot.slane %v11894, 4
      %v11897 = vshll.u32 %v11686, 16
      %v11899 = vrot.slane %v11897, 5
      %v11900 = vsel %vm722, %v11895, %v11899
      %v11901 = vshrl.u32 %v11686, 16
      %v11903 = vrot.slane %v11901, 4
      %v11904 = vor.u32 %v11903, %v11899
      %v11905 = vrot.slane %v11904, 4
      %v11907 = vshll.u32 %v11710, 16
      %v11909 = vrot.slane %v11907, 5
      %v11910 = vsel %vm722, %v11905, %v11909
      %v11912 = vshrl.u32 %v11687, 16
      %v11914 = vrot.slane %v11912, 4
      %v11915 = vshll.u32 %v11687, 16
      %v11917 = vrot.slane %v11915, 5
      %v11918 = vor.u32 %v11914, %v11917
      %v11919 = vrot.slane %v11918, 4
      %v11921 = vshll.u32 %v11688, 16
      %v11923 = vrot.slane %v11921, 5
      %v11924 = vsel %vm722, %v11919, %v11923
      %v11925 = vshrl.u32 %v11688, 16
      %v11927 = vrot.slane %v11925, 4
      %v11928 = vor.u32 %v11927, %v11923
      %v11929 = vrot.slane %v11928, 4
      %v11931 = vshll.u32 %v11711, 16
      %v11933 = vrot.slane %v11931, 5
      %v11934 = vsel %vm722, %v11929, %v11933
      %v11936 = vshrl.u32 %v11689, 16
      %v11938 = vrot.slane %v11936, 4
      %v11939 = vshll.u32 %v11689, 16
      %v11941 = vrot.slane %v11939, 5
      %v11942 = vor.u32 %v11938, %v11941
      %v11943 = vrot.slane %v11942, 4
      %v11945 = vshll.u32 %v11690, 16
      %v11947 = vrot.slane %v11945, 5
      %v11948 = vsel %vm722, %v11943, %v11947
      %v11949 = vshrl.u32 %v11690, 16
      %v11951 = vrot.slane %v11949, 4
      %v11952 = vor.u32 %v11951, %v11947
      %v11953 = vrot.slane %v11952, 4
      %v11955 = vshll.u32 %v11712, 16
      %v11957 = vrot.slane %v11955, 5
      %v11958 = vsel %vm722, %v11953, %v11957
      %v11960 = vshrl.u32 %v11691, 16
      %v11962 = vrot.slane %v11960, 4
      %v11963 = vshll.u32 %v11691, 16
      %v11965 = vrot.slane %v11963, 5
      %v11966 = vor.u32 %v11962, %v11965
      %v11967 = vrot.slane %v11966, 4
      %v11969 = vshll.u32 %v11692, 16
      %v11971 = vrot.slane %v11969, 5
      %v11972 = vsel %vm722, %v11967, %v11971
      %v11973 = vshrl.u32 %v11692, 16
      %v11975 = vrot.slane %v11973, 4
      %v11976 = vor.u32 %v11975, %v11971
      %v11977 = vrot.slane %v11976, 4
      %v11979 = vshll.u32 %v11713, 16
      %v11981 = vrot.slane %v11979, 5
      %v11982 = vsel %vm722, %v11977, %v11981
      %v11984 = vshrl.u32 %v11693, 16
      %v11986 = vrot.slane %v11984, 4
      %v11987 = vshll.u32 %v11693, 16
      %v11989 = vrot.slane %v11987, 5
      %v11990 = vor.u32 %v11986, %v11989
      %v11991 = vrot.slane %v11990, 4
      %v11993 = vshll.u32 %v11694, 16
      %v11995 = vrot.slane %v11993, 5
      %v11996 = vsel %vm722, %v11991, %v11995
      %v11997 = vshrl.u32 %v11694, 16
      %v11999 = vrot.slane %v11997, 4
      %v12000 = vor.u32 %v11999, %v11995
      %v12001 = vrot.slane %v12000, 4
      %v12003 = vshll.u32 %v11714, 16
      %v12005 = vrot.slane %v12003, 5
      %v12006 = vsel %vm722, %v12001, %v12005
      %v12008 = vshrl.u32 %v11695, 16
      %v12010 = vrot.slane %v12008, 4
      %v12011 = vshll.u32 %v11695, 16
      %v12013 = vrot.slane %v12011, 5
      %v12014 = vor.u32 %v12010, %v12013
      %v12015 = vrot.slane %v12014, 4
      %v12017 = vshll.u32 %v11696, 16
      %v12019 = vrot.slane %v12017, 5
      %v12020 = vsel %vm722, %v12015, %v12019
      %v12021 = vshrl.u32 %v11696, 16
      %v12023 = vrot.slane %v12021, 4
      %v12024 = vor.u32 %v12023, %v12019
      %v12025 = vrot.slane %v12024, 4
      %v12027 = vshll.u32 %v11715, 16
      %v12029 = vrot.slane %v12027, 5
      %v12030 = vsel %vm722, %v12025, %v12029
      %v12032 = vshrl.u32 %v11697, 16
      %v12034 = vrot.slane %v12032, 4
      %v12035 = vshll.u32 %v11697, 16
      %v12037 = vrot.slane %v12035, 5
      %v12038 = vor.u32 %v12034, %v12037
      %v12039 = vrot.slane %v12038, 4
      %v12041 = vshll.u32 %v11698, 16
      %v12043 = vrot.slane %v12041, 5
      %v12044 = vsel %vm722, %v12039, %v12043
      %v12045 = vshrl.u32 %v11698, 16
      %v12047 = vrot.slane %v12045, 4
      %v12048 = vor.u32 %v12047, %v12043
      %v12049 = vrot.slane %v12048, 4
      %v12051 = vshll.u32 %v11716, 16
      %v12053 = vrot.slane %v12051, 5
      %v12054 = vsel %vm722, %v12049, %v12053
      %v12056 = vshrl.u32 %v11699, 16
      %v12058 = vrot.slane %v12056, 4
      %v12059 = vshll.u32 %v11699, 16
      %v12061 = vrot.slane %v12059, 5
      %v12062 = vor.u32 %v12058, %v12061
      %v12063 = vrot.slane %v12062, 4
      %v12065 = vshll.u32 %v11700, 16
      %v12067 = vrot.slane %v12065, 5
      %v12068 = vsel %vm722, %v12063, %v12067
      %v12069 = vshrl.u32 %v11700, 16
      %v12071 = vrot.slane %v12069, 4
      %v12072 = vor.u32 %v12071, %v12067
      %v12073 = vrot.slane %v12072, 4
      %v12075 = vshll.u32 %v11717, 16
      %v12077 = vrot.slane %v12075, 5
      %v12078 = vsel %vm722, %v12073, %v12077
      %v12080 = vshrl.u32 %v11701, 16
      %v12082 = vrot.slane %v12080, 4
      %v12083 = vshll.u32 %v11701, 16
      %v12085 = vrot.slane %v12083, 5
      %v12086 = vor.u32 %v12082, %v12085
      %v12087 = vrot.slane %v12086, 4
      %v12089 = vshll.u32 %v11702, 16
      %v12091 = vrot.slane %v12089, 5
      %v12092 = vsel %vm722, %v12087, %v12091
      %v12093 = vshrl.u32 %v11702, 16
      %v12095 = vrot.slane %v12093, 4
      %v12096 = vor.u32 %v12095, %v12091
      %v12097 = vrot.slane %v12096, 4
      %v12099 = vshll.u32 %v11718, 16
      %v12101 = vrot.slane %v12099, 5
      %v12102 = vsel %vm722, %v12097, %v12101
      %v12103 = vld [vmem:[%s11670] sm:$0xe]
      %v12104 = vld [vmem:[%s11670 + $0xc] sm:$0xe]
      %v12105 = vld [vmem:[%s11670 + $0x18] sm:$0xe]
      %v12106 = vld [vmem:[%s11670 + $0x24] sm:$0xe]
      %v12107 = vld [vmem:[%s11670 + $0x30] sm:$0xe]
      %v12108 = vld [vmem:[%s11670 + $0x3c] sm:$0xe]
      %v12109 = vld [vmem:[%s11670 + $0x48] sm:$0xe]
      %v12110 = vld [vmem:[%s11670 + $0x54] sm:$0xe]
      %v12111 = vld [vmem:[%s11670 + $0x60] sm:$0xe]
      %v12112 = vld [vmem:[%s11670 + $0x6c] sm:$0xe]
      %v12113 = vld [vmem:[%s11670 + $0x78] sm:$0xe]
      %v12114 = vld [vmem:[%s11670 + $0x84] sm:$0xe]
      %v12115 = vld [vmem:[%s11670 + $0x90] sm:$0xe]
      %v12116 = vld [vmem:[%s11670 + $0x9c] sm:$0xe]
      %v12117 = vld [vmem:[%s11670 + $0xa8] sm:$0xe]
      %v12118 = vld [vmem:[%s11670 + $0xb4] sm:$0xe]
      %v12167 = vrot.slane %v12103, 5
      %v12168 = vrot.slane %v12167, 4
      %v12169 = vrot.slane %v11672, 5
      %v12170 = vsel %vm5570, %v12168, %v12169
      %v12171 = vrot.slane %v12169, 4
      %v12172 = vrot.slane %v11703, 5
      %v12173 = vsel %vm5570, %v12171, %v12172
      %v12174 = vrot.slane %v12104, 5
      %v12175 = vrot.slane %v12174, 4
      %v12176 = vrot.slane %v11674, 5
      %v12177 = vsel %vm5570, %v12175, %v12176
      %v12178 = vrot.slane %v12176, 4
      %v12179 = vrot.slane %v11704, 5
      %v12180 = vsel %vm5570, %v12178, %v12179
      %v12181 = vrot.slane %v12105, 5
      %v12182 = vrot.slane %v12181, 4
      %v12183 = vrot.slane %v11676, 5
      %v12184 = vsel %vm5570, %v12182, %v12183
      %v12185 = vrot.slane %v12183, 4
      %v12186 = vrot.slane %v11705, 5
      %v12187 = vsel %vm5570, %v12185, %v12186
      %v12188 = vrot.slane %v12106, 5
      %v12189 = vrot.slane %v12188, 4
      %v12190 = vrot.slane %v11678, 5
      %v12191 = vsel %vm5570, %v12189, %v12190
      %v12192 = vrot.slane %v12190, 4
      %v12193 = vrot.slane %v11706, 5
      %v12194 = vsel %vm5570, %v12192, %v12193
      %v12195 = vrot.slane %v12107, 5
      %v12196 = vrot.slane %v12195, 4
      %v12197 = vrot.slane %v11680, 5
      %v12198 = vsel %vm5570, %v12196, %v12197
      %v12199 = vrot.slane %v12197, 4
      %v12200 = vrot.slane %v11707, 5
      %v12201 = vsel %vm5570, %v12199, %v12200
      %v12202 = vrot.slane %v12108, 5
      %v12203 = vrot.slane %v12202, 4
      %v12204 = vrot.slane %v11682, 5
      %v12205 = vsel %vm5570, %v12203, %v12204
      %v12206 = vrot.slane %v12204, 4
      %v12207 = vrot.slane %v11708, 5
      %v12208 = vsel %vm5570, %v12206, %v12207
      %v12209 = vrot.slane %v12109, 5
      %v12210 = vrot.slane %v12209, 4
      %v12211 = vrot.slane %v11684, 5
      %v12212 = vsel %vm5570, %v12210, %v12211
      %v12213 = vrot.slane %v12211, 4
      %v12214 = vrot.slane %v11709, 5
      %v12215 = vsel %vm5570, %v12213, %v12214
      %v12216 = vrot.slane %v12110, 5
      %v12217 = vrot.slane %v12216, 4
      %v12218 = vrot.slane %v11686, 5
      %v12219 = vsel %vm5570, %v12217, %v12218
      %v12220 = vrot.slane %v12218, 4
      %v12221 = vrot.slane %v11710, 5
      %v12222 = vsel %vm5570, %v12220, %v12221
      %v12223 = vrot.slane %v12111, 5
      %v12224 = vrot.slane %v12223, 4
      %v12225 = vrot.slane %v11688, 5
      %v12226 = vsel %vm5570, %v12224, %v12225
      %v12227 = vrot.slane %v12225, 4
      %v12228 = vrot.slane %v11711, 5
      %v12229 = vsel %vm5570, %v12227, %v12228
      %v12230 = vrot.slane %v12112, 5
      %v12231 = vrot.slane %v12230, 4
      %v12232 = vrot.slane %v11690, 5
      %v12233 = vsel %vm5570, %v12231, %v12232
      %v12234 = vrot.slane %v12232, 4
      %v12235 = vrot.slane %v11712, 5
      %v12236 = vsel %vm5570, %v12234, %v12235
      %v12237 = vrot.slane %v12113, 5
      %v12238 = vrot.slane %v12237, 4
      %v12239 = vrot.slane %v11692, 5
      %v12240 = vsel %vm5570, %v12238, %v12239
      %v12241 = vrot.slane %v12239, 4
      %v12242 = vrot.slane %v11713, 5
      %v12243 = vsel %vm5570, %v12241, %v12242
      %v12244 = vrot.slane %v12114, 5
      %v12245 = vrot.slane %v12244, 4
      %v12246 = vrot.slane %v11694, 5
      %v12247 = vsel %vm5570, %v12245, %v12246
      %v12248 = vrot.slane %v12246, 4
      %v12249 = vrot.slane %v11714, 5
      %v12250 = vsel %vm5570, %v12248, %v12249
      %v12251 = vrot.slane %v12115, 5
      %v12252 = vrot.slane %v12251, 4
      %v12253 = vrot.slane %v11696, 5
      %v12254 = vsel %vm5570, %v12252, %v12253
      %v12255 = vrot.slane %v12253, 4
      %v12256 = vrot.slane %v11715, 5
      %v12257 = vsel %vm5570, %v12255, %v12256
      %v12258 = vrot.slane %v12116, 5
      %v12259 = vrot.slane %v12258, 4
      %v12260 = vrot.slane %v11698, 5
      %v12261 = vsel %vm5570, %v12259, %v12260
      %v12262 = vrot.slane %v12260, 4
      %v12263 = vrot.slane %v11716, 5
      %v12264 = vsel %vm5570, %v12262, %v12263
      %v12265 = vrot.slane %v12117, 5
      %v12266 = vrot.slane %v12265, 4
      %v12267 = vrot.slane %v11700, 5
      %v12268 = vsel %vm5570, %v12266, %v12267
      %v12269 = vrot.slane %v12267, 4
      %v12270 = vrot.slane %v11717, 5
      %v12271 = vsel %vm5570, %v12269, %v12270
      %v12272 = vrot.slane %v12118, 5
      %v12273 = vrot.slane %v12272, 4
      %v12274 = vrot.slane %v11702, 5
      %v12275 = vsel %vm5570, %v12273, %v12274
      %v12276 = vrot.slane %v12274, 4
      %v12277 = vrot.slane %v11718, 5
      %v12278 = vsel %vm5570, %v12276, %v12277
      %v12295 = vunpack.c.l.b16 %v11671
      %v12296 = vunpack.c.l.b16 %v11672
      %v12297 = vunpack.c.l.b16 %v11673
      %v12298 = vunpack.c.l.b16 %v11674
      %v12299 = vunpack.c.l.b16 %v11675
      %v12300 = vunpack.c.l.b16 %v11676
      %v12301 = vunpack.c.l.b16 %v11677
      %v12302 = vunpack.c.l.b16 %v11678
      %v12303 = vunpack.c.l.b16 %v11679
      %v12304 = vunpack.c.l.b16 %v11680
      %v12305 = vunpack.c.l.b16 %v11681
      %v12306 = vunpack.c.l.b16 %v11682
      %v12307 = vunpack.c.l.b16 %v11683
      %v12308 = vunpack.c.l.b16 %v11684
      %v12309 = vunpack.c.l.b16 %v11685
      %v12310 = vunpack.c.l.b16 %v11686
      %v12311 = vunpack.c.l.b16 %v11687
      %v12312 = vunpack.c.l.b16 %v11688
      %v12313 = vunpack.c.l.b16 %v11689
      %v12314 = vunpack.c.l.b16 %v11690
      %v12315 = vunpack.c.l.b16 %v11691
      %v12316 = vunpack.c.l.b16 %v11692
      %v12317 = vunpack.c.l.b16 %v11693
      %v12318 = vunpack.c.l.b16 %v11694
      %v12319 = vunpack.c.l.b16 %v11695
      %v12320 = vunpack.c.l.b16 %v11696
      %v12321 = vunpack.c.l.b16 %v11697
      %v12322 = vunpack.c.l.b16 %v11698
      %v12323 = vunpack.c.l.b16 %v11699
      %v12324 = vunpack.c.l.b16 %v11700
      %v12325 = vunpack.c.l.b16 %v11701
      %v12326 = vunpack.c.l.b16 %v11702
      %v12327 = vpack.c.b16 %v12296, %v12295
      %v12328 = vpack.c.b16 %v12298, %v12297
      %v12329 = vpack.c.b16 %v12300, %v12299
      %v12330 = vpack.c.b16 %v12302, %v12301
      %v12331 = vpack.c.b16 %v12304, %v12303
      %v12332 = vpack.c.b16 %v12306, %v12305
      %v12333 = vpack.c.b16 %v12308, %v12307
      %v12334 = vpack.c.b16 %v12310, %v12309
      %v12335 = vpack.c.b16 %v12312, %v12311
      %v12336 = vpack.c.b16 %v12314, %v12313
      %v12337 = vpack.c.b16 %v12316, %v12315
      %v12338 = vpack.c.b16 %v12318, %v12317
      %v12339 = vpack.c.b16 %v12320, %v12319
      %v12340 = vpack.c.b16 %v12322, %v12321
      %v12341 = vpack.c.b16 %v12324, %v12323
      %v12342 = vpack.c.b16 %v12326, %v12325
      %v12343 = vunpack.c.l.b16 %v11732
      %v12344 = vunpack.c.l.b16 %v11742
      %v12345 = vunpack.c.l.b16 %v11756
      %v12346 = vunpack.c.l.b16 %v11766
      %v12347 = vunpack.c.l.b16 %v11780
      %v12348 = vunpack.c.l.b16 %v11790
      %v12349 = vunpack.c.l.b16 %v11804
      %v12350 = vunpack.c.l.b16 %v11814
      %v12351 = vunpack.c.l.b16 %v11828
      %v12352 = vunpack.c.l.b16 %v11838
      %v12353 = vunpack.c.l.b16 %v11852
      %v12354 = vunpack.c.l.b16 %v11862
      %v12355 = vunpack.c.l.b16 %v11876
      %v12356 = vunpack.c.l.b16 %v11886
      %v12357 = vunpack.c.l.b16 %v11900
      %v12358 = vunpack.c.l.b16 %v11910
      %v12359 = vunpack.c.l.b16 %v11924
      %v12360 = vunpack.c.l.b16 %v11934
      %v12361 = vunpack.c.l.b16 %v11948
      %v12362 = vunpack.c.l.b16 %v11958
      %v12363 = vunpack.c.l.b16 %v11972
      %v12364 = vunpack.c.l.b16 %v11982
      %v12365 = vunpack.c.l.b16 %v11996
      %v12366 = vunpack.c.l.b16 %v12006
      %v12367 = vunpack.c.l.b16 %v12020
      %v12368 = vunpack.c.l.b16 %v12030
      %v12369 = vunpack.c.l.b16 %v12044
      %v12370 = vunpack.c.l.b16 %v12054
      %v12371 = vunpack.c.l.b16 %v12068
      %v12372 = vunpack.c.l.b16 %v12078
      %v12373 = vunpack.c.l.b16 %v12092
      %v12374 = vunpack.c.l.b16 %v12102
      %v12375 = vpack.c.b16 %v12344, %v12343
      %v12376 = vpack.c.b16 %v12346, %v12345
      %v12377 = vpack.c.b16 %v12348, %v12347
      %v12378 = vpack.c.b16 %v12350, %v12349
      %v12379 = vpack.c.b16 %v12352, %v12351
      %v12380 = vpack.c.b16 %v12354, %v12353
      %v12381 = vpack.c.b16 %v12356, %v12355
      %v12382 = vpack.c.b16 %v12358, %v12357
      %v12383 = vpack.c.b16 %v12360, %v12359
      %v12384 = vpack.c.b16 %v12362, %v12361
      %v12385 = vpack.c.b16 %v12364, %v12363
      %v12386 = vpack.c.b16 %v12366, %v12365
      %v12387 = vpack.c.b16 %v12368, %v12367
      %v12388 = vpack.c.b16 %v12370, %v12369
      %v12389 = vpack.c.b16 %v12372, %v12371
      %v12390 = vpack.c.b16 %v12374, %v12373
      %12391 = vrot.lane.b32.xlu0 %v12375, 4
      %v12392 = vpop.permute.xlu0 %12391
      %12393 = vrot.lane.b32.xlu0 %v12376, 4
      %v12394 = vpop.permute.xlu0 %12393
      %12395 = vrot.lane.b32.xlu0 %v12377, 4
      %v12396 = vpop.permute.xlu0 %12395
      %12397 = vrot.lane.b32.xlu0 %v12378, 4
      %v12398 = vpop.permute.xlu0 %12397
      %12399 = vrot.lane.b32.xlu0 %v12379, 4
      %v12400 = vpop.permute.xlu0 %12399
      %12401 = vrot.lane.b32.xlu0 %v12380, 4
      %v12402 = vpop.permute.xlu0 %12401
      %12403 = vrot.lane.b32.xlu0 %v12381, 4
      %v12404 = vpop.permute.xlu0 %12403
      %12405 = vrot.lane.b32.xlu0 %v12382, 4
      %v12406 = vpop.permute.xlu0 %12405
      %12407 = vrot.lane.b32.xlu0 %v12383, 4
      %v12408 = vpop.permute.xlu0 %12407
      %12409 = vrot.lane.b32.xlu0 %v12384, 4
      %v12410 = vpop.permute.xlu0 %12409
      %12411 = vrot.lane.b32.xlu0 %v12385, 4
      %v12412 = vpop.permute.xlu0 %12411
      %12413 = vrot.lane.b32.xlu0 %v12386, 4
      %v12414 = vpop.permute.xlu0 %12413
      %12415 = vrot.lane.b32.xlu0 %v12387, 4
      %v12416 = vpop.permute.xlu0 %12415
      %12417 = vrot.lane.b32.xlu0 %v12388, 4
      %v12418 = vpop.permute.xlu0 %12417
      %12419 = vrot.lane.b32.xlu0 %v12389, 4
      %v12420 = vpop.permute.xlu0 %12419
      %12421 = vrot.lane.b32.xlu0 %v12390, 4
      %v12422 = vpop.permute.xlu0 %12421
      %v12423 = vunpack.c.l.b16 %v12170
      %v12424 = vunpack.c.l.b16 %v12173
      %v12425 = vunpack.c.l.b16 %v12177
      %v12426 = vunpack.c.l.b16 %v12180
      %v12427 = vunpack.c.l.b16 %v12184
      %v12428 = vunpack.c.l.b16 %v12187
      %v12429 = vunpack.c.l.b16 %v12191
      %v12430 = vunpack.c.l.b16 %v12194
      %v12431 = vunpack.c.l.b16 %v12198
      %v12432 = vunpack.c.l.b16 %v12201
      %v12433 = vunpack.c.l.b16 %v12205
      %v12434 = vunpack.c.l.b16 %v12208
      %v12435 = vunpack.c.l.b16 %v12212
      %v12436 = vunpack.c.l.b16 %v12215
      %v12437 = vunpack.c.l.b16 %v12219
      %v12438 = vunpack.c.l.b16 %v12222
      %v12439 = vunpack.c.l.b16 %v12226
      %v12440 = vunpack.c.l.b16 %v12229
      %v12441 = vunpack.c.l.b16 %v12233
      %v12442 = vunpack.c.l.b16 %v12236
      %v12443 = vunpack.c.l.b16 %v12240
      %v12444 = vunpack.c.l.b16 %v12243
      %v12445 = vunpack.c.l.b16 %v12247
      %v12446 = vunpack.c.l.b16 %v12250
      %v12447 = vunpack.c.l.b16 %v12254
      %v12448 = vunpack.c.l.b16 %v12257
      %v12449 = vunpack.c.l.b16 %v12261
      %v12450 = vunpack.c.l.b16 %v12264
      %v12451 = vunpack.c.l.b16 %v12268
      %v12452 = vunpack.c.l.b16 %v12271
      %v12453 = vunpack.c.l.b16 %v12275
      %v12454 = vunpack.c.l.b16 %v12278
      %v12455 = vpack.c.b16 %v12424, %v12423
      %v12456 = vpack.c.b16 %v12426, %v12425
      %v12457 = vpack.c.b16 %v12428, %v12427
      %v12458 = vpack.c.b16 %v12430, %v12429
      %v12459 = vpack.c.b16 %v12432, %v12431
      %v12460 = vpack.c.b16 %v12434, %v12433
      %v12461 = vpack.c.b16 %v12436, %v12435
      %v12462 = vpack.c.b16 %v12438, %v12437
      %v12463 = vpack.c.b16 %v12440, %v12439
      %v12464 = vpack.c.b16 %v12442, %v12441
      %v12465 = vpack.c.b16 %v12444, %v12443
      %v12466 = vpack.c.b16 %v12446, %v12445
      %v12467 = vpack.c.b16 %v12448, %v12447
      %v12468 = vpack.c.b16 %v12450, %v12449
      %v12469 = vpack.c.b16 %v12452, %v12451
      %v12470 = vpack.c.b16 %v12454, %v12453
      %12471 = vrot.lane.b32.xlu0 %v12455, 8
      %v12472 = vpop.permute.xlu0 %12471
      %12473 = vrot.lane.b32.xlu0 %v12456, 8
      %v12474 = vpop.permute.xlu0 %12473
      %12475 = vrot.lane.b32.xlu0 %v12457, 8
      %v12476 = vpop.permute.xlu0 %12475
      %12477 = vrot.lane.b32.xlu0 %v12458, 8
      %v12478 = vpop.permute.xlu0 %12477
      %12479 = vrot.lane.b32.xlu0 %v12459, 8
      %v12480 = vpop.permute.xlu0 %12479
      %12481 = vrot.lane.b32.xlu0 %v12460, 8
      %v12482 = vpop.permute.xlu0 %12481
      %12483 = vrot.lane.b32.xlu0 %v12461, 8
      %v12484 = vpop.permute.xlu0 %12483
      %12485 = vrot.lane.b32.xlu0 %v12462, 8
      %v12486 = vpop.permute.xlu0 %12485
      %12487 = vrot.lane.b32.xlu0 %v12463, 8
      %v12488 = vpop.permute.xlu0 %12487
      %12489 = vrot.lane.b32.xlu0 %v12464, 8
      %v12490 = vpop.permute.xlu0 %12489
      %12491 = vrot.lane.b32.xlu0 %v12465, 8
      %v12492 = vpop.permute.xlu0 %12491
      %12493 = vrot.lane.b32.xlu0 %v12466, 8
      %v12494 = vpop.permute.xlu0 %12493
      %12495 = vrot.lane.b32.xlu0 %v12467, 8
      %v12496 = vpop.permute.xlu0 %12495
      %12497 = vrot.lane.b32.xlu0 %v12468, 8
      %v12498 = vpop.permute.xlu0 %12497
      %12499 = vrot.lane.b32.xlu0 %v12469, 8
      %v12500 = vpop.permute.xlu0 %12499
      %12501 = vrot.lane.b32.xlu0 %v12470, 8
      %v12502 = vpop.permute.xlu0 %12501
      %v12505 = vsel %vm10521, %v12327, %v12392
      %v12508 = vsel %vm10521, %v12328, %v12394
      %v12511 = vsel %vm10521, %v12329, %v12396
      %v12514 = vsel %vm10521, %v12330, %v12398
      %v12517 = vsel %vm10521, %v12331, %v12400
      %v12520 = vsel %vm10521, %v12332, %v12402
      %v12523 = vsel %vm10521, %v12333, %v12404
      %v12526 = vsel %vm10521, %v12334, %v12406
      %v12529 = vsel %vm10521, %v12335, %v12408
      %v12532 = vsel %vm10521, %v12336, %v12410
      %v12535 = vsel %vm10521, %v12337, %v12412
      %v12538 = vsel %vm10521, %v12338, %v12414
      %v12541 = vsel %vm10521, %v12339, %v12416
      %v12544 = vsel %vm10521, %v12340, %v12418
      %v12547 = vsel %vm10521, %v12341, %v12420
      %v12550 = vsel %vm10521, %v12342, %v12422
      %v12552 = vsel %vm1052, %v12505, %v12472
      %v12554 = vsel %vm1052, %v12508, %v12474
      %v12556 = vsel %vm1052, %v12511, %v12476
      %v12558 = vsel %vm1052, %v12514, %v12478
      %v12560 = vsel %vm1052, %v12517, %v12480
      %v12562 = vsel %vm1052, %v12520, %v12482
      %v12564 = vsel %vm1052, %v12523, %v12484
      %v12566 = vsel %vm1052, %v12526, %v12486
      %v12568 = vsel %vm1052, %v12529, %v12488
      %v12570 = vsel %vm1052, %v12532, %v12490
      %v12572 = vsel %vm1052, %v12535, %v12492
      %v12574 = vsel %vm1052, %v12538, %v12494
      %v12576 = vsel %vm1052, %v12541, %v12496
      %v12578 = vsel %vm1052, %v12544, %v12498
      %v12580 = vsel %vm1052, %v12547, %v12500
      %v12582 = vsel %vm1052, %v12550, %v12502
      %s12583 = scalar_lea.vmem %s10, 4
      %v12584 = vld [vmem:[%s12583] sm:$0x3]
      %v12586 = vsel %vm11517, %v12584, 0
      %v12588 = vsel %vm11517, %v12552, 0
      %v12590 = vsel %vm11517, %v12554, 0
      %v12592 = vsel %vm11517, %v12556, 0
      %v12594 = vsel %vm11517, %v12558, 0
      %v12596 = vsel %vm11517, %v12560, 0
      %v12598 = vsel %vm11517, %v12562, 0
      %v12600 = vsel %vm11517, %v12564, 0
      %v12602 = vsel %vm11517, %v12566, 0
      %v12604 = vsel %vm11517, %v12568, 0
      %v12606 = vsel %vm11517, %v12570, 0
      %v12608 = vsel %vm11517, %v12572, 0
      %v12610 = vsel %vm11517, %v12574, 0
      %v12612 = vsel %vm11517, %v12576, 0
      %v12614 = vsel %vm11517, %v12578, 0
      %v12616 = vsel %vm11517, %v12580, 0
      %v12618 = vsel %vm11517, %v12582, 0
      %12620 = vmatprep.subr.bf16.mxu0 0
      %12621 = vmatpush1.bf16.xpose.msra.mxu0 %v12602
      %12622 = vmatprep.subr.bf16.mxu0 0
      %12623 = vmatpush1.bf16.xpose.msra.mxu0 %v12600
      %12624 = vmatprep.subr.bf16.mxu0 0
      %12625 = vmatpush1.bf16.xpose.msra.mxu0 %v12598
      %12626 = vmatprep.subr.bf16.mxu0 0
      %12627 = vmatpush1.bf16.xpose.msra.mxu0 %v12596
      %12628 = vmatprep.subr.bf16.mxu0 0
      %12629 = vmatpush1.bf16.xpose.msra.mxu0 %v12594
      %12630 = vmatprep.subr.bf16.mxu0 0
      %12631 = vmatpush1.bf16.xpose.msra.mxu0 %v12592
      %12632 = vmatprep.subr.bf16.mxu0 0
      %12633 = vmatpush1.bf16.xpose.msra.mxu0 %v12590
      %12634 = vmatprep.subr.bf16.mxu0 0
      %12635 = vmatpush1.bf16.xpose.msra.mxu0 %v12588
      %12636 = vmatprep.subr.bf16.mxu0 0
      %12637 = vmatpush2.bf16.xpose.msra.mxu0 %v12618
      %12638 = vmatprep.subr.bf16.mxu0 0
      %12639 = vmatpush2.bf16.xpose.msra.mxu0 %v12616
      %12640 = vmatprep.subr.bf16.mxu0 0
      %12641 = vmatpush2.bf16.xpose.msra.mxu0 %v12614
      %12642 = vmatprep.subr.bf16.mxu0 0
      %12643 = vmatpush2.bf16.xpose.msra.mxu0 %v12612
      %12644 = vmatprep.subr.bf16.mxu0 0
      %12645 = vmatpush2.bf16.xpose.msra.mxu0 %v12610
      %12646 = vmatprep.subr.bf16.mxu0 0
      %12647 = vmatpush2.bf16.xpose.msra.mxu0 %v12608
      %12648 = vmatprep.subr.bf16.mxu0 0
      %12649 = vmatpush2.bf16.xpose.msra.mxu0 %v12606
      %12650 = vmatprep.subr.bf16.mxu0 0
      %12651 = vmatpush2.bf16.xpose.msra.mxu0 %v12604
      %12652 = vmatprep.mubr.bf16.mxu0 0
      %12653 = vmatmul.mubr.bf16.gmra.mxu0 %v12586
      %v12654 = vpop.f32.mrf.mxu0
      %v12655 = vadd.f32 0.0, %v12654
      %v12656 = vpop.f32.mrf.mxu0
      %v12657 = vadd.f32 0.0, %v12656
      %v12658 = vpop.f32.mrf.mxu0
      %v12659 = vpop.f32.mrf.mxu0
      %12660 = vdwg.mxu0
      %v12661 = vadd.f32 %v11664, %v12655
      %v12662 = vadd.f32 %v11666, %v12657
      %v12663 = vld [vmem:[%s11] sm:$0xf]
      %12665 = vset.pattern.permute.xlu0 0
      %12666 = vperm.xlu0 %12665, %v12663
      %v12667 = vpop.permute.xlu0 %12666
      %v12669 = vmul.f32 %v12661, %v12667
      %v12670 = vmul.f32 %v12662, %v12667
      %v12671 = vld [vmem:[%s12] sm:$0xf]
      %12673 = vset.pattern.permute.xlu0 0
      %12674 = vperm.xlu0 %12673, %v12671
      %v12675 = vpop.permute.xlu0 %12674
      %v12677 = vadd.f32 %v12669, %v12675
      %v12678 = vadd.f32 %v12670, %v12675
      %v12679 = vmax.f32 %v12677, 0.0
      %v12680 = vmax.f32 %v12678, 0.0
      %v12681 = vadd.f32 %v12679, %v9683
      %v12682 = vadd.f32 %v12680, %v9685
      %v12683 = vpack.c.bf16 %v12681, %v12681
      %v12684 = vpack.c.bf16 %v12682, %v12682
      %v12687 = vcombine.low %v12683, %v12684
      %v12689 = vunpack.c.l.s4 1983009808
      %v12690 = vunpack.c.0.s8 %v12689
      %v12691 = vlaneseq
      %v12692 = vshrl.u32 %v12691, 7
      %v12693 = vsub.s32 %v12690, %v12692
      %v12694 = vrot.slane %v12687, %v12693
      %12696 = vst [vmem:[%s460] sm:$0xf] %v12694
      %p12697 = scmp.lt.s32.totalorder %s24, 1
      %s12698 = scalar_select %p12697, %s24, 1
      %s12699 = smul.addr %s12698, 2
      %s12700 = smul.addr %s12699, 2
      %s12701 = scalar_lea.vmem %s13, %s12700
      // Predicated region
      $region73: #{res_decoder_block_forward.1} parent=71 // pred_check
        %p12702 = pneg %p325
      $region74: #{res_decoder_block_forward.1} parent=71 // pred_check_branch
        %12704 = sbr.rel (%p12702) target = $region76
      $region75: #{res_decoder_block_forward.1} parent=71 // pred_region
        _
      $region76: #{res_decoder_block_forward.1} parent=71 // pred_fallthru
        _
    $region72: #{res_decoder_block_forward.1} parent=5 // pred_fallthru
      _
    %p12705 = scmp.le.s32.totalorder 2, %s19
    // Predicated region
    $region77: #{res_decoder_block_forward.1} parent=5 // pred_check
      %p12706 = pneg %p12705
    $region78: #{res_decoder_block_forward.1} parent=5 // pred_check_branch
      %12708 = sbr.rel (%p12706) target = $region80
    $region79: #{res_decoder_block_forward.1} parent=5 // pred_region
      %s12709 = ssub.s32 %s19, 2
      // Predicated region
      $region81: #{res_decoder_block_forward.1} parent=79 // pred_check
        %p12710 = pneg %p331
      $region82: #{res_decoder_block_forward.1} parent=79 // pred_check_branch
        %12712 = sbr.rel (%p12710) target = $region84
      $region83: #{res_decoder_block_forward.1} parent=79 // pred_region
        %p12713 = scmp.lt.s32.totalorder %s25, 1
        %s12714 = scalar_select %p12713, %s25, 1
        %s12715 = smul.addr %s12714, 2
        %s12716 = smul.addr %s12715, 2
        %s12717 = scalar_lea.vmem %s13, %s12716
      $region84: #{res_decoder_block_forward.1} parent=79 // pred_fallthru
        _
    $region80: #{res_decoder_block_forward.1} parent=5 // pred_fallthru
      _
  $region6: #{res_decoder_block_forward.1} parent=0 // loop_footer
    %s23 = sadd.s32 1, %s19
  $region7: #{res_decoder_block_forward.1} parent=0 // loop_footer_branch
    %18 = sbr.rel target = $region3
  $region8: #{res_decoder_block_forward.1} parent=0 // loop_exit
    _

</llo_original>
